<compile_context>
chip_gen: v7x
topology: tpu7x:2x2x1
jax: 0.10.0
libtpu: 0.0.40
codegen_flags: <defaults>
</compile_context>

<pallas_src>
import math
import numpy as np
import jax
import jax.numpy as jnp
from jax import lax
from jax.experimental import pallas as pl
from jax.experimental.pallas import tpu as pltpu

LANE = 128


# ----------------------------------------------------------------------------
# steerable_A basis (numpy, deterministic) — mirrors the SESN reference impl.
# ----------------------------------------------------------------------------
def _hermite_poly(X, n):
    coeff = [0.0] * n + [1.0]
    return np.polynomial.hermite_e.hermeval(X, coeff)


def _onescale_grid_hermite_gaussian(size, scale, max_order):
    X = np.linspace(-(size // 2), size // 2, size)
    order_y, order_x = np.indices([max_order + 1, max_order + 1])
    G = np.exp(-X ** 2 / (2 * scale ** 2)) / scale
    basis_x = np.stack([G * _hermite_poly(X / scale, n) for n in order_x.ravel()])
    basis_y = np.stack([G * _hermite_poly(X / scale, n) for n in order_y.ravel()])
    return basis_x[:, :, None] * basis_y[:, None, :]          # [F, size, size]


def steerable_A(size, scales, effective_size):
    max_order = effective_size - 1
    max_scale = max(scales)
    tensors = []
    for scale in scales:
        size_before_pad = int(size * scale / max_scale) // 2 * 2 + 1
        b = _onescale_grid_hermite_gaussian(size_before_pad, scale, max_order)
        p = (size - size_before_pad) // 2
        b = np.pad(b, ((0, 0), (p, p), (p, p)))
        tensors.append(b)
    return np.stack(tensors, 1)                                # [F, S, k, k]


def normalize_basis_by_min_scale(basis):
    norm = np.sqrt((basis ** 2).sum(axis=(2, 3), keepdims=True))[:, [0]]
    return basis / norm


# ----------------------------------------------------------------------------
# Fused Pallas kernel: per scale (grid step) run the whole layer stack.
# Every layer = im2col (one deep patch matrix) + one bf16 MXU matmul (f32 acc)
# + bias + optional ReLU. Only the final, lane-dense [M, 128] result hits HBM.
# ----------------------------------------------------------------------------
def _make_fused_kernel(B, H, W, K, Ch, Lh):
    pad = K // 2
    Wp = W + 2 * pad
    M = B * H * W

    def kernel(x_ref, wh_ref, bh_ref, wf_ref, bf_ref, o_ref):
        # Padding constants hoisted: built once per grid step, reused by every
        # layer's im2col (JAX does not CSE broadcast_in_dim).
        zw = jnp.zeros((B, H, pad, Ch), jnp.float32)
        zh = jnp.zeros((B, pad, Wp, Ch), jnp.float32)

        def im2col(a):
            # Spatial zero-padding via concatenation keeps every access
            # full-block / aligned, then gather the K*K shifted views into a
            # single [M, K*K*Ch] bf16 patch matrix -> one deep MXU contraction.
            xp = jnp.concatenate([zw, a, zw], axis=2)          # [B, H, Wp, Ch]
            xp = jnp.concatenate([zh, xp, zh], axis=1)         # [B, Hp, Wp, Ch]
            cols = [xp[:, ky:ky + H, kx:kx + W, :].reshape(M, Ch)
                    for ky in range(K) for kx in range(K)]
            return jnp.concatenate(cols, axis=-1).astype(jnp.bfloat16)

        a = x_ref[...]                                         # [B, H, W, Ch] f32
        # Hidden layers (layer 0 + middle layers): matmul + bias + ReLU.
        for l in range(Lh):
            y = jnp.dot(im2col(a), wh_ref[l, 0],
                        preferred_element_type=jnp.float32)    # [M, Ch] f32
            y = jnp.maximum(y + bh_ref[l], 0.0)
            a = y.reshape(B, H, W, Ch)
        # Final layer (single-scale basis, no ReLU): lane-dense [M, Cf] store.
        out = jnp.dot(im2col(a), wf_ref[...],
                      preferred_element_type=jnp.float32)      # [M, Cf] f32
        o_ref[0] = out + bf_ref[...]

    return kernel


def forward(x_nchw, packed, *, hidden_dim, out_channels, K,
            compute_all_scales=False):
    """Full Relaxed_Scale_SteerCNNs forward: [B, Cin, H, W] -> [B, out, H, W]."""
    B, Cin, H, W = x_nchw.shape
    Ch = hidden_dim
    Lh, S, KKC, _ = packed['wh'].shape
    Cf = packed['bf'].shape[1]
    M = B * H * W

    # scale_size == 1 for every layer (no scale mixing) and the final layer is
    # built with scales=[1.0], so the module output depends only on the
    # scale-0 branch.  Skip the dead branches unless explicitly requested.
    S_used = S if compute_all_scales else 1
    wh = packed['wh'][:, :S_used]                              # [Lh, S_used, KKC, Ch]

    x = jnp.transpose(x_nchw, (0, 2, 3, 1)).astype(jnp.float32)   # [B, H, W, Cin]
    x = jnp.pad(x, ((0, 0), (0, 0), (0, 0), (0, Ch - Cin)))       # channel-pad -> Ch

    out = pl.pallas_call(
        _make_fused_kernel(B, H, W, K, Ch, Lh),
        out_shape=jax.ShapeDtypeStruct((S_used, M, Cf), jnp.float32),
        grid_spec=pltpu.PrefetchScalarGridSpec(
            num_scalar_prefetch=0,
            grid=(S_used,),
            in_specs=[
                # single input image, shared by all scales (no S-broadcast in HBM)
                pl.BlockSpec((B, H, W, Ch), lambda s: (0, 0, 0, 0)),
                # stacked hidden-layer weights, per-scale slice
                pl.BlockSpec((Lh, 1, KKC, Ch), lambda s: (0, s, 0, 0)),
                pl.BlockSpec((Lh, 1, Ch), lambda s: (0, 0, 0)),
                # final-layer weight/bias (single-scale basis, shared)
                pl.BlockSpec((KKC, Cf), lambda s: (0, 0)),
                pl.BlockSpec((1, Cf), lambda s: (0, 0)),
            ],
            out_specs=pl.BlockSpec((1, M, Cf), lambda s: (s, 0, 0)),
        ),
        compiler_params=pltpu.CompilerParams(
            dimension_semantics=("parallel",)),
    )(x, wh, packed['bh'], packed['wf'], packed['bf'])

    # The module's final layer uses only scale 0 (scales=[1.0]) -> squeeze(2).
    y = out[0].reshape(B, H, W, Cf)[..., :out_channels]
    return jnp.transpose(y, (0, 3, 1, 2))                      # [B, out, H, W]


# ----------------------------------------------------------------------------
# Parameter construction (deterministic), mirroring module __init__ shapes.
# Layers are kept as f32 [S, K, K, Cin, Cout] effective kernels (for the
# reference), then packed / padded / bf16-cast for the fused Pallas kernel.
# ----------------------------------------------------------------------------
def _kaiming_uniform(key, shape, a):
    fan_in = int(np.prod(shape[1:]))
    gain = math.sqrt(2.0 / (1.0 + a ** 2))
    bound = gain * math.sqrt(3.0 / fan_in)
    return jax.random.uniform(key, shape, jnp.float32, -bound, bound)


def build_model_params(key, in_channels, out_channels, hidden_dim,
                       kernel_size, num_layers, scales):
    K = kernel_size
    pad = K // 2
    a = 5 ** 0.5 / 25
    keys = jax.random.split(key, num_layers)
    layers = []

    basis = jnp.asarray(normalize_basis_by_min_scale(
        steerable_A(K, scales, 7)), jnp.float32)               # [F, S, K, K]
    F0 = basis.shape[0]

    # ---- layer 0: Relaxed_SESConv_Z2_H (relu=True) ----
    w0 = _kaiming_uniform(keys[0], (hidden_dim, in_channels, F0, K, K), a)
    ker0 = jnp.einsum('oifyx,fsyx->oisyx', w0, basis)          # [O, I, S, K, K]
    layers.append(dict(w=jnp.transpose(ker0, (2, 3, 4, 1, 0)),  # [S, K, K, I, O]
                       b=jnp.zeros((hidden_dim,), jnp.float32), relu=True))

    # ---- middle layers: Relaxed_SESConv_H_H, scale_size=1, relu ----
    for li in range(1, num_layers - 1):
        w = _kaiming_uniform(keys[li], (hidden_dim, hidden_dim, 1, F0, K, K), a)
        ker = jnp.einsum('oizfyx,fsyx->oizsyx', w, basis)[:, :, 0]   # [O, I, S, K, K]
        layers.append(dict(w=jnp.transpose(ker, (2, 3, 4, 1, 0)),
                           b=jnp.zeros((hidden_dim,), jnp.float32), relu=True))

    # ---- final layer: Relaxed_SESConv_H_H, scales=[1.0], final_layer (no relu) ----
    basisf = jnp.asarray(normalize_basis_by_min_scale(
        steerable_A(K, [1.0], 7)), jnp.float32)
    Ff = basisf.shape[0]
    wf = _kaiming_uniform(keys[-1], (out_channels, hidden_dim, 1, Ff, K, K), a)
    kerf = jnp.einsum('oizfyx,fsyx->oizsyx', wf, basisf)[:, :, 0]
    layers.append(dict(w=jnp.transpose(kerf, (2, 3, 4, 1, 0)),  # [1, K, K, I, O]
                       b=jnp.zeros((out_channels,), jnp.float32), relu=False))
    return layers, pad


def pack_params(layers, in_channels, hidden_dim, out_channels, K):
    """Pack per-layer kernels into the fused-kernel layout:
       wh [Lh, S, K*K*Ch, Ch] bf16, bh [Lh, 1, Ch] f32,
       wf [K*K*Ch, Cf_pad] bf16, bf [1, Cf_pad] f32."""
    assert in_channels <= hidden_dim
    Ch = hidden_dim
    S = layers[0]['w'].shape[0]
    KKC = K * K * Ch

    wh_list, bh_list = [], []
    for layer in layers[:-1]:
        w = layer['w']                                         # [S, K, K, Cin, Ch]
        cin = w.shape[3]
        if cin < Ch:                                           # zero-pad layer-0 Cin
            w = jnp.pad(w, ((0, 0), (0, 0), (0, 0), (0, Ch - cin), (0, 0)))
        wh_list.append(w.reshape(S, KKC, Ch))
        bh_list.append(layer['b'].reshape(1, Ch))
    wh = jnp.stack(wh_list, 0).astype(jnp.bfloat16)            # [Lh, S, KKC, Ch]
    bh = jnp.stack(bh_list, 0).astype(jnp.float32)             # [Lh, 1, Ch]

    Cf = ((out_channels + LANE - 1) // LANE) * LANE            # lane-dense output
    wf = jnp.pad(layers[-1]['w'],
                 ((0, 0), (0, 0), (0, 0), (0, 0), (0, Cf - out_channels)))
    wf = wf.reshape(KKC, Cf).astype(jnp.bfloat16)              # [KKC, Cf]
    bf = jnp.pad(layers[-1]['b'], (0, Cf - out_channels)).reshape(1, Cf)
    bf = bf.astype(jnp.float32)
    return dict(wh=wh, bh=bh, wf=wf, bf=bf)


# ----------------------------------------------------------------------------
# Pure-JAX reference (lax.conv, f32 HIGHEST) for correctness checking.
# ----------------------------------------------------------------------------
def ref_forward(x_nchw, layers, pad):
    x = jnp.transpose(x_nchw, (0, 2, 3, 1))                    # [B, H, W, Cin]
    cur = None
    for li, layer in enumerate(layers):
        w = layer['w']                                         # [S, K, K, Cin, Cout]
        S_l = w.shape[0]
        outs = []
        for s in range(S_l):
            xs = x if li == 0 else cur[s]
            y = lax.conv_general_dilated(
                xs, w[s], window_strides=(1, 1),
                padding=[(pad, pad), (pad, pad)],
                dimension_numbers=('NHWC', 'HWIO', 'NHWC'),
                precision=lax.Precision.HIGHEST)
            outs.append(y + layer['b'])
        y = jnp.stack(outs, 0)
        if layer['relu']:
            y = jnp.maximum(y, 0.0)
        cur = y
    return jnp.transpose(cur[0], (0, 3, 1, 2))                 # [B, out, H, W]


if __name__ == "__main__":
    # Small config consistent with the module:
    #   Relaxed_Scale_SteerCNNs(in_channels=4, out_channels=2, hidden_dim=32,
    #                           kernel_size=3, num_layers=3, scales=[1.0, 1.5])
    in_channels, out_channels = 4, 2
    hidden_dim, kernel_size, num_layers = 32, 3, 3
    scales = [1.0, 1.5]
    B, H, W = 2, 16, 16

    key = jax.random.PRNGKey(0)
    k_param, k_x = jax.random.split(key)
    layers, pad = build_model_params(k_param, in_channels, out_channels,
                                     hidden_dim, kernel_size, num_layers, scales)
    packed = pack_params(layers, in_channels, hidden_dim, out_channels, kernel_size)
    x = jax.random.normal(k_x, (B, in_channels, H, W), jnp.float32)

    fwd = jax.jit(lambda xx: forward(xx, packed, hidden_dim=hidden_dim,
                                     out_channels=out_channels, K=kernel_size))
    out = jax.block_until_ready(fwd(x))
    assert out.shape == (B, out_channels, H, W)

    ref = jax.block_until_ready(ref_forward(x, layers, pad))
    # bf16 matmul inputs (f32 accumulation) -> slightly relaxed tolerance vs f32 ref.
    np.testing.assert_allclose(np.asarray(out), np.asarray(ref),
                               rtol=2e-2, atol=2e-2)

    # TODO(synk): get_weight_constraint (training-time regularizer) is not part of
    # forward() and is intentionally not implemented.
    print("KERNEL_OK")
</pallas_src>

<mosaic_0001>
module attributes {stable_mosaic.version = 11 : i64} {
  func.func @kernel(%arg0: i32, %arg1: memref<2x16x16x32xf32, #tpu.memory_space<vmem>>, %arg2: memref<2x1x288x32xbf16, #tpu.memory_space<vmem>>, %arg3: memref<2x1x32xf32, #tpu.memory_space<vmem>>, %arg4: memref<288x128xbf16, #tpu.memory_space<vmem>>, %arg5: memref<1x128xf32, #tpu.memory_space<vmem>>, %arg6: memref<1x512x128xf32, #tpu.memory_space<vmem>>) attributes {dimension_semantics = [#tpu.dimension_semantics<parallel>], iteration_bounds = array<i64: 1>, scalar_prefetch = 0 : i64, scratch_operands = 0 : i64, tpu.core_type = #tpu.core_type<tc>, window_params = [{pipeline_mode = #tpu.pipeline_mode<synchronous>, transform_indices = @transform_0, window_bounds = array<i64: 2, 16, 16, 32>}, {transform_indices = @transform_1, window_bounds = array<i64: 2, 1, 288, 32>}, {pipeline_mode = #tpu.pipeline_mode<synchronous>, transform_indices = @transform_2, window_bounds = array<i64: 2, 1, 32>}, {pipeline_mode = #tpu.pipeline_mode<synchronous>, transform_indices = @transform_3, window_bounds = array<i64: 288, 128>}, {pipeline_mode = #tpu.pipeline_mode<synchronous>, transform_indices = @transform_4, window_bounds = array<i64: 1, 128>}, {transform_indices = @transform_5, window_bounds = array<i64: 1, 512, 128>}]} {
    %cst = arith.constant 0.000000e+00 : f32
    %0 = vector.broadcast %cst : f32 to vector<2x16x1x32xf32>
    %cst_0 = arith.constant 0.000000e+00 : f32
    %1 = vector.broadcast %cst_0 : f32 to vector<2x1x18x32xf32>
    %c0 = arith.constant 0 : index
    %c0_1 = arith.constant 0 : index
    %c0_2 = arith.constant 0 : index
    %c0_3 = arith.constant 0 : index
    %2 = vector.load %arg1[%c0, %c0_1, %c0_2, %c0_3] : memref<2x16x16x32xf32, #tpu.memory_space<vmem>>, vector<2x16x16x32xf32>
    %3 = tpu.concatenate %0, %2, %0 in 2 : vector<2x16x1x32xf32>, vector<2x16x16x32xf32>, vector<2x16x1x32xf32> -> vector<2x16x18x32xf32>
    %4 = tpu.concatenate %1, %3, %1 in 1 : vector<2x1x18x32xf32>, vector<2x16x18x32xf32>, vector<2x1x18x32xf32> -> vector<2x18x18x32xf32>
    %5 = vector.extract_strided_slice %4 {offsets = [0, 0, 0, 0], sizes = [2, 16, 16, 32], strides = [1, 1, 1, 1]} : vector<2x18x18x32xf32> to vector<2x16x16x32xf32>
    %6 = vector.shape_cast %5 : vector<2x16x16x32xf32> to vector<512x32xf32>
    %7 = vector.extract_strided_slice %4 {offsets = [0, 0, 1, 0], sizes = [2, 16, 16, 32], strides = [1, 1, 1, 1]} : vector<2x18x18x32xf32> to vector<2x16x16x32xf32>
    %8 = vector.shape_cast %7 : vector<2x16x16x32xf32> to vector<512x32xf32>
    %9 = vector.extract_strided_slice %4 {offsets = [0, 0, 2, 0], sizes = [2, 16, 16, 32], strides = [1, 1, 1, 1]} : vector<2x18x18x32xf32> to vector<2x16x16x32xf32>
    %10 = vector.shape_cast %9 : vector<2x16x16x32xf32> to vector<512x32xf32>
    %11 = vector.extract_strided_slice %4 {offsets = [0, 1, 0, 0], sizes = [2, 16, 16, 32], strides = [1, 1, 1, 1]} : vector<2x18x18x32xf32> to vector<2x16x16x32xf32>
    %12 = vector.shape_cast %11 : vector<2x16x16x32xf32> to vector<512x32xf32>
    %13 = vector.extract_strided_slice %4 {offsets = [0, 1, 1, 0], sizes = [2, 16, 16, 32], strides = [1, 1, 1, 1]} : vector<2x18x18x32xf32> to vector<2x16x16x32xf32>
    %14 = vector.shape_cast %13 : vector<2x16x16x32xf32> to vector<512x32xf32>
    %15 = vector.extract_strided_slice %4 {offsets = [0, 1, 2, 0], sizes = [2, 16, 16, 32], strides = [1, 1, 1, 1]} : vector<2x18x18x32xf32> to vector<2x16x16x32xf32>
    %16 = vector.shape_cast %15 : vector<2x16x16x32xf32> to vector<512x32xf32>
    %17 = vector.extract_strided_slice %4 {offsets = [0, 2, 0, 0], sizes = [2, 16, 16, 32], strides = [1, 1, 1, 1]} : vector<2x18x18x32xf32> to vector<2x16x16x32xf32>
    %18 = vector.shape_cast %17 : vector<2x16x16x32xf32> to vector<512x32xf32>
    %19 = vector.extract_strided_slice %4 {offsets = [0, 2, 1, 0], sizes = [2, 16, 16, 32], strides = [1, 1, 1, 1]} : vector<2x18x18x32xf32> to vector<2x16x16x32xf32>
    %20 = vector.shape_cast %19 : vector<2x16x16x32xf32> to vector<512x32xf32>
    %21 = vector.extract_strided_slice %4 {offsets = [0, 2, 2, 0], sizes = [2, 16, 16, 32], strides = [1, 1, 1, 1]} : vector<2x18x18x32xf32> to vector<2x16x16x32xf32>
    %22 = vector.shape_cast %21 : vector<2x16x16x32xf32> to vector<512x32xf32>
    %23 = tpu.concatenate %6, %8, %10, %12, %14, %16, %18, %20, %22 in 1 : vector<512x32xf32>, vector<512x32xf32>, vector<512x32xf32>, vector<512x32xf32>, vector<512x32xf32>, vector<512x32xf32>, vector<512x32xf32>, vector<512x32xf32>, vector<512x32xf32> -> vector<512x288xf32>
    %24 = arith.truncf %23 : vector<512x288xf32> to vector<512x288xbf16>
    %c0_4 = arith.constant 0 : index
    %c0_5 = arith.constant 0 : index
    %c0_6 = arith.constant 0 : index
    %c0_7 = arith.constant 0 : index
    %25 = vector.load %arg2[%c0_4, %c0_5, %c0_6, %c0_7] : memref<2x1x288x32xbf16, #tpu.memory_space<vmem>>, vector<1x1x288x32xbf16>
    %26 = vector.shape_cast %25 : vector<1x1x288x32xbf16> to vector<288x32xbf16>
    %cst_8 = arith.constant dense<0.000000e+00> : vector<512x32xf32>
    %27 = tpu.matmul %24, %26, %cst_8 {dimension_numbers = #tpu.dot_dimension_numbers<[1], [0], [0], [1], [0, 0, 1, 1], [], []>} : vector<512x288xbf16>, vector<288x32xbf16>, vector<512x32xf32> -> vector<512x32xf32>
    %c0_9 = arith.constant 0 : index
    %c0_10 = arith.constant 0 : index
    %c0_11 = arith.constant 0 : index
    %28 = vector.load %arg3[%c0_9, %c0_10, %c0_11] : memref<2x1x32xf32, #tpu.memory_space<vmem>>, vector<1x1x32xf32>
    %29 = vector.shape_cast %28 : vector<1x1x32xf32> to vector<1x32xf32>
    %30 = vector.broadcast %29 : vector<1x32xf32> to vector<512x32xf32>
    %31 = arith.addf %27, %30 : vector<512x32xf32>
    %cst_12 = arith.constant 0.000000e+00 : f32
    %32 = vector.broadcast %cst_12 : f32 to vector<512x32xf32>
    %33 = arith.maximumf %31, %32 : vector<512x32xf32>
    %34 = vector.shape_cast %33 : vector<512x32xf32> to vector<2x16x16x32xf32>
    %35 = tpu.concatenate %0, %34, %0 in 2 : vector<2x16x1x32xf32>, vector<2x16x16x32xf32>, vector<2x16x1x32xf32> -> vector<2x16x18x32xf32>
    %36 = tpu.concatenate %1, %35, %1 in 1 : vector<2x1x18x32xf32>, vector<2x16x18x32xf32>, vector<2x1x18x32xf32> -> vector<2x18x18x32xf32>
    %37 = vector.extract_strided_slice %36 {offsets = [0, 0, 0, 0], sizes = [2, 16, 16, 32], strides = [1, 1, 1, 1]} : vector<2x18x18x32xf32> to vector<2x16x16x32xf32>
    %38 = vector.shape_cast %37 : vector<2x16x16x32xf32> to vector<512x32xf32>
    %39 = vector.extract_strided_slice %36 {offsets = [0, 0, 1, 0], sizes = [2, 16, 16, 32], strides = [1, 1, 1, 1]} : vector<2x18x18x32xf32> to vector<2x16x16x32xf32>
    %40 = vector.shape_cast %39 : vector<2x16x16x32xf32> to vector<512x32xf32>
    %41 = vector.extract_strided_slice %36 {offsets = [0, 0, 2, 0], sizes = [2, 16, 16, 32], strides = [1, 1, 1, 1]} : vector<2x18x18x32xf32> to vector<2x16x16x32xf32>
    %42 = vector.shape_cast %41 : vector<2x16x16x32xf32> to vector<512x32xf32>
    %43 = vector.extract_strided_slice %36 {offsets = [0, 1, 0, 0], sizes = [2, 16, 16, 32], strides = [1, 1, 1, 1]} : vector<2x18x18x32xf32> to vector<2x16x16x32xf32>
    %44 = vector.shape_cast %43 : vector<2x16x16x32xf32> to vector<512x32xf32>
    %45 = vector.extract_strided_slice %36 {offsets = [0, 1, 1, 0], sizes = [2, 16, 16, 32], strides = [1, 1, 1, 1]} : vector<2x18x18x32xf32> to vector<2x16x16x32xf32>
    %46 = vector.shape_cast %45 : vector<2x16x16x32xf32> to vector<512x32xf32>
    %47 = vector.extract_strided_slice %36 {offsets = [0, 1, 2, 0], sizes = [2, 16, 16, 32], strides = [1, 1, 1, 1]} : vector<2x18x18x32xf32> to vector<2x16x16x32xf32>
    %48 = vector.shape_cast %47 : vector<2x16x16x32xf32> to vector<512x32xf32>
    %49 = vector.extract_strided_slice %36 {offsets = [0, 2, 0, 0], sizes = [2, 16, 16, 32], strides = [1, 1, 1, 1]} : vector<2x18x18x32xf32> to vector<2x16x16x32xf32>
    %50 = vector.shape_cast %49 : vector<2x16x16x32xf32> to vector<512x32xf32>
    %51 = vector.extract_strided_slice %36 {offsets = [0, 2, 1, 0], sizes = [2, 16, 16, 32], strides = [1, 1, 1, 1]} : vector<2x18x18x32xf32> to vector<2x16x16x32xf32>
    %52 = vector.shape_cast %51 : vector<2x16x16x32xf32> to vector<512x32xf32>
    %53 = vector.extract_strided_slice %36 {offsets = [0, 2, 2, 0], sizes = [2, 16, 16, 32], strides = [1, 1, 1, 1]} : vector<2x18x18x32xf32> to vector<2x16x16x32xf32>
    %54 = vector.shape_cast %53 : vector<2x16x16x32xf32> to vector<512x32xf32>
    %55 = tpu.concatenate %38, %40, %42, %44, %46, %48, %50, %52, %54 in 1 : vector<512x32xf32>, vector<512x32xf32>, vector<512x32xf32>, vector<512x32xf32>, vector<512x32xf32>, vector<512x32xf32>, vector<512x32xf32>, vector<512x32xf32>, vector<512x32xf32> -> vector<512x288xf32>
    %56 = arith.truncf %55 : vector<512x288xf32> to vector<512x288xbf16>
    %c1 = arith.constant 1 : index
    %c0_13 = arith.constant 0 : index
    %c0_14 = arith.constant 0 : index
    %c0_15 = arith.constant 0 : index
    %57 = vector.load %arg2[%c1, %c0_13, %c0_14, %c0_15] : memref<2x1x288x32xbf16, #tpu.memory_space<vmem>>, vector<1x1x288x32xbf16>
    %58 = vector.shape_cast %57 : vector<1x1x288x32xbf16> to vector<288x32xbf16>
    %cst_16 = arith.constant dense<0.000000e+00> : vector<512x32xf32>
    %59 = tpu.matmul %56, %58, %cst_16 {dimension_numbers = #tpu.dot_dimension_numbers<[1], [0], [0], [1], [0, 0, 1, 1], [], []>} : vector<512x288xbf16>, vector<288x32xbf16>, vector<512x32xf32> -> vector<512x32xf32>
    %c1_17 = arith.constant 1 : index
    %c0_18 = arith.constant 0 : index
    %c0_19 = arith.constant 0 : index
    %60 = vector.load %arg3[%c1_17, %c0_18, %c0_19] : memref<2x1x32xf32, #tpu.memory_space<vmem>>, vector<1x1x32xf32>
    %61 = vector.shape_cast %60 : vector<1x1x32xf32> to vector<1x32xf32>
    %62 = vector.broadcast %61 : vector<1x32xf32> to vector<512x32xf32>
    %63 = arith.addf %59, %62 : vector<512x32xf32>
    %cst_20 = arith.constant 0.000000e+00 : f32
    %64 = vector.broadcast %cst_20 : f32 to vector<512x32xf32>
    %65 = arith.maximumf %63, %64 : vector<512x32xf32>
    %66 = vector.shape_cast %65 : vector<512x32xf32> to vector<2x16x16x32xf32>
    %67 = tpu.concatenate %0, %66, %0 in 2 : vector<2x16x1x32xf32>, vector<2x16x16x32xf32>, vector<2x16x1x32xf32> -> vector<2x16x18x32xf32>
    %68 = tpu.concatenate %1, %67, %1 in 1 : vector<2x1x18x32xf32>, vector<2x16x18x32xf32>, vector<2x1x18x32xf32> -> vector<2x18x18x32xf32>
    %69 = vector.extract_strided_slice %68 {offsets = [0, 0, 0, 0], sizes = [2, 16, 16, 32], strides = [1, 1, 1, 1]} : vector<2x18x18x32xf32> to vector<2x16x16x32xf32>
    %70 = vector.shape_cast %69 : vector<2x16x16x32xf32> to vector<512x32xf32>
    %71 = vector.extract_strided_slice %68 {offsets = [0, 0, 1, 0], sizes = [2, 16, 16, 32], strides = [1, 1, 1, 1]} : vector<2x18x18x32xf32> to vector<2x16x16x32xf32>
    %72 = vector.shape_cast %71 : vector<2x16x16x32xf32> to vector<512x32xf32>
    %73 = vector.extract_strided_slice %68 {offsets = [0, 0, 2, 0], sizes = [2, 16, 16, 32], strides = [1, 1, 1, 1]} : vector<2x18x18x32xf32> to vector<2x16x16x32xf32>
    %74 = vector.shape_cast %73 : vector<2x16x16x32xf32> to vector<512x32xf32>
    %75 = vector.extract_strided_slice %68 {offsets = [0, 1, 0, 0], sizes = [2, 16, 16, 32], strides = [1, 1, 1, 1]} : vector<2x18x18x32xf32> to vector<2x16x16x32xf32>
    %76 = vector.shape_cast %75 : vector<2x16x16x32xf32> to vector<512x32xf32>
    %77 = vector.extract_strided_slice %68 {offsets = [0, 1, 1, 0], sizes = [2, 16, 16, 32], strides = [1, 1, 1, 1]} : vector<2x18x18x32xf32> to vector<2x16x16x32xf32>
    %78 = vector.shape_cast %77 : vector<2x16x16x32xf32> to vector<512x32xf32>
    %79 = vector.extract_strided_slice %68 {offsets = [0, 1, 2, 0], sizes = [2, 16, 16, 32], strides = [1, 1, 1, 1]} : vector<2x18x18x32xf32> to vector<2x16x16x32xf32>
    %80 = vector.shape_cast %79 : vector<2x16x16x32xf32> to vector<512x32xf32>
    %81 = vector.extract_strided_slice %68 {offsets = [0, 2, 0, 0], sizes = [2, 16, 16, 32], strides = [1, 1, 1, 1]} : vector<2x18x18x32xf32> to vector<2x16x16x32xf32>
    %82 = vector.shape_cast %81 : vector<2x16x16x32xf32> to vector<512x32xf32>
    %83 = vector.extract_strided_slice %68 {offsets = [0, 2, 1, 0], sizes = [2, 16, 16, 32], strides = [1, 1, 1, 1]} : vector<2x18x18x32xf32> to vector<2x16x16x32xf32>
    %84 = vector.shape_cast %83 : vector<2x16x16x32xf32> to vector<512x32xf32>
    %85 = vector.extract_strided_slice %68 {offsets = [0, 2, 2, 0], sizes = [2, 16, 16, 32], strides = [1, 1, 1, 1]} : vector<2x18x18x32xf32> to vector<2x16x16x32xf32>
    %86 = vector.shape_cast %85 : vector<2x16x16x32xf32> to vector<512x32xf32>
    %87 = tpu.concatenate %70, %72, %74, %76, %78, %80, %82, %84, %86 in 1 : vector<512x32xf32>, vector<512x32xf32>, vector<512x32xf32>, vector<512x32xf32>, vector<512x32xf32>, vector<512x32xf32>, vector<512x32xf32>, vector<512x32xf32>, vector<512x32xf32> -> vector<512x288xf32>
    %88 = arith.truncf %87 : vector<512x288xf32> to vector<512x288xbf16>
    %c0_21 = arith.constant 0 : index
    %c0_22 = arith.constant 0 : index
    %89 = vector.load %arg4[%c0_21, %c0_22] : memref<288x128xbf16, #tpu.memory_space<vmem>>, vector<288x128xbf16>
    %cst_23 = arith.constant dense<0.000000e+00> : vector<512x128xf32>
    %90 = tpu.matmul %88, %89, %cst_23 {dimension_numbers = #tpu.dot_dimension_numbers<[1], [0], [0], [1], [0, 0, 1, 1], [], []>} : vector<512x288xbf16>, vector<288x128xbf16>, vector<512x128xf32> -> vector<512x128xf32>
    %c0_24 = arith.constant 0 : index
    %c0_25 = arith.constant 0 : index
    %91 = vector.load %arg5[%c0_24, %c0_25] : memref<1x128xf32, #tpu.memory_space<vmem>>, vector<1x128xf32>
    %92 = vector.broadcast %91 : vector<1x128xf32> to vector<512x128xf32>
    %93 = arith.addf %90, %92 : vector<512x128xf32>
    %c0_26 = arith.constant 0 : index
    %c0_27 = arith.constant 0 : index
    %c0_28 = arith.constant 0 : index
    %94 = vector.load %arg6[%c0_26, %c0_27, %c0_28] : memref<1x512x128xf32, #tpu.memory_space<vmem>>, vector<1x512x128xf32>
    %95 = vector.shape_cast %94 : vector<1x512x128xf32> to vector<512x128xf32>
    %96 = vector.shape_cast %93 : vector<512x128xf32> to vector<1x512x128xf32>
    tpu.vector_store %arg6[%c0_26, %c0_27, %c0_28], %96 {strides = array<i32>} : memref<1x512x128xf32, #tpu.memory_space<vmem>>, vector<1x512x128xf32>,
    return
  }
  func.func @transform_0(%arg0: i32) -> (i32, i32, i32, i32) {
    %c0_i32 = arith.constant 0 : i32
    %c0_i32_0 = arith.constant 0 : i32
    %c0_i32_1 = arith.constant 0 : i32
    %c0_i32_2 = arith.constant 0 : i32
    %c0_i32_3 = arith.constant 0 : i32
    return %c0_i32, %c0_i32_0, %c0_i32_1, %c0_i32_2 : i32, i32, i32, i32
  }
  func.func @transform_1(%arg0: i32) -> (i32, i32, i32, i32) {
    %c0_i32 = arith.constant 0 : i32
    %c0_i32_0 = arith.constant 0 : i32
    %c0_i32_1 = arith.constant 0 : i32
    %c0_i32_2 = arith.constant 0 : i32
    return %c0_i32, %arg0, %c0_i32_0, %c0_i32_1 : i32, i32, i32, i32
  }
  func.func @transform_2(%arg0: i32) -> (i32, i32, i32) {
    %c0_i32 = arith.constant 0 : i32
    %c0_i32_0 = arith.constant 0 : i32
    %c0_i32_1 = arith.constant 0 : i32
    %c0_i32_2 = arith.constant 0 : i32
    return %c0_i32, %c0_i32_0, %c0_i32_1 : i32, i32, i32
  }
  func.func @transform_3(%arg0: i32) -> (i32, i32) {
    %c0_i32 = arith.constant 0 : i32
    %c0_i32_0 = arith.constant 0 : i32
    %c0_i32_1 = arith.constant 0 : i32
    return %c0_i32, %c0_i32_0 : i32, i32
  }
  func.func @transform_4(%arg0: i32) -> (i32, i32) {
    %c0_i32 = arith.constant 0 : i32
    %c0_i32_0 = arith.constant 0 : i32
    %c0_i32_1 = arith.constant 0 : i32
    return %c0_i32, %c0_i32_0 : i32, i32
  }
  func.func @transform_5(%arg0: i32) -> (i32, i32, i32) {
    %c0_i32 = arith.constant 0 : i32
    %c0_i32_0 = arith.constant 0 : i32
    %c0_i32_1 = arith.constant 0 : i32
    return %arg0, %c0_i32, %c0_i32_0 : i32, i32, i32
  }
}

</mosaic_0001>

<llo_original>
// kernel: _lambda_.1
$region0: #{_lambda_.1}
  #allocation0 [shape = 'u32[]', space=smem, size = 0x4, offset = 0x4, fixed_abs, tag = 'smem constant byte address 0x4 - core index']
  #allocation1 [shape = 'u32[144,128]{1,0:T(1,128)}', space=vmem, size = 0x12000, scoped, tag = 'internal scratch']
  %s0 = inlined_call_operand.vmem [shape: f32[2,16,16,32], index: 0, kind: input, shape index: {}]
  %s1 = inlined_call_operand.vmem [shape: bf16[2,1,288,32], index: 1, kind: input, shape index: {}]
  %s2 = inlined_call_operand.vmem [shape: f32[2,1,32], index: 2, kind: input, shape index: {}]
  %s3 = inlined_call_operand.vmem [shape: bf16[288,128], index: 3, kind: input, shape index: {}]
  %s4 = inlined_call_operand.vmem [shape: f32[1,128], index: 4, kind: input, shape index: {}]
  %s5 = inlined_call_operand.vmem [shape: f32[1,512,128], index: 5, kind: output, shape index: {}]
  %s6 = sld [smem:[#allocation0]]
  $region30: #{_lambda_.1} parent=0
    _
  %s8 = ssub.s32 1, %s6
  %s9 = scalar_select 0, %s8, %s6
  // Predicated region
  $region2: #{_lambda_.1} parent=0 // pred_check
    _
  $region3: #{_lambda_.1} parent=0 // pred_check_branch
    %11 = sbr.rel (0) target = $region5
  $region4: #{_lambda_.1} parent=0 // pred_region
    _
  $region5: #{_lambda_.1} parent=0 // pred_fallthru
    _
  // Predicated region
  $region6: #{_lambda_.1} parent=0 // pred_check
    _
  $region7: #{_lambda_.1} parent=0 // pred_check_branch
    %13 = sbr.rel (0) target = $region9
  $region8: #{_lambda_.1} parent=0 // pred_region
    _
  $region9: #{_lambda_.1} parent=0 // pred_fallthru
    _
  // Predicated region
  $region10: #{_lambda_.1} parent=0 // pred_check
    _
  $region11: #{_lambda_.1} parent=0 // pred_check_branch
    %15 = sbr.rel (0) target = $region13
  $region12: #{_lambda_.1} parent=0 // pred_region
    _
  $region13: #{_lambda_.1} parent=0 // pred_fallthru
    _
  // Predicated region
  $region14: #{_lambda_.1} parent=0 // pred_check
    _
  $region15: #{_lambda_.1} parent=0 // pred_check_branch
    %17 = sbr.rel (0) target = $region17
  $region16: #{_lambda_.1} parent=0 // pred_region
    _
  $region17: #{_lambda_.1} parent=0 // pred_fallthru
    _
  // Predicated region
  $region18: #{_lambda_.1} parent=0 // pred_check
    _
  $region19: #{_lambda_.1} parent=0 // pred_check_branch
    %19 = sbr.rel (0) target = $region21
  $region20: #{_lambda_.1} parent=0 // pred_region
    _
  $region21: #{_lambda_.1} parent=0 // pred_fallthru
    _
  %v21 = vld [vmem:[%s0] sm:$0xff]
  %v22 = vld [vmem:[%s0 + $0x8] sm:$0xff]
  %v23 = vld [vmem:[%s0 + $0x10] sm:$0xff]
  %v24 = vld [vmem:[%s0 + $0x18] sm:$0xff]
  %v25 = vld [vmem:[%s0 + $0x20] sm:$0xff]
  %v26 = vld [vmem:[%s0 + $0x28] sm:$0xff]
  %v27 = vld [vmem:[%s0 + $0x30] sm:$0xff]
  %v28 = vld [vmem:[%s0 + $0x38] sm:$0xff]
  %v29 = vld [vmem:[%s0 + $0x40] sm:$0xff]
  %v30 = vld [vmem:[%s0 + $0x48] sm:$0xff]
  %v31 = vld [vmem:[%s0 + $0x50] sm:$0xff]
  %v32 = vld [vmem:[%s0 + $0x58] sm:$0xff]
  %v33 = vld [vmem:[%s0 + $0x60] sm:$0xff]
  %v34 = vld [vmem:[%s0 + $0x68] sm:$0xff]
  %v35 = vld [vmem:[%s0 + $0x70] sm:$0xff]
  %v36 = vld [vmem:[%s0 + $0x78] sm:$0xff]
  %v37 = vld [vmem:[%s0 + $0x80] sm:$0xff]
  %v38 = vld [vmem:[%s0 + $0x88] sm:$0xff]
  %v39 = vld [vmem:[%s0 + $0x90] sm:$0xff]
  %v40 = vld [vmem:[%s0 + $0x98] sm:$0xff]
  %v41 = vld [vmem:[%s0 + $0xa0] sm:$0xff]
  %v42 = vld [vmem:[%s0 + $0xa8] sm:$0xff]
  %v43 = vld [vmem:[%s0 + $0xb0] sm:$0xff]
  %v44 = vld [vmem:[%s0 + $0xb8] sm:$0xff]
  %v45 = vld [vmem:[%s0 + $0xc0] sm:$0xff]
  %v46 = vld [vmem:[%s0 + $0xc8] sm:$0xff]
  %v47 = vld [vmem:[%s0 + $0xd0] sm:$0xff]
  %v48 = vld [vmem:[%s0 + $0xd8] sm:$0xff]
  %v49 = vld [vmem:[%s0 + $0xe0] sm:$0xff]
  %v50 = vld [vmem:[%s0 + $0xe8] sm:$0xff]
  %v51 = vld [vmem:[%s0 + $0xf0] sm:$0xff]
  %v52 = vld [vmem:[%s0 + $0xf8] sm:$0xff]
  %v53 = vld [vmem:[%s0 + $0x100] sm:$0xff]
  %v54 = vld [vmem:[%s0 + $0x108] sm:$0xff]
  %v55 = vld [vmem:[%s0 + $0x110] sm:$0xff]
  %v56 = vld [vmem:[%s0 + $0x118] sm:$0xff]
  %v57 = vld [vmem:[%s0 + $0x120] sm:$0xff]
  %v58 = vld [vmem:[%s0 + $0x128] sm:$0xff]
  %v59 = vld [vmem:[%s0 + $0x130] sm:$0xff]
  %v60 = vld [vmem:[%s0 + $0x138] sm:$0xff]
  %v61 = vld [vmem:[%s0 + $0x140] sm:$0xff]
  %v62 = vld [vmem:[%s0 + $0x148] sm:$0xff]
  %v63 = vld [vmem:[%s0 + $0x150] sm:$0xff]
  %v64 = vld [vmem:[%s0 + $0x158] sm:$0xff]
  %v65 = vld [vmem:[%s0 + $0x160] sm:$0xff]
  %v66 = vld [vmem:[%s0 + $0x168] sm:$0xff]
  %v67 = vld [vmem:[%s0 + $0x170] sm:$0xff]
  %v68 = vld [vmem:[%s0 + $0x178] sm:$0xff]
  %v69 = vld [vmem:[%s0 + $0x180] sm:$0xff]
  %v70 = vld [vmem:[%s0 + $0x188] sm:$0xff]
  %v71 = vld [vmem:[%s0 + $0x190] sm:$0xff]
  %v72 = vld [vmem:[%s0 + $0x198] sm:$0xff]
  %v73 = vld [vmem:[%s0 + $0x1a0] sm:$0xff]
  %v74 = vld [vmem:[%s0 + $0x1a8] sm:$0xff]
  %v75 = vld [vmem:[%s0 + $0x1b0] sm:$0xff]
  %v76 = vld [vmem:[%s0 + $0x1b8] sm:$0xff]
  %v77 = vld [vmem:[%s0 + $0x1c0] sm:$0xff]
  %v78 = vld [vmem:[%s0 + $0x1c8] sm:$0xff]
  %v79 = vld [vmem:[%s0 + $0x1d0] sm:$0xff]
  %v80 = vld [vmem:[%s0 + $0x1d8] sm:$0xff]
  %v81 = vld [vmem:[%s0 + $0x1e0] sm:$0xff]
  %v82 = vld [vmem:[%s0 + $0x1e8] sm:$0xff]
  %v83 = vld [vmem:[%s0 + $0x1f0] sm:$0xff]
  %v84 = vld [vmem:[%s0 + $0x1f8] sm:$0xff]
  %vm149 = vcmask 1040384
  %v150 = vrot.slane %v21, 7
  %v151 = vrot.slane %v22, 7
  %v152 = vsel %vm149, %v150, %v151
  %v153 = vrot.slane %v23, 7
  %v154 = vrot.slane %v24, 7
  %v155 = vsel %vm149, %v153, %v154
  %v156 = vrot.slane %v25, 7
  %v157 = vrot.slane %v26, 7
  %v158 = vsel %vm149, %v156, %v157
  %v159 = vrot.slane %v27, 7
  %v160 = vrot.slane %v28, 7
  %v161 = vsel %vm149, %v159, %v160
  %v162 = vrot.slane %v29, 7
  %v163 = vrot.slane %v30, 7
  %v164 = vsel %vm149, %v162, %v163
  %v165 = vrot.slane %v31, 7
  %v166 = vrot.slane %v32, 7
  %v167 = vsel %vm149, %v165, %v166
  %v168 = vrot.slane %v33, 7
  %v169 = vrot.slane %v34, 7
  %v170 = vsel %vm149, %v168, %v169
  %v171 = vrot.slane %v35, 7
  %v172 = vrot.slane %v36, 7
  %v173 = vsel %vm149, %v171, %v172
  %v174 = vrot.slane %v37, 7
  %v175 = vrot.slane %v38, 7
  %v176 = vsel %vm149, %v174, %v175
  %v177 = vrot.slane %v39, 7
  %v178 = vrot.slane %v40, 7
  %v179 = vsel %vm149, %v177, %v178
  %v180 = vrot.slane %v41, 7
  %v181 = vrot.slane %v42, 7
  %v182 = vsel %vm149, %v180, %v181
  %v183 = vrot.slane %v43, 7
  %v184 = vrot.slane %v44, 7
  %v185 = vsel %vm149, %v183, %v184
  %v186 = vrot.slane %v45, 7
  %v187 = vrot.slane %v46, 7
  %v188 = vsel %vm149, %v186, %v187
  %v189 = vrot.slane %v47, 7
  %v190 = vrot.slane %v48, 7
  %v191 = vsel %vm149, %v189, %v190
  %v192 = vrot.slane %v49, 7
  %v193 = vrot.slane %v50, 7
  %v194 = vsel %vm149, %v192, %v193
  %v195 = vrot.slane %v51, 7
  %v196 = vrot.slane %v52, 7
  %v197 = vsel %vm149, %v195, %v196
  %v198 = vrot.slane %v53, 7
  %v199 = vrot.slane %v54, 7
  %v200 = vsel %vm149, %v198, %v199
  %v201 = vrot.slane %v55, 7
  %v202 = vrot.slane %v56, 7
  %v203 = vsel %vm149, %v201, %v202
  %v204 = vrot.slane %v57, 7
  %v205 = vrot.slane %v58, 7
  %v206 = vsel %vm149, %v204, %v205
  %v207 = vrot.slane %v59, 7
  %v208 = vrot.slane %v60, 7
  %v209 = vsel %vm149, %v207, %v208
  %v210 = vrot.slane %v61, 7
  %v211 = vrot.slane %v62, 7
  %v212 = vsel %vm149, %v210, %v211
  %v213 = vrot.slane %v63, 7
  %v214 = vrot.slane %v64, 7
  %v215 = vsel %vm149, %v213, %v214
  %v216 = vrot.slane %v65, 7
  %v217 = vrot.slane %v66, 7
  %v218 = vsel %vm149, %v216, %v217
  %v219 = vrot.slane %v67, 7
  %v220 = vrot.slane %v68, 7
  %v221 = vsel %vm149, %v219, %v220
  %v222 = vrot.slane %v69, 7
  %v223 = vrot.slane %v70, 7
  %v224 = vsel %vm149, %v222, %v223
  %v225 = vrot.slane %v71, 7
  %v226 = vrot.slane %v72, 7
  %v227 = vsel %vm149, %v225, %v226
  %v228 = vrot.slane %v73, 7
  %v229 = vrot.slane %v74, 7
  %v230 = vsel %vm149, %v228, %v229
  %v231 = vrot.slane %v75, 7
  %v232 = vrot.slane %v76, 7
  %v233 = vsel %vm149, %v231, %v232
  %v234 = vrot.slane %v77, 7
  %v235 = vrot.slane %v78, 7
  %v236 = vsel %vm149, %v234, %v235
  %v237 = vrot.slane %v79, 7
  %v238 = vrot.slane %v80, 7
  %v239 = vsel %vm149, %v237, %v238
  %v240 = vrot.slane %v81, 7
  %v241 = vrot.slane %v82, 7
  %v242 = vsel %vm149, %v240, %v241
  %v243 = vrot.slane %v83, 7
  %v244 = vrot.slane %v84, 7
  %v245 = vsel %vm149, %v243, %v244
  %v340 = vsel %vm149, 0.0, %v150
  %v341 = vsel %vm149, 0.0, %v153
  %v342 = vsel %vm149, 0.0, %v156
  %v343 = vsel %vm149, 0.0, %v159
  %v344 = vsel %vm149, 0.0, %v162
  %v345 = vsel %vm149, 0.0, %v165
  %v346 = vsel %vm149, 0.0, %v168
  %v347 = vsel %vm149, 0.0, %v171
  %v348 = vsel %vm149, 0.0, %v174
  %v349 = vsel %vm149, 0.0, %v177
  %v350 = vsel %vm149, 0.0, %v180
  %v351 = vsel %vm149, 0.0, %v183
  %v352 = vsel %vm149, 0.0, %v186
  %v353 = vsel %vm149, 0.0, %v189
  %v354 = vsel %vm149, 0.0, %v192
  %v355 = vsel %vm149, 0.0, %v195
  %v356 = vsel %vm149, 0.0, %v198
  %v357 = vsel %vm149, 0.0, %v201
  %v358 = vsel %vm149, 0.0, %v204
  %v359 = vsel %vm149, 0.0, %v207
  %v360 = vsel %vm149, 0.0, %v210
  %v361 = vsel %vm149, 0.0, %v213
  %v362 = vsel %vm149, 0.0, %v216
  %v363 = vsel %vm149, 0.0, %v219
  %v364 = vsel %vm149, 0.0, %v222
  %v365 = vsel %vm149, 0.0, %v225
  %v366 = vsel %vm149, 0.0, %v228
  %v367 = vsel %vm149, 0.0, %v231
  %v368 = vsel %vm149, 0.0, %v234
  %v369 = vsel %vm149, 0.0, %v237
  %v370 = vsel %vm149, 0.0, %v240
  %v371 = vsel %vm149, 0.0, %v243
  %v372 = vsel %vm149, %v151, 0.0
  %v373 = vsel %vm149, %v154, 0.0
  %v374 = vsel %vm149, %v157, 0.0
  %v375 = vsel %vm149, %v160, 0.0
  %v376 = vsel %vm149, %v163, 0.0
  %v377 = vsel %vm149, %v166, 0.0
  %v378 = vsel %vm149, %v169, 0.0
  %v379 = vsel %vm149, %v172, 0.0
  %v380 = vsel %vm149, %v175, 0.0
  %v381 = vsel %vm149, %v178, 0.0
  %v382 = vsel %vm149, %v181, 0.0
  %v383 = vsel %vm149, %v184, 0.0
  %v384 = vsel %vm149, %v187, 0.0
  %v385 = vsel %vm149, %v190, 0.0
  %v386 = vsel %vm149, %v193, 0.0
  %v387 = vsel %vm149, %v196, 0.0
  %v388 = vsel %vm149, %v199, 0.0
  %v389 = vsel %vm149, %v202, 0.0
  %v390 = vsel %vm149, %v205, 0.0
  %v391 = vsel %vm149, %v208, 0.0
  %v392 = vsel %vm149, %v211, 0.0
  %v393 = vsel %vm149, %v214, 0.0
  %v394 = vsel %vm149, %v217, 0.0
  %v395 = vsel %vm149, %v220, 0.0
  %v396 = vsel %vm149, %v223, 0.0
  %v397 = vsel %vm149, %v226, 0.0
  %v398 = vsel %vm149, %v229, 0.0
  %v399 = vsel %vm149, %v232, 0.0
  %v400 = vsel %vm149, %v235, 0.0
  %v401 = vsel %vm149, %v238, 0.0
  %v402 = vsel %vm149, %v241, 0.0
  %v403 = vsel %vm149, %v244, 0.0
  %vm465 = vcmask 1046528
  %v466 = vrot.slane 0.0, 1
  %v467 = vsel %vm465, %v466, %v466
  %v468 = vrot.slane %v340, 1
  %v469 = vrot.slane %v152, 1
  %v470 = vsel %vm465, %v468, %v469
  %v471 = vrot.slane %v372, 1
  %v472 = vsel %vm465, %v469, %v471
  %v473 = vrot.slane %v341, 1
  %v474 = vrot.slane %v155, 1
  %v475 = vsel %vm465, %v473, %v474
  %v476 = vrot.slane %v373, 1
  %v477 = vsel %vm465, %v474, %v476
  %v478 = vrot.slane %v342, 1
  %v479 = vrot.slane %v158, 1
  %v480 = vsel %vm465, %v478, %v479
  %v481 = vrot.slane %v374, 1
  %v482 = vsel %vm465, %v479, %v481
  %v483 = vrot.slane %v343, 1
  %v484 = vrot.slane %v161, 1
  %v485 = vsel %vm465, %v483, %v484
  %v486 = vrot.slane %v375, 1
  %v487 = vsel %vm465, %v484, %v486
  %v488 = vrot.slane %v344, 1
  %v489 = vrot.slane %v164, 1
  %v490 = vsel %vm465, %v488, %v489
  %v491 = vrot.slane %v376, 1
  %v492 = vsel %vm465, %v489, %v491
  %v493 = vrot.slane %v345, 1
  %v494 = vrot.slane %v167, 1
  %v495 = vsel %vm465, %v493, %v494
  %v496 = vrot.slane %v377, 1
  %v497 = vsel %vm465, %v494, %v496
  %v498 = vrot.slane %v346, 1
  %v499 = vrot.slane %v170, 1
  %v500 = vsel %vm465, %v498, %v499
  %v501 = vrot.slane %v378, 1
  %v502 = vsel %vm465, %v499, %v501
  %v503 = vrot.slane %v347, 1
  %v504 = vrot.slane %v173, 1
  %v505 = vsel %vm465, %v503, %v504
  %v506 = vrot.slane %v379, 1
  %v507 = vsel %vm465, %v504, %v506
  %v508 = vrot.slane %v348, 1
  %v509 = vrot.slane %v176, 1
  %v510 = vsel %vm465, %v508, %v509
  %v511 = vrot.slane %v380, 1
  %v512 = vsel %vm465, %v509, %v511
  %v513 = vrot.slane %v349, 1
  %v514 = vrot.slane %v179, 1
  %v515 = vsel %vm465, %v513, %v514
  %v516 = vrot.slane %v381, 1
  %v517 = vsel %vm465, %v514, %v516
  %v518 = vrot.slane %v350, 1
  %v519 = vrot.slane %v182, 1
  %v520 = vsel %vm465, %v518, %v519
  %v521 = vrot.slane %v382, 1
  %v522 = vsel %vm465, %v519, %v521
  %v523 = vrot.slane %v351, 1
  %v524 = vrot.slane %v185, 1
  %v525 = vsel %vm465, %v523, %v524
  %v526 = vrot.slane %v383, 1
  %v527 = vsel %vm465, %v524, %v526
  %v528 = vrot.slane %v352, 1
  %v529 = vrot.slane %v188, 1
  %v530 = vsel %vm465, %v528, %v529
  %v531 = vrot.slane %v384, 1
  %v532 = vsel %vm465, %v529, %v531
  %v533 = vrot.slane %v353, 1
  %v534 = vrot.slane %v191, 1
  %v535 = vsel %vm465, %v533, %v534
  %v536 = vrot.slane %v385, 1
  %v537 = vsel %vm465, %v534, %v536
  %v538 = vrot.slane %v354, 1
  %v539 = vrot.slane %v194, 1
  %v540 = vsel %vm465, %v538, %v539
  %v541 = vrot.slane %v386, 1
  %v542 = vsel %vm465, %v539, %v541
  %v543 = vrot.slane %v356, 1
  %v544 = vrot.slane %v200, 1
  %v545 = vsel %vm465, %v543, %v544
  %v546 = vrot.slane %v388, 1
  %v547 = vsel %vm465, %v544, %v546
  %v548 = vrot.slane %v357, 1
  %v549 = vrot.slane %v203, 1
  %v550 = vsel %vm465, %v548, %v549
  %v551 = vrot.slane %v389, 1
  %v552 = vsel %vm465, %v549, %v551
  %v553 = vrot.slane %v358, 1
  %v554 = vrot.slane %v206, 1
  %v555 = vsel %vm465, %v553, %v554
  %v556 = vrot.slane %v390, 1
  %v557 = vsel %vm465, %v554, %v556
  %v558 = vrot.slane %v359, 1
  %v559 = vrot.slane %v209, 1
  %v560 = vsel %vm465, %v558, %v559
  %v561 = vrot.slane %v391, 1
  %v562 = vsel %vm465, %v559, %v561
  %v563 = vrot.slane %v360, 1
  %v564 = vrot.slane %v212, 1
  %v565 = vsel %vm465, %v563, %v564
  %v566 = vrot.slane %v392, 1
  %v567 = vsel %vm465, %v564, %v566
  %v568 = vrot.slane %v361, 1
  %v569 = vrot.slane %v215, 1
  %v570 = vsel %vm465, %v568, %v569
  %v571 = vrot.slane %v393, 1
  %v572 = vsel %vm465, %v569, %v571
  %v573 = vrot.slane %v362, 1
  %v574 = vrot.slane %v218, 1
  %v575 = vsel %vm465, %v573, %v574
  %v576 = vrot.slane %v394, 1
  %v577 = vsel %vm465, %v574, %v576
  %v578 = vrot.slane %v363, 1
  %v579 = vrot.slane %v221, 1
  %v580 = vsel %vm465, %v578, %v579
  %v581 = vrot.slane %v395, 1
  %v582 = vsel %vm465, %v579, %v581
  %v583 = vrot.slane %v364, 1
  %v584 = vrot.slane %v224, 1
  %v585 = vsel %vm465, %v583, %v584
  %v586 = vrot.slane %v396, 1
  %v587 = vsel %vm465, %v584, %v586
  %v588 = vrot.slane %v365, 1
  %v589 = vrot.slane %v227, 1
  %v590 = vsel %vm465, %v588, %v589
  %v591 = vrot.slane %v397, 1
  %v592 = vsel %vm465, %v589, %v591
  %v593 = vrot.slane %v366, 1
  %v594 = vrot.slane %v230, 1
  %v595 = vsel %vm465, %v593, %v594
  %v596 = vrot.slane %v398, 1
  %v597 = vsel %vm465, %v594, %v596
  %v598 = vrot.slane %v367, 1
  %v599 = vrot.slane %v233, 1
  %v600 = vsel %vm465, %v598, %v599
  %v601 = vrot.slane %v399, 1
  %v602 = vsel %vm465, %v599, %v601
  %v603 = vrot.slane %v368, 1
  %v604 = vrot.slane %v236, 1
  %v605 = vsel %vm465, %v603, %v604
  %v606 = vrot.slane %v400, 1
  %v607 = vsel %vm465, %v604, %v606
  %v608 = vrot.slane %v369, 1
  %v609 = vrot.slane %v239, 1
  %v610 = vsel %vm465, %v608, %v609
  %v611 = vrot.slane %v401, 1
  %v612 = vsel %vm465, %v609, %v611
  %v613 = vrot.slane %v370, 1
  %v614 = vrot.slane %v242, 1
  %v615 = vsel %vm465, %v613, %v614
  %v616 = vrot.slane %v402, 1
  %v617 = vsel %vm465, %v614, %v616
  %vm618 = vcmask 1045504
  %v619 = vrot.slane 0.0, 2
  %v620 = vsel %vm618, %v619, %v619
  %v621 = vrot.slane %v340, 2
  %v622 = vrot.slane %v152, 2
  %v623 = vsel %vm618, %v621, %v622
  %v624 = vrot.slane %v372, 2
  %v625 = vsel %vm618, %v622, %v624
  %v626 = vrot.slane %v341, 2
  %v627 = vrot.slane %v155, 2
  %v628 = vsel %vm618, %v626, %v627
  %v629 = vrot.slane %v373, 2
  %v630 = vsel %vm618, %v627, %v629
  %v631 = vrot.slane %v342, 2
  %v632 = vrot.slane %v158, 2
  %v633 = vsel %vm618, %v631, %v632
  %v634 = vrot.slane %v374, 2
  %v635 = vsel %vm618, %v632, %v634
  %v636 = vrot.slane %v343, 2
  %v637 = vrot.slane %v161, 2
  %v638 = vsel %vm618, %v636, %v637
  %v639 = vrot.slane %v375, 2
  %v640 = vsel %vm618, %v637, %v639
  %v641 = vrot.slane %v344, 2
  %v642 = vrot.slane %v164, 2
  %v643 = vsel %vm618, %v641, %v642
  %v644 = vrot.slane %v376, 2
  %v645 = vsel %vm618, %v642, %v644
  %v646 = vrot.slane %v345, 2
  %v647 = vrot.slane %v167, 2
  %v648 = vsel %vm618, %v646, %v647
  %v649 = vrot.slane %v377, 2
  %v650 = vsel %vm618, %v647, %v649
  %v651 = vrot.slane %v346, 2
  %v652 = vrot.slane %v170, 2
  %v653 = vsel %vm618, %v651, %v652
  %v654 = vrot.slane %v378, 2
  %v655 = vsel %vm618, %v652, %v654
  %v656 = vrot.slane %v347, 2
  %v657 = vrot.slane %v173, 2
  %v658 = vsel %vm618, %v656, %v657
  %v659 = vrot.slane %v379, 2
  %v660 = vsel %vm618, %v657, %v659
  %v661 = vrot.slane %v348, 2
  %v662 = vrot.slane %v176, 2
  %v663 = vsel %vm618, %v661, %v662
  %v664 = vrot.slane %v380, 2
  %v665 = vsel %vm618, %v662, %v664
  %v666 = vrot.slane %v349, 2
  %v667 = vrot.slane %v179, 2
  %v668 = vsel %vm618, %v666, %v667
  %v669 = vrot.slane %v381, 2
  %v670 = vsel %vm618, %v667, %v669
  %v671 = vrot.slane %v350, 2
  %v672 = vrot.slane %v182, 2
  %v673 = vsel %vm618, %v671, %v672
  %v674 = vrot.slane %v382, 2
  %v675 = vsel %vm618, %v672, %v674
  %v676 = vrot.slane %v351, 2
  %v677 = vrot.slane %v185, 2
  %v678 = vsel %vm618, %v676, %v677
  %v679 = vrot.slane %v383, 2
  %v680 = vsel %vm618, %v677, %v679
  %v681 = vrot.slane %v352, 2
  %v682 = vrot.slane %v188, 2
  %v683 = vsel %vm618, %v681, %v682
  %v684 = vrot.slane %v384, 2
  %v685 = vsel %vm618, %v682, %v684
  %v686 = vrot.slane %v353, 2
  %v687 = vrot.slane %v191, 2
  %v688 = vsel %vm618, %v686, %v687
  %v689 = vrot.slane %v385, 2
  %v690 = vsel %vm618, %v687, %v689
  %v691 = vrot.slane %v354, 2
  %v692 = vrot.slane %v194, 2
  %v693 = vsel %vm618, %v691, %v692
  %v694 = vrot.slane %v386, 2
  %v695 = vsel %vm618, %v692, %v694
  %v696 = vrot.slane %v356, 2
  %v697 = vrot.slane %v200, 2
  %v698 = vsel %vm618, %v696, %v697
  %v699 = vrot.slane %v388, 2
  %v700 = vsel %vm618, %v697, %v699
  %v701 = vrot.slane %v357, 2
  %v702 = vrot.slane %v203, 2
  %v703 = vsel %vm618, %v701, %v702
  %v704 = vrot.slane %v389, 2
  %v705 = vsel %vm618, %v702, %v704
  %v706 = vrot.slane %v358, 2
  %v707 = vrot.slane %v206, 2
  %v708 = vsel %vm618, %v706, %v707
  %v709 = vrot.slane %v390, 2
  %v710 = vsel %vm618, %v707, %v709
  %v711 = vrot.slane %v359, 2
  %v712 = vrot.slane %v209, 2
  %v713 = vsel %vm618, %v711, %v712
  %v714 = vrot.slane %v391, 2
  %v715 = vsel %vm618, %v712, %v714
  %v716 = vrot.slane %v360, 2
  %v717 = vrot.slane %v212, 2
  %v718 = vsel %vm618, %v716, %v717
  %v719 = vrot.slane %v392, 2
  %v720 = vsel %vm618, %v717, %v719
  %v721 = vrot.slane %v361, 2
  %v722 = vrot.slane %v215, 2
  %v723 = vsel %vm618, %v721, %v722
  %v724 = vrot.slane %v393, 2
  %v725 = vsel %vm618, %v722, %v724
  %v726 = vrot.slane %v362, 2
  %v727 = vrot.slane %v218, 2
  %v728 = vsel %vm618, %v726, %v727
  %v729 = vrot.slane %v394, 2
  %v730 = vsel %vm618, %v727, %v729
  %v731 = vrot.slane %v363, 2
  %v732 = vrot.slane %v221, 2
  %v733 = vsel %vm618, %v731, %v732
  %v734 = vrot.slane %v395, 2
  %v735 = vsel %vm618, %v732, %v734
  %v736 = vrot.slane %v364, 2
  %v737 = vrot.slane %v224, 2
  %v738 = vsel %vm618, %v736, %v737
  %v739 = vrot.slane %v396, 2
  %v740 = vsel %vm618, %v737, %v739
  %v741 = vrot.slane %v365, 2
  %v742 = vrot.slane %v227, 2
  %v743 = vsel %vm618, %v741, %v742
  %v744 = vrot.slane %v397, 2
  %v745 = vsel %vm618, %v742, %v744
  %v746 = vrot.slane %v366, 2
  %v747 = vrot.slane %v230, 2
  %v748 = vsel %vm618, %v746, %v747
  %v749 = vrot.slane %v398, 2
  %v750 = vsel %vm618, %v747, %v749
  %v751 = vrot.slane %v367, 2
  %v752 = vrot.slane %v233, 2
  %v753 = vsel %vm618, %v751, %v752
  %v754 = vrot.slane %v399, 2
  %v755 = vsel %vm618, %v752, %v754
  %v756 = vrot.slane %v368, 2
  %v757 = vrot.slane %v236, 2
  %v758 = vsel %vm618, %v756, %v757
  %v759 = vrot.slane %v400, 2
  %v760 = vsel %vm618, %v757, %v759
  %v761 = vrot.slane %v369, 2
  %v762 = vrot.slane %v239, 2
  %v763 = vsel %vm618, %v761, %v762
  %v764 = vrot.slane %v401, 2
  %v765 = vsel %vm618, %v762, %v764
  %v766 = vrot.slane %v370, 2
  %v767 = vrot.slane %v242, 2
  %v768 = vsel %vm618, %v766, %v767
  %v769 = vrot.slane %v402, 2
  %v770 = vsel %vm618, %v767, %v769
  %v775 = vrot.slane %v355, 1
  %v776 = vrot.slane %v197, 1
  %v777 = vsel %vm465, %v775, %v776
  %v778 = vrot.slane %v387, 1
  %v779 = vsel %vm465, %v776, %v778
  %v780 = vrot.slane %v371, 1
  %v781 = vrot.slane %v245, 1
  %v782 = vsel %vm465, %v780, %v781
  %v783 = vrot.slane %v403, 1
  %v784 = vsel %vm465, %v781, %v783
  %v849 = vrot.slane %v355, 2
  %v850 = vrot.slane %v197, 2
  %v851 = vsel %vm618, %v849, %v850
  %v852 = vrot.slane %v387, 2
  %v853 = vsel %vm618, %v850, %v852
  %v854 = vrot.slane %v371, 2
  %v855 = vrot.slane %v245, 2
  %v856 = vsel %vm618, %v854, %v855
  %v857 = vrot.slane %v403, 2
  %v858 = vsel %vm618, %v855, %v857
  %920 = vrot.lane.b32.xlu0 %v467, 32
  %v921 = vpop.permute.xlu0 %920
  %922 = vrot.lane.b32.xlu0 %v470, 32
  %v923 = vpop.permute.xlu0 %922
  %924 = vrot.lane.b32.xlu0 %v472, 32
  %v925 = vpop.permute.xlu0 %924
  %926 = vrot.lane.b32.xlu0 %v475, 32
  %v927 = vpop.permute.xlu0 %926
  %928 = vrot.lane.b32.xlu0 %v477, 32
  %v929 = vpop.permute.xlu0 %928
  %930 = vrot.lane.b32.xlu0 %v480, 32
  %v931 = vpop.permute.xlu0 %930
  %932 = vrot.lane.b32.xlu0 %v482, 32
  %v933 = vpop.permute.xlu0 %932
  %934 = vrot.lane.b32.xlu0 %v485, 32
  %v935 = vpop.permute.xlu0 %934
  %936 = vrot.lane.b32.xlu0 %v487, 32
  %v937 = vpop.permute.xlu0 %936
  %938 = vrot.lane.b32.xlu0 %v490, 32
  %v939 = vpop.permute.xlu0 %938
  %940 = vrot.lane.b32.xlu0 %v492, 32
  %v941 = vpop.permute.xlu0 %940
  %942 = vrot.lane.b32.xlu0 %v495, 32
  %v943 = vpop.permute.xlu0 %942
  %944 = vrot.lane.b32.xlu0 %v497, 32
  %v945 = vpop.permute.xlu0 %944
  %946 = vrot.lane.b32.xlu0 %v500, 32
  %v947 = vpop.permute.xlu0 %946
  %948 = vrot.lane.b32.xlu0 %v502, 32
  %v949 = vpop.permute.xlu0 %948
  %950 = vrot.lane.b32.xlu0 %v505, 32
  %v951 = vpop.permute.xlu0 %950
  %952 = vrot.lane.b32.xlu0 %v507, 32
  %v953 = vpop.permute.xlu0 %952
  %954 = vrot.lane.b32.xlu0 %v510, 32
  %v955 = vpop.permute.xlu0 %954
  %956 = vrot.lane.b32.xlu0 %v512, 32
  %v957 = vpop.permute.xlu0 %956
  %958 = vrot.lane.b32.xlu0 %v515, 32
  %v959 = vpop.permute.xlu0 %958
  %960 = vrot.lane.b32.xlu0 %v517, 32
  %v961 = vpop.permute.xlu0 %960
  %962 = vrot.lane.b32.xlu0 %v520, 32
  %v963 = vpop.permute.xlu0 %962
  %964 = vrot.lane.b32.xlu0 %v522, 32
  %v965 = vpop.permute.xlu0 %964
  %966 = vrot.lane.b32.xlu0 %v525, 32
  %v967 = vpop.permute.xlu0 %966
  %968 = vrot.lane.b32.xlu0 %v527, 32
  %v969 = vpop.permute.xlu0 %968
  %970 = vrot.lane.b32.xlu0 %v530, 32
  %v971 = vpop.permute.xlu0 %970
  %972 = vrot.lane.b32.xlu0 %v532, 32
  %v973 = vpop.permute.xlu0 %972
  %974 = vrot.lane.b32.xlu0 %v535, 32
  %v975 = vpop.permute.xlu0 %974
  %976 = vrot.lane.b32.xlu0 %v537, 32
  %v977 = vpop.permute.xlu0 %976
  %978 = vrot.lane.b32.xlu0 %v540, 32
  %v979 = vpop.permute.xlu0 %978
  %980 = vrot.lane.b32.xlu0 %v542, 32
  %v981 = vpop.permute.xlu0 %980
  %982 = vrot.lane.b32.xlu0 %v545, 32
  %v983 = vpop.permute.xlu0 %982
  %984 = vrot.lane.b32.xlu0 %v547, 32
  %v985 = vpop.permute.xlu0 %984
  %986 = vrot.lane.b32.xlu0 %v550, 32
  %v987 = vpop.permute.xlu0 %986
  %988 = vrot.lane.b32.xlu0 %v552, 32
  %v989 = vpop.permute.xlu0 %988
  %990 = vrot.lane.b32.xlu0 %v555, 32
  %v991 = vpop.permute.xlu0 %990
  %992 = vrot.lane.b32.xlu0 %v557, 32
  %v993 = vpop.permute.xlu0 %992
  %994 = vrot.lane.b32.xlu0 %v560, 32
  %v995 = vpop.permute.xlu0 %994
  %996 = vrot.lane.b32.xlu0 %v562, 32
  %v997 = vpop.permute.xlu0 %996
  %998 = vrot.lane.b32.xlu0 %v565, 32
  %v999 = vpop.permute.xlu0 %998
  %1000 = vrot.lane.b32.xlu0 %v567, 32
  %v1001 = vpop.permute.xlu0 %1000
  %1002 = vrot.lane.b32.xlu0 %v570, 32
  %v1003 = vpop.permute.xlu0 %1002
  %1004 = vrot.lane.b32.xlu0 %v572, 32
  %v1005 = vpop.permute.xlu0 %1004
  %1006 = vrot.lane.b32.xlu0 %v575, 32
  %v1007 = vpop.permute.xlu0 %1006
  %1008 = vrot.lane.b32.xlu0 %v577, 32
  %v1009 = vpop.permute.xlu0 %1008
  %1010 = vrot.lane.b32.xlu0 %v580, 32
  %v1011 = vpop.permute.xlu0 %1010
  %1012 = vrot.lane.b32.xlu0 %v582, 32
  %v1013 = vpop.permute.xlu0 %1012
  %1014 = vrot.lane.b32.xlu0 %v585, 32
  %v1015 = vpop.permute.xlu0 %1014
  %1016 = vrot.lane.b32.xlu0 %v587, 32
  %v1017 = vpop.permute.xlu0 %1016
  %1018 = vrot.lane.b32.xlu0 %v590, 32
  %v1019 = vpop.permute.xlu0 %1018
  %1020 = vrot.lane.b32.xlu0 %v592, 32
  %v1021 = vpop.permute.xlu0 %1020
  %1022 = vrot.lane.b32.xlu0 %v595, 32
  %v1023 = vpop.permute.xlu0 %1022
  %1024 = vrot.lane.b32.xlu0 %v597, 32
  %v1025 = vpop.permute.xlu0 %1024
  %1026 = vrot.lane.b32.xlu0 %v600, 32
  %v1027 = vpop.permute.xlu0 %1026
  %1028 = vrot.lane.b32.xlu0 %v602, 32
  %v1029 = vpop.permute.xlu0 %1028
  %1030 = vrot.lane.b32.xlu0 %v605, 32
  %v1031 = vpop.permute.xlu0 %1030
  %1032 = vrot.lane.b32.xlu0 %v607, 32
  %v1033 = vpop.permute.xlu0 %1032
  %1034 = vrot.lane.b32.xlu0 %v610, 32
  %v1035 = vpop.permute.xlu0 %1034
  %1036 = vrot.lane.b32.xlu0 %v612, 32
  %v1037 = vpop.permute.xlu0 %1036
  %1038 = vrot.lane.b32.xlu0 %v615, 32
  %v1039 = vpop.permute.xlu0 %1038
  %1040 = vrot.lane.b32.xlu0 %v617, 32
  %v1041 = vpop.permute.xlu0 %1040
  %1103 = vrot.lane.b32.xlu0 %v620, 64
  %v1104 = vpop.permute.xlu0 %1103
  %1105 = vrot.lane.b32.xlu0 %v623, 64
  %v1106 = vpop.permute.xlu0 %1105
  %1107 = vrot.lane.b32.xlu0 %v625, 64
  %v1108 = vpop.permute.xlu0 %1107
  %1109 = vrot.lane.b32.xlu0 %v628, 64
  %v1110 = vpop.permute.xlu0 %1109
  %1111 = vrot.lane.b32.xlu0 %v630, 64
  %v1112 = vpop.permute.xlu0 %1111
  %1113 = vrot.lane.b32.xlu0 %v633, 64
  %v1114 = vpop.permute.xlu0 %1113
  %1115 = vrot.lane.b32.xlu0 %v635, 64
  %v1116 = vpop.permute.xlu0 %1115
  %1117 = vrot.lane.b32.xlu0 %v638, 64
  %v1118 = vpop.permute.xlu0 %1117
  %1119 = vrot.lane.b32.xlu0 %v640, 64
  %v1120 = vpop.permute.xlu0 %1119
  %1121 = vrot.lane.b32.xlu0 %v643, 64
  %v1122 = vpop.permute.xlu0 %1121
  %1123 = vrot.lane.b32.xlu0 %v645, 64
  %v1124 = vpop.permute.xlu0 %1123
  %1125 = vrot.lane.b32.xlu0 %v648, 64
  %v1126 = vpop.permute.xlu0 %1125
  %1127 = vrot.lane.b32.xlu0 %v650, 64
  %v1128 = vpop.permute.xlu0 %1127
  %1129 = vrot.lane.b32.xlu0 %v653, 64
  %v1130 = vpop.permute.xlu0 %1129
  %1131 = vrot.lane.b32.xlu0 %v655, 64
  %v1132 = vpop.permute.xlu0 %1131
  %1133 = vrot.lane.b32.xlu0 %v658, 64
  %v1134 = vpop.permute.xlu0 %1133
  %1135 = vrot.lane.b32.xlu0 %v660, 64
  %v1136 = vpop.permute.xlu0 %1135
  %1137 = vrot.lane.b32.xlu0 %v663, 64
  %v1138 = vpop.permute.xlu0 %1137
  %1139 = vrot.lane.b32.xlu0 %v665, 64
  %v1140 = vpop.permute.xlu0 %1139
  %1141 = vrot.lane.b32.xlu0 %v668, 64
  %v1142 = vpop.permute.xlu0 %1141
  %1143 = vrot.lane.b32.xlu0 %v670, 64
  %v1144 = vpop.permute.xlu0 %1143
  %1145 = vrot.lane.b32.xlu0 %v673, 64
  %v1146 = vpop.permute.xlu0 %1145
  %1147 = vrot.lane.b32.xlu0 %v675, 64
  %v1148 = vpop.permute.xlu0 %1147
  %1149 = vrot.lane.b32.xlu0 %v678, 64
  %v1150 = vpop.permute.xlu0 %1149
  %1151 = vrot.lane.b32.xlu0 %v680, 64
  %v1152 = vpop.permute.xlu0 %1151
  %1153 = vrot.lane.b32.xlu0 %v683, 64
  %v1154 = vpop.permute.xlu0 %1153
  %1155 = vrot.lane.b32.xlu0 %v685, 64
  %v1156 = vpop.permute.xlu0 %1155
  %1157 = vrot.lane.b32.xlu0 %v688, 64
  %v1158 = vpop.permute.xlu0 %1157
  %1159 = vrot.lane.b32.xlu0 %v690, 64
  %v1160 = vpop.permute.xlu0 %1159
  %1161 = vrot.lane.b32.xlu0 %v693, 64
  %v1162 = vpop.permute.xlu0 %1161
  %1163 = vrot.lane.b32.xlu0 %v695, 64
  %v1164 = vpop.permute.xlu0 %1163
  %1165 = vrot.lane.b32.xlu0 %v698, 64
  %v1166 = vpop.permute.xlu0 %1165
  %1167 = vrot.lane.b32.xlu0 %v700, 64
  %v1168 = vpop.permute.xlu0 %1167
  %1169 = vrot.lane.b32.xlu0 %v703, 64
  %v1170 = vpop.permute.xlu0 %1169
  %1171 = vrot.lane.b32.xlu0 %v705, 64
  %v1172 = vpop.permute.xlu0 %1171
  %1173 = vrot.lane.b32.xlu0 %v708, 64
  %v1174 = vpop.permute.xlu0 %1173
  %1175 = vrot.lane.b32.xlu0 %v710, 64
  %v1176 = vpop.permute.xlu0 %1175
  %1177 = vrot.lane.b32.xlu0 %v713, 64
  %v1178 = vpop.permute.xlu0 %1177
  %1179 = vrot.lane.b32.xlu0 %v715, 64
  %v1180 = vpop.permute.xlu0 %1179
  %1181 = vrot.lane.b32.xlu0 %v718, 64
  %v1182 = vpop.permute.xlu0 %1181
  %1183 = vrot.lane.b32.xlu0 %v720, 64
  %v1184 = vpop.permute.xlu0 %1183
  %1185 = vrot.lane.b32.xlu0 %v723, 64
  %v1186 = vpop.permute.xlu0 %1185
  %1187 = vrot.lane.b32.xlu0 %v725, 64
  %v1188 = vpop.permute.xlu0 %1187
  %1189 = vrot.lane.b32.xlu0 %v728, 64
  %v1190 = vpop.permute.xlu0 %1189
  %1191 = vrot.lane.b32.xlu0 %v730, 64
  %v1192 = vpop.permute.xlu0 %1191
  %1193 = vrot.lane.b32.xlu0 %v733, 64
  %v1194 = vpop.permute.xlu0 %1193
  %1195 = vrot.lane.b32.xlu0 %v735, 64
  %v1196 = vpop.permute.xlu0 %1195
  %1197 = vrot.lane.b32.xlu0 %v738, 64
  %v1198 = vpop.permute.xlu0 %1197
  %1199 = vrot.lane.b32.xlu0 %v740, 64
  %v1200 = vpop.permute.xlu0 %1199
  %1201 = vrot.lane.b32.xlu0 %v743, 64
  %v1202 = vpop.permute.xlu0 %1201
  %1203 = vrot.lane.b32.xlu0 %v745, 64
  %v1204 = vpop.permute.xlu0 %1203
  %1205 = vrot.lane.b32.xlu0 %v748, 64
  %v1206 = vpop.permute.xlu0 %1205
  %1207 = vrot.lane.b32.xlu0 %v750, 64
  %v1208 = vpop.permute.xlu0 %1207
  %1209 = vrot.lane.b32.xlu0 %v753, 64
  %v1210 = vpop.permute.xlu0 %1209
  %1211 = vrot.lane.b32.xlu0 %v755, 64
  %v1212 = vpop.permute.xlu0 %1211
  %1213 = vrot.lane.b32.xlu0 %v758, 64
  %v1214 = vpop.permute.xlu0 %1213
  %1215 = vrot.lane.b32.xlu0 %v760, 64
  %v1216 = vpop.permute.xlu0 %1215
  %1217 = vrot.lane.b32.xlu0 %v763, 64
  %v1218 = vpop.permute.xlu0 %1217
  %1219 = vrot.lane.b32.xlu0 %v765, 64
  %v1220 = vpop.permute.xlu0 %1219
  %1221 = vrot.lane.b32.xlu0 %v768, 64
  %v1222 = vpop.permute.xlu0 %1221
  %1223 = vrot.lane.b32.xlu0 %v770, 64
  %v1224 = vpop.permute.xlu0 %1223
  %1286 = vrot.lane.b32.xlu0 %v340, 96
  %v1287 = vpop.permute.xlu0 %1286
  %1288 = vrot.lane.b32.xlu0 %v152, 96
  %v1289 = vpop.permute.xlu0 %1288
  %1290 = vrot.lane.b32.xlu0 %v341, 96
  %v1291 = vpop.permute.xlu0 %1290
  %1292 = vrot.lane.b32.xlu0 %v155, 96
  %v1293 = vpop.permute.xlu0 %1292
  %1294 = vrot.lane.b32.xlu0 %v342, 96
  %v1295 = vpop.permute.xlu0 %1294
  %1296 = vrot.lane.b32.xlu0 %v158, 96
  %v1297 = vpop.permute.xlu0 %1296
  %1298 = vrot.lane.b32.xlu0 %v343, 96
  %v1299 = vpop.permute.xlu0 %1298
  %1300 = vrot.lane.b32.xlu0 %v161, 96
  %v1301 = vpop.permute.xlu0 %1300
  %1302 = vrot.lane.b32.xlu0 %v344, 96
  %v1303 = vpop.permute.xlu0 %1302
  %1304 = vrot.lane.b32.xlu0 %v164, 96
  %v1305 = vpop.permute.xlu0 %1304
  %1306 = vrot.lane.b32.xlu0 %v345, 96
  %v1307 = vpop.permute.xlu0 %1306
  %1308 = vrot.lane.b32.xlu0 %v167, 96
  %v1309 = vpop.permute.xlu0 %1308
  %1310 = vrot.lane.b32.xlu0 %v346, 96
  %v1311 = vpop.permute.xlu0 %1310
  %1312 = vrot.lane.b32.xlu0 %v170, 96
  %v1313 = vpop.permute.xlu0 %1312
  %1314 = vrot.lane.b32.xlu0 %v347, 96
  %v1315 = vpop.permute.xlu0 %1314
  %1316 = vrot.lane.b32.xlu0 %v173, 96
  %v1317 = vpop.permute.xlu0 %1316
  %1318 = vrot.lane.b32.xlu0 %v348, 96
  %v1319 = vpop.permute.xlu0 %1318
  %1320 = vrot.lane.b32.xlu0 %v176, 96
  %v1321 = vpop.permute.xlu0 %1320
  %1322 = vrot.lane.b32.xlu0 %v349, 96
  %v1323 = vpop.permute.xlu0 %1322
  %1324 = vrot.lane.b32.xlu0 %v179, 96
  %v1325 = vpop.permute.xlu0 %1324
  %1326 = vrot.lane.b32.xlu0 %v350, 96
  %v1327 = vpop.permute.xlu0 %1326
  %1328 = vrot.lane.b32.xlu0 %v182, 96
  %v1329 = vpop.permute.xlu0 %1328
  %1330 = vrot.lane.b32.xlu0 %v351, 96
  %v1331 = vpop.permute.xlu0 %1330
  %1332 = vrot.lane.b32.xlu0 %v185, 96
  %v1333 = vpop.permute.xlu0 %1332
  %1334 = vrot.lane.b32.xlu0 %v352, 96
  %v1335 = vpop.permute.xlu0 %1334
  %1336 = vrot.lane.b32.xlu0 %v188, 96
  %v1337 = vpop.permute.xlu0 %1336
  %1338 = vrot.lane.b32.xlu0 %v353, 96
  %v1339 = vpop.permute.xlu0 %1338
  %1340 = vrot.lane.b32.xlu0 %v191, 96
  %v1341 = vpop.permute.xlu0 %1340
  %1342 = vrot.lane.b32.xlu0 %v354, 96
  %v1343 = vpop.permute.xlu0 %1342
  %1344 = vrot.lane.b32.xlu0 %v194, 96
  %v1345 = vpop.permute.xlu0 %1344
  %1346 = vrot.lane.b32.xlu0 %v355, 96
  %v1347 = vpop.permute.xlu0 %1346
  %1348 = vrot.lane.b32.xlu0 %v197, 96
  %v1349 = vpop.permute.xlu0 %1348
  %1350 = vrot.lane.b32.xlu0 %v356, 96
  %v1351 = vpop.permute.xlu0 %1350
  %1352 = vrot.lane.b32.xlu0 %v200, 96
  %v1353 = vpop.permute.xlu0 %1352
  %1354 = vrot.lane.b32.xlu0 %v357, 96
  %v1355 = vpop.permute.xlu0 %1354
  %1356 = vrot.lane.b32.xlu0 %v203, 96
  %v1357 = vpop.permute.xlu0 %1356
  %1358 = vrot.lane.b32.xlu0 %v358, 96
  %v1359 = vpop.permute.xlu0 %1358
  %1360 = vrot.lane.b32.xlu0 %v206, 96
  %v1361 = vpop.permute.xlu0 %1360
  %1362 = vrot.lane.b32.xlu0 %v359, 96
  %v1363 = vpop.permute.xlu0 %1362
  %1364 = vrot.lane.b32.xlu0 %v209, 96
  %v1365 = vpop.permute.xlu0 %1364
  %1366 = vrot.lane.b32.xlu0 %v360, 96
  %v1367 = vpop.permute.xlu0 %1366
  %1368 = vrot.lane.b32.xlu0 %v212, 96
  %v1369 = vpop.permute.xlu0 %1368
  %1370 = vrot.lane.b32.xlu0 %v361, 96
  %v1371 = vpop.permute.xlu0 %1370
  %1372 = vrot.lane.b32.xlu0 %v215, 96
  %v1373 = vpop.permute.xlu0 %1372
  %1374 = vrot.lane.b32.xlu0 %v362, 96
  %v1375 = vpop.permute.xlu0 %1374
  %1376 = vrot.lane.b32.xlu0 %v218, 96
  %v1377 = vpop.permute.xlu0 %1376
  %1378 = vrot.lane.b32.xlu0 %v363, 96
  %v1379 = vpop.permute.xlu0 %1378
  %1380 = vrot.lane.b32.xlu0 %v221, 96
  %v1381 = vpop.permute.xlu0 %1380
  %1382 = vrot.lane.b32.xlu0 %v364, 96
  %v1383 = vpop.permute.xlu0 %1382
  %1384 = vrot.lane.b32.xlu0 %v224, 96
  %v1385 = vpop.permute.xlu0 %1384
  %1386 = vrot.lane.b32.xlu0 %v365, 96
  %v1387 = vpop.permute.xlu0 %1386
  %1388 = vrot.lane.b32.xlu0 %v227, 96
  %v1389 = vpop.permute.xlu0 %1388
  %1390 = vrot.lane.b32.xlu0 %v366, 96
  %v1391 = vpop.permute.xlu0 %1390
  %1392 = vrot.lane.b32.xlu0 %v230, 96
  %v1393 = vpop.permute.xlu0 %1392
  %1394 = vrot.lane.b32.xlu0 %v367, 96
  %v1395 = vpop.permute.xlu0 %1394
  %1396 = vrot.lane.b32.xlu0 %v233, 96
  %v1397 = vpop.permute.xlu0 %1396
  %1398 = vrot.lane.b32.xlu0 %v368, 96
  %v1399 = vpop.permute.xlu0 %1398
  %1400 = vrot.lane.b32.xlu0 %v236, 96
  %v1401 = vpop.permute.xlu0 %1400
  %1402 = vrot.lane.b32.xlu0 %v369, 96
  %v1403 = vpop.permute.xlu0 %1402
  %1404 = vrot.lane.b32.xlu0 %v239, 96
  %v1405 = vpop.permute.xlu0 %1404
  %1406 = vrot.lane.b32.xlu0 %v370, 96
  %v1407 = vpop.permute.xlu0 %1406
  %1408 = vrot.lane.b32.xlu0 %v242, 96
  %v1409 = vpop.permute.xlu0 %1408
  %1410 = vrot.lane.b32.xlu0 %v371, 96
  %v1411 = vpop.permute.xlu0 %1410
  %1412 = vrot.lane.b32.xlu0 %v245, 96
  %v1413 = vpop.permute.xlu0 %1412
  %1478 = vrot.lane.b32.xlu0 %v623, 32
  %v1479 = vpop.permute.xlu0 %1478
  %1480 = vrot.lane.b32.xlu0 %v625, 32
  %v1481 = vpop.permute.xlu0 %1480
  %1482 = vrot.lane.b32.xlu0 %v628, 32
  %v1483 = vpop.permute.xlu0 %1482
  %1484 = vrot.lane.b32.xlu0 %v630, 32
  %v1485 = vpop.permute.xlu0 %1484
  %1486 = vrot.lane.b32.xlu0 %v633, 32
  %v1487 = vpop.permute.xlu0 %1486
  %1488 = vrot.lane.b32.xlu0 %v635, 32
  %v1489 = vpop.permute.xlu0 %1488
  %1490 = vrot.lane.b32.xlu0 %v638, 32
  %v1491 = vpop.permute.xlu0 %1490
  %1492 = vrot.lane.b32.xlu0 %v640, 32
  %v1493 = vpop.permute.xlu0 %1492
  %1494 = vrot.lane.b32.xlu0 %v643, 32
  %v1495 = vpop.permute.xlu0 %1494
  %1496 = vrot.lane.b32.xlu0 %v645, 32
  %v1497 = vpop.permute.xlu0 %1496
  %1498 = vrot.lane.b32.xlu0 %v648, 32
  %v1499 = vpop.permute.xlu0 %1498
  %1500 = vrot.lane.b32.xlu0 %v650, 32
  %v1501 = vpop.permute.xlu0 %1500
  %1502 = vrot.lane.b32.xlu0 %v653, 32
  %v1503 = vpop.permute.xlu0 %1502
  %1504 = vrot.lane.b32.xlu0 %v655, 32
  %v1505 = vpop.permute.xlu0 %1504
  %1506 = vrot.lane.b32.xlu0 %v658, 32
  %v1507 = vpop.permute.xlu0 %1506
  %1508 = vrot.lane.b32.xlu0 %v660, 32
  %v1509 = vpop.permute.xlu0 %1508
  %1510 = vrot.lane.b32.xlu0 %v663, 32
  %v1511 = vpop.permute.xlu0 %1510
  %1512 = vrot.lane.b32.xlu0 %v665, 32
  %v1513 = vpop.permute.xlu0 %1512
  %1514 = vrot.lane.b32.xlu0 %v668, 32
  %v1515 = vpop.permute.xlu0 %1514
  %1516 = vrot.lane.b32.xlu0 %v670, 32
  %v1517 = vpop.permute.xlu0 %1516
  %1518 = vrot.lane.b32.xlu0 %v673, 32
  %v1519 = vpop.permute.xlu0 %1518
  %1520 = vrot.lane.b32.xlu0 %v675, 32
  %v1521 = vpop.permute.xlu0 %1520
  %1522 = vrot.lane.b32.xlu0 %v678, 32
  %v1523 = vpop.permute.xlu0 %1522
  %1524 = vrot.lane.b32.xlu0 %v680, 32
  %v1525 = vpop.permute.xlu0 %1524
  %1526 = vrot.lane.b32.xlu0 %v683, 32
  %v1527 = vpop.permute.xlu0 %1526
  %1528 = vrot.lane.b32.xlu0 %v685, 32
  %v1529 = vpop.permute.xlu0 %1528
  %1530 = vrot.lane.b32.xlu0 %v688, 32
  %v1531 = vpop.permute.xlu0 %1530
  %1532 = vrot.lane.b32.xlu0 %v690, 32
  %v1533 = vpop.permute.xlu0 %1532
  %1534 = vrot.lane.b32.xlu0 %v693, 32
  %v1535 = vpop.permute.xlu0 %1534
  %1536 = vrot.lane.b32.xlu0 %v695, 32
  %v1537 = vpop.permute.xlu0 %1536
  %1538 = vrot.lane.b32.xlu0 %v851, 32
  %v1539 = vpop.permute.xlu0 %1538
  %1540 = vrot.lane.b32.xlu0 %v853, 32
  %v1541 = vpop.permute.xlu0 %1540
  %1542 = vrot.lane.b32.xlu0 %v698, 32
  %v1543 = vpop.permute.xlu0 %1542
  %1544 = vrot.lane.b32.xlu0 %v700, 32
  %v1545 = vpop.permute.xlu0 %1544
  %1546 = vrot.lane.b32.xlu0 %v703, 32
  %v1547 = vpop.permute.xlu0 %1546
  %1548 = vrot.lane.b32.xlu0 %v705, 32
  %v1549 = vpop.permute.xlu0 %1548
  %1550 = vrot.lane.b32.xlu0 %v708, 32
  %v1551 = vpop.permute.xlu0 %1550
  %1552 = vrot.lane.b32.xlu0 %v710, 32
  %v1553 = vpop.permute.xlu0 %1552
  %1554 = vrot.lane.b32.xlu0 %v713, 32
  %v1555 = vpop.permute.xlu0 %1554
  %1556 = vrot.lane.b32.xlu0 %v715, 32
  %v1557 = vpop.permute.xlu0 %1556
  %1558 = vrot.lane.b32.xlu0 %v718, 32
  %v1559 = vpop.permute.xlu0 %1558
  %1560 = vrot.lane.b32.xlu0 %v720, 32
  %v1561 = vpop.permute.xlu0 %1560
  %1562 = vrot.lane.b32.xlu0 %v723, 32
  %v1563 = vpop.permute.xlu0 %1562
  %1564 = vrot.lane.b32.xlu0 %v725, 32
  %v1565 = vpop.permute.xlu0 %1564
  %1566 = vrot.lane.b32.xlu0 %v728, 32
  %v1567 = vpop.permute.xlu0 %1566
  %1568 = vrot.lane.b32.xlu0 %v730, 32
  %v1569 = vpop.permute.xlu0 %1568
  %1570 = vrot.lane.b32.xlu0 %v733, 32
  %v1571 = vpop.permute.xlu0 %1570
  %1572 = vrot.lane.b32.xlu0 %v735, 32
  %v1573 = vpop.permute.xlu0 %1572
  %1574 = vrot.lane.b32.xlu0 %v738, 32
  %v1575 = vpop.permute.xlu0 %1574
  %1576 = vrot.lane.b32.xlu0 %v740, 32
  %v1577 = vpop.permute.xlu0 %1576
  %1578 = vrot.lane.b32.xlu0 %v743, 32
  %v1579 = vpop.permute.xlu0 %1578
  %1580 = vrot.lane.b32.xlu0 %v745, 32
  %v1581 = vpop.permute.xlu0 %1580
  %1582 = vrot.lane.b32.xlu0 %v748, 32
  %v1583 = vpop.permute.xlu0 %1582
  %1584 = vrot.lane.b32.xlu0 %v750, 32
  %v1585 = vpop.permute.xlu0 %1584
  %1586 = vrot.lane.b32.xlu0 %v753, 32
  %v1587 = vpop.permute.xlu0 %1586
  %1588 = vrot.lane.b32.xlu0 %v755, 32
  %v1589 = vpop.permute.xlu0 %1588
  %1590 = vrot.lane.b32.xlu0 %v758, 32
  %v1591 = vpop.permute.xlu0 %1590
  %1592 = vrot.lane.b32.xlu0 %v760, 32
  %v1593 = vpop.permute.xlu0 %1592
  %1594 = vrot.lane.b32.xlu0 %v763, 32
  %v1595 = vpop.permute.xlu0 %1594
  %1596 = vrot.lane.b32.xlu0 %v765, 32
  %v1597 = vpop.permute.xlu0 %1596
  %1598 = vrot.lane.b32.xlu0 %v768, 32
  %v1599 = vpop.permute.xlu0 %1598
  %1600 = vrot.lane.b32.xlu0 %v770, 32
  %v1601 = vpop.permute.xlu0 %1600
  %1602 = vrot.lane.b32.xlu0 %v856, 32
  %v1603 = vpop.permute.xlu0 %1602
  %1604 = vrot.lane.b32.xlu0 %v858, 32
  %v1605 = vpop.permute.xlu0 %1604
  %1670 = vrot.lane.b32.xlu0 %v341, 64
  %v1671 = vpop.permute.xlu0 %1670
  %1672 = vrot.lane.b32.xlu0 %v155, 64
  %v1673 = vpop.permute.xlu0 %1672
  %1674 = vrot.lane.b32.xlu0 %v342, 64
  %v1675 = vpop.permute.xlu0 %1674
  %1676 = vrot.lane.b32.xlu0 %v158, 64
  %v1677 = vpop.permute.xlu0 %1676
  %1678 = vrot.lane.b32.xlu0 %v343, 64
  %v1679 = vpop.permute.xlu0 %1678
  %1680 = vrot.lane.b32.xlu0 %v161, 64
  %v1681 = vpop.permute.xlu0 %1680
  %1682 = vrot.lane.b32.xlu0 %v344, 64
  %v1683 = vpop.permute.xlu0 %1682
  %1684 = vrot.lane.b32.xlu0 %v164, 64
  %v1685 = vpop.permute.xlu0 %1684
  %1686 = vrot.lane.b32.xlu0 %v345, 64
  %v1687 = vpop.permute.xlu0 %1686
  %1688 = vrot.lane.b32.xlu0 %v167, 64
  %v1689 = vpop.permute.xlu0 %1688
  %1690 = vrot.lane.b32.xlu0 %v346, 64
  %v1691 = vpop.permute.xlu0 %1690
  %1692 = vrot.lane.b32.xlu0 %v170, 64
  %v1693 = vpop.permute.xlu0 %1692
  %1694 = vrot.lane.b32.xlu0 %v347, 64
  %v1695 = vpop.permute.xlu0 %1694
  %1696 = vrot.lane.b32.xlu0 %v173, 64
  %v1697 = vpop.permute.xlu0 %1696
  %1698 = vrot.lane.b32.xlu0 %v348, 64
  %v1699 = vpop.permute.xlu0 %1698
  %1700 = vrot.lane.b32.xlu0 %v176, 64
  %v1701 = vpop.permute.xlu0 %1700
  %1702 = vrot.lane.b32.xlu0 %v349, 64
  %v1703 = vpop.permute.xlu0 %1702
  %1704 = vrot.lane.b32.xlu0 %v179, 64
  %v1705 = vpop.permute.xlu0 %1704
  %1706 = vrot.lane.b32.xlu0 %v350, 64
  %v1707 = vpop.permute.xlu0 %1706
  %1708 = vrot.lane.b32.xlu0 %v182, 64
  %v1709 = vpop.permute.xlu0 %1708
  %1710 = vrot.lane.b32.xlu0 %v351, 64
  %v1711 = vpop.permute.xlu0 %1710
  %1712 = vrot.lane.b32.xlu0 %v185, 64
  %v1713 = vpop.permute.xlu0 %1712
  %1714 = vrot.lane.b32.xlu0 %v352, 64
  %v1715 = vpop.permute.xlu0 %1714
  %1716 = vrot.lane.b32.xlu0 %v188, 64
  %v1717 = vpop.permute.xlu0 %1716
  %1718 = vrot.lane.b32.xlu0 %v353, 64
  %v1719 = vpop.permute.xlu0 %1718
  %1720 = vrot.lane.b32.xlu0 %v191, 64
  %v1721 = vpop.permute.xlu0 %1720
  %1722 = vrot.lane.b32.xlu0 %v354, 64
  %v1723 = vpop.permute.xlu0 %1722
  %1724 = vrot.lane.b32.xlu0 %v194, 64
  %v1725 = vpop.permute.xlu0 %1724
  %1726 = vrot.lane.b32.xlu0 %v355, 64
  %v1727 = vpop.permute.xlu0 %1726
  %1728 = vrot.lane.b32.xlu0 %v197, 64
  %v1729 = vpop.permute.xlu0 %1728
  %1730 = vrot.lane.b32.xlu0 0.0, 64
  %v1731 = vpop.permute.xlu0 %1730
  %1732 = vrot.lane.b32.xlu0 %v357, 64
  %v1733 = vpop.permute.xlu0 %1732
  %1734 = vrot.lane.b32.xlu0 %v203, 64
  %v1735 = vpop.permute.xlu0 %1734
  %1736 = vrot.lane.b32.xlu0 %v358, 64
  %v1737 = vpop.permute.xlu0 %1736
  %1738 = vrot.lane.b32.xlu0 %v206, 64
  %v1739 = vpop.permute.xlu0 %1738
  %1740 = vrot.lane.b32.xlu0 %v359, 64
  %v1741 = vpop.permute.xlu0 %1740
  %1742 = vrot.lane.b32.xlu0 %v209, 64
  %v1743 = vpop.permute.xlu0 %1742
  %1744 = vrot.lane.b32.xlu0 %v360, 64
  %v1745 = vpop.permute.xlu0 %1744
  %1746 = vrot.lane.b32.xlu0 %v212, 64
  %v1747 = vpop.permute.xlu0 %1746
  %1748 = vrot.lane.b32.xlu0 %v361, 64
  %v1749 = vpop.permute.xlu0 %1748
  %1750 = vrot.lane.b32.xlu0 %v215, 64
  %v1751 = vpop.permute.xlu0 %1750
  %1752 = vrot.lane.b32.xlu0 %v362, 64
  %v1753 = vpop.permute.xlu0 %1752
  %1754 = vrot.lane.b32.xlu0 %v218, 64
  %v1755 = vpop.permute.xlu0 %1754
  %1756 = vrot.lane.b32.xlu0 %v363, 64
  %v1757 = vpop.permute.xlu0 %1756
  %1758 = vrot.lane.b32.xlu0 %v221, 64
  %v1759 = vpop.permute.xlu0 %1758
  %1760 = vrot.lane.b32.xlu0 %v364, 64
  %v1761 = vpop.permute.xlu0 %1760
  %1762 = vrot.lane.b32.xlu0 %v224, 64
  %v1763 = vpop.permute.xlu0 %1762
  %1764 = vrot.lane.b32.xlu0 %v365, 64
  %v1765 = vpop.permute.xlu0 %1764
  %1766 = vrot.lane.b32.xlu0 %v227, 64
  %v1767 = vpop.permute.xlu0 %1766
  %1768 = vrot.lane.b32.xlu0 %v366, 64
  %v1769 = vpop.permute.xlu0 %1768
  %1770 = vrot.lane.b32.xlu0 %v230, 64
  %v1771 = vpop.permute.xlu0 %1770
  %1772 = vrot.lane.b32.xlu0 %v367, 64
  %v1773 = vpop.permute.xlu0 %1772
  %1774 = vrot.lane.b32.xlu0 %v233, 64
  %v1775 = vpop.permute.xlu0 %1774
  %1776 = vrot.lane.b32.xlu0 %v368, 64
  %v1777 = vpop.permute.xlu0 %1776
  %1778 = vrot.lane.b32.xlu0 %v236, 64
  %v1779 = vpop.permute.xlu0 %1778
  %1780 = vrot.lane.b32.xlu0 %v369, 64
  %v1781 = vpop.permute.xlu0 %1780
  %1782 = vrot.lane.b32.xlu0 %v239, 64
  %v1783 = vpop.permute.xlu0 %1782
  %1784 = vrot.lane.b32.xlu0 %v370, 64
  %v1785 = vpop.permute.xlu0 %1784
  %1786 = vrot.lane.b32.xlu0 %v242, 64
  %v1787 = vpop.permute.xlu0 %1786
  %1788 = vrot.lane.b32.xlu0 %v371, 64
  %v1789 = vpop.permute.xlu0 %1788
  %1790 = vrot.lane.b32.xlu0 %v245, 64
  %v1791 = vpop.permute.xlu0 %1790
  %1853 = vrot.lane.b32.xlu0 %v475, 96
  %v1854 = vpop.permute.xlu0 %1853
  %1855 = vrot.lane.b32.xlu0 %v477, 96
  %v1856 = vpop.permute.xlu0 %1855
  %1857 = vrot.lane.b32.xlu0 %v480, 96
  %v1858 = vpop.permute.xlu0 %1857
  %1859 = vrot.lane.b32.xlu0 %v482, 96
  %v1860 = vpop.permute.xlu0 %1859
  %1861 = vrot.lane.b32.xlu0 %v485, 96
  %v1862 = vpop.permute.xlu0 %1861
  %1863 = vrot.lane.b32.xlu0 %v487, 96
  %v1864 = vpop.permute.xlu0 %1863
  %1865 = vrot.lane.b32.xlu0 %v490, 96
  %v1866 = vpop.permute.xlu0 %1865
  %1867 = vrot.lane.b32.xlu0 %v492, 96
  %v1868 = vpop.permute.xlu0 %1867
  %1869 = vrot.lane.b32.xlu0 %v495, 96
  %v1870 = vpop.permute.xlu0 %1869
  %1871 = vrot.lane.b32.xlu0 %v497, 96
  %v1872 = vpop.permute.xlu0 %1871
  %1873 = vrot.lane.b32.xlu0 %v500, 96
  %v1874 = vpop.permute.xlu0 %1873
  %1875 = vrot.lane.b32.xlu0 %v502, 96
  %v1876 = vpop.permute.xlu0 %1875
  %1877 = vrot.lane.b32.xlu0 %v505, 96
  %v1878 = vpop.permute.xlu0 %1877
  %1879 = vrot.lane.b32.xlu0 %v507, 96
  %v1880 = vpop.permute.xlu0 %1879
  %1881 = vrot.lane.b32.xlu0 %v510, 96
  %v1882 = vpop.permute.xlu0 %1881
  %1883 = vrot.lane.b32.xlu0 %v512, 96
  %v1884 = vpop.permute.xlu0 %1883
  %1885 = vrot.lane.b32.xlu0 %v515, 96
  %v1886 = vpop.permute.xlu0 %1885
  %1887 = vrot.lane.b32.xlu0 %v517, 96
  %v1888 = vpop.permute.xlu0 %1887
  %1889 = vrot.lane.b32.xlu0 %v520, 96
  %v1890 = vpop.permute.xlu0 %1889
  %1891 = vrot.lane.b32.xlu0 %v522, 96
  %v1892 = vpop.permute.xlu0 %1891
  %1893 = vrot.lane.b32.xlu0 %v525, 96
  %v1894 = vpop.permute.xlu0 %1893
  %1895 = vrot.lane.b32.xlu0 %v527, 96
  %v1896 = vpop.permute.xlu0 %1895
  %1897 = vrot.lane.b32.xlu0 %v530, 96
  %v1898 = vpop.permute.xlu0 %1897
  %1899 = vrot.lane.b32.xlu0 %v532, 96
  %v1900 = vpop.permute.xlu0 %1899
  %1901 = vrot.lane.b32.xlu0 %v535, 96
  %v1902 = vpop.permute.xlu0 %1901
  %1903 = vrot.lane.b32.xlu0 %v537, 96
  %v1904 = vpop.permute.xlu0 %1903
  %1905 = vrot.lane.b32.xlu0 %v540, 96
  %v1906 = vpop.permute.xlu0 %1905
  %1907 = vrot.lane.b32.xlu0 %v542, 96
  %v1908 = vpop.permute.xlu0 %1907
  %1909 = vrot.lane.b32.xlu0 %v777, 96
  %v1910 = vpop.permute.xlu0 %1909
  %1911 = vrot.lane.b32.xlu0 %v779, 96
  %v1912 = vpop.permute.xlu0 %1911
  %1913 = vrot.lane.b32.xlu0 %v467, 96
  %v1914 = vpop.permute.xlu0 %1913
  %1915 = vrot.lane.b32.xlu0 %v550, 96
  %v1916 = vpop.permute.xlu0 %1915
  %1917 = vrot.lane.b32.xlu0 %v552, 96
  %v1918 = vpop.permute.xlu0 %1917
  %1919 = vrot.lane.b32.xlu0 %v555, 96
  %v1920 = vpop.permute.xlu0 %1919
  %1921 = vrot.lane.b32.xlu0 %v557, 96
  %v1922 = vpop.permute.xlu0 %1921
  %1923 = vrot.lane.b32.xlu0 %v560, 96
  %v1924 = vpop.permute.xlu0 %1923
  %1925 = vrot.lane.b32.xlu0 %v562, 96
  %v1926 = vpop.permute.xlu0 %1925
  %1927 = vrot.lane.b32.xlu0 %v565, 96
  %v1928 = vpop.permute.xlu0 %1927
  %1929 = vrot.lane.b32.xlu0 %v567, 96
  %v1930 = vpop.permute.xlu0 %1929
  %1931 = vrot.lane.b32.xlu0 %v570, 96
  %v1932 = vpop.permute.xlu0 %1931
  %1933 = vrot.lane.b32.xlu0 %v572, 96
  %v1934 = vpop.permute.xlu0 %1933
  %1935 = vrot.lane.b32.xlu0 %v575, 96
  %v1936 = vpop.permute.xlu0 %1935
  %1937 = vrot.lane.b32.xlu0 %v577, 96
  %v1938 = vpop.permute.xlu0 %1937
  %1939 = vrot.lane.b32.xlu0 %v580, 96
  %v1940 = vpop.permute.xlu0 %1939
  %1941 = vrot.lane.b32.xlu0 %v582, 96
  %v1942 = vpop.permute.xlu0 %1941
  %1943 = vrot.lane.b32.xlu0 %v585, 96
  %v1944 = vpop.permute.xlu0 %1943
  %1945 = vrot.lane.b32.xlu0 %v587, 96
  %v1946 = vpop.permute.xlu0 %1945
  %1947 = vrot.lane.b32.xlu0 %v590, 96
  %v1948 = vpop.permute.xlu0 %1947
  %1949 = vrot.lane.b32.xlu0 %v592, 96
  %v1950 = vpop.permute.xlu0 %1949
  %1951 = vrot.lane.b32.xlu0 %v595, 96
  %v1952 = vpop.permute.xlu0 %1951
  %1953 = vrot.lane.b32.xlu0 %v597, 96
  %v1954 = vpop.permute.xlu0 %1953
  %1955 = vrot.lane.b32.xlu0 %v600, 96
  %v1956 = vpop.permute.xlu0 %1955
  %1957 = vrot.lane.b32.xlu0 %v602, 96
  %v1958 = vpop.permute.xlu0 %1957
  %1959 = vrot.lane.b32.xlu0 %v605, 96
  %v1960 = vpop.permute.xlu0 %1959
  %1961 = vrot.lane.b32.xlu0 %v607, 96
  %v1962 = vpop.permute.xlu0 %1961
  %1963 = vrot.lane.b32.xlu0 %v610, 96
  %v1964 = vpop.permute.xlu0 %1963
  %1965 = vrot.lane.b32.xlu0 %v612, 96
  %v1966 = vpop.permute.xlu0 %1965
  %1967 = vrot.lane.b32.xlu0 %v615, 96
  %v1968 = vpop.permute.xlu0 %1967
  %1969 = vrot.lane.b32.xlu0 %v617, 96
  %v1970 = vpop.permute.xlu0 %1969
  %1971 = vrot.lane.b32.xlu0 %v782, 96
  %v1972 = vpop.permute.xlu0 %1971
  %1973 = vrot.lane.b32.xlu0 %v784, 96
  %v1974 = vpop.permute.xlu0 %1973
  %vm2036 = vcmask 261120
  %v2037 = vsel %vm2036, 0.0, %v921
  %v2038 = vsel %vm2036, %v340, %v923
  %v2039 = vsel %vm2036, %v152, %v925
  %v2040 = vsel %vm2036, %v341, %v927
  %v2041 = vsel %vm2036, %v155, %v929
  %v2042 = vsel %vm2036, %v342, %v931
  %v2043 = vsel %vm2036, %v158, %v933
  %v2044 = vsel %vm2036, %v343, %v935
  %v2045 = vsel %vm2036, %v161, %v937
  %v2046 = vsel %vm2036, %v344, %v939
  %v2047 = vsel %vm2036, %v164, %v941
  %v2048 = vsel %vm2036, %v345, %v943
  %v2049 = vsel %vm2036, %v167, %v945
  %v2050 = vsel %vm2036, %v346, %v947
  %v2051 = vsel %vm2036, %v170, %v949
  %v2052 = vsel %vm2036, %v347, %v951
  %v2053 = vsel %vm2036, %v173, %v953
  %v2054 = vsel %vm2036, %v348, %v955
  %v2055 = vsel %vm2036, %v176, %v957
  %v2056 = vsel %vm2036, %v349, %v959
  %v2057 = vsel %vm2036, %v179, %v961
  %v2058 = vsel %vm2036, %v350, %v963
  %v2059 = vsel %vm2036, %v182, %v965
  %v2060 = vsel %vm2036, %v351, %v967
  %v2061 = vsel %vm2036, %v185, %v969
  %v2062 = vsel %vm2036, %v352, %v971
  %v2063 = vsel %vm2036, %v188, %v973
  %v2064 = vsel %vm2036, %v353, %v975
  %v2065 = vsel %vm2036, %v191, %v977
  %v2066 = vsel %vm2036, %v354, %v979
  %v2067 = vsel %vm2036, %v194, %v981
  %v2068 = vsel %vm2036, %v356, %v983
  %v2069 = vsel %vm2036, %v200, %v985
  %v2070 = vsel %vm2036, %v357, %v987
  %v2071 = vsel %vm2036, %v203, %v989
  %v2072 = vsel %vm2036, %v358, %v991
  %v2073 = vsel %vm2036, %v206, %v993
  %v2074 = vsel %vm2036, %v359, %v995
  %v2075 = vsel %vm2036, %v209, %v997
  %v2076 = vsel %vm2036, %v360, %v999
  %v2077 = vsel %vm2036, %v212, %v1001
  %v2078 = vsel %vm2036, %v361, %v1003
  %v2079 = vsel %vm2036, %v215, %v1005
  %v2080 = vsel %vm2036, %v362, %v1007
  %v2081 = vsel %vm2036, %v218, %v1009
  %v2082 = vsel %vm2036, %v363, %v1011
  %v2083 = vsel %vm2036, %v221, %v1013
  %v2084 = vsel %vm2036, %v364, %v1015
  %v2085 = vsel %vm2036, %v224, %v1017
  %v2086 = vsel %vm2036, %v365, %v1019
  %v2087 = vsel %vm2036, %v227, %v1021
  %v2088 = vsel %vm2036, %v366, %v1023
  %v2089 = vsel %vm2036, %v230, %v1025
  %v2090 = vsel %vm2036, %v367, %v1027
  %v2091 = vsel %vm2036, %v233, %v1029
  %v2092 = vsel %vm2036, %v368, %v1031
  %v2093 = vsel %vm2036, %v236, %v1033
  %v2094 = vsel %vm2036, %v369, %v1035
  %v2095 = vsel %vm2036, %v239, %v1037
  %v2096 = vsel %vm2036, %v370, %v1039
  %v2097 = vsel %vm2036, %v242, %v1041
  %vm2098 = vcmask 523264
  %v2099 = vsel %vm2098, %v2037, %v1104
  %v2100 = vsel %vm2098, %v2038, %v1106
  %v2101 = vsel %vm2098, %v2039, %v1108
  %v2102 = vsel %vm2098, %v2040, %v1110
  %v2103 = vsel %vm2098, %v2041, %v1112
  %v2104 = vsel %vm2098, %v2042, %v1114
  %v2105 = vsel %vm2098, %v2043, %v1116
  %v2106 = vsel %vm2098, %v2044, %v1118
  %v2107 = vsel %vm2098, %v2045, %v1120
  %v2108 = vsel %vm2098, %v2046, %v1122
  %v2109 = vsel %vm2098, %v2047, %v1124
  %v2110 = vsel %vm2098, %v2048, %v1126
  %v2111 = vsel %vm2098, %v2049, %v1128
  %v2112 = vsel %vm2098, %v2050, %v1130
  %v2113 = vsel %vm2098, %v2051, %v1132
  %v2114 = vsel %vm2098, %v2052, %v1134
  %v2115 = vsel %vm2098, %v2053, %v1136
  %v2116 = vsel %vm2098, %v2054, %v1138
  %v2117 = vsel %vm2098, %v2055, %v1140
  %v2118 = vsel %vm2098, %v2056, %v1142
  %v2119 = vsel %vm2098, %v2057, %v1144
  %v2120 = vsel %vm2098, %v2058, %v1146
  %v2121 = vsel %vm2098, %v2059, %v1148
  %v2122 = vsel %vm2098, %v2060, %v1150
  %v2123 = vsel %vm2098, %v2061, %v1152
  %v2124 = vsel %vm2098, %v2062, %v1154
  %v2125 = vsel %vm2098, %v2063, %v1156
  %v2126 = vsel %vm2098, %v2064, %v1158
  %v2127 = vsel %vm2098, %v2065, %v1160
  %v2128 = vsel %vm2098, %v2066, %v1162
  %v2129 = vsel %vm2098, %v2067, %v1164
  %v2130 = vsel %vm2098, %v2068, %v1166
  %v2131 = vsel %vm2098, %v2069, %v1168
  %v2132 = vsel %vm2098, %v2070, %v1170
  %v2133 = vsel %vm2098, %v2071, %v1172
  %v2134 = vsel %vm2098, %v2072, %v1174
  %v2135 = vsel %vm2098, %v2073, %v1176
  %v2136 = vsel %vm2098, %v2074, %v1178
  %v2137 = vsel %vm2098, %v2075, %v1180
  %v2138 = vsel %vm2098, %v2076, %v1182
  %v2139 = vsel %vm2098, %v2077, %v1184
  %v2140 = vsel %vm2098, %v2078, %v1186
  %v2141 = vsel %vm2098, %v2079, %v1188
  %v2142 = vsel %vm2098, %v2080, %v1190
  %v2143 = vsel %vm2098, %v2081, %v1192
  %v2144 = vsel %vm2098, %v2082, %v1194
  %v2145 = vsel %vm2098, %v2083, %v1196
  %v2146 = vsel %vm2098, %v2084, %v1198
  %v2147 = vsel %vm2098, %v2085, %v1200
  %v2148 = vsel %vm2098, %v2086, %v1202
  %v2149 = vsel %vm2098, %v2087, %v1204
  %v2150 = vsel %vm2098, %v2088, %v1206
  %v2151 = vsel %vm2098, %v2089, %v1208
  %v2152 = vsel %vm2098, %v2090, %v1210
  %v2153 = vsel %vm2098, %v2091, %v1212
  %v2154 = vsel %vm2098, %v2092, %v1214
  %v2155 = vsel %vm2098, %v2093, %v1216
  %v2156 = vsel %vm2098, %v2094, %v1218
  %v2157 = vsel %vm2098, %v2095, %v1220
  %v2158 = vsel %vm2098, %v2096, %v1222
  %v2159 = vsel %vm2098, %v2097, %v1224
  %vm2160 = vcmask 785408
  %v2161 = vsel %vm2160, %v2099, %v1287
  %v2162 = vsel %vm2160, %v2099, %v1289
  %v2163 = vsel %vm2160, %v2100, %v1291
  %v2164 = vsel %vm2160, %v2101, %v1293
  %v2165 = vsel %vm2160, %v2102, %v1295
  %v2166 = vsel %vm2160, %v2103, %v1297
  %v2167 = vsel %vm2160, %v2104, %v1299
  %v2168 = vsel %vm2160, %v2105, %v1301
  %v2169 = vsel %vm2160, %v2106, %v1303
  %v2170 = vsel %vm2160, %v2107, %v1305
  %v2171 = vsel %vm2160, %v2108, %v1307
  %v2172 = vsel %vm2160, %v2109, %v1309
  %v2173 = vsel %vm2160, %v2110, %v1311
  %v2174 = vsel %vm2160, %v2111, %v1313
  %v2175 = vsel %vm2160, %v2112, %v1315
  %v2176 = vsel %vm2160, %v2113, %v1317
  %v2177 = vsel %vm2160, %v2114, %v1319
  %v2178 = vsel %vm2160, %v2115, %v1321
  %v2179 = vsel %vm2160, %v2116, %v1323
  %v2180 = vsel %vm2160, %v2117, %v1325
  %v2181 = vsel %vm2160, %v2118, %v1327
  %v2182 = vsel %vm2160, %v2119, %v1329
  %v2183 = vsel %vm2160, %v2120, %v1331
  %v2184 = vsel %vm2160, %v2121, %v1333
  %v2185 = vsel %vm2160, %v2122, %v1335
  %v2186 = vsel %vm2160, %v2123, %v1337
  %v2187 = vsel %vm2160, %v2124, %v1339
  %v2188 = vsel %vm2160, %v2125, %v1341
  %v2189 = vsel %vm2160, %v2126, %v1343
  %v2190 = vsel %vm2160, %v2127, %v1345
  %v2191 = vsel %vm2160, %v2128, %v1347
  %v2192 = vsel %vm2160, %v2129, %v1349
  %v2193 = vsel %vm2160, %v2099, %v1351
  %v2194 = vsel %vm2160, %v2099, %v1353
  %v2195 = vsel %vm2160, %v2130, %v1355
  %v2196 = vsel %vm2160, %v2131, %v1357
  %v2197 = vsel %vm2160, %v2132, %v1359
  %v2198 = vsel %vm2160, %v2133, %v1361
  %v2199 = vsel %vm2160, %v2134, %v1363
  %v2200 = vsel %vm2160, %v2135, %v1365
  %v2201 = vsel %vm2160, %v2136, %v1367
  %v2202 = vsel %vm2160, %v2137, %v1369
  %v2203 = vsel %vm2160, %v2138, %v1371
  %v2204 = vsel %vm2160, %v2139, %v1373
  %v2205 = vsel %vm2160, %v2140, %v1375
  %v2206 = vsel %vm2160, %v2141, %v1377
  %v2207 = vsel %vm2160, %v2142, %v1379
  %v2208 = vsel %vm2160, %v2143, %v1381
  %v2209 = vsel %vm2160, %v2144, %v1383
  %v2210 = vsel %vm2160, %v2145, %v1385
  %v2211 = vsel %vm2160, %v2146, %v1387
  %v2212 = vsel %vm2160, %v2147, %v1389
  %v2213 = vsel %vm2160, %v2148, %v1391
  %v2214 = vsel %vm2160, %v2149, %v1393
  %v2215 = vsel %vm2160, %v2150, %v1395
  %v2216 = vsel %vm2160, %v2151, %v1397
  %v2217 = vsel %vm2160, %v2152, %v1399
  %v2218 = vsel %vm2160, %v2153, %v1401
  %v2219 = vsel %vm2160, %v2154, %v1403
  %v2220 = vsel %vm2160, %v2155, %v1405
  %v2221 = vsel %vm2160, %v2156, %v1407
  %v2222 = vsel %vm2160, %v2157, %v1409
  %v2223 = vsel %vm2160, %v2158, %v1411
  %v2224 = vsel %vm2160, %v2159, %v1413
  %v2225 = vsel %vm2036, %v470, %v1479
  %v2226 = vsel %vm2036, %v472, %v1481
  %v2227 = vsel %vm2036, %v475, %v1483
  %v2228 = vsel %vm2036, %v477, %v1485
  %v2229 = vsel %vm2036, %v480, %v1487
  %v2230 = vsel %vm2036, %v482, %v1489
  %v2231 = vsel %vm2036, %v485, %v1491
  %v2232 = vsel %vm2036, %v487, %v1493
  %v2233 = vsel %vm2036, %v490, %v1495
  %v2234 = vsel %vm2036, %v492, %v1497
  %v2235 = vsel %vm2036, %v495, %v1499
  %v2236 = vsel %vm2036, %v497, %v1501
  %v2237 = vsel %vm2036, %v500, %v1503
  %v2238 = vsel %vm2036, %v502, %v1505
  %v2239 = vsel %vm2036, %v505, %v1507
  %v2240 = vsel %vm2036, %v507, %v1509
  %v2241 = vsel %vm2036, %v510, %v1511
  %v2242 = vsel %vm2036, %v512, %v1513
  %v2243 = vsel %vm2036, %v515, %v1515
  %v2244 = vsel %vm2036, %v517, %v1517
  %v2245 = vsel %vm2036, %v520, %v1519
  %v2246 = vsel %vm2036, %v522, %v1521
  %v2247 = vsel %vm2036, %v525, %v1523
  %v2248 = vsel %vm2036, %v527, %v1525
  %v2249 = vsel %vm2036, %v530, %v1527
  %v2250 = vsel %vm2036, %v532, %v1529
  %v2251 = vsel %vm2036, %v535, %v1531
  %v2252 = vsel %vm2036, %v537, %v1533
  %v2253 = vsel %vm2036, %v540, %v1535
  %v2254 = vsel %vm2036, %v542, %v1537
  %v2255 = vsel %vm2036, %v777, %v1539
  %v2256 = vsel %vm2036, %v779, %v1541
  %v2257 = vsel %vm2036, %v545, %v1543
  %v2258 = vsel %vm2036, %v547, %v1545
  %v2259 = vsel %vm2036, %v550, %v1547
  %v2260 = vsel %vm2036, %v552, %v1549
  %v2261 = vsel %vm2036, %v555, %v1551
  %v2262 = vsel %vm2036, %v557, %v1553
  %v2263 = vsel %vm2036, %v560, %v1555
  %v2264 = vsel %vm2036, %v562, %v1557
  %v2265 = vsel %vm2036, %v565, %v1559
  %v2266 = vsel %vm2036, %v567, %v1561
  %v2267 = vsel %vm2036, %v570, %v1563
  %v2268 = vsel %vm2036, %v572, %v1565
  %v2269 = vsel %vm2036, %v575, %v1567
  %v2270 = vsel %vm2036, %v577, %v1569
  %v2271 = vsel %vm2036, %v580, %v1571
  %v2272 = vsel %vm2036, %v582, %v1573
  %v2273 = vsel %vm2036, %v585, %v1575
  %v2274 = vsel %vm2036, %v587, %v1577
  %v2275 = vsel %vm2036, %v590, %v1579
  %v2276 = vsel %vm2036, %v592, %v1581
  %v2277 = vsel %vm2036, %v595, %v1583
  %v2278 = vsel %vm2036, %v597, %v1585
  %v2279 = vsel %vm2036, %v600, %v1587
  %v2280 = vsel %vm2036, %v602, %v1589
  %v2281 = vsel %vm2036, %v605, %v1591
  %v2282 = vsel %vm2036, %v607, %v1593
  %v2283 = vsel %vm2036, %v610, %v1595
  %v2284 = vsel %vm2036, %v612, %v1597
  %v2285 = vsel %vm2036, %v615, %v1599
  %v2286 = vsel %vm2036, %v617, %v1601
  %v2287 = vsel %vm2036, %v782, %v1603
  %v2288 = vsel %vm2036, %v784, %v1605
  %v2289 = vsel %vm2098, %v2225, %v1671
  %v2290 = vsel %vm2098, %v2226, %v1673
  %v2291 = vsel %vm2098, %v2227, %v1675
  %v2292 = vsel %vm2098, %v2228, %v1677
  %v2293 = vsel %vm2098, %v2229, %v1679
  %v2294 = vsel %vm2098, %v2230, %v1681
  %v2295 = vsel %vm2098, %v2231, %v1683
  %v2296 = vsel %vm2098, %v2232, %v1685
  %v2297 = vsel %vm2098, %v2233, %v1687
  %v2298 = vsel %vm2098, %v2234, %v1689
  %v2299 = vsel %vm2098, %v2235, %v1691
  %v2300 = vsel %vm2098, %v2236, %v1693
  %v2301 = vsel %vm2098, %v2237, %v1695
  %v2302 = vsel %vm2098, %v2238, %v1697
  %v2303 = vsel %vm2098, %v2239, %v1699
  %v2304 = vsel %vm2098, %v2240, %v1701
  %v2305 = vsel %vm2098, %v2241, %v1703
  %v2306 = vsel %vm2098, %v2242, %v1705
  %v2307 = vsel %vm2098, %v2243, %v1707
  %v2308 = vsel %vm2098, %v2244, %v1709
  %v2309 = vsel %vm2098, %v2245, %v1711
  %v2310 = vsel %vm2098, %v2246, %v1713
  %v2311 = vsel %vm2098, %v2247, %v1715
  %v2312 = vsel %vm2098, %v2248, %v1717
  %v2313 = vsel %vm2098, %v2249, %v1719
  %v2314 = vsel %vm2098, %v2250, %v1721
  %v2315 = vsel %vm2098, %v2251, %v1723
  %v2316 = vsel %vm2098, %v2252, %v1725
  %v2317 = vsel %vm2098, %v2253, %v1727
  %v2318 = vsel %vm2098, %v2254, %v1729
  %v2319 = vsel %vm2098, %v2255, %v1731
  %v2320 = vsel %vm2098, %v2256, %v1731
  %v2321 = vsel %vm2098, %v2257, %v1733
  %v2322 = vsel %vm2098, %v2258, %v1735
  %v2323 = vsel %vm2098, %v2259, %v1737
  %v2324 = vsel %vm2098, %v2260, %v1739
  %v2325 = vsel %vm2098, %v2261, %v1741
  %v2326 = vsel %vm2098, %v2262, %v1743
  %v2327 = vsel %vm2098, %v2263, %v1745
  %v2328 = vsel %vm2098, %v2264, %v1747
  %v2329 = vsel %vm2098, %v2265, %v1749
  %v2330 = vsel %vm2098, %v2266, %v1751
  %v2331 = vsel %vm2098, %v2267, %v1753
  %v2332 = vsel %vm2098, %v2268, %v1755
  %v2333 = vsel %vm2098, %v2269, %v1757
  %v2334 = vsel %vm2098, %v2270, %v1759
  %v2335 = vsel %vm2098, %v2271, %v1761
  %v2336 = vsel %vm2098, %v2272, %v1763
  %v2337 = vsel %vm2098, %v2273, %v1765
  %v2338 = vsel %vm2098, %v2274, %v1767
  %v2339 = vsel %vm2098, %v2275, %v1769
  %v2340 = vsel %vm2098, %v2276, %v1771
  %v2341 = vsel %vm2098, %v2277, %v1773
  %v2342 = vsel %vm2098, %v2278, %v1775
  %v2343 = vsel %vm2098, %v2279, %v1777
  %v2344 = vsel %vm2098, %v2280, %v1779
  %v2345 = vsel %vm2098, %v2281, %v1781
  %v2346 = vsel %vm2098, %v2282, %v1783
  %v2347 = vsel %vm2098, %v2283, %v1785
  %v2348 = vsel %vm2098, %v2284, %v1787
  %v2349 = vsel %vm2098, %v2285, %v1789
  %v2350 = vsel %vm2098, %v2286, %v1791
  %v2351 = vsel %vm2098, %v2287, %v1731
  %v2352 = vsel %vm2098, %v2288, %v1731
  %v2353 = vsel %vm2160, %v2289, %v1854
  %v2354 = vsel %vm2160, %v2290, %v1856
  %v2355 = vsel %vm2160, %v2291, %v1858
  %v2356 = vsel %vm2160, %v2292, %v1860
  %v2357 = vsel %vm2160, %v2293, %v1862
  %v2358 = vsel %vm2160, %v2294, %v1864
  %v2359 = vsel %vm2160, %v2295, %v1866
  %v2360 = vsel %vm2160, %v2296, %v1868
  %v2361 = vsel %vm2160, %v2297, %v1870
  %v2362 = vsel %vm2160, %v2298, %v1872
  %v2363 = vsel %vm2160, %v2299, %v1874
  %v2364 = vsel %vm2160, %v2300, %v1876
  %v2365 = vsel %vm2160, %v2301, %v1878
  %v2366 = vsel %vm2160, %v2302, %v1880
  %v2367 = vsel %vm2160, %v2303, %v1882
  %v2368 = vsel %vm2160, %v2304, %v1884
  %v2369 = vsel %vm2160, %v2305, %v1886
  %v2370 = vsel %vm2160, %v2306, %v1888
  %v2371 = vsel %vm2160, %v2307, %v1890
  %v2372 = vsel %vm2160, %v2308, %v1892
  %v2373 = vsel %vm2160, %v2309, %v1894
  %v2374 = vsel %vm2160, %v2310, %v1896
  %v2375 = vsel %vm2160, %v2311, %v1898
  %v2376 = vsel %vm2160, %v2312, %v1900
  %v2377 = vsel %vm2160, %v2313, %v1902
  %v2378 = vsel %vm2160, %v2314, %v1904
  %v2379 = vsel %vm2160, %v2315, %v1906
  %v2380 = vsel %vm2160, %v2316, %v1908
  %v2381 = vsel %vm2160, %v2317, %v1910
  %v2382 = vsel %vm2160, %v2318, %v1912
  %v2383 = vsel %vm2160, %v2319, %v1914
  %v2384 = vsel %vm2160, %v2320, %v1914
  %v2385 = vsel %vm2160, %v2321, %v1916
  %v2386 = vsel %vm2160, %v2322, %v1918
  %v2387 = vsel %vm2160, %v2323, %v1920
  %v2388 = vsel %vm2160, %v2324, %v1922
  %v2389 = vsel %vm2160, %v2325, %v1924
  %v2390 = vsel %vm2160, %v2326, %v1926
  %v2391 = vsel %vm2160, %v2327, %v1928
  %v2392 = vsel %vm2160, %v2328, %v1930
  %v2393 = vsel %vm2160, %v2329, %v1932
  %v2394 = vsel %vm2160, %v2330, %v1934
  %v2395 = vsel %vm2160, %v2331, %v1936
  %v2396 = vsel %vm2160, %v2332, %v1938
  %v2397 = vsel %vm2160, %v2333, %v1940
  %v2398 = vsel %vm2160, %v2334, %v1942
  %v2399 = vsel %vm2160, %v2335, %v1944
  %v2400 = vsel %vm2160, %v2336, %v1946
  %v2401 = vsel %vm2160, %v2337, %v1948
  %v2402 = vsel %vm2160, %v2338, %v1950
  %v2403 = vsel %vm2160, %v2339, %v1952
  %v2404 = vsel %vm2160, %v2340, %v1954
  %v2405 = vsel %vm2160, %v2341, %v1956
  %v2406 = vsel %vm2160, %v2342, %v1958
  %v2407 = vsel %vm2160, %v2343, %v1960
  %v2408 = vsel %vm2160, %v2344, %v1962
  %v2409 = vsel %vm2160, %v2345, %v1964
  %v2410 = vsel %vm2160, %v2346, %v1966
  %v2411 = vsel %vm2160, %v2347, %v1968
  %v2412 = vsel %vm2160, %v2348, %v1970
  %v2413 = vsel %vm2160, %v2349, %v1972
  %v2414 = vsel %vm2160, %v2350, %v1974
  %v2415 = vsel %vm2160, %v2351, %v1914
  %v2416 = vsel %vm2160, %v2352, %v1914
  %v2417 = vpack.c.bf16 %v2162, %v2161
  %v2418 = vpack.c.bf16 %v2354, %v2353
  %v2419 = vpack.c.bf16 %v630, %v628
  %v2420 = vpack.c.bf16 %v2164, %v2163
  %v2421 = vpack.c.bf16 %v2356, %v2355
  %v2422 = vpack.c.bf16 %v635, %v633
  %v2423 = vpack.c.bf16 %v2166, %v2165
  %v2424 = vpack.c.bf16 %v2358, %v2357
  %v2425 = vpack.c.bf16 %v640, %v638
  %v2426 = vpack.c.bf16 %v2168, %v2167
  %v2427 = vpack.c.bf16 %v2360, %v2359
  %v2428 = vpack.c.bf16 %v645, %v643
  %v2429 = vpack.c.bf16 %v2170, %v2169
  %v2430 = vpack.c.bf16 %v2362, %v2361
  %v2431 = vpack.c.bf16 %v650, %v648
  %v2432 = vpack.c.bf16 %v2172, %v2171
  %v2433 = vpack.c.bf16 %v2364, %v2363
  %v2434 = vpack.c.bf16 %v655, %v653
  %v2435 = vpack.c.bf16 %v2174, %v2173
  %v2436 = vpack.c.bf16 %v2366, %v2365
  %v2437 = vpack.c.bf16 %v660, %v658
  %v2438 = vpack.c.bf16 %v2176, %v2175
  %v2439 = vpack.c.bf16 %v2368, %v2367
  %v2440 = vpack.c.bf16 %v665, %v663
  %v2441 = vpack.c.bf16 %v2178, %v2177
  %v2442 = vpack.c.bf16 %v2370, %v2369
  %v2443 = vpack.c.bf16 %v670, %v668
  %v2444 = vpack.c.bf16 %v2180, %v2179
  %v2445 = vpack.c.bf16 %v2372, %v2371
  %v2446 = vpack.c.bf16 %v675, %v673
  %v2447 = vpack.c.bf16 %v2182, %v2181
  %v2448 = vpack.c.bf16 %v2374, %v2373
  %v2449 = vpack.c.bf16 %v680, %v678
  %v2450 = vpack.c.bf16 %v2184, %v2183
  %v2451 = vpack.c.bf16 %v2376, %v2375
  %v2452 = vpack.c.bf16 %v685, %v683
  %v2453 = vpack.c.bf16 %v2186, %v2185
  %v2454 = vpack.c.bf16 %v2378, %v2377
  %v2455 = vpack.c.bf16 %v690, %v688
  %v2456 = vpack.c.bf16 %v2188, %v2187
  %v2457 = vpack.c.bf16 %v2380, %v2379
  %v2458 = vpack.c.bf16 %v695, %v693
  %v2459 = vpack.c.bf16 %v2190, %v2189
  %v2460 = vpack.c.bf16 %v2382, %v2381
  %v2461 = vpack.c.bf16 %v853, %v851
  %v2462 = vpack.c.bf16 %v2192, %v2191
  %v2463 = vpack.c.bf16 %v2384, %v2383
  %v2464 = vpack.c.bf16 %v620, %v620
  %v2465 = vpack.c.bf16 %v2194, %v2193
  %v2466 = vpack.c.bf16 %v2386, %v2385
  %v2467 = vpack.c.bf16 %v705, %v703
  %v2468 = vpack.c.bf16 %v2196, %v2195
  %v2469 = vpack.c.bf16 %v2388, %v2387
  %v2470 = vpack.c.bf16 %v710, %v708
  %v2471 = vpack.c.bf16 %v2198, %v2197
  %v2472 = vpack.c.bf16 %v2390, %v2389
  %v2473 = vpack.c.bf16 %v715, %v713
  %v2474 = vpack.c.bf16 %v2200, %v2199
  %v2475 = vpack.c.bf16 %v2392, %v2391
  %v2476 = vpack.c.bf16 %v720, %v718
  %v2477 = vpack.c.bf16 %v2202, %v2201
  %v2478 = vpack.c.bf16 %v2394, %v2393
  %v2479 = vpack.c.bf16 %v725, %v723
  %v2480 = vpack.c.bf16 %v2204, %v2203
  %v2481 = vpack.c.bf16 %v2396, %v2395
  %v2482 = vpack.c.bf16 %v730, %v728
  %v2483 = vpack.c.bf16 %v2206, %v2205
  %v2484 = vpack.c.bf16 %v2398, %v2397
  %v2485 = vpack.c.bf16 %v735, %v733
  %v2486 = vpack.c.bf16 %v2208, %v2207
  %v2487 = vpack.c.bf16 %v2400, %v2399
  %v2488 = vpack.c.bf16 %v740, %v738
  %v2489 = vpack.c.bf16 %v2210, %v2209
  %v2490 = vpack.c.bf16 %v2402, %v2401
  %v2491 = vpack.c.bf16 %v745, %v743
  %v2492 = vpack.c.bf16 %v2212, %v2211
  %v2493 = vpack.c.bf16 %v2404, %v2403
  %v2494 = vpack.c.bf16 %v750, %v748
  %v2495 = vpack.c.bf16 %v2214, %v2213
  %v2496 = vpack.c.bf16 %v2406, %v2405
  %v2497 = vpack.c.bf16 %v755, %v753
  %v2498 = vpack.c.bf16 %v2216, %v2215
  %v2499 = vpack.c.bf16 %v2408, %v2407
  %v2500 = vpack.c.bf16 %v760, %v758
  %v2501 = vpack.c.bf16 %v2218, %v2217
  %v2502 = vpack.c.bf16 %v2410, %v2409
  %v2503 = vpack.c.bf16 %v765, %v763
  %v2504 = vpack.c.bf16 %v2220, %v2219
  %v2505 = vpack.c.bf16 %v2412, %v2411
  %v2506 = vpack.c.bf16 %v770, %v768
  %v2507 = vpack.c.bf16 %v2222, %v2221
  %v2508 = vpack.c.bf16 %v2414, %v2413
  %v2509 = vpack.c.bf16 %v858, %v856
  %v2510 = vpack.c.bf16 %v2224, %v2223
  %v2511 = vpack.c.bf16 %v2416, %v2415
  %v2512 = vld [vmem:[%s1] sm:$0xf]
  %v2513 = vld [vmem:[%s1 + $0x4] sm:$0xf]
  %v2514 = vld [vmem:[%s1 + $0x8] sm:$0xf]
  %v2515 = vld [vmem:[%s1 + $0xc] sm:$0xf]
  %v2516 = vld [vmem:[%s1 + $0x10] sm:$0xf]
  %v2517 = vld [vmem:[%s1 + $0x14] sm:$0xf]
  %v2518 = vld [vmem:[%s1 + $0x18] sm:$0xf]
  %v2519 = vld [vmem:[%s1 + $0x1c] sm:$0xf]
  %v2520 = vld [vmem:[%s1 + $0x20] sm:$0xf]
  %v2521 = vld [vmem:[%s1 + $0x24] sm:$0xf]
  %v2522 = vld [vmem:[%s1 + $0x28] sm:$0xf]
  %v2523 = vld [vmem:[%s1 + $0x2c] sm:$0xf]
  %v2524 = vld [vmem:[%s1 + $0x30] sm:$0xf]
  %v2525 = vld [vmem:[%s1 + $0x34] sm:$0xf]
  %v2526 = vld [vmem:[%s1 + $0x38] sm:$0xf]
  %v2527 = vld [vmem:[%s1 + $0x3c] sm:$0xf]
  %v2528 = vld [vmem:[%s1 + $0x40] sm:$0xf]
  %v2529 = vld [vmem:[%s1 + $0x44] sm:$0xf]
  %v2530 = vld [vmem:[%s1 + $0x48] sm:$0xf]
  %v2531 = vld [vmem:[%s1 + $0x4c] sm:$0xf]
  %v2532 = vld [vmem:[%s1 + $0x50] sm:$0xf]
  %v2533 = vld [vmem:[%s1 + $0x54] sm:$0xf]
  %v2534 = vld [vmem:[%s1 + $0x58] sm:$0xf]
  %v2535 = vld [vmem:[%s1 + $0x5c] sm:$0xf]
  %v2536 = vld [vmem:[%s1 + $0x60] sm:$0xf]
  %v2537 = vld [vmem:[%s1 + $0x64] sm:$0xf]
  %v2538 = vld [vmem:[%s1 + $0x68] sm:$0xf]
  %v2539 = vld [vmem:[%s1 + $0x6c] sm:$0xf]
  %v2540 = vld [vmem:[%s1 + $0x70] sm:$0xf]
  %v2541 = vld [vmem:[%s1 + $0x74] sm:$0xf]
  %v2542 = vld [vmem:[%s1 + $0x78] sm:$0xf]
  %v2543 = vld [vmem:[%s1 + $0x7c] sm:$0xf]
  %v2544 = vld [vmem:[%s1 + $0x80] sm:$0xf]
  %v2545 = vld [vmem:[%s1 + $0x84] sm:$0xf]
  %v2546 = vld [vmem:[%s1 + $0x88] sm:$0xf]
  %v2547 = vld [vmem:[%s1 + $0x8c] sm:$0xf]
  %v2548 = vld [vmem:[%s2] sm:$0x1]
  %v2550 = vlaneseq
  %v2551 = vshrl.u32 %v2550, 7
  %v2552 = vsub.s32 0, %v2551
  %v2553 = vrot.slane %v2548, %v2552
  %v2591 = vunpack.c.l.b16 %v2512
  %v2592 = vunpack.c.l.b16 %v2513
  %v2593 = vunpack.c.l.b16 %v2514
  %v2594 = vunpack.c.l.b16 %v2515
  %v2595 = vunpack.c.l.b16 %v2516
  %v2596 = vunpack.c.l.b16 %v2517
  %v2597 = vunpack.c.l.b16 %v2518
  %v2598 = vunpack.c.l.b16 %v2519
  %v2599 = vunpack.c.l.b16 %v2520
  %v2600 = vunpack.c.l.b16 %v2521
  %v2601 = vunpack.c.l.b16 %v2522
  %v2602 = vunpack.c.l.b16 %v2523
  %v2603 = vunpack.c.l.b16 %v2524
  %v2604 = vunpack.c.l.b16 %v2525
  %v2605 = vunpack.c.l.b16 %v2526
  %v2606 = vunpack.c.l.b16 %v2527
  %v2607 = vunpack.c.l.b16 %v2528
  %v2608 = vunpack.c.l.b16 %v2529
  %v2609 = vunpack.c.l.b16 %v2530
  %v2610 = vunpack.c.l.b16 %v2531
  %v2611 = vunpack.c.l.b16 %v2532
  %v2612 = vunpack.c.l.b16 %v2533
  %v2613 = vunpack.c.l.b16 %v2534
  %v2614 = vunpack.c.l.b16 %v2535
  %v2615 = vunpack.c.l.b16 %v2536
  %v2616 = vunpack.c.l.b16 %v2537
  %v2617 = vunpack.c.l.b16 %v2538
  %v2618 = vunpack.c.l.b16 %v2539
  %v2619 = vunpack.c.l.b16 %v2540
  %v2620 = vunpack.c.l.b16 %v2541
  %v2621 = vunpack.c.l.b16 %v2542
  %v2622 = vunpack.c.l.b16 %v2543
  %v2623 = vunpack.c.l.b16 %v2544
  %v2624 = vunpack.c.l.b16 %v2545
  %v2625 = vunpack.c.l.b16 %v2546
  %v2626 = vunpack.c.l.b16 %v2547
  %v2627 = vpack.c.b16 %v2592, %v2591
  %v2628 = vpack.c.b16 %v2594, %v2593
  %v2629 = vpack.c.b16 %v2596, %v2595
  %v2630 = vpack.c.b16 %v2598, %v2597
  %v2631 = vpack.c.b16 %v2600, %v2599
  %v2632 = vpack.c.b16 %v2602, %v2601
  %v2633 = vpack.c.b16 %v2604, %v2603
  %v2634 = vpack.c.b16 %v2606, %v2605
  %v2635 = vpack.c.b16 %v2608, %v2607
  %v2636 = vpack.c.b16 %v2610, %v2609
  %v2637 = vpack.c.b16 %v2612, %v2611
  %v2638 = vpack.c.b16 %v2614, %v2613
  %v2639 = vpack.c.b16 %v2616, %v2615
  %v2640 = vpack.c.b16 %v2618, %v2617
  %v2641 = vpack.c.b16 %v2620, %v2619
  %v2642 = vpack.c.b16 %v2622, %v2621
  %v2643 = vpack.c.b16 %v2624, %v2623
  %v2644 = vpack.c.b16 %v2626, %v2625
  %v2664 = vsel %vm2036, %v2419, 0
  %v2667 = vsel %vm2036, %v2422, 0
  %v2670 = vsel %vm2036, %v2425, 0
  %v2673 = vsel %vm2036, %v2428, 0
  %v2676 = vsel %vm2036, %v2431, 0
  %v2679 = vsel %vm2036, %v2434, 0
  %v2682 = vsel %vm2036, %v2437, 0
  %v2685 = vsel %vm2036, %v2440, 0
  %v2688 = vsel %vm2036, %v2443, 0
  %v2691 = vsel %vm2036, %v2446, 0
  %v2694 = vsel %vm2036, %v2449, 0
  %v2697 = vsel %vm2036, %v2452, 0
  %v2700 = vsel %vm2036, %v2455, 0
  %v2703 = vsel %vm2036, %v2458, 0
  %v2706 = vsel %vm2036, %v2461, 0
  %v2709 = vsel %vm2036, %v2464, 0
  %v2712 = vsel %vm2036, %v2467, 0
  %v2715 = vsel %vm2036, %v2470, 0
  %v2718 = vsel %vm2036, %v2473, 0
  %v2721 = vsel %vm2036, %v2476, 0
  %v2724 = vsel %vm2036, %v2479, 0
  %v2727 = vsel %vm2036, %v2482, 0
  %v2730 = vsel %vm2036, %v2485, 0
  %v2733 = vsel %vm2036, %v2488, 0
  %v2736 = vsel %vm2036, %v2491, 0
  %v2739 = vsel %vm2036, %v2494, 0
  %v2742 = vsel %vm2036, %v2497, 0
  %v2745 = vsel %vm2036, %v2500, 0
  %v2748 = vsel %vm2036, %v2503, 0
  %v2751 = vsel %vm2036, %v2506, 0
  %v2754 = vsel %vm2036, %v2509, 0
  %2756 = vmatprep.subr.bf16.mxu0 0
  %2757 = vmatpush1.bf16.msra.mxu0 %v2627
  %2758 = vmatprep.subr.bf16.mxu0 0
  %2759 = vmatpush1.bf16.msra.mxu0 %v2628
  %2760 = vmatprep.subr.bf16.mxu0 0
  %2761 = vmatpush1.bf16.msra.mxu0 %v2629
  %2762 = vmatprep.subr.bf16.mxu0 0
  %2763 = vmatpush1.bf16.msra.mxu0 %v2630
  %2764 = vmatprep.subr.bf16.mxu0 0
  %2765 = vmatpush1.bf16.msra.mxu0 %v2631
  %2766 = vmatprep.subr.bf16.mxu0 0
  %2767 = vmatpush1.bf16.msra.mxu0 %v2632
  %2768 = vmatprep.subr.bf16.mxu0 0
  %2769 = vmatpush1.bf16.msra.mxu0 %v2633
  %2770 = vmatprep.subr.bf16.mxu0 0
  %2771 = vmatpush1.bf16.msra.mxu0 %v2634
  %2772 = vmatprep.subr.bf16.mxu0 0
  %2773 = vmatpush1.bf16.msra.mxu0 %v2635
  %2774 = vmatprep.subr.bf16.mxu0 0
  %2775 = vmatpush1.bf16.msra.mxu0 %v2636
  %2776 = vmatprep.subr.bf16.mxu0 0
  %2777 = vmatpush1.bf16.msra.mxu0 %v2637
  %2778 = vmatprep.subr.bf16.mxu0 0
  %2779 = vmatpush1.bf16.msra.mxu0 %v2638
  %2780 = vmatprep.subr.bf16.mxu0 0
  %2781 = vmatpush1.bf16.msra.mxu0 %v2639
  %2782 = vmatprep.subr.bf16.mxu0 0
  %2783 = vmatpush1.bf16.msra.mxu0 %v2640
  %2784 = vmatprep.subr.bf16.mxu0 0
  %2785 = vmatpush1.bf16.msra.mxu0 %v2641
  %2786 = vmatprep.subr.bf16.mxu0 0
  %2787 = vmatpush1.bf16.msra.mxu0 %v2642
  %2788 = vmatprep.mubr.bf16.mxu0 %v2418
  %2789 = vmatmul.mubr.bf16.gmra.mrb[0].mxu0 %v2417
  %v2790 = vpop.f32.mrb[0].mxu0
  %v2791 = vadd.f32 %v2553, %v2790
  %v2792 = vpop.f32.mrb[0].mxu0
  %v2793 = vpop.f32.mrb[0].mxu0
  %v2794 = vadd.f32 %v2553, %v2793
  %v2795 = vpop.f32.mrb[0].mxu0
  %2796 = vmatprep.mubr.bf16.mxu0 %v2421
  %2797 = vmatmul.mubr.bf16.gmra.mrb[0].mxu0 %v2420
  %v2798 = vpop.f32.mrb[0].mxu0
  %v2799 = vadd.f32 %v2553, %v2798
  %v2800 = vpop.f32.mrb[0].mxu0
  %v2801 = vpop.f32.mrb[0].mxu0
  %v2802 = vadd.f32 %v2553, %v2801
  %v2803 = vpop.f32.mrb[0].mxu0
  %2804 = vmatprep.mubr.bf16.mxu0 %v2424
  %2805 = vmatmul.mubr.bf16.gmra.mrb[0].mxu0 %v2423
  %v2806 = vpop.f32.mrb[0].mxu0
  %v2807 = vadd.f32 %v2553, %v2806
  %v2808 = vpop.f32.mrb[0].mxu0
  %v2809 = vpop.f32.mrb[0].mxu0
  %v2810 = vadd.f32 %v2553, %v2809
  %v2811 = vpop.f32.mrb[0].mxu0
  %2812 = vmatprep.mubr.bf16.mxu0 %v2427
  %2813 = vmatmul.mubr.bf16.gmra.mrb[0].mxu0 %v2426
  %v2814 = vpop.f32.mrb[0].mxu0
  %v2815 = vadd.f32 %v2553, %v2814
  %v2816 = vpop.f32.mrb[0].mxu0
  %v2817 = vpop.f32.mrb[0].mxu0
  %v2818 = vadd.f32 %v2553, %v2817
  %v2819 = vpop.f32.mrb[0].mxu0
  %2820 = vmatprep.mubr.bf16.mxu0 %v2430
  %2821 = vmatmul.mubr.bf16.gmra.mrb[0].mxu0 %v2429
  %v2822 = vpop.f32.mrb[0].mxu0
  %v2823 = vadd.f32 %v2553, %v2822
  %v2824 = vpop.f32.mrb[0].mxu0
  %v2825 = vpop.f32.mrb[0].mxu0
  %v2826 = vadd.f32 %v2553, %v2825
  %v2827 = vpop.f32.mrb[0].mxu0
  %2828 = vmatprep.mubr.bf16.mxu0 %v2433
  %2829 = vmatmul.mubr.bf16.gmra.mrb[0].mxu0 %v2432
  %v2830 = vpop.f32.mrb[0].mxu0
  %v2831 = vadd.f32 %v2553, %v2830
  %v2832 = vpop.f32.mrb[0].mxu0
  %v2833 = vpop.f32.mrb[0].mxu0
  %v2834 = vadd.f32 %v2553, %v2833
  %v2835 = vpop.f32.mrb[0].mxu0
  %2836 = vmatprep.mubr.bf16.mxu0 %v2436
  %2837 = vmatmul.mubr.bf16.gmra.mrb[0].mxu0 %v2435
  %v2838 = vpop.f32.mrb[0].mxu0
  %v2839 = vadd.f32 %v2553, %v2838
  %v2840 = vpop.f32.mrb[0].mxu0
  %v2841 = vpop.f32.mrb[0].mxu0
  %v2842 = vadd.f32 %v2553, %v2841
  %v2843 = vpop.f32.mrb[0].mxu0
  %2844 = vmatprep.mubr.bf16.mxu0 %v2439
  %2845 = vmatmul.mubr.bf16.gmra.mrb[0].mxu0 %v2438
  %v2846 = vpop.f32.mrb[0].mxu0
  %v2847 = vadd.f32 %v2553, %v2846
  %v2848 = vpop.f32.mrb[0].mxu0
  %v2849 = vpop.f32.mrb[0].mxu0
  %v2850 = vadd.f32 %v2553, %v2849
  %v2851 = vpop.f32.mrb[0].mxu0
  %2852 = vmatprep.mubr.bf16.mxu0 %v2442
  %2853 = vmatmul.mubr.bf16.gmra.mrb[0].mxu0 %v2441
  %v2854 = vpop.f32.mrb[0].mxu0
  %v2855 = vadd.f32 %v2553, %v2854
  %v2856 = vpop.f32.mrb[0].mxu0
  %v2857 = vpop.f32.mrb[0].mxu0
  %v2858 = vadd.f32 %v2553, %v2857
  %v2859 = vpop.f32.mrb[0].mxu0
  %2860 = vmatprep.mubr.bf16.mxu0 %v2445
  %2861 = vmatmul.mubr.bf16.gmra.mrb[0].mxu0 %v2444
  %v2862 = vpop.f32.mrb[0].mxu0
  %v2863 = vadd.f32 %v2553, %v2862
  %v2864 = vpop.f32.mrb[0].mxu0
  %v2865 = vpop.f32.mrb[0].mxu0
  %v2866 = vadd.f32 %v2553, %v2865
  %v2867 = vpop.f32.mrb[0].mxu0
  %2868 = vmatprep.mubr.bf16.mxu0 %v2448
  %2869 = vmatmul.mubr.bf16.gmra.mrb[0].mxu0 %v2447
  %v2870 = vpop.f32.mrb[0].mxu0
  %v2871 = vadd.f32 %v2553, %v2870
  %v2872 = vpop.f32.mrb[0].mxu0
  %v2873 = vpop.f32.mrb[0].mxu0
  %v2874 = vadd.f32 %v2553, %v2873
  %v2875 = vpop.f32.mrb[0].mxu0
  %2876 = vmatprep.mubr.bf16.mxu0 %v2451
  %2877 = vmatmul.mubr.bf16.gmra.mrb[0].mxu0 %v2450
  %v2878 = vpop.f32.mrb[0].mxu0
  %v2879 = vadd.f32 %v2553, %v2878
  %v2880 = vpop.f32.mrb[0].mxu0
  %v2881 = vpop.f32.mrb[0].mxu0
  %v2882 = vadd.f32 %v2553, %v2881
  %v2883 = vpop.f32.mrb[0].mxu0
  %2884 = vmatprep.mubr.bf16.mxu0 %v2454
  %2885 = vmatmul.mubr.bf16.gmra.mrb[0].mxu0 %v2453
  %v2886 = vpop.f32.mrb[0].mxu0
  %v2887 = vadd.f32 %v2553, %v2886
  %v2888 = vpop.f32.mrb[0].mxu0
  %v2889 = vpop.f32.mrb[0].mxu0
  %v2890 = vadd.f32 %v2553, %v2889
  %v2891 = vpop.f32.mrb[0].mxu0
  %2892 = vmatprep.mubr.bf16.mxu0 %v2457
  %2893 = vmatmul.mubr.bf16.gmra.mrb[0].mxu0 %v2456
  %v2894 = vpop.f32.mrb[0].mxu0
  %v2895 = vadd.f32 %v2553, %v2894
  %v2896 = vpop.f32.mrb[0].mxu0
  %v2897 = vpop.f32.mrb[0].mxu0
  %v2898 = vadd.f32 %v2553, %v2897
  %v2899 = vpop.f32.mrb[0].mxu0
  %2900 = vmatprep.mubr.bf16.mxu0 %v2460
  %2901 = vmatmul.mubr.bf16.gmra.mrb[0].mxu0 %v2459
  %v2902 = vpop.f32.mrb[0].mxu0
  %v2903 = vadd.f32 %v2553, %v2902
  %v2904 = vpop.f32.mrb[0].mxu0
  %v2905 = vpop.f32.mrb[0].mxu0
  %v2906 = vadd.f32 %v2553, %v2905
  %v2907 = vpop.f32.mrb[0].mxu0
  %2908 = vmatprep.mubr.bf16.mxu0 %v2463
  %2909 = vmatmul.mubr.bf16.gmra.mrb[0].mxu0 %v2462
  %v2910 = vpop.f32.mrb[0].mxu0
  %v2911 = vadd.f32 %v2553, %v2910
  %v2912 = vpop.f32.mrb[0].mxu0
  %v2913 = vpop.f32.mrb[0].mxu0
  %v2914 = vadd.f32 %v2553, %v2913
  %v2915 = vpop.f32.mrb[0].mxu0
  %2916 = vmatprep.mubr.bf16.mxu0 %v2466
  %2917 = vmatmul.mubr.bf16.gmra.mrb[0].mxu0 %v2465
  %v2918 = vpop.f32.mrb[0].mxu0
  %v2919 = vadd.f32 %v2553, %v2918
  %v2920 = vpop.f32.mrb[0].mxu0
  %v2921 = vpop.f32.mrb[0].mxu0
  %v2922 = vadd.f32 %v2553, %v2921
  %v2923 = vpop.f32.mrb[0].mxu0
  %2924 = vmatprep.mubr.bf16.mxu0 %v2469
  %2925 = vmatmul.mubr.bf16.gmra.mrb[0].mxu0 %v2468
  %v2926 = vpop.f32.mrb[0].mxu0
  %v2927 = vadd.f32 %v2553, %v2926
  %v2928 = vpop.f32.mrb[0].mxu0
  %v2929 = vpop.f32.mrb[0].mxu0
  %v2930 = vadd.f32 %v2553, %v2929
  %v2931 = vpop.f32.mrb[0].mxu0
  %2932 = vmatprep.mubr.bf16.mxu0 %v2472
  %2933 = vmatmul.mubr.bf16.gmra.mrb[0].mxu0 %v2471
  %v2934 = vpop.f32.mrb[0].mxu0
  %v2935 = vadd.f32 %v2553, %v2934
  %v2936 = vpop.f32.mrb[0].mxu0
  %v2937 = vpop.f32.mrb[0].mxu0
  %v2938 = vadd.f32 %v2553, %v2937
  %v2939 = vpop.f32.mrb[0].mxu0
  %2940 = vmatprep.mubr.bf16.mxu0 %v2475
  %2941 = vmatmul.mubr.bf16.gmra.mrb[0].mxu0 %v2474
  %v2942 = vpop.f32.mrb[0].mxu0
  %v2943 = vadd.f32 %v2553, %v2942
  %v2944 = vpop.f32.mrb[0].mxu0
  %v2945 = vpop.f32.mrb[0].mxu0
  %v2946 = vadd.f32 %v2553, %v2945
  %v2947 = vpop.f32.mrb[0].mxu0
  %2948 = vmatprep.mubr.bf16.mxu0 %v2478
  %2949 = vmatmul.mubr.bf16.gmra.mrb[0].mxu0 %v2477
  %v2950 = vpop.f32.mrb[0].mxu0
  %v2951 = vadd.f32 %v2553, %v2950
  %v2952 = vpop.f32.mrb[0].mxu0
  %v2953 = vpop.f32.mrb[0].mxu0
  %v2954 = vadd.f32 %v2553, %v2953
  %v2955 = vpop.f32.mrb[0].mxu0
  %2956 = vmatprep.mubr.bf16.mxu0 %v2481
  %2957 = vmatmul.mubr.bf16.gmra.mrb[0].mxu0 %v2480
  %v2958 = vpop.f32.mrb[0].mxu0
  %v2959 = vadd.f32 %v2553, %v2958
  %v2960 = vpop.f32.mrb[0].mxu0
  %v2961 = vpop.f32.mrb[0].mxu0
  %v2962 = vadd.f32 %v2553, %v2961
  %v2963 = vpop.f32.mrb[0].mxu0
  %2964 = vmatprep.mubr.bf16.mxu0 %v2484
  %2965 = vmatmul.mubr.bf16.gmra.mrb[0].mxu0 %v2483
  %v2966 = vpop.f32.mrb[0].mxu0
  %v2967 = vadd.f32 %v2553, %v2966
  %v2968 = vpop.f32.mrb[0].mxu0
  %v2969 = vpop.f32.mrb[0].mxu0
  %v2970 = vadd.f32 %v2553, %v2969
  %v2971 = vpop.f32.mrb[0].mxu0
  %2972 = vmatprep.mubr.bf16.mxu0 %v2487
  %2973 = vmatmul.mubr.bf16.gmra.mrb[0].mxu0 %v2486
  %v2974 = vpop.f32.mrb[0].mxu0
  %v2975 = vadd.f32 %v2553, %v2974
  %v2976 = vpop.f32.mrb[0].mxu0
  %v2977 = vpop.f32.mrb[0].mxu0
  %v2978 = vadd.f32 %v2553, %v2977
  %v2979 = vpop.f32.mrb[0].mxu0
  %2980 = vmatprep.mubr.bf16.mxu0 %v2490
  %2981 = vmatmul.mubr.bf16.gmra.mrb[0].mxu0 %v2489
  %v2982 = vpop.f32.mrb[0].mxu0
  %v2983 = vadd.f32 %v2553, %v2982
  %v2984 = vpop.f32.mrb[0].mxu0
  %v2985 = vpop.f32.mrb[0].mxu0
  %v2986 = vadd.f32 %v2553, %v2985
  %v2987 = vpop.f32.mrb[0].mxu0
  %2988 = vmatprep.mubr.bf16.mxu0 %v2493
  %2989 = vmatmul.mubr.bf16.gmra.mrb[0].mxu0 %v2492
  %v2990 = vpop.f32.mrb[0].mxu0
  %v2991 = vadd.f32 %v2553, %v2990
  %v2992 = vpop.f32.mrb[0].mxu0
  %v2993 = vpop.f32.mrb[0].mxu0
  %v2994 = vadd.f32 %v2553, %v2993
  %v2995 = vpop.f32.mrb[0].mxu0
  %2996 = vmatprep.mubr.bf16.mxu0 %v2496
  %2997 = vmatmul.mubr.bf16.gmra.mrb[0].mxu0 %v2495
  %v2998 = vpop.f32.mrb[0].mxu0
  %v2999 = vadd.f32 %v2553, %v2998
  %v3000 = vpop.f32.mrb[0].mxu0
  %v3001 = vpop.f32.mrb[0].mxu0
  %v3002 = vadd.f32 %v2553, %v3001
  %v3003 = vpop.f32.mrb[0].mxu0
  %3004 = vmatprep.mubr.bf16.mxu0 %v2499
  %3005 = vmatmul.mubr.bf16.gmra.mrb[0].mxu0 %v2498
  %v3006 = vpop.f32.mrb[0].mxu0
  %v3007 = vadd.f32 %v2553, %v3006
  %v3008 = vpop.f32.mrb[0].mxu0
  %v3009 = vpop.f32.mrb[0].mxu0
  %v3010 = vadd.f32 %v2553, %v3009
  %v3011 = vpop.f32.mrb[0].mxu0
  %3012 = vmatprep.mubr.bf16.mxu0 %v2502
  %3013 = vmatmul.mubr.bf16.gmra.mrb[0].mxu0 %v2501
  %v3014 = vpop.f32.mrb[0].mxu0
  %v3015 = vadd.f32 %v2553, %v3014
  %v3016 = vpop.f32.mrb[0].mxu0
  %v3017 = vpop.f32.mrb[0].mxu0
  %v3018 = vadd.f32 %v2553, %v3017
  %v3019 = vpop.f32.mrb[0].mxu0
  %3020 = vmatprep.mubr.bf16.mxu0 %v2505
  %3021 = vmatmul.mubr.bf16.gmra.mrb[0].mxu0 %v2504
  %v3022 = vpop.f32.mrb[0].mxu0
  %v3023 = vadd.f32 %v2553, %v3022
  %v3024 = vpop.f32.mrb[0].mxu0
  %v3025 = vpop.f32.mrb[0].mxu0
  %v3026 = vadd.f32 %v2553, %v3025
  %v3027 = vpop.f32.mrb[0].mxu0
  %3028 = vmatprep.mubr.bf16.mxu0 %v2508
  %3029 = vmatmul.mubr.bf16.gmra.mrb[0].mxu0 %v2507
  %v3030 = vpop.f32.mrb[0].mxu0
  %v3031 = vadd.f32 %v2553, %v3030
  %v3032 = vpop.f32.mrb[0].mxu0
  %v3033 = vpop.f32.mrb[0].mxu0
  %v3034 = vadd.f32 %v2553, %v3033
  %v3035 = vpop.f32.mrb[0].mxu0
  %3036 = vmatprep.mubr.bf16.mxu0 %v2511
  %3037 = vmatmul.mubr.bf16.gmra.mrb[0].mxu0 %v2510
  %v3038 = vpop.f32.mrb[0].mxu0
  %v3039 = vadd.f32 %v2553, %v3038
  %v3040 = vpop.f32.mrb[0].mxu0
  %v3041 = vpop.f32.mrb[0].mxu0
  %v3042 = vadd.f32 %v2553, %v3041
  %v3043 = vpop.f32.mrb[0].mxu0
  %3044 = vdwg.mxu0
  %3045 = vmatprep.subr.bf16.mxu0 0
  %3046 = vmatpush1.bf16.msra.mxu0 %v2643
  %3047 = vmatprep.subr.bf16.mxu0 0
  %3048 = vmatpush1.bf16.msra.mxu0 %v2644
  %3049 = vmatprep.subr.bf16.mxu0 0
  %3050 = vmatpush1.bf16.msra.mxu0 0
  %3051 = vmatprep.subr.bf16.mxu0 0
  %3052 = vmatpush1.bf16.msra.mxu0 0
  %3053 = vmatprep.subr.bf16.mxu0 0
  %3054 = vmatpush1.bf16.msra.mxu0 0
  %3055 = vmatprep.subr.bf16.mxu0 0
  %3056 = vmatpush1.bf16.msra.mxu0 0
  %3057 = vmatprep.subr.bf16.mxu0 0
  %3058 = vmatpush1.bf16.msra.mxu0 0
  %3059 = vmatprep.subr.bf16.mxu0 0
  %3060 = vmatpush1.bf16.msra.mxu0 0
  %3061 = vmatprep.subr.bf16.mxu0 0
  %3062 = vmatpush1.bf16.msra.mxu0 0
  %3063 = vmatprep.subr.bf16.mxu0 0
  %3064 = vmatpush1.bf16.msra.mxu0 0
  %3065 = vmatprep.subr.bf16.mxu0 0
  %3066 = vmatpush1.bf16.msra.mxu0 0
  %3067 = vmatprep.subr.bf16.mxu0 0
  %3068 = vmatpush1.bf16.msra.mxu0 0
  %3069 = vmatprep.subr.bf16.mxu0 0
  %3070 = vmatpush1.bf16.msra.mxu0 0
  %3071 = vmatprep.subr.bf16.mxu0 0
  %3072 = vmatpush1.bf16.msra.mxu0 0
  %3073 = vmatprep.subr.bf16.mxu0 0
  %3074 = vmatpush1.bf16.msra.mxu0 0
  %3075 = vmatprep.subr.bf16.mxu0 0
  %3076 = vmatpush1.bf16.msra.mxu0 0
  %3077 = vmatprep.mubr.bf16.mxu0 0
  %3078 = vmatmul.mubr.bf16.gmra.mrb[0].mxu0 %v2664
  %v3079 = vpop.f32.mrb[0].mxu0
  %v3080 = vadd.f32 %v2791, %v3079
  %v3081 = vpop.f32.mrb[0].mxu0
  %v3082 = vpop.f32.mrb[0].mxu0
  %v3083 = vadd.f32 %v2794, %v3082
  %v3084 = vpop.f32.mrb[0].mxu0
  %3085 = vmatprep.mubr.bf16.mxu0 0
  %3086 = vmatmul.mubr.bf16.gmra.mrb[0].mxu0 %v2667
  %v3087 = vpop.f32.mrb[0].mxu0
  %v3088 = vadd.f32 %v2799, %v3087
  %v3089 = vpop.f32.mrb[0].mxu0
  %v3090 = vpop.f32.mrb[0].mxu0
  %v3091 = vadd.f32 %v2802, %v3090
  %v3092 = vpop.f32.mrb[0].mxu0
  %3093 = vmatprep.mubr.bf16.mxu0 0
  %3094 = vmatmul.mubr.bf16.gmra.mrb[0].mxu0 %v2670
  %v3095 = vpop.f32.mrb[0].mxu0
  %v3096 = vadd.f32 %v2807, %v3095
  %v3097 = vpop.f32.mrb[0].mxu0
  %v3098 = vpop.f32.mrb[0].mxu0
  %v3099 = vadd.f32 %v2810, %v3098
  %v3100 = vpop.f32.mrb[0].mxu0
  %3101 = vmatprep.mubr.bf16.mxu0 0
  %3102 = vmatmul.mubr.bf16.gmra.mrb[0].mxu0 %v2673
  %v3103 = vpop.f32.mrb[0].mxu0
  %v3104 = vadd.f32 %v2815, %v3103
  %v3105 = vpop.f32.mrb[0].mxu0
  %v3106 = vpop.f32.mrb[0].mxu0
  %v3107 = vadd.f32 %v2818, %v3106
  %v3108 = vpop.f32.mrb[0].mxu0
  %3109 = vmatprep.mubr.bf16.mxu0 0
  %3110 = vmatmul.mubr.bf16.gmra.mrb[0].mxu0 %v2676
  %v3111 = vpop.f32.mrb[0].mxu0
  %v3112 = vadd.f32 %v2823, %v3111
  %v3113 = vpop.f32.mrb[0].mxu0
  %v3114 = vpop.f32.mrb[0].mxu0
  %v3115 = vadd.f32 %v2826, %v3114
  %v3116 = vpop.f32.mrb[0].mxu0
  %3117 = vmatprep.mubr.bf16.mxu0 0
  %3118 = vmatmul.mubr.bf16.gmra.mrb[0].mxu0 %v2679
  %v3119 = vpop.f32.mrb[0].mxu0
  %v3120 = vadd.f32 %v2831, %v3119
  %v3121 = vpop.f32.mrb[0].mxu0
  %v3122 = vpop.f32.mrb[0].mxu0
  %v3123 = vadd.f32 %v2834, %v3122
  %v3124 = vpop.f32.mrb[0].mxu0
  %3125 = vmatprep.mubr.bf16.mxu0 0
  %3126 = vmatmul.mubr.bf16.gmra.mrb[0].mxu0 %v2682
  %v3127 = vpop.f32.mrb[0].mxu0
  %v3128 = vadd.f32 %v2839, %v3127
  %v3129 = vpop.f32.mrb[0].mxu0
  %v3130 = vpop.f32.mrb[0].mxu0
  %v3131 = vadd.f32 %v2842, %v3130
  %v3132 = vpop.f32.mrb[0].mxu0
  %3133 = vmatprep.mubr.bf16.mxu0 0
  %3134 = vmatmul.mubr.bf16.gmra.mrb[0].mxu0 %v2685
  %v3135 = vpop.f32.mrb[0].mxu0
  %v3136 = vadd.f32 %v2847, %v3135
  %v3137 = vpop.f32.mrb[0].mxu0
  %v3138 = vpop.f32.mrb[0].mxu0
  %v3139 = vadd.f32 %v2850, %v3138
  %v3140 = vpop.f32.mrb[0].mxu0
  %3141 = vmatprep.mubr.bf16.mxu0 0
  %3142 = vmatmul.mubr.bf16.gmra.mrb[0].mxu0 %v2688
  %v3143 = vpop.f32.mrb[0].mxu0
  %v3144 = vadd.f32 %v2855, %v3143
  %v3145 = vpop.f32.mrb[0].mxu0
  %v3146 = vpop.f32.mrb[0].mxu0
  %v3147 = vadd.f32 %v2858, %v3146
  %v3148 = vpop.f32.mrb[0].mxu0
  %3149 = vmatprep.mubr.bf16.mxu0 0
  %3150 = vmatmul.mubr.bf16.gmra.mrb[0].mxu0 %v2691
  %v3151 = vpop.f32.mrb[0].mxu0
  %v3152 = vadd.f32 %v2863, %v3151
  %v3153 = vpop.f32.mrb[0].mxu0
  %v3154 = vpop.f32.mrb[0].mxu0
  %v3155 = vadd.f32 %v2866, %v3154
  %v3156 = vpop.f32.mrb[0].mxu0
  %3157 = vmatprep.mubr.bf16.mxu0 0
  %3158 = vmatmul.mubr.bf16.gmra.mrb[0].mxu0 %v2694
  %v3159 = vpop.f32.mrb[0].mxu0
  %v3160 = vadd.f32 %v2871, %v3159
  %v3161 = vpop.f32.mrb[0].mxu0
  %v3162 = vpop.f32.mrb[0].mxu0
  %v3163 = vadd.f32 %v2874, %v3162
  %v3164 = vpop.f32.mrb[0].mxu0
  %3165 = vmatprep.mubr.bf16.mxu0 0
  %3166 = vmatmul.mubr.bf16.gmra.mrb[0].mxu0 %v2697
  %v3167 = vpop.f32.mrb[0].mxu0
  %v3168 = vadd.f32 %v2879, %v3167
  %v3169 = vpop.f32.mrb[0].mxu0
  %v3170 = vpop.f32.mrb[0].mxu0
  %v3171 = vadd.f32 %v2882, %v3170
  %v3172 = vpop.f32.mrb[0].mxu0
  %3173 = vmatprep.mubr.bf16.mxu0 0
  %3174 = vmatmul.mubr.bf16.gmra.mrb[0].mxu0 %v2700
  %v3175 = vpop.f32.mrb[0].mxu0
  %v3176 = vadd.f32 %v2887, %v3175
  %v3177 = vpop.f32.mrb[0].mxu0
  %v3178 = vpop.f32.mrb[0].mxu0
  %v3179 = vadd.f32 %v2890, %v3178
  %v3180 = vpop.f32.mrb[0].mxu0
  %3181 = vmatprep.mubr.bf16.mxu0 0
  %3182 = vmatmul.mubr.bf16.gmra.mrb[0].mxu0 %v2703
  %v3183 = vpop.f32.mrb[0].mxu0
  %v3184 = vadd.f32 %v2895, %v3183
  %v3185 = vpop.f32.mrb[0].mxu0
  %v3186 = vpop.f32.mrb[0].mxu0
  %v3187 = vadd.f32 %v2898, %v3186
  %v3188 = vpop.f32.mrb[0].mxu0
  %3189 = vmatprep.mubr.bf16.mxu0 0
  %3190 = vmatmul.mubr.bf16.gmra.mrb[0].mxu0 %v2706
  %v3191 = vpop.f32.mrb[0].mxu0
  %v3192 = vadd.f32 %v2903, %v3191
  %v3193 = vpop.f32.mrb[0].mxu0
  %v3194 = vpop.f32.mrb[0].mxu0
  %v3195 = vadd.f32 %v2906, %v3194
  %v3196 = vpop.f32.mrb[0].mxu0
  %3197 = vmatprep.mubr.bf16.mxu0 0
  %3198 = vmatmul.mubr.bf16.gmra.mrb[0].mxu0 %v2709
  %v3199 = vpop.f32.mrb[0].mxu0
  %v3200 = vadd.f32 %v2911, %v3199
  %v3201 = vpop.f32.mrb[0].mxu0
  %v3202 = vpop.f32.mrb[0].mxu0
  %v3203 = vadd.f32 %v2914, %v3202
  %v3204 = vpop.f32.mrb[0].mxu0
  %3205 = vmatprep.mubr.bf16.mxu0 0
  %3206 = vmatmul.mubr.bf16.gmra.mrb[0].mxu0 %v2712
  %v3207 = vpop.f32.mrb[0].mxu0
  %v3208 = vadd.f32 %v2919, %v3207
  %v3209 = vpop.f32.mrb[0].mxu0
  %v3210 = vpop.f32.mrb[0].mxu0
  %v3211 = vadd.f32 %v2922, %v3210
  %v3212 = vpop.f32.mrb[0].mxu0
  %3213 = vmatprep.mubr.bf16.mxu0 0
  %3214 = vmatmul.mubr.bf16.gmra.mrb[0].mxu0 %v2715
  %v3215 = vpop.f32.mrb[0].mxu0
  %v3216 = vadd.f32 %v2927, %v3215
  %v3217 = vpop.f32.mrb[0].mxu0
  %v3218 = vpop.f32.mrb[0].mxu0
  %v3219 = vadd.f32 %v2930, %v3218
  %v3220 = vpop.f32.mrb[0].mxu0
  %3221 = vmatprep.mubr.bf16.mxu0 0
  %3222 = vmatmul.mubr.bf16.gmra.mrb[0].mxu0 %v2718
  %v3223 = vpop.f32.mrb[0].mxu0
  %v3224 = vadd.f32 %v2935, %v3223
  %v3225 = vpop.f32.mrb[0].mxu0
  %v3226 = vpop.f32.mrb[0].mxu0
  %v3227 = vadd.f32 %v2938, %v3226
  %v3228 = vpop.f32.mrb[0].mxu0
  %3229 = vmatprep.mubr.bf16.mxu0 0
  %3230 = vmatmul.mubr.bf16.gmra.mrb[0].mxu0 %v2721
  %v3231 = vpop.f32.mrb[0].mxu0
  %v3232 = vadd.f32 %v2943, %v3231
  %v3233 = vpop.f32.mrb[0].mxu0
  %v3234 = vpop.f32.mrb[0].mxu0
  %v3235 = vadd.f32 %v2946, %v3234
  %v3236 = vpop.f32.mrb[0].mxu0
  %3237 = vmatprep.mubr.bf16.mxu0 0
  %3238 = vmatmul.mubr.bf16.gmra.mrb[0].mxu0 %v2724
  %v3239 = vpop.f32.mrb[0].mxu0
  %v3240 = vadd.f32 %v2951, %v3239
  %v3241 = vpop.f32.mrb[0].mxu0
  %v3242 = vpop.f32.mrb[0].mxu0
  %v3243 = vadd.f32 %v2954, %v3242
  %v3244 = vpop.f32.mrb[0].mxu0
  %3245 = vmatprep.mubr.bf16.mxu0 0
  %3246 = vmatmul.mubr.bf16.gmra.mrb[0].mxu0 %v2727
  %v3247 = vpop.f32.mrb[0].mxu0
  %v3248 = vadd.f32 %v2959, %v3247
  %v3249 = vpop.f32.mrb[0].mxu0
  %v3250 = vpop.f32.mrb[0].mxu0
  %v3251 = vadd.f32 %v2962, %v3250
  %v3252 = vpop.f32.mrb[0].mxu0
  %3253 = vmatprep.mubr.bf16.mxu0 0
  %3254 = vmatmul.mubr.bf16.gmra.mrb[0].mxu0 %v2730
  %v3255 = vpop.f32.mrb[0].mxu0
  %v3256 = vadd.f32 %v2967, %v3255
  %v3257 = vpop.f32.mrb[0].mxu0
  %v3258 = vpop.f32.mrb[0].mxu0
  %v3259 = vadd.f32 %v2970, %v3258
  %v3260 = vpop.f32.mrb[0].mxu0
  %3261 = vmatprep.mubr.bf16.mxu0 0
  %3262 = vmatmul.mubr.bf16.gmra.mrb[0].mxu0 %v2733
  %v3263 = vpop.f32.mrb[0].mxu0
  %v3264 = vadd.f32 %v2975, %v3263
  %v3265 = vpop.f32.mrb[0].mxu0
  %v3266 = vpop.f32.mrb[0].mxu0
  %v3267 = vadd.f32 %v2978, %v3266
  %v3268 = vpop.f32.mrb[0].mxu0
  %3269 = vmatprep.mubr.bf16.mxu0 0
  %3270 = vmatmul.mubr.bf16.gmra.mrb[0].mxu0 %v2736
  %v3271 = vpop.f32.mrb[0].mxu0
  %v3272 = vadd.f32 %v2983, %v3271
  %v3273 = vpop.f32.mrb[0].mxu0
  %v3274 = vpop.f32.mrb[0].mxu0
  %v3275 = vadd.f32 %v2986, %v3274
  %v3276 = vpop.f32.mrb[0].mxu0
  %3277 = vmatprep.mubr.bf16.mxu0 0
  %3278 = vmatmul.mubr.bf16.gmra.mrb[0].mxu0 %v2739
  %v3279 = vpop.f32.mrb[0].mxu0
  %v3280 = vadd.f32 %v2991, %v3279
  %v3281 = vpop.f32.mrb[0].mxu0
  %v3282 = vpop.f32.mrb[0].mxu0
  %v3283 = vadd.f32 %v2994, %v3282
  %v3284 = vpop.f32.mrb[0].mxu0
  %3285 = vmatprep.mubr.bf16.mxu0 0
  %3286 = vmatmul.mubr.bf16.gmra.mrb[0].mxu0 %v2742
  %v3287 = vpop.f32.mrb[0].mxu0
  %v3288 = vadd.f32 %v2999, %v3287
  %v3289 = vpop.f32.mrb[0].mxu0
  %v3290 = vpop.f32.mrb[0].mxu0
  %v3291 = vadd.f32 %v3002, %v3290
  %v3292 = vpop.f32.mrb[0].mxu0
  %3293 = vmatprep.mubr.bf16.mxu0 0
  %3294 = vmatmul.mubr.bf16.gmra.mrb[0].mxu0 %v2745
  %v3295 = vpop.f32.mrb[0].mxu0
  %v3296 = vadd.f32 %v3007, %v3295
  %v3297 = vpop.f32.mrb[0].mxu0
  %v3298 = vpop.f32.mrb[0].mxu0
  %v3299 = vadd.f32 %v3010, %v3298
  %v3300 = vpop.f32.mrb[0].mxu0
  %3301 = vmatprep.mubr.bf16.mxu0 0
  %3302 = vmatmul.mubr.bf16.gmra.mrb[0].mxu0 %v2748
  %v3303 = vpop.f32.mrb[0].mxu0
  %v3304 = vadd.f32 %v3015, %v3303
  %v3305 = vpop.f32.mrb[0].mxu0
  %v3306 = vpop.f32.mrb[0].mxu0
  %v3307 = vadd.f32 %v3018, %v3306
  %v3308 = vpop.f32.mrb[0].mxu0
  %3309 = vmatprep.mubr.bf16.mxu0 0
  %3310 = vmatmul.mubr.bf16.gmra.mrb[0].mxu0 %v2751
  %v3311 = vpop.f32.mrb[0].mxu0
  %v3312 = vadd.f32 %v3023, %v3311
  %v3313 = vpop.f32.mrb[0].mxu0
  %v3314 = vpop.f32.mrb[0].mxu0
  %v3315 = vadd.f32 %v3026, %v3314
  %v3316 = vpop.f32.mrb[0].mxu0
  %3317 = vmatprep.mubr.bf16.mxu0 0
  %3318 = vmatmul.mubr.bf16.gmra.mrb[0].mxu0 %v2754
  %v3319 = vpop.f32.mrb[0].mxu0
  %v3320 = vadd.f32 %v3031, %v3319
  %v3321 = vpop.f32.mrb[0].mxu0
  %v3322 = vpop.f32.mrb[0].mxu0
  %v3323 = vadd.f32 %v3034, %v3322
  %v3324 = vpop.f32.mrb[0].mxu0
  %3325 = vmatprep.mubr.bf16.mxu0 0
  %3326 = vmatmul.mubr.bf16.gmra.mrb[0].mxu0 %v2709
  %v3327 = vpop.f32.mrb[0].mxu0
  %v3328 = vadd.f32 %v3039, %v3327
  %v3329 = vpop.f32.mrb[0].mxu0
  %v3330 = vpop.f32.mrb[0].mxu0
  %v3331 = vadd.f32 %v3042, %v3330
  %v3332 = vpop.f32.mrb[0].mxu0
  %3333 = vdwg.mxu0
  %v3334 = vmax.f32 %v3080, 0.0
  %v3335 = vmax.f32 %v3083, 0.0
  %v3336 = vmax.f32 %v3088, 0.0
  %v3337 = vmax.f32 %v3091, 0.0
  %v3338 = vmax.f32 %v3096, 0.0
  %v3339 = vmax.f32 %v3099, 0.0
  %v3340 = vmax.f32 %v3104, 0.0
  %v3341 = vmax.f32 %v3107, 0.0
  %v3342 = vmax.f32 %v3112, 0.0
  %v3343 = vmax.f32 %v3115, 0.0
  %v3344 = vmax.f32 %v3120, 0.0
  %v3345 = vmax.f32 %v3123, 0.0
  %v3346 = vmax.f32 %v3128, 0.0
  %v3347 = vmax.f32 %v3131, 0.0
  %v3348 = vmax.f32 %v3136, 0.0
  %v3349 = vmax.f32 %v3139, 0.0
  %v3350 = vmax.f32 %v3144, 0.0
  %v3351 = vmax.f32 %v3147, 0.0
  %v3352 = vmax.f32 %v3152, 0.0
  %v3353 = vmax.f32 %v3155, 0.0
  %v3354 = vmax.f32 %v3160, 0.0
  %v3355 = vmax.f32 %v3163, 0.0
  %v3356 = vmax.f32 %v3168, 0.0
  %v3357 = vmax.f32 %v3171, 0.0
  %v3358 = vmax.f32 %v3176, 0.0
  %v3359 = vmax.f32 %v3179, 0.0
  %v3360 = vmax.f32 %v3184, 0.0
  %v3361 = vmax.f32 %v3187, 0.0
  %v3362 = vmax.f32 %v3192, 0.0
  %v3363 = vmax.f32 %v3195, 0.0
  %v3364 = vmax.f32 %v3200, 0.0
  %v3365 = vmax.f32 %v3203, 0.0
  %v3366 = vmax.f32 %v3208, 0.0
  %v3367 = vmax.f32 %v3211, 0.0
  %v3368 = vmax.f32 %v3216, 0.0
  %v3369 = vmax.f32 %v3219, 0.0
  %v3370 = vmax.f32 %v3224, 0.0
  %v3371 = vmax.f32 %v3227, 0.0
  %v3372 = vmax.f32 %v3232, 0.0
  %v3373 = vmax.f32 %v3235, 0.0
  %v3374 = vmax.f32 %v3240, 0.0
  %v3375 = vmax.f32 %v3243, 0.0
  %v3376 = vmax.f32 %v3248, 0.0
  %v3377 = vmax.f32 %v3251, 0.0
  %v3378 = vmax.f32 %v3256, 0.0
  %v3379 = vmax.f32 %v3259, 0.0
  %v3380 = vmax.f32 %v3264, 0.0
  %v3381 = vmax.f32 %v3267, 0.0
  %v3382 = vmax.f32 %v3272, 0.0
  %v3383 = vmax.f32 %v3275, 0.0
  %v3384 = vmax.f32 %v3280, 0.0
  %v3385 = vmax.f32 %v3283, 0.0
  %v3386 = vmax.f32 %v3288, 0.0
  %v3387 = vmax.f32 %v3291, 0.0
  %v3388 = vmax.f32 %v3296, 0.0
  %v3389 = vmax.f32 %v3299, 0.0
  %v3390 = vmax.f32 %v3304, 0.0
  %v3391 = vmax.f32 %v3307, 0.0
  %v3392 = vmax.f32 %v3312, 0.0
  %v3393 = vmax.f32 %v3315, 0.0
  %v3394 = vmax.f32 %v3320, 0.0
  %v3395 = vmax.f32 %v3323, 0.0
  %v3396 = vmax.f32 %v3328, 0.0
  %v3397 = vmax.f32 %v3331, 0.0
  %v3462 = vrot.slane %v3334, 7
  %v3463 = vrot.slane %v3335, 7
  %v3464 = vsel %vm149, %v3462, %v3463
  %v3465 = vrot.slane %v3336, 7
  %v3466 = vrot.slane %v3337, 7
  %v3467 = vsel %vm149, %v3465, %v3466
  %v3468 = vrot.slane %v3338, 7
  %v3469 = vrot.slane %v3339, 7
  %v3470 = vsel %vm149, %v3468, %v3469
  %v3471 = vrot.slane %v3340, 7
  %v3472 = vrot.slane %v3341, 7
  %v3473 = vsel %vm149, %v3471, %v3472
  %v3474 = vrot.slane %v3342, 7
  %v3475 = vrot.slane %v3343, 7
  %v3476 = vsel %vm149, %v3474, %v3475
  %v3477 = vrot.slane %v3344, 7
  %v3478 = vrot.slane %v3345, 7
  %v3479 = vsel %vm149, %v3477, %v3478
  %v3480 = vrot.slane %v3346, 7
  %v3481 = vrot.slane %v3347, 7
  %v3482 = vsel %vm149, %v3480, %v3481
  %v3483 = vrot.slane %v3348, 7
  %v3484 = vrot.slane %v3349, 7
  %v3485 = vsel %vm149, %v3483, %v3484
  %v3486 = vrot.slane %v3350, 7
  %v3487 = vrot.slane %v3351, 7
  %v3488 = vsel %vm149, %v3486, %v3487
  %v3489 = vrot.slane %v3352, 7
  %v3490 = vrot.slane %v3353, 7
  %v3491 = vsel %vm149, %v3489, %v3490
  %v3492 = vrot.slane %v3354, 7
  %v3493 = vrot.slane %v3355, 7
  %v3494 = vsel %vm149, %v3492, %v3493
  %v3495 = vrot.slane %v3356, 7
  %v3496 = vrot.slane %v3357, 7
  %v3497 = vsel %vm149, %v3495, %v3496
  %v3498 = vrot.slane %v3358, 7
  %v3499 = vrot.slane %v3359, 7
  %v3500 = vsel %vm149, %v3498, %v3499
  %v3501 = vrot.slane %v3360, 7
  %v3502 = vrot.slane %v3361, 7
  %v3503 = vsel %vm149, %v3501, %v3502
  %v3504 = vrot.slane %v3362, 7
  %v3505 = vrot.slane %v3363, 7
  %v3506 = vsel %vm149, %v3504, %v3505
  %v3507 = vrot.slane %v3364, 7
  %v3508 = vrot.slane %v3365, 7
  %v3509 = vsel %vm149, %v3507, %v3508
  %v3510 = vrot.slane %v3366, 7
  %v3511 = vrot.slane %v3367, 7
  %v3512 = vsel %vm149, %v3510, %v3511
  %v3513 = vrot.slane %v3368, 7
  %v3514 = vrot.slane %v3369, 7
  %v3515 = vsel %vm149, %v3513, %v3514
  %v3516 = vrot.slane %v3370, 7
  %v3517 = vrot.slane %v3371, 7
  %v3518 = vsel %vm149, %v3516, %v3517
  %v3519 = vrot.slane %v3372, 7
  %v3520 = vrot.slane %v3373, 7
  %v3521 = vsel %vm149, %v3519, %v3520
  %v3522 = vrot.slane %v3374, 7
  %v3523 = vrot.slane %v3375, 7
  %v3524 = vsel %vm149, %v3522, %v3523
  %v3525 = vrot.slane %v3376, 7
  %v3526 = vrot.slane %v3377, 7
  %v3527 = vsel %vm149, %v3525, %v3526
  %v3528 = vrot.slane %v3378, 7
  %v3529 = vrot.slane %v3379, 7
  %v3530 = vsel %vm149, %v3528, %v3529
  %v3531 = vrot.slane %v3380, 7
  %v3532 = vrot.slane %v3381, 7
  %v3533 = vsel %vm149, %v3531, %v3532
  %v3534 = vrot.slane %v3382, 7
  %v3535 = vrot.slane %v3383, 7
  %v3536 = vsel %vm149, %v3534, %v3535
  %v3537 = vrot.slane %v3384, 7
  %v3538 = vrot.slane %v3385, 7
  %v3539 = vsel %vm149, %v3537, %v3538
  %v3540 = vrot.slane %v3386, 7
  %v3541 = vrot.slane %v3387, 7
  %v3542 = vsel %vm149, %v3540, %v3541
  %v3543 = vrot.slane %v3388, 7
  %v3544 = vrot.slane %v3389, 7
  %v3545 = vsel %vm149, %v3543, %v3544
  %v3546 = vrot.slane %v3390, 7
  %v3547 = vrot.slane %v3391, 7
  %v3548 = vsel %vm149, %v3546, %v3547
  %v3549 = vrot.slane %v3392, 7
  %v3550 = vrot.slane %v3393, 7
  %v3551 = vsel %vm149, %v3549, %v3550
  %v3552 = vrot.slane %v3394, 7
  %v3553 = vrot.slane %v3395, 7
  %v3554 = vsel %vm149, %v3552, %v3553
  %v3555 = vrot.slane %v3396, 7
  %v3556 = vrot.slane %v3397, 7
  %v3557 = vsel %vm149, %v3555, %v3556
  %v3652 = vsel %vm149, 0.0, %v3462
  %v3653 = vsel %vm149, 0.0, %v3465
  %v3654 = vsel %vm149, 0.0, %v3468
  %v3655 = vsel %vm149, 0.0, %v3471
  %v3656 = vsel %vm149, 0.0, %v3474
  %v3657 = vsel %vm149, 0.0, %v3477
  %v3658 = vsel %vm149, 0.0, %v3480
  %v3659 = vsel %vm149, 0.0, %v3483
  %v3660 = vsel %vm149, 0.0, %v3486
  %v3661 = vsel %vm149, 0.0, %v3489
  %v3662 = vsel %vm149, 0.0, %v3492
  %v3663 = vsel %vm149, 0.0, %v3495
  %v3664 = vsel %vm149, 0.0, %v3498
  %v3665 = vsel %vm149, 0.0, %v3501
  %v3666 = vsel %vm149, 0.0, %v3504
  %v3667 = vsel %vm149, 0.0, %v3507
  %v3668 = vsel %vm149, 0.0, %v3510
  %v3669 = vsel %vm149, 0.0, %v3513
  %v3670 = vsel %vm149, 0.0, %v3516
  %v3671 = vsel %vm149, 0.0, %v3519
  %v3672 = vsel %vm149, 0.0, %v3522
  %v3673 = vsel %vm149, 0.0, %v3525
  %v3674 = vsel %vm149, 0.0, %v3528
  %v3675 = vsel %vm149, 0.0, %v3531
  %v3676 = vsel %vm149, 0.0, %v3534
  %v3677 = vsel %vm149, 0.0, %v3537
  %v3678 = vsel %vm149, 0.0, %v3540
  %v3679 = vsel %vm149, 0.0, %v3543
  %v3680 = vsel %vm149, 0.0, %v3546
  %v3681 = vsel %vm149, 0.0, %v3549
  %v3682 = vsel %vm149, 0.0, %v3552
  %v3683 = vsel %vm149, 0.0, %v3555
  %v3684 = vsel %vm149, %v3463, 0.0
  %v3685 = vsel %vm149, %v3466, 0.0
  %v3686 = vsel %vm149, %v3469, 0.0
  %v3687 = vsel %vm149, %v3472, 0.0
  %v3688 = vsel %vm149, %v3475, 0.0
  %v3689 = vsel %vm149, %v3478, 0.0
  %v3690 = vsel %vm149, %v3481, 0.0
  %v3691 = vsel %vm149, %v3484, 0.0
  %v3692 = vsel %vm149, %v3487, 0.0
  %v3693 = vsel %vm149, %v3490, 0.0
  %v3694 = vsel %vm149, %v3493, 0.0
  %v3695 = vsel %vm149, %v3496, 0.0
  %v3696 = vsel %vm149, %v3499, 0.0
  %v3697 = vsel %vm149, %v3502, 0.0
  %v3698 = vsel %vm149, %v3505, 0.0
  %v3699 = vsel %vm149, %v3508, 0.0
  %v3700 = vsel %vm149, %v3511, 0.0
  %v3701 = vsel %vm149, %v3514, 0.0
  %v3702 = vsel %vm149, %v3517, 0.0
  %v3703 = vsel %vm149, %v3520, 0.0
  %v3704 = vsel %vm149, %v3523, 0.0
  %v3705 = vsel %vm149, %v3526, 0.0
  %v3706 = vsel %vm149, %v3529, 0.0
  %v3707 = vsel %vm149, %v3532, 0.0
  %v3708 = vsel %vm149, %v3535, 0.0
  %v3709 = vsel %vm149, %v3538, 0.0
  %v3710 = vsel %vm149, %v3541, 0.0
  %v3711 = vsel %vm149, %v3544, 0.0
  %v3712 = vsel %vm149, %v3547, 0.0
  %v3713 = vsel %vm149, %v3550, 0.0
  %v3714 = vsel %vm149, %v3553, 0.0
  %v3715 = vsel %vm149, %v3556, 0.0
  %v3776 = vrot.slane %v3652, 1
  %v3777 = vrot.slane %v3464, 1
  %v3778 = vsel %vm465, %v3776, %v3777
  %v3779 = vrot.slane %v3684, 1
  %v3780 = vsel %vm465, %v3777, %v3779
  %v3781 = vrot.slane %v3653, 1
  %v3782 = vrot.slane %v3467, 1
  %v3783 = vsel %vm465, %v3781, %v3782
  %v3784 = vrot.slane %v3685, 1
  %v3785 = vsel %vm465, %v3782, %v3784
  %v3786 = vrot.slane %v3654, 1
  %v3787 = vrot.slane %v3470, 1
  %v3788 = vsel %vm465, %v3786, %v3787
  %v3789 = vrot.slane %v3686, 1
  %v3790 = vsel %vm465, %v3787, %v3789
  %v3791 = vrot.slane %v3655, 1
  %v3792 = vrot.slane %v3473, 1
  %v3793 = vsel %vm465, %v3791, %v3792
  %v3794 = vrot.slane %v3687, 1
  %v3795 = vsel %vm465, %v3792, %v3794
  %v3796 = vrot.slane %v3656, 1
  %v3797 = vrot.slane %v3476, 1
  %v3798 = vsel %vm465, %v3796, %v3797
  %v3799 = vrot.slane %v3688, 1
  %v3800 = vsel %vm465, %v3797, %v3799
  %v3801 = vrot.slane %v3657, 1
  %v3802 = vrot.slane %v3479, 1
  %v3803 = vsel %vm465, %v3801, %v3802
  %v3804 = vrot.slane %v3689, 1
  %v3805 = vsel %vm465, %v3802, %v3804
  %v3806 = vrot.slane %v3658, 1
  %v3807 = vrot.slane %v3482, 1
  %v3808 = vsel %vm465, %v3806, %v3807
  %v3809 = vrot.slane %v3690, 1
  %v3810 = vsel %vm465, %v3807, %v3809
  %v3811 = vrot.slane %v3659, 1
  %v3812 = vrot.slane %v3485, 1
  %v3813 = vsel %vm465, %v3811, %v3812
  %v3814 = vrot.slane %v3691, 1
  %v3815 = vsel %vm465, %v3812, %v3814
  %v3816 = vrot.slane %v3660, 1
  %v3817 = vrot.slane %v3488, 1
  %v3818 = vsel %vm465, %v3816, %v3817
  %v3819 = vrot.slane %v3692, 1
  %v3820 = vsel %vm465, %v3817, %v3819
  %v3821 = vrot.slane %v3661, 1
  %v3822 = vrot.slane %v3491, 1
  %v3823 = vsel %vm465, %v3821, %v3822
  %v3824 = vrot.slane %v3693, 1
  %v3825 = vsel %vm465, %v3822, %v3824
  %v3826 = vrot.slane %v3662, 1
  %v3827 = vrot.slane %v3494, 1
  %v3828 = vsel %vm465, %v3826, %v3827
  %v3829 = vrot.slane %v3694, 1
  %v3830 = vsel %vm465, %v3827, %v3829
  %v3831 = vrot.slane %v3663, 1
  %v3832 = vrot.slane %v3497, 1
  %v3833 = vsel %vm465, %v3831, %v3832
  %v3834 = vrot.slane %v3695, 1
  %v3835 = vsel %vm465, %v3832, %v3834
  %v3836 = vrot.slane %v3664, 1
  %v3837 = vrot.slane %v3500, 1
  %v3838 = vsel %vm465, %v3836, %v3837
  %v3839 = vrot.slane %v3696, 1
  %v3840 = vsel %vm465, %v3837, %v3839
  %v3841 = vrot.slane %v3665, 1
  %v3842 = vrot.slane %v3503, 1
  %v3843 = vsel %vm465, %v3841, %v3842
  %v3844 = vrot.slane %v3697, 1
  %v3845 = vsel %vm465, %v3842, %v3844
  %v3846 = vrot.slane %v3666, 1
  %v3847 = vrot.slane %v3506, 1
  %v3848 = vsel %vm465, %v3846, %v3847
  %v3849 = vrot.slane %v3698, 1
  %v3850 = vsel %vm465, %v3847, %v3849
  %v3851 = vrot.slane %v3668, 1
  %v3852 = vrot.slane %v3512, 1
  %v3853 = vsel %vm465, %v3851, %v3852
  %v3854 = vrot.slane %v3700, 1
  %v3855 = vsel %vm465, %v3852, %v3854
  %v3856 = vrot.slane %v3669, 1
  %v3857 = vrot.slane %v3515, 1
  %v3858 = vsel %vm465, %v3856, %v3857
  %v3859 = vrot.slane %v3701, 1
  %v3860 = vsel %vm465, %v3857, %v3859
  %v3861 = vrot.slane %v3670, 1
  %v3862 = vrot.slane %v3518, 1
  %v3863 = vsel %vm465, %v3861, %v3862
  %v3864 = vrot.slane %v3702, 1
  %v3865 = vsel %vm465, %v3862, %v3864
  %v3866 = vrot.slane %v3671, 1
  %v3867 = vrot.slane %v3521, 1
  %v3868 = vsel %vm465, %v3866, %v3867
  %v3869 = vrot.slane %v3703, 1
  %v3870 = vsel %vm465, %v3867, %v3869
  %v3871 = vrot.slane %v3672, 1
  %v3872 = vrot.slane %v3524, 1
  %v3873 = vsel %vm465, %v3871, %v3872
  %v3874 = vrot.slane %v3704, 1
  %v3875 = vsel %vm465, %v3872, %v3874
  %v3876 = vrot.slane %v3673, 1
  %v3877 = vrot.slane %v3527, 1
  %v3878 = vsel %vm465, %v3876, %v3877
  %v3879 = vrot.slane %v3705, 1
  %v3880 = vsel %vm465, %v3877, %v3879
  %v3881 = vrot.slane %v3674, 1
  %v3882 = vrot.slane %v3530, 1
  %v3883 = vsel %vm465, %v3881, %v3882
  %v3884 = vrot.slane %v3706, 1
  %v3885 = vsel %vm465, %v3882, %v3884
  %v3886 = vrot.slane %v3675, 1
  %v3887 = vrot.slane %v3533, 1
  %v3888 = vsel %vm465, %v3886, %v3887
  %v3889 = vrot.slane %v3707, 1
  %v3890 = vsel %vm465, %v3887, %v3889
  %v3891 = vrot.slane %v3676, 1
  %v3892 = vrot.slane %v3536, 1
  %v3893 = vsel %vm465, %v3891, %v3892
  %v3894 = vrot.slane %v3708, 1
  %v3895 = vsel %vm465, %v3892, %v3894
  %v3896 = vrot.slane %v3677, 1
  %v3897 = vrot.slane %v3539, 1
  %v3898 = vsel %vm465, %v3896, %v3897
  %v3899 = vrot.slane %v3709, 1
  %v3900 = vsel %vm465, %v3897, %v3899
  %v3901 = vrot.slane %v3678, 1
  %v3902 = vrot.slane %v3542, 1
  %v3903 = vsel %vm465, %v3901, %v3902
  %v3904 = vrot.slane %v3710, 1
  %v3905 = vsel %vm465, %v3902, %v3904
  %v3906 = vrot.slane %v3679, 1
  %v3907 = vrot.slane %v3545, 1
  %v3908 = vsel %vm465, %v3906, %v3907
  %v3909 = vrot.slane %v3711, 1
  %v3910 = vsel %vm465, %v3907, %v3909
  %v3911 = vrot.slane %v3680, 1
  %v3912 = vrot.slane %v3548, 1
  %v3913 = vsel %vm465, %v3911, %v3912
  %v3914 = vrot.slane %v3712, 1
  %v3915 = vsel %vm465, %v3912, %v3914
  %v3916 = vrot.slane %v3681, 1
  %v3917 = vrot.slane %v3551, 1
  %v3918 = vsel %vm465, %v3916, %v3917
  %v3919 = vrot.slane %v3713, 1
  %v3920 = vsel %vm465, %v3917, %v3919
  %v3921 = vrot.slane %v3682, 1
  %v3922 = vrot.slane %v3554, 1
  %v3923 = vsel %vm465, %v3921, %v3922
  %v3924 = vrot.slane %v3714, 1
  %v3925 = vsel %vm465, %v3922, %v3924
  %v3926 = vrot.slane %v3652, 2
  %v3927 = vrot.slane %v3464, 2
  %v3928 = vsel %vm618, %v3926, %v3927
  %v3929 = vrot.slane %v3684, 2
  %v3930 = vsel %vm618, %v3927, %v3929
  %v3931 = vrot.slane %v3653, 2
  %v3932 = vrot.slane %v3467, 2
  %v3933 = vsel %vm618, %v3931, %v3932
  %v3934 = vrot.slane %v3685, 2
  %v3935 = vsel %vm618, %v3932, %v3934
  %v3936 = vrot.slane %v3654, 2
  %v3937 = vrot.slane %v3470, 2
  %v3938 = vsel %vm618, %v3936, %v3937
  %v3939 = vrot.slane %v3686, 2
  %v3940 = vsel %vm618, %v3937, %v3939
  %v3941 = vrot.slane %v3655, 2
  %v3942 = vrot.slane %v3473, 2
  %v3943 = vsel %vm618, %v3941, %v3942
  %v3944 = vrot.slane %v3687, 2
  %v3945 = vsel %vm618, %v3942, %v3944
  %v3946 = vrot.slane %v3656, 2
  %v3947 = vrot.slane %v3476, 2
  %v3948 = vsel %vm618, %v3946, %v3947
  %v3949 = vrot.slane %v3688, 2
  %v3950 = vsel %vm618, %v3947, %v3949
  %v3951 = vrot.slane %v3657, 2
  %v3952 = vrot.slane %v3479, 2
  %v3953 = vsel %vm618, %v3951, %v3952
  %v3954 = vrot.slane %v3689, 2
  %v3955 = vsel %vm618, %v3952, %v3954
  %v3956 = vrot.slane %v3658, 2
  %v3957 = vrot.slane %v3482, 2
  %v3958 = vsel %vm618, %v3956, %v3957
  %v3959 = vrot.slane %v3690, 2
  %v3960 = vsel %vm618, %v3957, %v3959
  %v3961 = vrot.slane %v3659, 2
  %v3962 = vrot.slane %v3485, 2
  %v3963 = vsel %vm618, %v3961, %v3962
  %v3964 = vrot.slane %v3691, 2
  %v3965 = vsel %vm618, %v3962, %v3964
  %v3966 = vrot.slane %v3660, 2
  %v3967 = vrot.slane %v3488, 2
  %v3968 = vsel %vm618, %v3966, %v3967
  %v3969 = vrot.slane %v3692, 2
  %v3970 = vsel %vm618, %v3967, %v3969
  %v3971 = vrot.slane %v3661, 2
  %v3972 = vrot.slane %v3491, 2
  %v3973 = vsel %vm618, %v3971, %v3972
  %v3974 = vrot.slane %v3693, 2
  %v3975 = vsel %vm618, %v3972, %v3974
  %v3976 = vrot.slane %v3662, 2
  %v3977 = vrot.slane %v3494, 2
  %v3978 = vsel %vm618, %v3976, %v3977
  %v3979 = vrot.slane %v3694, 2
  %v3980 = vsel %vm618, %v3977, %v3979
  %v3981 = vrot.slane %v3663, 2
  %v3982 = vrot.slane %v3497, 2
  %v3983 = vsel %vm618, %v3981, %v3982
  %v3984 = vrot.slane %v3695, 2
  %v3985 = vsel %vm618, %v3982, %v3984
  %v3986 = vrot.slane %v3664, 2
  %v3987 = vrot.slane %v3500, 2
  %v3988 = vsel %vm618, %v3986, %v3987
  %v3989 = vrot.slane %v3696, 2
  %v3990 = vsel %vm618, %v3987, %v3989
  %v3991 = vrot.slane %v3665, 2
  %v3992 = vrot.slane %v3503, 2
  %v3993 = vsel %vm618, %v3991, %v3992
  %v3994 = vrot.slane %v3697, 2
  %v3995 = vsel %vm618, %v3992, %v3994
  %v3996 = vrot.slane %v3666, 2
  %v3997 = vrot.slane %v3506, 2
  %v3998 = vsel %vm618, %v3996, %v3997
  %v3999 = vrot.slane %v3698, 2
  %v4000 = vsel %vm618, %v3997, %v3999
  %v4001 = vrot.slane %v3668, 2
  %v4002 = vrot.slane %v3512, 2
  %v4003 = vsel %vm618, %v4001, %v4002
  %v4004 = vrot.slane %v3700, 2
  %v4005 = vsel %vm618, %v4002, %v4004
  %v4006 = vrot.slane %v3669, 2
  %v4007 = vrot.slane %v3515, 2
  %v4008 = vsel %vm618, %v4006, %v4007
  %v4009 = vrot.slane %v3701, 2
  %v4010 = vsel %vm618, %v4007, %v4009
  %v4011 = vrot.slane %v3670, 2
  %v4012 = vrot.slane %v3518, 2
  %v4013 = vsel %vm618, %v4011, %v4012
  %v4014 = vrot.slane %v3702, 2
  %v4015 = vsel %vm618, %v4012, %v4014
  %v4016 = vrot.slane %v3671, 2
  %v4017 = vrot.slane %v3521, 2
  %v4018 = vsel %vm618, %v4016, %v4017
  %v4019 = vrot.slane %v3703, 2
  %v4020 = vsel %vm618, %v4017, %v4019
  %v4021 = vrot.slane %v3672, 2
  %v4022 = vrot.slane %v3524, 2
  %v4023 = vsel %vm618, %v4021, %v4022
  %v4024 = vrot.slane %v3704, 2
  %v4025 = vsel %vm618, %v4022, %v4024
  %v4026 = vrot.slane %v3673, 2
  %v4027 = vrot.slane %v3527, 2
  %v4028 = vsel %vm618, %v4026, %v4027
  %v4029 = vrot.slane %v3705, 2
  %v4030 = vsel %vm618, %v4027, %v4029
  %v4031 = vrot.slane %v3674, 2
  %v4032 = vrot.slane %v3530, 2
  %v4033 = vsel %vm618, %v4031, %v4032
  %v4034 = vrot.slane %v3706, 2
  %v4035 = vsel %vm618, %v4032, %v4034
  %v4036 = vrot.slane %v3675, 2
  %v4037 = vrot.slane %v3533, 2
  %v4038 = vsel %vm618, %v4036, %v4037
  %v4039 = vrot.slane %v3707, 2
  %v4040 = vsel %vm618, %v4037, %v4039
  %v4041 = vrot.slane %v3676, 2
  %v4042 = vrot.slane %v3536, 2
  %v4043 = vsel %vm618, %v4041, %v4042
  %v4044 = vrot.slane %v3708, 2
  %v4045 = vsel %vm618, %v4042, %v4044
  %v4046 = vrot.slane %v3677, 2
  %v4047 = vrot.slane %v3539, 2
  %v4048 = vsel %vm618, %v4046, %v4047
  %v4049 = vrot.slane %v3709, 2
  %v4050 = vsel %vm618, %v4047, %v4049
  %v4051 = vrot.slane %v3678, 2
  %v4052 = vrot.slane %v3542, 2
  %v4053 = vsel %vm618, %v4051, %v4052
  %v4054 = vrot.slane %v3710, 2
  %v4055 = vsel %vm618, %v4052, %v4054
  %v4056 = vrot.slane %v3679, 2
  %v4057 = vrot.slane %v3545, 2
  %v4058 = vsel %vm618, %v4056, %v4057
  %v4059 = vrot.slane %v3711, 2
  %v4060 = vsel %vm618, %v4057, %v4059
  %v4061 = vrot.slane %v3680, 2
  %v4062 = vrot.slane %v3548, 2
  %v4063 = vsel %vm618, %v4061, %v4062
  %v4064 = vrot.slane %v3712, 2
  %v4065 = vsel %vm618, %v4062, %v4064
  %v4066 = vrot.slane %v3681, 2
  %v4067 = vrot.slane %v3551, 2
  %v4068 = vsel %vm618, %v4066, %v4067
  %v4069 = vrot.slane %v3713, 2
  %v4070 = vsel %vm618, %v4067, %v4069
  %v4071 = vrot.slane %v3682, 2
  %v4072 = vrot.slane %v3554, 2
  %v4073 = vsel %vm618, %v4071, %v4072
  %v4074 = vrot.slane %v3714, 2
  %v4075 = vsel %vm618, %v4072, %v4074
  %v4080 = vrot.slane %v3667, 1
  %v4081 = vrot.slane %v3509, 1
  %v4082 = vsel %vm465, %v4080, %v4081
  %v4083 = vrot.slane %v3699, 1
  %v4084 = vsel %vm465, %v4081, %v4083
  %v4085 = vrot.slane %v3683, 1
  %v4086 = vrot.slane %v3557, 1
  %v4087 = vsel %vm465, %v4085, %v4086
  %v4088 = vrot.slane %v3715, 1
  %v4089 = vsel %vm465, %v4086, %v4088
  %v4154 = vrot.slane %v3667, 2
  %v4155 = vrot.slane %v3509, 2
  %v4156 = vsel %vm618, %v4154, %v4155
  %v4157 = vrot.slane %v3699, 2
  %v4158 = vsel %vm618, %v4155, %v4157
  %v4159 = vrot.slane %v3683, 2
  %v4160 = vrot.slane %v3557, 2
  %v4161 = vsel %vm618, %v4159, %v4160
  %v4162 = vrot.slane %v3715, 2
  %v4163 = vsel %vm618, %v4160, %v4162
  %4224 = vrot.lane.b32.xlu0 %v3778, 32
  %v4225 = vpop.permute.xlu0 %4224
  %4226 = vrot.lane.b32.xlu0 %v3780, 32
  %v4227 = vpop.permute.xlu0 %4226
  %4228 = vrot.lane.b32.xlu0 %v3783, 32
  %v4229 = vpop.permute.xlu0 %4228
  %4230 = vrot.lane.b32.xlu0 %v3785, 32
  %v4231 = vpop.permute.xlu0 %4230
  %4232 = vrot.lane.b32.xlu0 %v3788, 32
  %v4233 = vpop.permute.xlu0 %4232
  %4234 = vrot.lane.b32.xlu0 %v3790, 32
  %v4235 = vpop.permute.xlu0 %4234
  %4236 = vrot.lane.b32.xlu0 %v3793, 32
  %v4237 = vpop.permute.xlu0 %4236
  %4238 = vrot.lane.b32.xlu0 %v3795, 32
  %v4239 = vpop.permute.xlu0 %4238
  %4240 = vrot.lane.b32.xlu0 %v3798, 32
  %v4241 = vpop.permute.xlu0 %4240
  %4242 = vrot.lane.b32.xlu0 %v3800, 32
  %v4243 = vpop.permute.xlu0 %4242
  %4244 = vrot.lane.b32.xlu0 %v3803, 32
  %v4245 = vpop.permute.xlu0 %4244
  %4246 = vrot.lane.b32.xlu0 %v3805, 32
  %v4247 = vpop.permute.xlu0 %4246
  %4248 = vrot.lane.b32.xlu0 %v3808, 32
  %v4249 = vpop.permute.xlu0 %4248
  %4250 = vrot.lane.b32.xlu0 %v3810, 32
  %v4251 = vpop.permute.xlu0 %4250
  %4252 = vrot.lane.b32.xlu0 %v3813, 32
  %v4253 = vpop.permute.xlu0 %4252
  %4254 = vrot.lane.b32.xlu0 %v3815, 32
  %v4255 = vpop.permute.xlu0 %4254
  %4256 = vrot.lane.b32.xlu0 %v3818, 32
  %v4257 = vpop.permute.xlu0 %4256
  %4258 = vrot.lane.b32.xlu0 %v3820, 32
  %v4259 = vpop.permute.xlu0 %4258
  %4260 = vrot.lane.b32.xlu0 %v3823, 32
  %v4261 = vpop.permute.xlu0 %4260
  %4262 = vrot.lane.b32.xlu0 %v3825, 32
  %v4263 = vpop.permute.xlu0 %4262
  %4264 = vrot.lane.b32.xlu0 %v3828, 32
  %v4265 = vpop.permute.xlu0 %4264
  %4266 = vrot.lane.b32.xlu0 %v3830, 32
  %v4267 = vpop.permute.xlu0 %4266
  %4268 = vrot.lane.b32.xlu0 %v3833, 32
  %v4269 = vpop.permute.xlu0 %4268
  %4270 = vrot.lane.b32.xlu0 %v3835, 32
  %v4271 = vpop.permute.xlu0 %4270
  %4272 = vrot.lane.b32.xlu0 %v3838, 32
  %v4273 = vpop.permute.xlu0 %4272
  %4274 = vrot.lane.b32.xlu0 %v3840, 32
  %v4275 = vpop.permute.xlu0 %4274
  %4276 = vrot.lane.b32.xlu0 %v3843, 32
  %v4277 = vpop.permute.xlu0 %4276
  %4278 = vrot.lane.b32.xlu0 %v3845, 32
  %v4279 = vpop.permute.xlu0 %4278
  %4280 = vrot.lane.b32.xlu0 %v3848, 32
  %v4281 = vpop.permute.xlu0 %4280
  %4282 = vrot.lane.b32.xlu0 %v3850, 32
  %v4283 = vpop.permute.xlu0 %4282
  %4284 = vrot.lane.b32.xlu0 %v3853, 32
  %v4285 = vpop.permute.xlu0 %4284
  %4286 = vrot.lane.b32.xlu0 %v3855, 32
  %v4287 = vpop.permute.xlu0 %4286
  %4288 = vrot.lane.b32.xlu0 %v3858, 32
  %v4289 = vpop.permute.xlu0 %4288
  %4290 = vrot.lane.b32.xlu0 %v3860, 32
  %v4291 = vpop.permute.xlu0 %4290
  %4292 = vrot.lane.b32.xlu0 %v3863, 32
  %v4293 = vpop.permute.xlu0 %4292
  %4294 = vrot.lane.b32.xlu0 %v3865, 32
  %v4295 = vpop.permute.xlu0 %4294
  %4296 = vrot.lane.b32.xlu0 %v3868, 32
  %v4297 = vpop.permute.xlu0 %4296
  %4298 = vrot.lane.b32.xlu0 %v3870, 32
  %v4299 = vpop.permute.xlu0 %4298
  %4300 = vrot.lane.b32.xlu0 %v3873, 32
  %v4301 = vpop.permute.xlu0 %4300
  %4302 = vrot.lane.b32.xlu0 %v3875, 32
  %v4303 = vpop.permute.xlu0 %4302
  %4304 = vrot.lane.b32.xlu0 %v3878, 32
  %v4305 = vpop.permute.xlu0 %4304
  %4306 = vrot.lane.b32.xlu0 %v3880, 32
  %v4307 = vpop.permute.xlu0 %4306
  %4308 = vrot.lane.b32.xlu0 %v3883, 32
  %v4309 = vpop.permute.xlu0 %4308
  %4310 = vrot.lane.b32.xlu0 %v3885, 32
  %v4311 = vpop.permute.xlu0 %4310
  %4312 = vrot.lane.b32.xlu0 %v3888, 32
  %v4313 = vpop.permute.xlu0 %4312
  %4314 = vrot.lane.b32.xlu0 %v3890, 32
  %v4315 = vpop.permute.xlu0 %4314
  %4316 = vrot.lane.b32.xlu0 %v3893, 32
  %v4317 = vpop.permute.xlu0 %4316
  %4318 = vrot.lane.b32.xlu0 %v3895, 32
  %v4319 = vpop.permute.xlu0 %4318
  %4320 = vrot.lane.b32.xlu0 %v3898, 32
  %v4321 = vpop.permute.xlu0 %4320
  %4322 = vrot.lane.b32.xlu0 %v3900, 32
  %v4323 = vpop.permute.xlu0 %4322
  %4324 = vrot.lane.b32.xlu0 %v3903, 32
  %v4325 = vpop.permute.xlu0 %4324
  %4326 = vrot.lane.b32.xlu0 %v3905, 32
  %v4327 = vpop.permute.xlu0 %4326
  %4328 = vrot.lane.b32.xlu0 %v3908, 32
  %v4329 = vpop.permute.xlu0 %4328
  %4330 = vrot.lane.b32.xlu0 %v3910, 32
  %v4331 = vpop.permute.xlu0 %4330
  %4332 = vrot.lane.b32.xlu0 %v3913, 32
  %v4333 = vpop.permute.xlu0 %4332
  %4334 = vrot.lane.b32.xlu0 %v3915, 32
  %v4335 = vpop.permute.xlu0 %4334
  %4336 = vrot.lane.b32.xlu0 %v3918, 32
  %v4337 = vpop.permute.xlu0 %4336
  %4338 = vrot.lane.b32.xlu0 %v3920, 32
  %v4339 = vpop.permute.xlu0 %4338
  %4340 = vrot.lane.b32.xlu0 %v3923, 32
  %v4341 = vpop.permute.xlu0 %4340
  %4342 = vrot.lane.b32.xlu0 %v3925, 32
  %v4343 = vpop.permute.xlu0 %4342
  %4404 = vrot.lane.b32.xlu0 %v3928, 64
  %v4405 = vpop.permute.xlu0 %4404
  %4406 = vrot.lane.b32.xlu0 %v3930, 64
  %v4407 = vpop.permute.xlu0 %4406
  %4408 = vrot.lane.b32.xlu0 %v3933, 64
  %v4409 = vpop.permute.xlu0 %4408
  %4410 = vrot.lane.b32.xlu0 %v3935, 64
  %v4411 = vpop.permute.xlu0 %4410
  %4412 = vrot.lane.b32.xlu0 %v3938, 64
  %v4413 = vpop.permute.xlu0 %4412
  %4414 = vrot.lane.b32.xlu0 %v3940, 64
  %v4415 = vpop.permute.xlu0 %4414
  %4416 = vrot.lane.b32.xlu0 %v3943, 64
  %v4417 = vpop.permute.xlu0 %4416
  %4418 = vrot.lane.b32.xlu0 %v3945, 64
  %v4419 = vpop.permute.xlu0 %4418
  %4420 = vrot.lane.b32.xlu0 %v3948, 64
  %v4421 = vpop.permute.xlu0 %4420
  %4422 = vrot.lane.b32.xlu0 %v3950, 64
  %v4423 = vpop.permute.xlu0 %4422
  %4424 = vrot.lane.b32.xlu0 %v3953, 64
  %v4425 = vpop.permute.xlu0 %4424
  %4426 = vrot.lane.b32.xlu0 %v3955, 64
  %v4427 = vpop.permute.xlu0 %4426
  %4428 = vrot.lane.b32.xlu0 %v3958, 64
  %v4429 = vpop.permute.xlu0 %4428
  %4430 = vrot.lane.b32.xlu0 %v3960, 64
  %v4431 = vpop.permute.xlu0 %4430
  %4432 = vrot.lane.b32.xlu0 %v3963, 64
  %v4433 = vpop.permute.xlu0 %4432
  %4434 = vrot.lane.b32.xlu0 %v3965, 64
  %v4435 = vpop.permute.xlu0 %4434
  %4436 = vrot.lane.b32.xlu0 %v3968, 64
  %v4437 = vpop.permute.xlu0 %4436
  %4438 = vrot.lane.b32.xlu0 %v3970, 64
  %v4439 = vpop.permute.xlu0 %4438
  %4440 = vrot.lane.b32.xlu0 %v3973, 64
  %v4441 = vpop.permute.xlu0 %4440
  %4442 = vrot.lane.b32.xlu0 %v3975, 64
  %v4443 = vpop.permute.xlu0 %4442
  %4444 = vrot.lane.b32.xlu0 %v3978, 64
  %v4445 = vpop.permute.xlu0 %4444
  %4446 = vrot.lane.b32.xlu0 %v3980, 64
  %v4447 = vpop.permute.xlu0 %4446
  %4448 = vrot.lane.b32.xlu0 %v3983, 64
  %v4449 = vpop.permute.xlu0 %4448
  %4450 = vrot.lane.b32.xlu0 %v3985, 64
  %v4451 = vpop.permute.xlu0 %4450
  %4452 = vrot.lane.b32.xlu0 %v3988, 64
  %v4453 = vpop.permute.xlu0 %4452
  %4454 = vrot.lane.b32.xlu0 %v3990, 64
  %v4455 = vpop.permute.xlu0 %4454
  %4456 = vrot.lane.b32.xlu0 %v3993, 64
  %v4457 = vpop.permute.xlu0 %4456
  %4458 = vrot.lane.b32.xlu0 %v3995, 64
  %v4459 = vpop.permute.xlu0 %4458
  %4460 = vrot.lane.b32.xlu0 %v3998, 64
  %v4461 = vpop.permute.xlu0 %4460
  %4462 = vrot.lane.b32.xlu0 %v4000, 64
  %v4463 = vpop.permute.xlu0 %4462
  %4464 = vrot.lane.b32.xlu0 %v4003, 64
  %v4465 = vpop.permute.xlu0 %4464
  %4466 = vrot.lane.b32.xlu0 %v4005, 64
  %v4467 = vpop.permute.xlu0 %4466
  %4468 = vrot.lane.b32.xlu0 %v4008, 64
  %v4469 = vpop.permute.xlu0 %4468
  %4470 = vrot.lane.b32.xlu0 %v4010, 64
  %v4471 = vpop.permute.xlu0 %4470
  %4472 = vrot.lane.b32.xlu0 %v4013, 64
  %v4473 = vpop.permute.xlu0 %4472
  %4474 = vrot.lane.b32.xlu0 %v4015, 64
  %v4475 = vpop.permute.xlu0 %4474
  %4476 = vrot.lane.b32.xlu0 %v4018, 64
  %v4477 = vpop.permute.xlu0 %4476
  %4478 = vrot.lane.b32.xlu0 %v4020, 64
  %v4479 = vpop.permute.xlu0 %4478
  %4480 = vrot.lane.b32.xlu0 %v4023, 64
  %v4481 = vpop.permute.xlu0 %4480
  %4482 = vrot.lane.b32.xlu0 %v4025, 64
  %v4483 = vpop.permute.xlu0 %4482
  %4484 = vrot.lane.b32.xlu0 %v4028, 64
  %v4485 = vpop.permute.xlu0 %4484
  %4486 = vrot.lane.b32.xlu0 %v4030, 64
  %v4487 = vpop.permute.xlu0 %4486
  %4488 = vrot.lane.b32.xlu0 %v4033, 64
  %v4489 = vpop.permute.xlu0 %4488
  %4490 = vrot.lane.b32.xlu0 %v4035, 64
  %v4491 = vpop.permute.xlu0 %4490
  %4492 = vrot.lane.b32.xlu0 %v4038, 64
  %v4493 = vpop.permute.xlu0 %4492
  %4494 = vrot.lane.b32.xlu0 %v4040, 64
  %v4495 = vpop.permute.xlu0 %4494
  %4496 = vrot.lane.b32.xlu0 %v4043, 64
  %v4497 = vpop.permute.xlu0 %4496
  %4498 = vrot.lane.b32.xlu0 %v4045, 64
  %v4499 = vpop.permute.xlu0 %4498
  %4500 = vrot.lane.b32.xlu0 %v4048, 64
  %v4501 = vpop.permute.xlu0 %4500
  %4502 = vrot.lane.b32.xlu0 %v4050, 64
  %v4503 = vpop.permute.xlu0 %4502
  %4504 = vrot.lane.b32.xlu0 %v4053, 64
  %v4505 = vpop.permute.xlu0 %4504
  %4506 = vrot.lane.b32.xlu0 %v4055, 64
  %v4507 = vpop.permute.xlu0 %4506
  %4508 = vrot.lane.b32.xlu0 %v4058, 64
  %v4509 = vpop.permute.xlu0 %4508
  %4510 = vrot.lane.b32.xlu0 %v4060, 64
  %v4511 = vpop.permute.xlu0 %4510
  %4512 = vrot.lane.b32.xlu0 %v4063, 64
  %v4513 = vpop.permute.xlu0 %4512
  %4514 = vrot.lane.b32.xlu0 %v4065, 64
  %v4515 = vpop.permute.xlu0 %4514
  %4516 = vrot.lane.b32.xlu0 %v4068, 64
  %v4517 = vpop.permute.xlu0 %4516
  %4518 = vrot.lane.b32.xlu0 %v4070, 64
  %v4519 = vpop.permute.xlu0 %4518
  %4520 = vrot.lane.b32.xlu0 %v4073, 64
  %v4521 = vpop.permute.xlu0 %4520
  %4522 = vrot.lane.b32.xlu0 %v4075, 64
  %v4523 = vpop.permute.xlu0 %4522
  %4584 = vrot.lane.b32.xlu0 %v3652, 96
  %v4585 = vpop.permute.xlu0 %4584
  %4586 = vrot.lane.b32.xlu0 %v3464, 96
  %v4587 = vpop.permute.xlu0 %4586
  %4588 = vrot.lane.b32.xlu0 %v3653, 96
  %v4589 = vpop.permute.xlu0 %4588
  %4590 = vrot.lane.b32.xlu0 %v3467, 96
  %v4591 = vpop.permute.xlu0 %4590
  %4592 = vrot.lane.b32.xlu0 %v3654, 96
  %v4593 = vpop.permute.xlu0 %4592
  %4594 = vrot.lane.b32.xlu0 %v3470, 96
  %v4595 = vpop.permute.xlu0 %4594
  %4596 = vrot.lane.b32.xlu0 %v3655, 96
  %v4597 = vpop.permute.xlu0 %4596
  %4598 = vrot.lane.b32.xlu0 %v3473, 96
  %v4599 = vpop.permute.xlu0 %4598
  %4600 = vrot.lane.b32.xlu0 %v3656, 96
  %v4601 = vpop.permute.xlu0 %4600
  %4602 = vrot.lane.b32.xlu0 %v3476, 96
  %v4603 = vpop.permute.xlu0 %4602
  %4604 = vrot.lane.b32.xlu0 %v3657, 96
  %v4605 = vpop.permute.xlu0 %4604
  %4606 = vrot.lane.b32.xlu0 %v3479, 96
  %v4607 = vpop.permute.xlu0 %4606
  %4608 = vrot.lane.b32.xlu0 %v3658, 96
  %v4609 = vpop.permute.xlu0 %4608
  %4610 = vrot.lane.b32.xlu0 %v3482, 96
  %v4611 = vpop.permute.xlu0 %4610
  %4612 = vrot.lane.b32.xlu0 %v3659, 96
  %v4613 = vpop.permute.xlu0 %4612
  %4614 = vrot.lane.b32.xlu0 %v3485, 96
  %v4615 = vpop.permute.xlu0 %4614
  %4616 = vrot.lane.b32.xlu0 %v3660, 96
  %v4617 = vpop.permute.xlu0 %4616
  %4618 = vrot.lane.b32.xlu0 %v3488, 96
  %v4619 = vpop.permute.xlu0 %4618
  %4620 = vrot.lane.b32.xlu0 %v3661, 96
  %v4621 = vpop.permute.xlu0 %4620
  %4622 = vrot.lane.b32.xlu0 %v3491, 96
  %v4623 = vpop.permute.xlu0 %4622
  %4624 = vrot.lane.b32.xlu0 %v3662, 96
  %v4625 = vpop.permute.xlu0 %4624
  %4626 = vrot.lane.b32.xlu0 %v3494, 96
  %v4627 = vpop.permute.xlu0 %4626
  %4628 = vrot.lane.b32.xlu0 %v3663, 96
  %v4629 = vpop.permute.xlu0 %4628
  %4630 = vrot.lane.b32.xlu0 %v3497, 96
  %v4631 = vpop.permute.xlu0 %4630
  %4632 = vrot.lane.b32.xlu0 %v3664, 96
  %v4633 = vpop.permute.xlu0 %4632
  %4634 = vrot.lane.b32.xlu0 %v3500, 96
  %v4635 = vpop.permute.xlu0 %4634
  %4636 = vrot.lane.b32.xlu0 %v3665, 96
  %v4637 = vpop.permute.xlu0 %4636
  %4638 = vrot.lane.b32.xlu0 %v3503, 96
  %v4639 = vpop.permute.xlu0 %4638
  %4640 = vrot.lane.b32.xlu0 %v3666, 96
  %v4641 = vpop.permute.xlu0 %4640
  %4642 = vrot.lane.b32.xlu0 %v3506, 96
  %v4643 = vpop.permute.xlu0 %4642
  %4644 = vrot.lane.b32.xlu0 %v3667, 96
  %v4645 = vpop.permute.xlu0 %4644
  %4646 = vrot.lane.b32.xlu0 %v3509, 96
  %v4647 = vpop.permute.xlu0 %4646
  %4648 = vrot.lane.b32.xlu0 %v3668, 96
  %v4649 = vpop.permute.xlu0 %4648
  %4650 = vrot.lane.b32.xlu0 %v3512, 96
  %v4651 = vpop.permute.xlu0 %4650
  %4652 = vrot.lane.b32.xlu0 %v3669, 96
  %v4653 = vpop.permute.xlu0 %4652
  %4654 = vrot.lane.b32.xlu0 %v3515, 96
  %v4655 = vpop.permute.xlu0 %4654
  %4656 = vrot.lane.b32.xlu0 %v3670, 96
  %v4657 = vpop.permute.xlu0 %4656
  %4658 = vrot.lane.b32.xlu0 %v3518, 96
  %v4659 = vpop.permute.xlu0 %4658
  %4660 = vrot.lane.b32.xlu0 %v3671, 96
  %v4661 = vpop.permute.xlu0 %4660
  %4662 = vrot.lane.b32.xlu0 %v3521, 96
  %v4663 = vpop.permute.xlu0 %4662
  %4664 = vrot.lane.b32.xlu0 %v3672, 96
  %v4665 = vpop.permute.xlu0 %4664
  %4666 = vrot.lane.b32.xlu0 %v3524, 96
  %v4667 = vpop.permute.xlu0 %4666
  %4668 = vrot.lane.b32.xlu0 %v3673, 96
  %v4669 = vpop.permute.xlu0 %4668
  %4670 = vrot.lane.b32.xlu0 %v3527, 96
  %v4671 = vpop.permute.xlu0 %4670
  %4672 = vrot.lane.b32.xlu0 %v3674, 96
  %v4673 = vpop.permute.xlu0 %4672
  %4674 = vrot.lane.b32.xlu0 %v3530, 96
  %v4675 = vpop.permute.xlu0 %4674
  %4676 = vrot.lane.b32.xlu0 %v3675, 96
  %v4677 = vpop.permute.xlu0 %4676
  %4678 = vrot.lane.b32.xlu0 %v3533, 96
  %v4679 = vpop.permute.xlu0 %4678
  %4680 = vrot.lane.b32.xlu0 %v3676, 96
  %v4681 = vpop.permute.xlu0 %4680
  %4682 = vrot.lane.b32.xlu0 %v3536, 96
  %v4683 = vpop.permute.xlu0 %4682
  %4684 = vrot.lane.b32.xlu0 %v3677, 96
  %v4685 = vpop.permute.xlu0 %4684
  %4686 = vrot.lane.b32.xlu0 %v3539, 96
  %v4687 = vpop.permute.xlu0 %4686
  %4688 = vrot.lane.b32.xlu0 %v3678, 96
  %v4689 = vpop.permute.xlu0 %4688
  %4690 = vrot.lane.b32.xlu0 %v3542, 96
  %v4691 = vpop.permute.xlu0 %4690
  %4692 = vrot.lane.b32.xlu0 %v3679, 96
  %v4693 = vpop.permute.xlu0 %4692
  %4694 = vrot.lane.b32.xlu0 %v3545, 96
  %v4695 = vpop.permute.xlu0 %4694
  %4696 = vrot.lane.b32.xlu0 %v3680, 96
  %v4697 = vpop.permute.xlu0 %4696
  %4698 = vrot.lane.b32.xlu0 %v3548, 96
  %v4699 = vpop.permute.xlu0 %4698
  %4700 = vrot.lane.b32.xlu0 %v3681, 96
  %v4701 = vpop.permute.xlu0 %4700
  %4702 = vrot.lane.b32.xlu0 %v3551, 96
  %v4703 = vpop.permute.xlu0 %4702
  %4704 = vrot.lane.b32.xlu0 %v3682, 96
  %v4705 = vpop.permute.xlu0 %4704
  %4706 = vrot.lane.b32.xlu0 %v3554, 96
  %v4707 = vpop.permute.xlu0 %4706
  %4708 = vrot.lane.b32.xlu0 %v3683, 96
  %v4709 = vpop.permute.xlu0 %4708
  %4710 = vrot.lane.b32.xlu0 %v3557, 96
  %v4711 = vpop.permute.xlu0 %4710
  %4776 = vrot.lane.b32.xlu0 %v3928, 32
  %v4777 = vpop.permute.xlu0 %4776
  %4778 = vrot.lane.b32.xlu0 %v3930, 32
  %v4779 = vpop.permute.xlu0 %4778
  %4780 = vrot.lane.b32.xlu0 %v3933, 32
  %v4781 = vpop.permute.xlu0 %4780
  %4782 = vrot.lane.b32.xlu0 %v3935, 32
  %v4783 = vpop.permute.xlu0 %4782
  %4784 = vrot.lane.b32.xlu0 %v3938, 32
  %v4785 = vpop.permute.xlu0 %4784
  %4786 = vrot.lane.b32.xlu0 %v3940, 32
  %v4787 = vpop.permute.xlu0 %4786
  %4788 = vrot.lane.b32.xlu0 %v3943, 32
  %v4789 = vpop.permute.xlu0 %4788
  %4790 = vrot.lane.b32.xlu0 %v3945, 32
  %v4791 = vpop.permute.xlu0 %4790
  %4792 = vrot.lane.b32.xlu0 %v3948, 32
  %v4793 = vpop.permute.xlu0 %4792
  %4794 = vrot.lane.b32.xlu0 %v3950, 32
  %v4795 = vpop.permute.xlu0 %4794
  %4796 = vrot.lane.b32.xlu0 %v3953, 32
  %v4797 = vpop.permute.xlu0 %4796
  %4798 = vrot.lane.b32.xlu0 %v3955, 32
  %v4799 = vpop.permute.xlu0 %4798
  %4800 = vrot.lane.b32.xlu0 %v3958, 32
  %v4801 = vpop.permute.xlu0 %4800
  %4802 = vrot.lane.b32.xlu0 %v3960, 32
  %v4803 = vpop.permute.xlu0 %4802
  %4804 = vrot.lane.b32.xlu0 %v3963, 32
  %v4805 = vpop.permute.xlu0 %4804
  %4806 = vrot.lane.b32.xlu0 %v3965, 32
  %v4807 = vpop.permute.xlu0 %4806
  %4808 = vrot.lane.b32.xlu0 %v3968, 32
  %v4809 = vpop.permute.xlu0 %4808
  %4810 = vrot.lane.b32.xlu0 %v3970, 32
  %v4811 = vpop.permute.xlu0 %4810
  %4812 = vrot.lane.b32.xlu0 %v3973, 32
  %v4813 = vpop.permute.xlu0 %4812
  %4814 = vrot.lane.b32.xlu0 %v3975, 32
  %v4815 = vpop.permute.xlu0 %4814
  %4816 = vrot.lane.b32.xlu0 %v3978, 32
  %v4817 = vpop.permute.xlu0 %4816
  %4818 = vrot.lane.b32.xlu0 %v3980, 32
  %v4819 = vpop.permute.xlu0 %4818
  %4820 = vrot.lane.b32.xlu0 %v3983, 32
  %v4821 = vpop.permute.xlu0 %4820
  %4822 = vrot.lane.b32.xlu0 %v3985, 32
  %v4823 = vpop.permute.xlu0 %4822
  %4824 = vrot.lane.b32.xlu0 %v3988, 32
  %v4825 = vpop.permute.xlu0 %4824
  %4826 = vrot.lane.b32.xlu0 %v3990, 32
  %v4827 = vpop.permute.xlu0 %4826
  %4828 = vrot.lane.b32.xlu0 %v3993, 32
  %v4829 = vpop.permute.xlu0 %4828
  %4830 = vrot.lane.b32.xlu0 %v3995, 32
  %v4831 = vpop.permute.xlu0 %4830
  %4832 = vrot.lane.b32.xlu0 %v3998, 32
  %v4833 = vpop.permute.xlu0 %4832
  %4834 = vrot.lane.b32.xlu0 %v4000, 32
  %v4835 = vpop.permute.xlu0 %4834
  %4836 = vrot.lane.b32.xlu0 %v4156, 32
  %v4837 = vpop.permute.xlu0 %4836
  %4838 = vrot.lane.b32.xlu0 %v4158, 32
  %v4839 = vpop.permute.xlu0 %4838
  %4840 = vrot.lane.b32.xlu0 %v4003, 32
  %v4841 = vpop.permute.xlu0 %4840
  %4842 = vrot.lane.b32.xlu0 %v4005, 32
  %v4843 = vpop.permute.xlu0 %4842
  %4844 = vrot.lane.b32.xlu0 %v4008, 32
  %v4845 = vpop.permute.xlu0 %4844
  %4846 = vrot.lane.b32.xlu0 %v4010, 32
  %v4847 = vpop.permute.xlu0 %4846
  %4848 = vrot.lane.b32.xlu0 %v4013, 32
  %v4849 = vpop.permute.xlu0 %4848
  %4850 = vrot.lane.b32.xlu0 %v4015, 32
  %v4851 = vpop.permute.xlu0 %4850
  %4852 = vrot.lane.b32.xlu0 %v4018, 32
  %v4853 = vpop.permute.xlu0 %4852
  %4854 = vrot.lane.b32.xlu0 %v4020, 32
  %v4855 = vpop.permute.xlu0 %4854
  %4856 = vrot.lane.b32.xlu0 %v4023, 32
  %v4857 = vpop.permute.xlu0 %4856
  %4858 = vrot.lane.b32.xlu0 %v4025, 32
  %v4859 = vpop.permute.xlu0 %4858
  %4860 = vrot.lane.b32.xlu0 %v4028, 32
  %v4861 = vpop.permute.xlu0 %4860
  %4862 = vrot.lane.b32.xlu0 %v4030, 32
  %v4863 = vpop.permute.xlu0 %4862
  %4864 = vrot.lane.b32.xlu0 %v4033, 32
  %v4865 = vpop.permute.xlu0 %4864
  %4866 = vrot.lane.b32.xlu0 %v4035, 32
  %v4867 = vpop.permute.xlu0 %4866
  %4868 = vrot.lane.b32.xlu0 %v4038, 32
  %v4869 = vpop.permute.xlu0 %4868
  %4870 = vrot.lane.b32.xlu0 %v4040, 32
  %v4871 = vpop.permute.xlu0 %4870
  %4872 = vrot.lane.b32.xlu0 %v4043, 32
  %v4873 = vpop.permute.xlu0 %4872
  %4874 = vrot.lane.b32.xlu0 %v4045, 32
  %v4875 = vpop.permute.xlu0 %4874
  %4876 = vrot.lane.b32.xlu0 %v4048, 32
  %v4877 = vpop.permute.xlu0 %4876
  %4878 = vrot.lane.b32.xlu0 %v4050, 32
  %v4879 = vpop.permute.xlu0 %4878
  %4880 = vrot.lane.b32.xlu0 %v4053, 32
  %v4881 = vpop.permute.xlu0 %4880
  %4882 = vrot.lane.b32.xlu0 %v4055, 32
  %v4883 = vpop.permute.xlu0 %4882
  %4884 = vrot.lane.b32.xlu0 %v4058, 32
  %v4885 = vpop.permute.xlu0 %4884
  %4886 = vrot.lane.b32.xlu0 %v4060, 32
  %v4887 = vpop.permute.xlu0 %4886
  %4888 = vrot.lane.b32.xlu0 %v4063, 32
  %v4889 = vpop.permute.xlu0 %4888
  %4890 = vrot.lane.b32.xlu0 %v4065, 32
  %v4891 = vpop.permute.xlu0 %4890
  %4892 = vrot.lane.b32.xlu0 %v4068, 32
  %v4893 = vpop.permute.xlu0 %4892
  %4894 = vrot.lane.b32.xlu0 %v4070, 32
  %v4895 = vpop.permute.xlu0 %4894
  %4896 = vrot.lane.b32.xlu0 %v4073, 32
  %v4897 = vpop.permute.xlu0 %4896
  %4898 = vrot.lane.b32.xlu0 %v4075, 32
  %v4899 = vpop.permute.xlu0 %4898
  %4900 = vrot.lane.b32.xlu0 %v4161, 32
  %v4901 = vpop.permute.xlu0 %4900
  %4902 = vrot.lane.b32.xlu0 %v4163, 32
  %v4903 = vpop.permute.xlu0 %4902
  %4968 = vrot.lane.b32.xlu0 %v3653, 64
  %v4969 = vpop.permute.xlu0 %4968
  %4970 = vrot.lane.b32.xlu0 %v3467, 64
  %v4971 = vpop.permute.xlu0 %4970
  %4972 = vrot.lane.b32.xlu0 %v3654, 64
  %v4973 = vpop.permute.xlu0 %4972
  %4974 = vrot.lane.b32.xlu0 %v3470, 64
  %v4975 = vpop.permute.xlu0 %4974
  %4976 = vrot.lane.b32.xlu0 %v3655, 64
  %v4977 = vpop.permute.xlu0 %4976
  %4978 = vrot.lane.b32.xlu0 %v3473, 64
  %v4979 = vpop.permute.xlu0 %4978
  %4980 = vrot.lane.b32.xlu0 %v3656, 64
  %v4981 = vpop.permute.xlu0 %4980
  %4982 = vrot.lane.b32.xlu0 %v3476, 64
  %v4983 = vpop.permute.xlu0 %4982
  %4984 = vrot.lane.b32.xlu0 %v3657, 64
  %v4985 = vpop.permute.xlu0 %4984
  %4986 = vrot.lane.b32.xlu0 %v3479, 64
  %v4987 = vpop.permute.xlu0 %4986
  %4988 = vrot.lane.b32.xlu0 %v3658, 64
  %v4989 = vpop.permute.xlu0 %4988
  %4990 = vrot.lane.b32.xlu0 %v3482, 64
  %v4991 = vpop.permute.xlu0 %4990
  %4992 = vrot.lane.b32.xlu0 %v3659, 64
  %v4993 = vpop.permute.xlu0 %4992
  %4994 = vrot.lane.b32.xlu0 %v3485, 64
  %v4995 = vpop.permute.xlu0 %4994
  %4996 = vrot.lane.b32.xlu0 %v3660, 64
  %v4997 = vpop.permute.xlu0 %4996
  %4998 = vrot.lane.b32.xlu0 %v3488, 64
  %v4999 = vpop.permute.xlu0 %4998
  %5000 = vrot.lane.b32.xlu0 %v3661, 64
  %v5001 = vpop.permute.xlu0 %5000
  %5002 = vrot.lane.b32.xlu0 %v3491, 64
  %v5003 = vpop.permute.xlu0 %5002
  %5004 = vrot.lane.b32.xlu0 %v3662, 64
  %v5005 = vpop.permute.xlu0 %5004
  %5006 = vrot.lane.b32.xlu0 %v3494, 64
  %v5007 = vpop.permute.xlu0 %5006
  %5008 = vrot.lane.b32.xlu0 %v3663, 64
  %v5009 = vpop.permute.xlu0 %5008
  %5010 = vrot.lane.b32.xlu0 %v3497, 64
  %v5011 = vpop.permute.xlu0 %5010
  %5012 = vrot.lane.b32.xlu0 %v3664, 64
  %v5013 = vpop.permute.xlu0 %5012
  %5014 = vrot.lane.b32.xlu0 %v3500, 64
  %v5015 = vpop.permute.xlu0 %5014
  %5016 = vrot.lane.b32.xlu0 %v3665, 64
  %v5017 = vpop.permute.xlu0 %5016
  %5018 = vrot.lane.b32.xlu0 %v3503, 64
  %v5019 = vpop.permute.xlu0 %5018
  %5020 = vrot.lane.b32.xlu0 %v3666, 64
  %v5021 = vpop.permute.xlu0 %5020
  %5022 = vrot.lane.b32.xlu0 %v3506, 64
  %v5023 = vpop.permute.xlu0 %5022
  %5024 = vrot.lane.b32.xlu0 %v3667, 64
  %v5025 = vpop.permute.xlu0 %5024
  %5026 = vrot.lane.b32.xlu0 %v3509, 64
  %v5027 = vpop.permute.xlu0 %5026
  %5028 = vrot.lane.b32.xlu0 %v3669, 64
  %v5029 = vpop.permute.xlu0 %5028
  %5030 = vrot.lane.b32.xlu0 %v3515, 64
  %v5031 = vpop.permute.xlu0 %5030
  %5032 = vrot.lane.b32.xlu0 %v3670, 64
  %v5033 = vpop.permute.xlu0 %5032
  %5034 = vrot.lane.b32.xlu0 %v3518, 64
  %v5035 = vpop.permute.xlu0 %5034
  %5036 = vrot.lane.b32.xlu0 %v3671, 64
  %v5037 = vpop.permute.xlu0 %5036
  %5038 = vrot.lane.b32.xlu0 %v3521, 64
  %v5039 = vpop.permute.xlu0 %5038
  %5040 = vrot.lane.b32.xlu0 %v3672, 64
  %v5041 = vpop.permute.xlu0 %5040
  %5042 = vrot.lane.b32.xlu0 %v3524, 64
  %v5043 = vpop.permute.xlu0 %5042
  %5044 = vrot.lane.b32.xlu0 %v3673, 64
  %v5045 = vpop.permute.xlu0 %5044
  %5046 = vrot.lane.b32.xlu0 %v3527, 64
  %v5047 = vpop.permute.xlu0 %5046
  %5048 = vrot.lane.b32.xlu0 %v3674, 64
  %v5049 = vpop.permute.xlu0 %5048
  %5050 = vrot.lane.b32.xlu0 %v3530, 64
  %v5051 = vpop.permute.xlu0 %5050
  %5052 = vrot.lane.b32.xlu0 %v3675, 64
  %v5053 = vpop.permute.xlu0 %5052
  %5054 = vrot.lane.b32.xlu0 %v3533, 64
  %v5055 = vpop.permute.xlu0 %5054
  %5056 = vrot.lane.b32.xlu0 %v3676, 64
  %v5057 = vpop.permute.xlu0 %5056
  %5058 = vrot.lane.b32.xlu0 %v3536, 64
  %v5059 = vpop.permute.xlu0 %5058
  %5060 = vrot.lane.b32.xlu0 %v3677, 64
  %v5061 = vpop.permute.xlu0 %5060
  %5062 = vrot.lane.b32.xlu0 %v3539, 64
  %v5063 = vpop.permute.xlu0 %5062
  %5064 = vrot.lane.b32.xlu0 %v3678, 64
  %v5065 = vpop.permute.xlu0 %5064
  %5066 = vrot.lane.b32.xlu0 %v3542, 64
  %v5067 = vpop.permute.xlu0 %5066
  %5068 = vrot.lane.b32.xlu0 %v3679, 64
  %v5069 = vpop.permute.xlu0 %5068
  %5070 = vrot.lane.b32.xlu0 %v3545, 64
  %v5071 = vpop.permute.xlu0 %5070
  %5072 = vrot.lane.b32.xlu0 %v3680, 64
  %v5073 = vpop.permute.xlu0 %5072
  %5074 = vrot.lane.b32.xlu0 %v3548, 64
  %v5075 = vpop.permute.xlu0 %5074
  %5076 = vrot.lane.b32.xlu0 %v3681, 64
  %v5077 = vpop.permute.xlu0 %5076
  %5078 = vrot.lane.b32.xlu0 %v3551, 64
  %v5079 = vpop.permute.xlu0 %5078
  %5080 = vrot.lane.b32.xlu0 %v3682, 64
  %v5081 = vpop.permute.xlu0 %5080
  %5082 = vrot.lane.b32.xlu0 %v3554, 64
  %v5083 = vpop.permute.xlu0 %5082
  %5084 = vrot.lane.b32.xlu0 %v3683, 64
  %v5085 = vpop.permute.xlu0 %5084
  %5086 = vrot.lane.b32.xlu0 %v3557, 64
  %v5087 = vpop.permute.xlu0 %5086
  %5148 = vrot.lane.b32.xlu0 %v3783, 96
  %v5149 = vpop.permute.xlu0 %5148
  %5150 = vrot.lane.b32.xlu0 %v3785, 96
  %v5151 = vpop.permute.xlu0 %5150
  %5152 = vrot.lane.b32.xlu0 %v3788, 96
  %v5153 = vpop.permute.xlu0 %5152
  %5154 = vrot.lane.b32.xlu0 %v3790, 96
  %v5155 = vpop.permute.xlu0 %5154
  %5156 = vrot.lane.b32.xlu0 %v3793, 96
  %v5157 = vpop.permute.xlu0 %5156
  %5158 = vrot.lane.b32.xlu0 %v3795, 96
  %v5159 = vpop.permute.xlu0 %5158
  %5160 = vrot.lane.b32.xlu0 %v3798, 96
  %v5161 = vpop.permute.xlu0 %5160
  %5162 = vrot.lane.b32.xlu0 %v3800, 96
  %v5163 = vpop.permute.xlu0 %5162
  %5164 = vrot.lane.b32.xlu0 %v3803, 96
  %v5165 = vpop.permute.xlu0 %5164
  %5166 = vrot.lane.b32.xlu0 %v3805, 96
  %v5167 = vpop.permute.xlu0 %5166
  %5168 = vrot.lane.b32.xlu0 %v3808, 96
  %v5169 = vpop.permute.xlu0 %5168
  %5170 = vrot.lane.b32.xlu0 %v3810, 96
  %v5171 = vpop.permute.xlu0 %5170
  %5172 = vrot.lane.b32.xlu0 %v3813, 96
  %v5173 = vpop.permute.xlu0 %5172
  %5174 = vrot.lane.b32.xlu0 %v3815, 96
  %v5175 = vpop.permute.xlu0 %5174
  %5176 = vrot.lane.b32.xlu0 %v3818, 96
  %v5177 = vpop.permute.xlu0 %5176
  %5178 = vrot.lane.b32.xlu0 %v3820, 96
  %v5179 = vpop.permute.xlu0 %5178
  %5180 = vrot.lane.b32.xlu0 %v3823, 96
  %v5181 = vpop.permute.xlu0 %5180
  %5182 = vrot.lane.b32.xlu0 %v3825, 96
  %v5183 = vpop.permute.xlu0 %5182
  %5184 = vrot.lane.b32.xlu0 %v3828, 96
  %v5185 = vpop.permute.xlu0 %5184
  %5186 = vrot.lane.b32.xlu0 %v3830, 96
  %v5187 = vpop.permute.xlu0 %5186
  %5188 = vrot.lane.b32.xlu0 %v3833, 96
  %v5189 = vpop.permute.xlu0 %5188
  %5190 = vrot.lane.b32.xlu0 %v3835, 96
  %v5191 = vpop.permute.xlu0 %5190
  %5192 = vrot.lane.b32.xlu0 %v3838, 96
  %v5193 = vpop.permute.xlu0 %5192
  %5194 = vrot.lane.b32.xlu0 %v3840, 96
  %v5195 = vpop.permute.xlu0 %5194
  %5196 = vrot.lane.b32.xlu0 %v3843, 96
  %v5197 = vpop.permute.xlu0 %5196
  %5198 = vrot.lane.b32.xlu0 %v3845, 96
  %v5199 = vpop.permute.xlu0 %5198
  %5200 = vrot.lane.b32.xlu0 %v3848, 96
  %v5201 = vpop.permute.xlu0 %5200
  %5202 = vrot.lane.b32.xlu0 %v3850, 96
  %v5203 = vpop.permute.xlu0 %5202
  %5204 = vrot.lane.b32.xlu0 %v4082, 96
  %v5205 = vpop.permute.xlu0 %5204
  %5206 = vrot.lane.b32.xlu0 %v4084, 96
  %v5207 = vpop.permute.xlu0 %5206
  %5208 = vrot.lane.b32.xlu0 %v3858, 96
  %v5209 = vpop.permute.xlu0 %5208
  %5210 = vrot.lane.b32.xlu0 %v3860, 96
  %v5211 = vpop.permute.xlu0 %5210
  %5212 = vrot.lane.b32.xlu0 %v3863, 96
  %v5213 = vpop.permute.xlu0 %5212
  %5214 = vrot.lane.b32.xlu0 %v3865, 96
  %v5215 = vpop.permute.xlu0 %5214
  %5216 = vrot.lane.b32.xlu0 %v3868, 96
  %v5217 = vpop.permute.xlu0 %5216
  %5218 = vrot.lane.b32.xlu0 %v3870, 96
  %v5219 = vpop.permute.xlu0 %5218
  %5220 = vrot.lane.b32.xlu0 %v3873, 96
  %v5221 = vpop.permute.xlu0 %5220
  %5222 = vrot.lane.b32.xlu0 %v3875, 96
  %v5223 = vpop.permute.xlu0 %5222
  %5224 = vrot.lane.b32.xlu0 %v3878, 96
  %v5225 = vpop.permute.xlu0 %5224
  %5226 = vrot.lane.b32.xlu0 %v3880, 96
  %v5227 = vpop.permute.xlu0 %5226
  %5228 = vrot.lane.b32.xlu0 %v3883, 96
  %v5229 = vpop.permute.xlu0 %5228
  %5230 = vrot.lane.b32.xlu0 %v3885, 96
  %v5231 = vpop.permute.xlu0 %5230
  %5232 = vrot.lane.b32.xlu0 %v3888, 96
  %v5233 = vpop.permute.xlu0 %5232
  %5234 = vrot.lane.b32.xlu0 %v3890, 96
  %v5235 = vpop.permute.xlu0 %5234
  %5236 = vrot.lane.b32.xlu0 %v3893, 96
  %v5237 = vpop.permute.xlu0 %5236
  %5238 = vrot.lane.b32.xlu0 %v3895, 96
  %v5239 = vpop.permute.xlu0 %5238
  %5240 = vrot.lane.b32.xlu0 %v3898, 96
  %v5241 = vpop.permute.xlu0 %5240
  %5242 = vrot.lane.b32.xlu0 %v3900, 96
  %v5243 = vpop.permute.xlu0 %5242
  %5244 = vrot.lane.b32.xlu0 %v3903, 96
  %v5245 = vpop.permute.xlu0 %5244
  %5246 = vrot.lane.b32.xlu0 %v3905, 96
  %v5247 = vpop.permute.xlu0 %5246
  %5248 = vrot.lane.b32.xlu0 %v3908, 96
  %v5249 = vpop.permute.xlu0 %5248
  %5250 = vrot.lane.b32.xlu0 %v3910, 96
  %v5251 = vpop.permute.xlu0 %5250
  %5252 = vrot.lane.b32.xlu0 %v3913, 96
  %v5253 = vpop.permute.xlu0 %5252
  %5254 = vrot.lane.b32.xlu0 %v3915, 96
  %v5255 = vpop.permute.xlu0 %5254
  %5256 = vrot.lane.b32.xlu0 %v3918, 96
  %v5257 = vpop.permute.xlu0 %5256
  %5258 = vrot.lane.b32.xlu0 %v3920, 96
  %v5259 = vpop.permute.xlu0 %5258
  %5260 = vrot.lane.b32.xlu0 %v3923, 96
  %v5261 = vpop.permute.xlu0 %5260
  %5262 = vrot.lane.b32.xlu0 %v3925, 96
  %v5263 = vpop.permute.xlu0 %5262
  %5264 = vrot.lane.b32.xlu0 %v4087, 96
  %v5265 = vpop.permute.xlu0 %5264
  %5266 = vrot.lane.b32.xlu0 %v4089, 96
  %v5267 = vpop.permute.xlu0 %5266
  %v5328 = vsel %vm2036, %v3652, %v4225
  %v5329 = vsel %vm2036, %v3464, %v4227
  %v5330 = vsel %vm2036, %v3653, %v4229
  %v5331 = vsel %vm2036, %v3467, %v4231
  %v5332 = vsel %vm2036, %v3654, %v4233
  %v5333 = vsel %vm2036, %v3470, %v4235
  %v5334 = vsel %vm2036, %v3655, %v4237
  %v5335 = vsel %vm2036, %v3473, %v4239
  %v5336 = vsel %vm2036, %v3656, %v4241
  %v5337 = vsel %vm2036, %v3476, %v4243
  %v5338 = vsel %vm2036, %v3657, %v4245
  %v5339 = vsel %vm2036, %v3479, %v4247
  %v5340 = vsel %vm2036, %v3658, %v4249
  %v5341 = vsel %vm2036, %v3482, %v4251
  %v5342 = vsel %vm2036, %v3659, %v4253
  %v5343 = vsel %vm2036, %v3485, %v4255
  %v5344 = vsel %vm2036, %v3660, %v4257
  %v5345 = vsel %vm2036, %v3488, %v4259
  %v5346 = vsel %vm2036, %v3661, %v4261
  %v5347 = vsel %vm2036, %v3491, %v4263
  %v5348 = vsel %vm2036, %v3662, %v4265
  %v5349 = vsel %vm2036, %v3494, %v4267
  %v5350 = vsel %vm2036, %v3663, %v4269
  %v5351 = vsel %vm2036, %v3497, %v4271
  %v5352 = vsel %vm2036, %v3664, %v4273
  %v5353 = vsel %vm2036, %v3500, %v4275
  %v5354 = vsel %vm2036, %v3665, %v4277
  %v5355 = vsel %vm2036, %v3503, %v4279
  %v5356 = vsel %vm2036, %v3666, %v4281
  %v5357 = vsel %vm2036, %v3506, %v4283
  %v5358 = vsel %vm2036, %v3668, %v4285
  %v5359 = vsel %vm2036, %v3512, %v4287
  %v5360 = vsel %vm2036, %v3669, %v4289
  %v5361 = vsel %vm2036, %v3515, %v4291
  %v5362 = vsel %vm2036, %v3670, %v4293
  %v5363 = vsel %vm2036, %v3518, %v4295
  %v5364 = vsel %vm2036, %v3671, %v4297
  %v5365 = vsel %vm2036, %v3521, %v4299
  %v5366 = vsel %vm2036, %v3672, %v4301
  %v5367 = vsel %vm2036, %v3524, %v4303
  %v5368 = vsel %vm2036, %v3673, %v4305
  %v5369 = vsel %vm2036, %v3527, %v4307
  %v5370 = vsel %vm2036, %v3674, %v4309
  %v5371 = vsel %vm2036, %v3530, %v4311
  %v5372 = vsel %vm2036, %v3675, %v4313
  %v5373 = vsel %vm2036, %v3533, %v4315
  %v5374 = vsel %vm2036, %v3676, %v4317
  %v5375 = vsel %vm2036, %v3536, %v4319
  %v5376 = vsel %vm2036, %v3677, %v4321
  %v5377 = vsel %vm2036, %v3539, %v4323
  %v5378 = vsel %vm2036, %v3678, %v4325
  %v5379 = vsel %vm2036, %v3542, %v4327
  %v5380 = vsel %vm2036, %v3679, %v4329
  %v5381 = vsel %vm2036, %v3545, %v4331
  %v5382 = vsel %vm2036, %v3680, %v4333
  %v5383 = vsel %vm2036, %v3548, %v4335
  %v5384 = vsel %vm2036, %v3681, %v4337
  %v5385 = vsel %vm2036, %v3551, %v4339
  %v5386 = vsel %vm2036, %v3682, %v4341
  %v5387 = vsel %vm2036, %v3554, %v4343
  %v5388 = vsel %vm2098, %v5328, %v4405
  %v5389 = vsel %vm2098, %v5329, %v4407
  %v5390 = vsel %vm2098, %v5330, %v4409
  %v5391 = vsel %vm2098, %v5331, %v4411
  %v5392 = vsel %vm2098, %v5332, %v4413
  %v5393 = vsel %vm2098, %v5333, %v4415
  %v5394 = vsel %vm2098, %v5334, %v4417
  %v5395 = vsel %vm2098, %v5335, %v4419
  %v5396 = vsel %vm2098, %v5336, %v4421
  %v5397 = vsel %vm2098, %v5337, %v4423
  %v5398 = vsel %vm2098, %v5338, %v4425
  %v5399 = vsel %vm2098, %v5339, %v4427
  %v5400 = vsel %vm2098, %v5340, %v4429
  %v5401 = vsel %vm2098, %v5341, %v4431
  %v5402 = vsel %vm2098, %v5342, %v4433
  %v5403 = vsel %vm2098, %v5343, %v4435
  %v5404 = vsel %vm2098, %v5344, %v4437
  %v5405 = vsel %vm2098, %v5345, %v4439
  %v5406 = vsel %vm2098, %v5346, %v4441
  %v5407 = vsel %vm2098, %v5347, %v4443
  %v5408 = vsel %vm2098, %v5348, %v4445
  %v5409 = vsel %vm2098, %v5349, %v4447
  %v5410 = vsel %vm2098, %v5350, %v4449
  %v5411 = vsel %vm2098, %v5351, %v4451
  %v5412 = vsel %vm2098, %v5352, %v4453
  %v5413 = vsel %vm2098, %v5353, %v4455
  %v5414 = vsel %vm2098, %v5354, %v4457
  %v5415 = vsel %vm2098, %v5355, %v4459
  %v5416 = vsel %vm2098, %v5356, %v4461
  %v5417 = vsel %vm2098, %v5357, %v4463
  %v5418 = vsel %vm2098, %v5358, %v4465
  %v5419 = vsel %vm2098, %v5359, %v4467
  %v5420 = vsel %vm2098, %v5360, %v4469
  %v5421 = vsel %vm2098, %v5361, %v4471
  %v5422 = vsel %vm2098, %v5362, %v4473
  %v5423 = vsel %vm2098, %v5363, %v4475
  %v5424 = vsel %vm2098, %v5364, %v4477
  %v5425 = vsel %vm2098, %v5365, %v4479
  %v5426 = vsel %vm2098, %v5366, %v4481
  %v5427 = vsel %vm2098, %v5367, %v4483
  %v5428 = vsel %vm2098, %v5368, %v4485
  %v5429 = vsel %vm2098, %v5369, %v4487
  %v5430 = vsel %vm2098, %v5370, %v4489
  %v5431 = vsel %vm2098, %v5371, %v4491
  %v5432 = vsel %vm2098, %v5372, %v4493
  %v5433 = vsel %vm2098, %v5373, %v4495
  %v5434 = vsel %vm2098, %v5374, %v4497
  %v5435 = vsel %vm2098, %v5375, %v4499
  %v5436 = vsel %vm2098, %v5376, %v4501
  %v5437 = vsel %vm2098, %v5377, %v4503
  %v5438 = vsel %vm2098, %v5378, %v4505
  %v5439 = vsel %vm2098, %v5379, %v4507
  %v5440 = vsel %vm2098, %v5380, %v4509
  %v5441 = vsel %vm2098, %v5381, %v4511
  %v5442 = vsel %vm2098, %v5382, %v4513
  %v5443 = vsel %vm2098, %v5383, %v4515
  %v5444 = vsel %vm2098, %v5384, %v4517
  %v5445 = vsel %vm2098, %v5385, %v4519
  %v5446 = vsel %vm2098, %v5386, %v4521
  %v5447 = vsel %vm2098, %v5387, %v4523
  %v5448 = vsel %vm2160, %v2099, %v4585
  %v5449 = vsel %vm2160, %v2099, %v4587
  %v5450 = vsel %vm2160, %v5388, %v4589
  %v5451 = vsel %vm2160, %v5389, %v4591
  %v5452 = vsel %vm2160, %v5390, %v4593
  %v5453 = vsel %vm2160, %v5391, %v4595
  %v5454 = vsel %vm2160, %v5392, %v4597
  %v5455 = vsel %vm2160, %v5393, %v4599
  %v5456 = vsel %vm2160, %v5394, %v4601
  %v5457 = vsel %vm2160, %v5395, %v4603
  %v5458 = vsel %vm2160, %v5396, %v4605
  %v5459 = vsel %vm2160, %v5397, %v4607
  %v5460 = vsel %vm2160, %v5398, %v4609
  %v5461 = vsel %vm2160, %v5399, %v4611
  %v5462 = vsel %vm2160, %v5400, %v4613
  %v5463 = vsel %vm2160, %v5401, %v4615
  %v5464 = vsel %vm2160, %v5402, %v4617
  %v5465 = vsel %vm2160, %v5403, %v4619
  %v5466 = vsel %vm2160, %v5404, %v4621
  %v5467 = vsel %vm2160, %v5405, %v4623
  %v5468 = vsel %vm2160, %v5406, %v4625
  %v5469 = vsel %vm2160, %v5407, %v4627
  %v5470 = vsel %vm2160, %v5408, %v4629
  %v5471 = vsel %vm2160, %v5409, %v4631
  %v5472 = vsel %vm2160, %v5410, %v4633
  %v5473 = vsel %vm2160, %v5411, %v4635
  %v5474 = vsel %vm2160, %v5412, %v4637
  %v5475 = vsel %vm2160, %v5413, %v4639
  %v5476 = vsel %vm2160, %v5414, %v4641
  %v5477 = vsel %vm2160, %v5415, %v4643
  %v5478 = vsel %vm2160, %v5416, %v4645
  %v5479 = vsel %vm2160, %v5417, %v4647
  %v5480 = vsel %vm2160, %v2099, %v4649
  %v5481 = vsel %vm2160, %v2099, %v4651
  %v5482 = vsel %vm2160, %v5418, %v4653
  %v5483 = vsel %vm2160, %v5419, %v4655
  %v5484 = vsel %vm2160, %v5420, %v4657
  %v5485 = vsel %vm2160, %v5421, %v4659
  %v5486 = vsel %vm2160, %v5422, %v4661
  %v5487 = vsel %vm2160, %v5423, %v4663
  %v5488 = vsel %vm2160, %v5424, %v4665
  %v5489 = vsel %vm2160, %v5425, %v4667
  %v5490 = vsel %vm2160, %v5426, %v4669
  %v5491 = vsel %vm2160, %v5427, %v4671
  %v5492 = vsel %vm2160, %v5428, %v4673
  %v5493 = vsel %vm2160, %v5429, %v4675
  %v5494 = vsel %vm2160, %v5430, %v4677
  %v5495 = vsel %vm2160, %v5431, %v4679
  %v5496 = vsel %vm2160, %v5432, %v4681
  %v5497 = vsel %vm2160, %v5433, %v4683
  %v5498 = vsel %vm2160, %v5434, %v4685
  %v5499 = vsel %vm2160, %v5435, %v4687
  %v5500 = vsel %vm2160, %v5436, %v4689
  %v5501 = vsel %vm2160, %v5437, %v4691
  %v5502 = vsel %vm2160, %v5438, %v4693
  %v5503 = vsel %vm2160, %v5439, %v4695
  %v5504 = vsel %vm2160, %v5440, %v4697
  %v5505 = vsel %vm2160, %v5441, %v4699
  %v5506 = vsel %vm2160, %v5442, %v4701
  %v5507 = vsel %vm2160, %v5443, %v4703
  %v5508 = vsel %vm2160, %v5444, %v4705
  %v5509 = vsel %vm2160, %v5445, %v4707
  %v5510 = vsel %vm2160, %v5446, %v4709
  %v5511 = vsel %vm2160, %v5447, %v4711
  %v5512 = vsel %vm2036, %v3778, %v4777
  %v5513 = vsel %vm2036, %v3780, %v4779
  %v5514 = vsel %vm2036, %v3783, %v4781
  %v5515 = vsel %vm2036, %v3785, %v4783
  %v5516 = vsel %vm2036, %v3788, %v4785
  %v5517 = vsel %vm2036, %v3790, %v4787
  %v5518 = vsel %vm2036, %v3793, %v4789
  %v5519 = vsel %vm2036, %v3795, %v4791
  %v5520 = vsel %vm2036, %v3798, %v4793
  %v5521 = vsel %vm2036, %v3800, %v4795
  %v5522 = vsel %vm2036, %v3803, %v4797
  %v5523 = vsel %vm2036, %v3805, %v4799
  %v5524 = vsel %vm2036, %v3808, %v4801
  %v5525 = vsel %vm2036, %v3810, %v4803
  %v5526 = vsel %vm2036, %v3813, %v4805
  %v5527 = vsel %vm2036, %v3815, %v4807
  %v5528 = vsel %vm2036, %v3818, %v4809
  %v5529 = vsel %vm2036, %v3820, %v4811
  %v5530 = vsel %vm2036, %v3823, %v4813
  %v5531 = vsel %vm2036, %v3825, %v4815
  %v5532 = vsel %vm2036, %v3828, %v4817
  %v5533 = vsel %vm2036, %v3830, %v4819
  %v5534 = vsel %vm2036, %v3833, %v4821
  %v5535 = vsel %vm2036, %v3835, %v4823
  %v5536 = vsel %vm2036, %v3838, %v4825
  %v5537 = vsel %vm2036, %v3840, %v4827
  %v5538 = vsel %vm2036, %v3843, %v4829
  %v5539 = vsel %vm2036, %v3845, %v4831
  %v5540 = vsel %vm2036, %v3848, %v4833
  %v5541 = vsel %vm2036, %v3850, %v4835
  %v5542 = vsel %vm2036, %v4082, %v4837
  %v5543 = vsel %vm2036, %v4084, %v4839
  %v5544 = vsel %vm2036, %v3853, %v4841
  %v5545 = vsel %vm2036, %v3855, %v4843
  %v5546 = vsel %vm2036, %v3858, %v4845
  %v5547 = vsel %vm2036, %v3860, %v4847
  %v5548 = vsel %vm2036, %v3863, %v4849
  %v5549 = vsel %vm2036, %v3865, %v4851
  %v5550 = vsel %vm2036, %v3868, %v4853
  %v5551 = vsel %vm2036, %v3870, %v4855
  %v5552 = vsel %vm2036, %v3873, %v4857
  %v5553 = vsel %vm2036, %v3875, %v4859
  %v5554 = vsel %vm2036, %v3878, %v4861
  %v5555 = vsel %vm2036, %v3880, %v4863
  %v5556 = vsel %vm2036, %v3883, %v4865
  %v5557 = vsel %vm2036, %v3885, %v4867
  %v5558 = vsel %vm2036, %v3888, %v4869
  %v5559 = vsel %vm2036, %v3890, %v4871
  %v5560 = vsel %vm2036, %v3893, %v4873
  %v5561 = vsel %vm2036, %v3895, %v4875
  %v5562 = vsel %vm2036, %v3898, %v4877
  %v5563 = vsel %vm2036, %v3900, %v4879
  %v5564 = vsel %vm2036, %v3903, %v4881
  %v5565 = vsel %vm2036, %v3905, %v4883
  %v5566 = vsel %vm2036, %v3908, %v4885
  %v5567 = vsel %vm2036, %v3910, %v4887
  %v5568 = vsel %vm2036, %v3913, %v4889
  %v5569 = vsel %vm2036, %v3915, %v4891
  %v5570 = vsel %vm2036, %v3918, %v4893
  %v5571 = vsel %vm2036, %v3920, %v4895
  %v5572 = vsel %vm2036, %v3923, %v4897
  %v5573 = vsel %vm2036, %v3925, %v4899
  %v5574 = vsel %vm2036, %v4087, %v4901
  %v5575 = vsel %vm2036, %v4089, %v4903
  %v5576 = vsel %vm2098, %v5512, %v4969
  %v5577 = vsel %vm2098, %v5513, %v4971
  %v5578 = vsel %vm2098, %v5514, %v4973
  %v5579 = vsel %vm2098, %v5515, %v4975
  %v5580 = vsel %vm2098, %v5516, %v4977
  %v5581 = vsel %vm2098, %v5517, %v4979
  %v5582 = vsel %vm2098, %v5518, %v4981
  %v5583 = vsel %vm2098, %v5519, %v4983
  %v5584 = vsel %vm2098, %v5520, %v4985
  %v5585 = vsel %vm2098, %v5521, %v4987
  %v5586 = vsel %vm2098, %v5522, %v4989
  %v5587 = vsel %vm2098, %v5523, %v4991
  %v5588 = vsel %vm2098, %v5524, %v4993
  %v5589 = vsel %vm2098, %v5525, %v4995
  %v5590 = vsel %vm2098, %v5526, %v4997
  %v5591 = vsel %vm2098, %v5527, %v4999
  %v5592 = vsel %vm2098, %v5528, %v5001
  %v5593 = vsel %vm2098, %v5529, %v5003
  %v5594 = vsel %vm2098, %v5530, %v5005
  %v5595 = vsel %vm2098, %v5531, %v5007
  %v5596 = vsel %vm2098, %v5532, %v5009
  %v5597 = vsel %vm2098, %v5533, %v5011
  %v5598 = vsel %vm2098, %v5534, %v5013
  %v5599 = vsel %vm2098, %v5535, %v5015
  %v5600 = vsel %vm2098, %v5536, %v5017
  %v5601 = vsel %vm2098, %v5537, %v5019
  %v5602 = vsel %vm2098, %v5538, %v5021
  %v5603 = vsel %vm2098, %v5539, %v5023
  %v5604 = vsel %vm2098, %v5540, %v5025
  %v5605 = vsel %vm2098, %v5541, %v5027
  %v5606 = vsel %vm2098, %v5542, %v1731
  %v5607 = vsel %vm2098, %v5543, %v1731
  %v5608 = vsel %vm2098, %v5544, %v5029
  %v5609 = vsel %vm2098, %v5545, %v5031
  %v5610 = vsel %vm2098, %v5546, %v5033
  %v5611 = vsel %vm2098, %v5547, %v5035
  %v5612 = vsel %vm2098, %v5548, %v5037
  %v5613 = vsel %vm2098, %v5549, %v5039
  %v5614 = vsel %vm2098, %v5550, %v5041
  %v5615 = vsel %vm2098, %v5551, %v5043
  %v5616 = vsel %vm2098, %v5552, %v5045
  %v5617 = vsel %vm2098, %v5553, %v5047
  %v5618 = vsel %vm2098, %v5554, %v5049
  %v5619 = vsel %vm2098, %v5555, %v5051
  %v5620 = vsel %vm2098, %v5556, %v5053
  %v5621 = vsel %vm2098, %v5557, %v5055
  %v5622 = vsel %vm2098, %v5558, %v5057
  %v5623 = vsel %vm2098, %v5559, %v5059
  %v5624 = vsel %vm2098, %v5560, %v5061
  %v5625 = vsel %vm2098, %v5561, %v5063
  %v5626 = vsel %vm2098, %v5562, %v5065
  %v5627 = vsel %vm2098, %v5563, %v5067
  %v5628 = vsel %vm2098, %v5564, %v5069
  %v5629 = vsel %vm2098, %v5565, %v5071
  %v5630 = vsel %vm2098, %v5566, %v5073
  %v5631 = vsel %vm2098, %v5567, %v5075
  %v5632 = vsel %vm2098, %v5568, %v5077
  %v5633 = vsel %vm2098, %v5569, %v5079
  %v5634 = vsel %vm2098, %v5570, %v5081
  %v5635 = vsel %vm2098, %v5571, %v5083
  %v5636 = vsel %vm2098, %v5572, %v5085
  %v5637 = vsel %vm2098, %v5573, %v5087
  %v5638 = vsel %vm2098, %v5574, %v1731
  %v5639 = vsel %vm2098, %v5575, %v1731
  %v5640 = vsel %vm2160, %v5576, %v5149
  %v5641 = vsel %vm2160, %v5577, %v5151
  %v5642 = vsel %vm2160, %v5578, %v5153
  %v5643 = vsel %vm2160, %v5579, %v5155
  %v5644 = vsel %vm2160, %v5580, %v5157
  %v5645 = vsel %vm2160, %v5581, %v5159
  %v5646 = vsel %vm2160, %v5582, %v5161
  %v5647 = vsel %vm2160, %v5583, %v5163
  %v5648 = vsel %vm2160, %v5584, %v5165
  %v5649 = vsel %vm2160, %v5585, %v5167
  %v5650 = vsel %vm2160, %v5586, %v5169
  %v5651 = vsel %vm2160, %v5587, %v5171
  %v5652 = vsel %vm2160, %v5588, %v5173
  %v5653 = vsel %vm2160, %v5589, %v5175
  %v5654 = vsel %vm2160, %v5590, %v5177
  %v5655 = vsel %vm2160, %v5591, %v5179
  %v5656 = vsel %vm2160, %v5592, %v5181
  %v5657 = vsel %vm2160, %v5593, %v5183
  %v5658 = vsel %vm2160, %v5594, %v5185
  %v5659 = vsel %vm2160, %v5595, %v5187
  %v5660 = vsel %vm2160, %v5596, %v5189
  %v5661 = vsel %vm2160, %v5597, %v5191
  %v5662 = vsel %vm2160, %v5598, %v5193
  %v5663 = vsel %vm2160, %v5599, %v5195
  %v5664 = vsel %vm2160, %v5600, %v5197
  %v5665 = vsel %vm2160, %v5601, %v5199
  %v5666 = vsel %vm2160, %v5602, %v5201
  %v5667 = vsel %vm2160, %v5603, %v5203
  %v5668 = vsel %vm2160, %v5604, %v5205
  %v5669 = vsel %vm2160, %v5605, %v5207
  %v5670 = vsel %vm2160, %v5606, %v1914
  %v5671 = vsel %vm2160, %v5607, %v1914
  %v5672 = vsel %vm2160, %v5608, %v5209
  %v5673 = vsel %vm2160, %v5609, %v5211
  %v5674 = vsel %vm2160, %v5610, %v5213
  %v5675 = vsel %vm2160, %v5611, %v5215
  %v5676 = vsel %vm2160, %v5612, %v5217
  %v5677 = vsel %vm2160, %v5613, %v5219
  %v5678 = vsel %vm2160, %v5614, %v5221
  %v5679 = vsel %vm2160, %v5615, %v5223
  %v5680 = vsel %vm2160, %v5616, %v5225
  %v5681 = vsel %vm2160, %v5617, %v5227
  %v5682 = vsel %vm2160, %v5618, %v5229
  %v5683 = vsel %vm2160, %v5619, %v5231
  %v5684 = vsel %vm2160, %v5620, %v5233
  %v5685 = vsel %vm2160, %v5621, %v5235
  %v5686 = vsel %vm2160, %v5622, %v5237
  %v5687 = vsel %vm2160, %v5623, %v5239
  %v5688 = vsel %vm2160, %v5624, %v5241
  %v5689 = vsel %vm2160, %v5625, %v5243
  %v5690 = vsel %vm2160, %v5626, %v5245
  %v5691 = vsel %vm2160, %v5627, %v5247
  %v5692 = vsel %vm2160, %v5628, %v5249
  %v5693 = vsel %vm2160, %v5629, %v5251
  %v5694 = vsel %vm2160, %v5630, %v5253
  %v5695 = vsel %vm2160, %v5631, %v5255
  %v5696 = vsel %vm2160, %v5632, %v5257
  %v5697 = vsel %vm2160, %v5633, %v5259
  %v5698 = vsel %vm2160, %v5634, %v5261
  %v5699 = vsel %vm2160, %v5635, %v5263
  %v5700 = vsel %vm2160, %v5636, %v5265
  %v5701 = vsel %vm2160, %v5637, %v5267
  %v5702 = vsel %vm2160, %v5638, %v1914
  %v5703 = vsel %vm2160, %v5639, %v1914
  %v5704 = vpack.c.bf16 %v5449, %v5448
  %v5705 = vpack.c.bf16 %v5641, %v5640
  %v5706 = vpack.c.bf16 %v3935, %v3933
  %v5707 = vpack.c.bf16 %v5451, %v5450
  %v5708 = vpack.c.bf16 %v5643, %v5642
  %v5709 = vpack.c.bf16 %v3940, %v3938
  %v5710 = vpack.c.bf16 %v5453, %v5452
  %v5711 = vpack.c.bf16 %v5645, %v5644
  %v5712 = vpack.c.bf16 %v3945, %v3943
  %v5713 = vpack.c.bf16 %v5455, %v5454
  %v5714 = vpack.c.bf16 %v5647, %v5646
  %v5715 = vpack.c.bf16 %v3950, %v3948
  %v5716 = vpack.c.bf16 %v5457, %v5456
  %v5717 = vpack.c.bf16 %v5649, %v5648
  %v5718 = vpack.c.bf16 %v3955, %v3953
  %v5719 = vpack.c.bf16 %v5459, %v5458
  %v5720 = vpack.c.bf16 %v5651, %v5650
  %v5721 = vpack.c.bf16 %v3960, %v3958
  %v5722 = vpack.c.bf16 %v5461, %v5460
  %v5723 = vpack.c.bf16 %v5653, %v5652
  %v5724 = vpack.c.bf16 %v3965, %v3963
  %v5725 = vpack.c.bf16 %v5463, %v5462
  %v5726 = vpack.c.bf16 %v5655, %v5654
  %v5727 = vpack.c.bf16 %v3970, %v3968
  %v5728 = vpack.c.bf16 %v5465, %v5464
  %v5729 = vpack.c.bf16 %v5657, %v5656
  %v5730 = vpack.c.bf16 %v3975, %v3973
  %v5731 = vpack.c.bf16 %v5467, %v5466
  %v5732 = vpack.c.bf16 %v5659, %v5658
  %v5733 = vpack.c.bf16 %v3980, %v3978
  %v5734 = vpack.c.bf16 %v5469, %v5468
  %v5735 = vpack.c.bf16 %v5661, %v5660
  %v5736 = vpack.c.bf16 %v3985, %v3983
  %v5737 = vpack.c.bf16 %v5471, %v5470
  %v5738 = vpack.c.bf16 %v5663, %v5662
  %v5739 = vpack.c.bf16 %v3990, %v3988
  %v5740 = vpack.c.bf16 %v5473, %v5472
  %v5741 = vpack.c.bf16 %v5665, %v5664
  %v5742 = vpack.c.bf16 %v3995, %v3993
  %v5743 = vpack.c.bf16 %v5475, %v5474
  %v5744 = vpack.c.bf16 %v5667, %v5666
  %v5745 = vpack.c.bf16 %v4000, %v3998
  %v5746 = vpack.c.bf16 %v5477, %v5476
  %v5747 = vpack.c.bf16 %v5669, %v5668
  %v5748 = vpack.c.bf16 %v4158, %v4156
  %v5749 = vpack.c.bf16 %v5479, %v5478
  %v5750 = vpack.c.bf16 %v5671, %v5670
  %v5751 = vpack.c.bf16 %v5481, %v5480
  %v5752 = vpack.c.bf16 %v5673, %v5672
  %v5753 = vpack.c.bf16 %v4010, %v4008
  %v5754 = vpack.c.bf16 %v5483, %v5482
  %v5755 = vpack.c.bf16 %v5675, %v5674
  %v5756 = vpack.c.bf16 %v4015, %v4013
  %v5757 = vpack.c.bf16 %v5485, %v5484
  %v5758 = vpack.c.bf16 %v5677, %v5676
  %v5759 = vpack.c.bf16 %v4020, %v4018
  %v5760 = vpack.c.bf16 %v5487, %v5486
  %v5761 = vpack.c.bf16 %v5679, %v5678
  %v5762 = vpack.c.bf16 %v4025, %v4023
  %v5763 = vpack.c.bf16 %v5489, %v5488
  %v5764 = vpack.c.bf16 %v5681, %v5680
  %v5765 = vpack.c.bf16 %v4030, %v4028
  %v5766 = vpack.c.bf16 %v5491, %v5490
  %v5767 = vpack.c.bf16 %v5683, %v5682
  %v5768 = vpack.c.bf16 %v4035, %v4033
  %v5769 = vpack.c.bf16 %v5493, %v5492
  %v5770 = vpack.c.bf16 %v5685, %v5684
  %v5771 = vpack.c.bf16 %v4040, %v4038
  %v5772 = vpack.c.bf16 %v5495, %v5494
  %v5773 = vpack.c.bf16 %v5687, %v5686
  %v5774 = vpack.c.bf16 %v4045, %v4043
  %v5775 = vpack.c.bf16 %v5497, %v5496
  %v5776 = vpack.c.bf16 %v5689, %v5688
  %v5777 = vpack.c.bf16 %v4050, %v4048
  %v5778 = vpack.c.bf16 %v5499, %v5498
  %v5779 = vpack.c.bf16 %v5691, %v5690
  %v5780 = vpack.c.bf16 %v4055, %v4053
  %v5781 = vpack.c.bf16 %v5501, %v5500
  %v5782 = vpack.c.bf16 %v5693, %v5692
  %v5783 = vpack.c.bf16 %v4060, %v4058
  %v5784 = vpack.c.bf16 %v5503, %v5502
  %v5785 = vpack.c.bf16 %v5695, %v5694
  %v5786 = vpack.c.bf16 %v4065, %v4063
  %v5787 = vpack.c.bf16 %v5505, %v5504
  %v5788 = vpack.c.bf16 %v5697, %v5696
  %v5789 = vpack.c.bf16 %v4070, %v4068
  %v5790 = vpack.c.bf16 %v5507, %v5506
  %v5791 = vpack.c.bf16 %v5699, %v5698
  %v5792 = vpack.c.bf16 %v4075, %v4073
  %v5793 = vpack.c.bf16 %v5509, %v5508
  %v5794 = vpack.c.bf16 %v5701, %v5700
  %v5795 = vpack.c.bf16 %v4163, %v4161
  %v5796 = vpack.c.bf16 %v5511, %v5510
  %v5797 = vpack.c.bf16 %v5703, %v5702
  %s5798 = scalar_lea.vmem %s1, 144
  %v5799 = vld [vmem:[%s5798] sm:$0xf]
  %v5800 = vld [vmem:[%s5798 + $0x4] sm:$0xf]
  %v5801 = vld [vmem:[%s5798 + $0x8] sm:$0xf]
  %v5802 = vld [vmem:[%s5798 + $0xc] sm:$0xf]
  %v5803 = vld [vmem:[%s5798 + $0x10] sm:$0xf]
  %v5804 = vld [vmem:[%s5798 + $0x14] sm:$0xf]
  %v5805 = vld [vmem:[%s5798 + $0x18] sm:$0xf]
  %v5806 = vld [vmem:[%s5798 + $0x1c] sm:$0xf]
  %v5807 = vld [vmem:[%s5798 + $0x20] sm:$0xf]
  %v5808 = vld [vmem:[%s5798 + $0x24] sm:$0xf]
  %v5809 = vld [vmem:[%s5798 + $0x28] sm:$0xf]
  %v5810 = vld [vmem:[%s5798 + $0x2c] sm:$0xf]
  %v5811 = vld [vmem:[%s5798 + $0x30] sm:$0xf]
  %v5812 = vld [vmem:[%s5798 + $0x34] sm:$0xf]
  %v5813 = vld [vmem:[%s5798 + $0x38] sm:$0xf]
  %v5814 = vld [vmem:[%s5798 + $0x3c] sm:$0xf]
  %v5815 = vld [vmem:[%s5798 + $0x40] sm:$0xf]
  %v5816 = vld [vmem:[%s5798 + $0x44] sm:$0xf]
  %v5817 = vld [vmem:[%s5798 + $0x48] sm:$0xf]
  %v5818 = vld [vmem:[%s5798 + $0x4c] sm:$0xf]
  %v5819 = vld [vmem:[%s5798 + $0x50] sm:$0xf]
  %v5820 = vld [vmem:[%s5798 + $0x54] sm:$0xf]
  %v5821 = vld [vmem:[%s5798 + $0x58] sm:$0xf]
  %v5822 = vld [vmem:[%s5798 + $0x5c] sm:$0xf]
  %v5823 = vld [vmem:[%s5798 + $0x60] sm:$0xf]
  %v5824 = vld [vmem:[%s5798 + $0x64] sm:$0xf]
  %v5825 = vld [vmem:[%s5798 + $0x68] sm:$0xf]
  %v5826 = vld [vmem:[%s5798 + $0x6c] sm:$0xf]
  %v5827 = vld [vmem:[%s5798 + $0x70] sm:$0xf]
  %v5828 = vld [vmem:[%s5798 + $0x74] sm:$0xf]
  %v5829 = vld [vmem:[%s5798 + $0x78] sm:$0xf]
  %v5830 = vld [vmem:[%s5798 + $0x7c] sm:$0xf]
  %v5831 = vld [vmem:[%s5798 + $0x80] sm:$0xf]
  %v5832 = vld [vmem:[%s5798 + $0x84] sm:$0xf]
  %v5833 = vld [vmem:[%s5798 + $0x88] sm:$0xf]
  %v5834 = vld [vmem:[%s5798 + $0x8c] sm:$0xf]
  %s5835 = scalar_lea.vmem %s2, 1
  %v5836 = vld [vmem:[%s5835] sm:$0x1]
  %v5838 = vlaneseq
  %v5839 = vshrl.u32 %v5838, 7
  %v5840 = vsub.s32 0, %v5839
  %v5841 = vrot.slane %v5836, %v5840
  %v5879 = vunpack.c.l.b16 %v5799
  %v5880 = vunpack.c.l.b16 %v5800
  %v5881 = vunpack.c.l.b16 %v5801
  %v5882 = vunpack.c.l.b16 %v5802
  %v5883 = vunpack.c.l.b16 %v5803
  %v5884 = vunpack.c.l.b16 %v5804
  %v5885 = vunpack.c.l.b16 %v5805
  %v5886 = vunpack.c.l.b16 %v5806
  %v5887 = vunpack.c.l.b16 %v5807
  %v5888 = vunpack.c.l.b16 %v5808
  %v5889 = vunpack.c.l.b16 %v5809
  %v5890 = vunpack.c.l.b16 %v5810
  %v5891 = vunpack.c.l.b16 %v5811
  %v5892 = vunpack.c.l.b16 %v5812
  %v5893 = vunpack.c.l.b16 %v5813
  %v5894 = vunpack.c.l.b16 %v5814
  %v5895 = vunpack.c.l.b16 %v5815
  %v5896 = vunpack.c.l.b16 %v5816
  %v5897 = vunpack.c.l.b16 %v5817
  %v5898 = vunpack.c.l.b16 %v5818
  %v5899 = vunpack.c.l.b16 %v5819
  %v5900 = vunpack.c.l.b16 %v5820
  %v5901 = vunpack.c.l.b16 %v5821
  %v5902 = vunpack.c.l.b16 %v5822
  %v5903 = vunpack.c.l.b16 %v5823
  %v5904 = vunpack.c.l.b16 %v5824
  %v5905 = vunpack.c.l.b16 %v5825
  %v5906 = vunpack.c.l.b16 %v5826
  %v5907 = vunpack.c.l.b16 %v5827
  %v5908 = vunpack.c.l.b16 %v5828
  %v5909 = vunpack.c.l.b16 %v5829
  %v5910 = vunpack.c.l.b16 %v5830
  %v5911 = vunpack.c.l.b16 %v5831
  %v5912 = vunpack.c.l.b16 %v5832
  %v5913 = vunpack.c.l.b16 %v5833
  %v5914 = vunpack.c.l.b16 %v5834
  %v5915 = vpack.c.b16 %v5880, %v5879
  %v5916 = vpack.c.b16 %v5882, %v5881
  %v5917 = vpack.c.b16 %v5884, %v5883
  %v5918 = vpack.c.b16 %v5886, %v5885
  %v5919 = vpack.c.b16 %v5888, %v5887
  %v5920 = vpack.c.b16 %v5890, %v5889
  %v5921 = vpack.c.b16 %v5892, %v5891
  %v5922 = vpack.c.b16 %v5894, %v5893
  %v5923 = vpack.c.b16 %v5896, %v5895
  %v5924 = vpack.c.b16 %v5898, %v5897
  %v5925 = vpack.c.b16 %v5900, %v5899
  %v5926 = vpack.c.b16 %v5902, %v5901
  %v5927 = vpack.c.b16 %v5904, %v5903
  %v5928 = vpack.c.b16 %v5906, %v5905
  %v5929 = vpack.c.b16 %v5908, %v5907
  %v5930 = vpack.c.b16 %v5910, %v5909
  %v5931 = vpack.c.b16 %v5912, %v5911
  %v5932 = vpack.c.b16 %v5914, %v5913
  %v5952 = vsel %vm2036, %v5706, 0
  %v5955 = vsel %vm2036, %v5709, 0
  %v5958 = vsel %vm2036, %v5712, 0
  %v5961 = vsel %vm2036, %v5715, 0
  %v5964 = vsel %vm2036, %v5718, 0
  %v5967 = vsel %vm2036, %v5721, 0
  %v5970 = vsel %vm2036, %v5724, 0
  %v5973 = vsel %vm2036, %v5727, 0
  %v5976 = vsel %vm2036, %v5730, 0
  %v5979 = vsel %vm2036, %v5733, 0
  %v5982 = vsel %vm2036, %v5736, 0
  %v5985 = vsel %vm2036, %v5739, 0
  %v5988 = vsel %vm2036, %v5742, 0
  %v5991 = vsel %vm2036, %v5745, 0
  %v5994 = vsel %vm2036, %v5748, 0
  %v5997 = vsel %vm2036, %v5753, 0
  %v6000 = vsel %vm2036, %v5756, 0
  %v6003 = vsel %vm2036, %v5759, 0
  %v6006 = vsel %vm2036, %v5762, 0
  %v6009 = vsel %vm2036, %v5765, 0
  %v6012 = vsel %vm2036, %v5768, 0
  %v6015 = vsel %vm2036, %v5771, 0
  %v6018 = vsel %vm2036, %v5774, 0
  %v6021 = vsel %vm2036, %v5777, 0
  %v6024 = vsel %vm2036, %v5780, 0
  %v6027 = vsel %vm2036, %v5783, 0
  %v6030 = vsel %vm2036, %v5786, 0
  %v6033 = vsel %vm2036, %v5789, 0
  %v6036 = vsel %vm2036, %v5792, 0
  %v6039 = vsel %vm2036, %v5795, 0
  %6041 = vmatprep.subr.bf16.mxu0 0
  %6042 = vmatpush1.bf16.msra.mxu0 %v5915
  %6043 = vmatprep.subr.bf16.mxu0 0
  %6044 = vmatpush1.bf16.msra.mxu0 %v5916
  %6045 = vmatprep.subr.bf16.mxu0 0
  %6046 = vmatpush1.bf16.msra.mxu0 %v5917
  %6047 = vmatprep.subr.bf16.mxu0 0
  %6048 = vmatpush1.bf16.msra.mxu0 %v5918
  %6049 = vmatprep.subr.bf16.mxu0 0
  %6050 = vmatpush1.bf16.msra.mxu0 %v5919
  %6051 = vmatprep.subr.bf16.mxu0 0
  %6052 = vmatpush1.bf16.msra.mxu0 %v5920
  %6053 = vmatprep.subr.bf16.mxu0 0
  %6054 = vmatpush1.bf16.msra.mxu0 %v5921
  %6055 = vmatprep.subr.bf16.mxu0 0
  %6056 = vmatpush1.bf16.msra.mxu0 %v5922
  %6057 = vmatprep.subr.bf16.mxu0 0
  %6058 = vmatpush1.bf16.msra.mxu0 %v5923
  %6059 = vmatprep.subr.bf16.mxu0 0
  %6060 = vmatpush1.bf16.msra.mxu0 %v5924
  %6061 = vmatprep.subr.bf16.mxu0 0
  %6062 = vmatpush1.bf16.msra.mxu0 %v5925
  %6063 = vmatprep.subr.bf16.mxu0 0
  %6064 = vmatpush1.bf16.msra.mxu0 %v5926
  %6065 = vmatprep.subr.bf16.mxu0 0
  %6066 = vmatpush1.bf16.msra.mxu0 %v5927
  %6067 = vmatprep.subr.bf16.mxu0 0
  %6068 = vmatpush1.bf16.msra.mxu0 %v5928
  %6069 = vmatprep.subr.bf16.mxu0 0
  %6070 = vmatpush1.bf16.msra.mxu0 %v5929
  %6071 = vmatprep.subr.bf16.mxu0 0
  %6072 = vmatpush1.bf16.msra.mxu0 %v5930
  %6073 = vmatprep.mubr.bf16.mxu0 %v5705
  %6074 = vmatmul.mubr.bf16.gmra.mrb[0].mxu0 %v5704
  %v6075 = vpop.f32.mrb[0].mxu0
  %v6076 = vadd.f32 %v5841, %v6075
  %v6077 = vpop.f32.mrb[0].mxu0
  %v6078 = vpop.f32.mrb[0].mxu0
  %v6079 = vadd.f32 %v5841, %v6078
  %v6080 = vpop.f32.mrb[0].mxu0
  %6081 = vmatprep.mubr.bf16.mxu0 %v5708
  %6082 = vmatmul.mubr.bf16.gmra.mrb[0].mxu0 %v5707
  %v6083 = vpop.f32.mrb[0].mxu0
  %v6084 = vadd.f32 %v5841, %v6083
  %v6085 = vpop.f32.mrb[0].mxu0
  %v6086 = vpop.f32.mrb[0].mxu0
  %v6087 = vadd.f32 %v5841, %v6086
  %v6088 = vpop.f32.mrb[0].mxu0
  %6089 = vmatprep.mubr.bf16.mxu0 %v5711
  %6090 = vmatmul.mubr.bf16.gmra.mrb[0].mxu0 %v5710
  %v6091 = vpop.f32.mrb[0].mxu0
  %v6092 = vadd.f32 %v5841, %v6091
  %v6093 = vpop.f32.mrb[0].mxu0
  %v6094 = vpop.f32.mrb[0].mxu0
  %v6095 = vadd.f32 %v5841, %v6094
  %v6096 = vpop.f32.mrb[0].mxu0
  %6097 = vmatprep.mubr.bf16.mxu0 %v5714
  %6098 = vmatmul.mubr.bf16.gmra.mrb[0].mxu0 %v5713
  %v6099 = vpop.f32.mrb[0].mxu0
  %v6100 = vadd.f32 %v5841, %v6099
  %v6101 = vpop.f32.mrb[0].mxu0
  %v6102 = vpop.f32.mrb[0].mxu0
  %v6103 = vadd.f32 %v5841, %v6102
  %v6104 = vpop.f32.mrb[0].mxu0
  %6105 = vmatprep.mubr.bf16.mxu0 %v5717
  %6106 = vmatmul.mubr.bf16.gmra.mrb[0].mxu0 %v5716
  %v6107 = vpop.f32.mrb[0].mxu0
  %v6108 = vadd.f32 %v5841, %v6107
  %v6109 = vpop.f32.mrb[0].mxu0
  %v6110 = vpop.f32.mrb[0].mxu0
  %v6111 = vadd.f32 %v5841, %v6110
  %v6112 = vpop.f32.mrb[0].mxu0
  %6113 = vmatprep.mubr.bf16.mxu0 %v5720
  %6114 = vmatmul.mubr.bf16.gmra.mrb[0].mxu0 %v5719
  %v6115 = vpop.f32.mrb[0].mxu0
  %v6116 = vadd.f32 %v5841, %v6115
  %v6117 = vpop.f32.mrb[0].mxu0
  %v6118 = vpop.f32.mrb[0].mxu0
  %v6119 = vadd.f32 %v5841, %v6118
  %v6120 = vpop.f32.mrb[0].mxu0
  %6121 = vmatprep.mubr.bf16.mxu0 %v5723
  %6122 = vmatmul.mubr.bf16.gmra.mrb[0].mxu0 %v5722
  %v6123 = vpop.f32.mrb[0].mxu0
  %v6124 = vadd.f32 %v5841, %v6123
  %v6125 = vpop.f32.mrb[0].mxu0
  %v6126 = vpop.f32.mrb[0].mxu0
  %v6127 = vadd.f32 %v5841, %v6126
  %v6128 = vpop.f32.mrb[0].mxu0
  %6129 = vmatprep.mubr.bf16.mxu0 %v5726
  %6130 = vmatmul.mubr.bf16.gmra.mrb[0].mxu0 %v5725
  %v6131 = vpop.f32.mrb[0].mxu0
  %v6132 = vadd.f32 %v5841, %v6131
  %v6133 = vpop.f32.mrb[0].mxu0
  %v6134 = vpop.f32.mrb[0].mxu0
  %v6135 = vadd.f32 %v5841, %v6134
  %v6136 = vpop.f32.mrb[0].mxu0
  %6137 = vmatprep.mubr.bf16.mxu0 %v5729
  %6138 = vmatmul.mubr.bf16.gmra.mrb[0].mxu0 %v5728
  %v6139 = vpop.f32.mrb[0].mxu0
  %v6140 = vadd.f32 %v5841, %v6139
  %v6141 = vpop.f32.mrb[0].mxu0
  %v6142 = vpop.f32.mrb[0].mxu0
  %v6143 = vadd.f32 %v5841, %v6142
  %v6144 = vpop.f32.mrb[0].mxu0
  %6145 = vmatprep.mubr.bf16.mxu0 %v5732
  %6146 = vmatmul.mubr.bf16.gmra.mrb[0].mxu0 %v5731
  %v6147 = vpop.f32.mrb[0].mxu0
  %v6148 = vadd.f32 %v5841, %v6147
  %v6149 = vpop.f32.mrb[0].mxu0
  %v6150 = vpop.f32.mrb[0].mxu0
  %v6151 = vadd.f32 %v5841, %v6150
  %v6152 = vpop.f32.mrb[0].mxu0
  %6153 = vmatprep.mubr.bf16.mxu0 %v5735
  %6154 = vmatmul.mubr.bf16.gmra.mrb[0].mxu0 %v5734
  %v6155 = vpop.f32.mrb[0].mxu0
  %v6156 = vadd.f32 %v5841, %v6155
  %v6157 = vpop.f32.mrb[0].mxu0
  %v6158 = vpop.f32.mrb[0].mxu0
  %v6159 = vadd.f32 %v5841, %v6158
  %v6160 = vpop.f32.mrb[0].mxu0
  %6161 = vmatprep.mubr.bf16.mxu0 %v5738
  %6162 = vmatmul.mubr.bf16.gmra.mrb[0].mxu0 %v5737
  %v6163 = vpop.f32.mrb[0].mxu0
  %v6164 = vadd.f32 %v5841, %v6163
  %v6165 = vpop.f32.mrb[0].mxu0
  %v6166 = vpop.f32.mrb[0].mxu0
  %v6167 = vadd.f32 %v5841, %v6166
  %v6168 = vpop.f32.mrb[0].mxu0
  %6169 = vmatprep.mubr.bf16.mxu0 %v5741
  %6170 = vmatmul.mubr.bf16.gmra.mrb[0].mxu0 %v5740
  %v6171 = vpop.f32.mrb[0].mxu0
  %v6172 = vadd.f32 %v5841, %v6171
  %v6173 = vpop.f32.mrb[0].mxu0
  %v6174 = vpop.f32.mrb[0].mxu0
  %v6175 = vadd.f32 %v5841, %v6174
  %v6176 = vpop.f32.mrb[0].mxu0
  %6177 = vmatprep.mubr.bf16.mxu0 %v5744
  %6178 = vmatmul.mubr.bf16.gmra.mrb[0].mxu0 %v5743
  %v6179 = vpop.f32.mrb[0].mxu0
  %v6180 = vadd.f32 %v5841, %v6179
  %v6181 = vpop.f32.mrb[0].mxu0
  %v6182 = vpop.f32.mrb[0].mxu0
  %v6183 = vadd.f32 %v5841, %v6182
  %v6184 = vpop.f32.mrb[0].mxu0
  %6185 = vmatprep.mubr.bf16.mxu0 %v5747
  %6186 = vmatmul.mubr.bf16.gmra.mrb[0].mxu0 %v5746
  %v6187 = vpop.f32.mrb[0].mxu0
  %v6188 = vadd.f32 %v5841, %v6187
  %v6189 = vpop.f32.mrb[0].mxu0
  %v6190 = vpop.f32.mrb[0].mxu0
  %v6191 = vadd.f32 %v5841, %v6190
  %v6192 = vpop.f32.mrb[0].mxu0
  %6193 = vmatprep.mubr.bf16.mxu0 %v5750
  %6194 = vmatmul.mubr.bf16.gmra.mrb[0].mxu0 %v5749
  %v6195 = vpop.f32.mrb[0].mxu0
  %v6196 = vadd.f32 %v5841, %v6195
  %v6197 = vpop.f32.mrb[0].mxu0
  %v6198 = vpop.f32.mrb[0].mxu0
  %v6199 = vadd.f32 %v5841, %v6198
  %v6200 = vpop.f32.mrb[0].mxu0
  %6201 = vmatprep.mubr.bf16.mxu0 %v5752
  %6202 = vmatmul.mubr.bf16.gmra.mrb[0].mxu0 %v5751
  %v6203 = vpop.f32.mrb[0].mxu0
  %v6204 = vadd.f32 %v5841, %v6203
  %v6205 = vpop.f32.mrb[0].mxu0
  %v6206 = vpop.f32.mrb[0].mxu0
  %v6207 = vadd.f32 %v5841, %v6206
  %v6208 = vpop.f32.mrb[0].mxu0
  %6209 = vmatprep.mubr.bf16.mxu0 %v5755
  %6210 = vmatmul.mubr.bf16.gmra.mrb[0].mxu0 %v5754
  %v6211 = vpop.f32.mrb[0].mxu0
  %v6212 = vadd.f32 %v5841, %v6211
  %v6213 = vpop.f32.mrb[0].mxu0
  %v6214 = vpop.f32.mrb[0].mxu0
  %v6215 = vadd.f32 %v5841, %v6214
  %v6216 = vpop.f32.mrb[0].mxu0
  %6217 = vmatprep.mubr.bf16.mxu0 %v5758
  %6218 = vmatmul.mubr.bf16.gmra.mrb[0].mxu0 %v5757
  %v6219 = vpop.f32.mrb[0].mxu0
  %v6220 = vadd.f32 %v5841, %v6219
  %v6221 = vpop.f32.mrb[0].mxu0
  %v6222 = vpop.f32.mrb[0].mxu0
  %v6223 = vadd.f32 %v5841, %v6222
  %v6224 = vpop.f32.mrb[0].mxu0
  %6225 = vmatprep.mubr.bf16.mxu0 %v5761
  %6226 = vmatmul.mubr.bf16.gmra.mrb[0].mxu0 %v5760
  %v6227 = vpop.f32.mrb[0].mxu0
  %v6228 = vadd.f32 %v5841, %v6227
  %v6229 = vpop.f32.mrb[0].mxu0
  %v6230 = vpop.f32.mrb[0].mxu0
  %v6231 = vadd.f32 %v5841, %v6230
  %v6232 = vpop.f32.mrb[0].mxu0
  %6233 = vmatprep.mubr.bf16.mxu0 %v5764
  %6234 = vmatmul.mubr.bf16.gmra.mrb[0].mxu0 %v5763
  %v6235 = vpop.f32.mrb[0].mxu0
  %v6236 = vadd.f32 %v5841, %v6235
  %v6237 = vpop.f32.mrb[0].mxu0
  %v6238 = vpop.f32.mrb[0].mxu0
  %v6239 = vadd.f32 %v5841, %v6238
  %v6240 = vpop.f32.mrb[0].mxu0
  %6241 = vmatprep.mubr.bf16.mxu0 %v5767
  %6242 = vmatmul.mubr.bf16.gmra.mrb[0].mxu0 %v5766
  %v6243 = vpop.f32.mrb[0].mxu0
  %v6244 = vadd.f32 %v5841, %v6243
  %v6245 = vpop.f32.mrb[0].mxu0
  %v6246 = vpop.f32.mrb[0].mxu0
  %v6247 = vadd.f32 %v5841, %v6246
  %v6248 = vpop.f32.mrb[0].mxu0
  %6249 = vmatprep.mubr.bf16.mxu0 %v5770
  %6250 = vmatmul.mubr.bf16.gmra.mrb[0].mxu0 %v5769
  %v6251 = vpop.f32.mrb[0].mxu0
  %v6252 = vadd.f32 %v5841, %v6251
  %v6253 = vpop.f32.mrb[0].mxu0
  %v6254 = vpop.f32.mrb[0].mxu0
  %v6255 = vadd.f32 %v5841, %v6254
  %v6256 = vpop.f32.mrb[0].mxu0
  %6257 = vmatprep.mubr.bf16.mxu0 %v5773
  %6258 = vmatmul.mubr.bf16.gmra.mrb[0].mxu0 %v5772
  %v6259 = vpop.f32.mrb[0].mxu0
  %v6260 = vadd.f32 %v5841, %v6259
  %v6261 = vpop.f32.mrb[0].mxu0
  %v6262 = vpop.f32.mrb[0].mxu0
  %v6263 = vadd.f32 %v5841, %v6262
  %v6264 = vpop.f32.mrb[0].mxu0
  %6265 = vmatprep.mubr.bf16.mxu0 %v5776
  %6266 = vmatmul.mubr.bf16.gmra.mrb[0].mxu0 %v5775
  %v6267 = vpop.f32.mrb[0].mxu0
  %v6268 = vadd.f32 %v5841, %v6267
  %v6269 = vpop.f32.mrb[0].mxu0
  %v6270 = vpop.f32.mrb[0].mxu0
  %v6271 = vadd.f32 %v5841, %v6270
  %v6272 = vpop.f32.mrb[0].mxu0
  %6273 = vmatprep.mubr.bf16.mxu0 %v5779
  %6274 = vmatmul.mubr.bf16.gmra.mrb[0].mxu0 %v5778
  %v6275 = vpop.f32.mrb[0].mxu0
  %v6276 = vadd.f32 %v5841, %v6275
  %v6277 = vpop.f32.mrb[0].mxu0
  %v6278 = vpop.f32.mrb[0].mxu0
  %v6279 = vadd.f32 %v5841, %v6278
  %v6280 = vpop.f32.mrb[0].mxu0
  %6281 = vmatprep.mubr.bf16.mxu0 %v5782
  %6282 = vmatmul.mubr.bf16.gmra.mrb[0].mxu0 %v5781
  %v6283 = vpop.f32.mrb[0].mxu0
  %v6284 = vadd.f32 %v5841, %v6283
  %v6285 = vpop.f32.mrb[0].mxu0
  %v6286 = vpop.f32.mrb[0].mxu0
  %v6287 = vadd.f32 %v5841, %v6286
  %v6288 = vpop.f32.mrb[0].mxu0
  %6289 = vmatprep.mubr.bf16.mxu0 %v5785
  %6290 = vmatmul.mubr.bf16.gmra.mrb[0].mxu0 %v5784
  %v6291 = vpop.f32.mrb[0].mxu0
  %v6292 = vadd.f32 %v5841, %v6291
  %v6293 = vpop.f32.mrb[0].mxu0
  %v6294 = vpop.f32.mrb[0].mxu0
  %v6295 = vadd.f32 %v5841, %v6294
  %v6296 = vpop.f32.mrb[0].mxu0
  %6297 = vmatprep.mubr.bf16.mxu0 %v5788
  %6298 = vmatmul.mubr.bf16.gmra.mrb[0].mxu0 %v5787
  %v6299 = vpop.f32.mrb[0].mxu0
  %v6300 = vadd.f32 %v5841, %v6299
  %v6301 = vpop.f32.mrb[0].mxu0
  %v6302 = vpop.f32.mrb[0].mxu0
  %v6303 = vadd.f32 %v5841, %v6302
  %v6304 = vpop.f32.mrb[0].mxu0
  %6305 = vmatprep.mubr.bf16.mxu0 %v5791
  %6306 = vmatmul.mubr.bf16.gmra.mrb[0].mxu0 %v5790
  %v6307 = vpop.f32.mrb[0].mxu0
  %v6308 = vadd.f32 %v5841, %v6307
  %v6309 = vpop.f32.mrb[0].mxu0
  %v6310 = vpop.f32.mrb[0].mxu0
  %v6311 = vadd.f32 %v5841, %v6310
  %v6312 = vpop.f32.mrb[0].mxu0
  %6313 = vmatprep.mubr.bf16.mxu0 %v5794
  %6314 = vmatmul.mubr.bf16.gmra.mrb[0].mxu0 %v5793
  %v6315 = vpop.f32.mrb[0].mxu0
  %v6316 = vadd.f32 %v5841, %v6315
  %v6317 = vpop.f32.mrb[0].mxu0
  %v6318 = vpop.f32.mrb[0].mxu0
  %v6319 = vadd.f32 %v5841, %v6318
  %v6320 = vpop.f32.mrb[0].mxu0
  %6321 = vmatprep.mubr.bf16.mxu0 %v5797
  %6322 = vmatmul.mubr.bf16.gmra.mrb[0].mxu0 %v5796
  %v6323 = vpop.f32.mrb[0].mxu0
  %v6324 = vadd.f32 %v5841, %v6323
  %v6325 = vpop.f32.mrb[0].mxu0
  %v6326 = vpop.f32.mrb[0].mxu0
  %v6327 = vadd.f32 %v5841, %v6326
  %v6328 = vpop.f32.mrb[0].mxu0
  %6329 = vdwg.mxu0
  %6330 = vmatprep.subr.bf16.mxu0 0
  %6331 = vmatpush1.bf16.msra.mxu0 %v5931
  %6332 = vmatprep.subr.bf16.mxu0 0
  %6333 = vmatpush1.bf16.msra.mxu0 %v5932
  %6334 = vmatprep.subr.bf16.mxu0 0
  %6335 = vmatpush1.bf16.msra.mxu0 0
  %6336 = vmatprep.subr.bf16.mxu0 0
  %6337 = vmatpush1.bf16.msra.mxu0 0
  %6338 = vmatprep.subr.bf16.mxu0 0
  %6339 = vmatpush1.bf16.msra.mxu0 0
  %6340 = vmatprep.subr.bf16.mxu0 0
  %6341 = vmatpush1.bf16.msra.mxu0 0
  %6342 = vmatprep.subr.bf16.mxu0 0
  %6343 = vmatpush1.bf16.msra.mxu0 0
  %6344 = vmatprep.subr.bf16.mxu0 0
  %6345 = vmatpush1.bf16.msra.mxu0 0
  %6346 = vmatprep.subr.bf16.mxu0 0
  %6347 = vmatpush1.bf16.msra.mxu0 0
  %6348 = vmatprep.subr.bf16.mxu0 0
  %6349 = vmatpush1.bf16.msra.mxu0 0
  %6350 = vmatprep.subr.bf16.mxu0 0
  %6351 = vmatpush1.bf16.msra.mxu0 0
  %6352 = vmatprep.subr.bf16.mxu0 0
  %6353 = vmatpush1.bf16.msra.mxu0 0
  %6354 = vmatprep.subr.bf16.mxu0 0
  %6355 = vmatpush1.bf16.msra.mxu0 0
  %6356 = vmatprep.subr.bf16.mxu0 0
  %6357 = vmatpush1.bf16.msra.mxu0 0
  %6358 = vmatprep.subr.bf16.mxu0 0
  %6359 = vmatpush1.bf16.msra.mxu0 0
  %6360 = vmatprep.subr.bf16.mxu0 0
  %6361 = vmatpush1.bf16.msra.mxu0 0
  %6362 = vmatprep.mubr.bf16.mxu0 0
  %6363 = vmatmul.mubr.bf16.gmra.mrb[0].mxu0 %v5952
  %v6364 = vpop.f32.mrb[0].mxu0
  %v6365 = vadd.f32 %v6076, %v6364
  %v6366 = vpop.f32.mrb[0].mxu0
  %v6367 = vpop.f32.mrb[0].mxu0
  %v6368 = vadd.f32 %v6079, %v6367
  %v6369 = vpop.f32.mrb[0].mxu0
  %6370 = vmatprep.mubr.bf16.mxu0 0
  %6371 = vmatmul.mubr.bf16.gmra.mrb[0].mxu0 %v5955
  %v6372 = vpop.f32.mrb[0].mxu0
  %v6373 = vadd.f32 %v6084, %v6372
  %v6374 = vpop.f32.mrb[0].mxu0
  %v6375 = vpop.f32.mrb[0].mxu0
  %v6376 = vadd.f32 %v6087, %v6375
  %v6377 = vpop.f32.mrb[0].mxu0
  %6378 = vmatprep.mubr.bf16.mxu0 0
  %6379 = vmatmul.mubr.bf16.gmra.mrb[0].mxu0 %v5958
  %v6380 = vpop.f32.mrb[0].mxu0
  %v6381 = vadd.f32 %v6092, %v6380
  %v6382 = vpop.f32.mrb[0].mxu0
  %v6383 = vpop.f32.mrb[0].mxu0
  %v6384 = vadd.f32 %v6095, %v6383
  %v6385 = vpop.f32.mrb[0].mxu0
  %6386 = vmatprep.mubr.bf16.mxu0 0
  %6387 = vmatmul.mubr.bf16.gmra.mrb[0].mxu0 %v5961
  %v6388 = vpop.f32.mrb[0].mxu0
  %v6389 = vadd.f32 %v6100, %v6388
  %v6390 = vpop.f32.mrb[0].mxu0
  %v6391 = vpop.f32.mrb[0].mxu0
  %v6392 = vadd.f32 %v6103, %v6391
  %v6393 = vpop.f32.mrb[0].mxu0
  %6394 = vmatprep.mubr.bf16.mxu0 0
  %6395 = vmatmul.mubr.bf16.gmra.mrb[0].mxu0 %v5964
  %v6396 = vpop.f32.mrb[0].mxu0
  %v6397 = vadd.f32 %v6108, %v6396
  %v6398 = vpop.f32.mrb[0].mxu0
  %v6399 = vpop.f32.mrb[0].mxu0
  %v6400 = vadd.f32 %v6111, %v6399
  %v6401 = vpop.f32.mrb[0].mxu0
  %6402 = vmatprep.mubr.bf16.mxu0 0
  %6403 = vmatmul.mubr.bf16.gmra.mrb[0].mxu0 %v5967
  %v6404 = vpop.f32.mrb[0].mxu0
  %v6405 = vadd.f32 %v6116, %v6404
  %v6406 = vpop.f32.mrb[0].mxu0
  %v6407 = vpop.f32.mrb[0].mxu0
  %v6408 = vadd.f32 %v6119, %v6407
  %v6409 = vpop.f32.mrb[0].mxu0
  %6410 = vmatprep.mubr.bf16.mxu0 0
  %6411 = vmatmul.mubr.bf16.gmra.mrb[0].mxu0 %v5970
  %v6412 = vpop.f32.mrb[0].mxu0
  %v6413 = vadd.f32 %v6124, %v6412
  %v6414 = vpop.f32.mrb[0].mxu0
  %v6415 = vpop.f32.mrb[0].mxu0
  %v6416 = vadd.f32 %v6127, %v6415
  %v6417 = vpop.f32.mrb[0].mxu0
  %6418 = vmatprep.mubr.bf16.mxu0 0
  %6419 = vmatmul.mubr.bf16.gmra.mrb[0].mxu0 %v5973
  %v6420 = vpop.f32.mrb[0].mxu0
  %v6421 = vadd.f32 %v6132, %v6420
  %v6422 = vpop.f32.mrb[0].mxu0
  %v6423 = vpop.f32.mrb[0].mxu0
  %v6424 = vadd.f32 %v6135, %v6423
  %v6425 = vpop.f32.mrb[0].mxu0
  %6426 = vmatprep.mubr.bf16.mxu0 0
  %6427 = vmatmul.mubr.bf16.gmra.mrb[0].mxu0 %v5976
  %v6428 = vpop.f32.mrb[0].mxu0
  %v6429 = vadd.f32 %v6140, %v6428
  %v6430 = vpop.f32.mrb[0].mxu0
  %v6431 = vpop.f32.mrb[0].mxu0
  %v6432 = vadd.f32 %v6143, %v6431
  %v6433 = vpop.f32.mrb[0].mxu0
  %6434 = vmatprep.mubr.bf16.mxu0 0
  %6435 = vmatmul.mubr.bf16.gmra.mrb[0].mxu0 %v5979
  %v6436 = vpop.f32.mrb[0].mxu0
  %v6437 = vadd.f32 %v6148, %v6436
  %v6438 = vpop.f32.mrb[0].mxu0
  %v6439 = vpop.f32.mrb[0].mxu0
  %v6440 = vadd.f32 %v6151, %v6439
  %v6441 = vpop.f32.mrb[0].mxu0
  %6442 = vmatprep.mubr.bf16.mxu0 0
  %6443 = vmatmul.mubr.bf16.gmra.mrb[0].mxu0 %v5982
  %v6444 = vpop.f32.mrb[0].mxu0
  %v6445 = vadd.f32 %v6156, %v6444
  %v6446 = vpop.f32.mrb[0].mxu0
  %v6447 = vpop.f32.mrb[0].mxu0
  %v6448 = vadd.f32 %v6159, %v6447
  %v6449 = vpop.f32.mrb[0].mxu0
  %6450 = vmatprep.mubr.bf16.mxu0 0
  %6451 = vmatmul.mubr.bf16.gmra.mrb[0].mxu0 %v5985
  %v6452 = vpop.f32.mrb[0].mxu0
  %v6453 = vadd.f32 %v6164, %v6452
  %v6454 = vpop.f32.mrb[0].mxu0
  %v6455 = vpop.f32.mrb[0].mxu0
  %v6456 = vadd.f32 %v6167, %v6455
  %v6457 = vpop.f32.mrb[0].mxu0
  %6458 = vmatprep.mubr.bf16.mxu0 0
  %6459 = vmatmul.mubr.bf16.gmra.mrb[0].mxu0 %v5988
  %v6460 = vpop.f32.mrb[0].mxu0
  %v6461 = vadd.f32 %v6172, %v6460
  %v6462 = vpop.f32.mrb[0].mxu0
  %v6463 = vpop.f32.mrb[0].mxu0
  %v6464 = vadd.f32 %v6175, %v6463
  %v6465 = vpop.f32.mrb[0].mxu0
  %6466 = vmatprep.mubr.bf16.mxu0 0
  %6467 = vmatmul.mubr.bf16.gmra.mrb[0].mxu0 %v5991
  %v6468 = vpop.f32.mrb[0].mxu0
  %v6469 = vadd.f32 %v6180, %v6468
  %v6470 = vpop.f32.mrb[0].mxu0
  %v6471 = vpop.f32.mrb[0].mxu0
  %v6472 = vadd.f32 %v6183, %v6471
  %v6473 = vpop.f32.mrb[0].mxu0
  %6474 = vmatprep.mubr.bf16.mxu0 0
  %6475 = vmatmul.mubr.bf16.gmra.mrb[0].mxu0 %v5994
  %v6476 = vpop.f32.mrb[0].mxu0
  %v6477 = vadd.f32 %v6188, %v6476
  %v6478 = vpop.f32.mrb[0].mxu0
  %v6479 = vpop.f32.mrb[0].mxu0
  %v6480 = vadd.f32 %v6191, %v6479
  %v6481 = vpop.f32.mrb[0].mxu0
  %6482 = vmatprep.mubr.bf16.mxu0 0
  %6483 = vmatmul.mubr.bf16.gmra.mrb[0].mxu0 %v2709
  %v6484 = vpop.f32.mrb[0].mxu0
  %v6485 = vadd.f32 %v6196, %v6484
  %v6486 = vpop.f32.mrb[0].mxu0
  %v6487 = vpop.f32.mrb[0].mxu0
  %v6488 = vadd.f32 %v6199, %v6487
  %v6489 = vpop.f32.mrb[0].mxu0
  %6490 = vmatprep.mubr.bf16.mxu0 0
  %6491 = vmatmul.mubr.bf16.gmra.mrb[0].mxu0 %v5997
  %v6492 = vpop.f32.mrb[0].mxu0
  %v6493 = vadd.f32 %v6204, %v6492
  %v6494 = vpop.f32.mrb[0].mxu0
  %v6495 = vpop.f32.mrb[0].mxu0
  %v6496 = vadd.f32 %v6207, %v6495
  %v6497 = vpop.f32.mrb[0].mxu0
  %6498 = vmatprep.mubr.bf16.mxu0 0
  %6499 = vmatmul.mubr.bf16.gmra.mrb[0].mxu0 %v6000
  %v6500 = vpop.f32.mrb[0].mxu0
  %v6501 = vadd.f32 %v6212, %v6500
  %v6502 = vpop.f32.mrb[0].mxu0
  %v6503 = vpop.f32.mrb[0].mxu0
  %v6504 = vadd.f32 %v6215, %v6503
  %v6505 = vpop.f32.mrb[0].mxu0
  %6506 = vmatprep.mubr.bf16.mxu0 0
  %6507 = vmatmul.mubr.bf16.gmra.mrb[0].mxu0 %v6003
  %v6508 = vpop.f32.mrb[0].mxu0
  %v6509 = vadd.f32 %v6220, %v6508
  %v6510 = vpop.f32.mrb[0].mxu0
  %v6511 = vpop.f32.mrb[0].mxu0
  %v6512 = vadd.f32 %v6223, %v6511
  %v6513 = vpop.f32.mrb[0].mxu0
  %6514 = vmatprep.mubr.bf16.mxu0 0
  %6515 = vmatmul.mubr.bf16.gmra.mrb[0].mxu0 %v6006
  %v6516 = vpop.f32.mrb[0].mxu0
  %v6517 = vadd.f32 %v6228, %v6516
  %v6518 = vpop.f32.mrb[0].mxu0
  %v6519 = vpop.f32.mrb[0].mxu0
  %v6520 = vadd.f32 %v6231, %v6519
  %v6521 = vpop.f32.mrb[0].mxu0
  %6522 = vmatprep.mubr.bf16.mxu0 0
  %6523 = vmatmul.mubr.bf16.gmra.mrb[0].mxu0 %v6009
  %v6524 = vpop.f32.mrb[0].mxu0
  %v6525 = vadd.f32 %v6236, %v6524
  %v6526 = vpop.f32.mrb[0].mxu0
  %v6527 = vpop.f32.mrb[0].mxu0
  %v6528 = vadd.f32 %v6239, %v6527
  %v6529 = vpop.f32.mrb[0].mxu0
  %6530 = vmatprep.mubr.bf16.mxu0 0
  %6531 = vmatmul.mubr.bf16.gmra.mrb[0].mxu0 %v6012
  %v6532 = vpop.f32.mrb[0].mxu0
  %v6533 = vadd.f32 %v6244, %v6532
  %v6534 = vpop.f32.mrb[0].mxu0
  %v6535 = vpop.f32.mrb[0].mxu0
  %v6536 = vadd.f32 %v6247, %v6535
  %v6537 = vpop.f32.mrb[0].mxu0
  %6538 = vmatprep.mubr.bf16.mxu0 0
  %6539 = vmatmul.mubr.bf16.gmra.mrb[0].mxu0 %v6015
  %v6540 = vpop.f32.mrb[0].mxu0
  %v6541 = vadd.f32 %v6252, %v6540
  %v6542 = vpop.f32.mrb[0].mxu0
  %v6543 = vpop.f32.mrb[0].mxu0
  %v6544 = vadd.f32 %v6255, %v6543
  %v6545 = vpop.f32.mrb[0].mxu0
  %6546 = vmatprep.mubr.bf16.mxu0 0
  %6547 = vmatmul.mubr.bf16.gmra.mrb[0].mxu0 %v6018
  %v6548 = vpop.f32.mrb[0].mxu0
  %v6549 = vadd.f32 %v6260, %v6548
  %v6550 = vpop.f32.mrb[0].mxu0
  %v6551 = vpop.f32.mrb[0].mxu0
  %v6552 = vadd.f32 %v6263, %v6551
  %v6553 = vpop.f32.mrb[0].mxu0
  %6554 = vmatprep.mubr.bf16.mxu0 0
  %6555 = vmatmul.mubr.bf16.gmra.mrb[0].mxu0 %v6021
  %v6556 = vpop.f32.mrb[0].mxu0
  %v6557 = vadd.f32 %v6268, %v6556
  %v6558 = vpop.f32.mrb[0].mxu0
  %v6559 = vpop.f32.mrb[0].mxu0
  %v6560 = vadd.f32 %v6271, %v6559
  %v6561 = vpop.f32.mrb[0].mxu0
  %6562 = vmatprep.mubr.bf16.mxu0 0
  %6563 = vmatmul.mubr.bf16.gmra.mrb[0].mxu0 %v6024
  %v6564 = vpop.f32.mrb[0].mxu0
  %v6565 = vadd.f32 %v6276, %v6564
  %v6566 = vpop.f32.mrb[0].mxu0
  %v6567 = vpop.f32.mrb[0].mxu0
  %v6568 = vadd.f32 %v6279, %v6567
  %v6569 = vpop.f32.mrb[0].mxu0
  %6570 = vmatprep.mubr.bf16.mxu0 0
  %6571 = vmatmul.mubr.bf16.gmra.mrb[0].mxu0 %v6027
  %v6572 = vpop.f32.mrb[0].mxu0
  %v6573 = vadd.f32 %v6284, %v6572
  %v6574 = vpop.f32.mrb[0].mxu0
  %v6575 = vpop.f32.mrb[0].mxu0
  %v6576 = vadd.f32 %v6287, %v6575
  %v6577 = vpop.f32.mrb[0].mxu0
  %6578 = vmatprep.mubr.bf16.mxu0 0
  %6579 = vmatmul.mubr.bf16.gmra.mrb[0].mxu0 %v6030
  %v6580 = vpop.f32.mrb[0].mxu0
  %v6581 = vadd.f32 %v6292, %v6580
  %v6582 = vpop.f32.mrb[0].mxu0
  %v6583 = vpop.f32.mrb[0].mxu0
  %v6584 = vadd.f32 %v6295, %v6583
  %v6585 = vpop.f32.mrb[0].mxu0
  %6586 = vmatprep.mubr.bf16.mxu0 0
  %6587 = vmatmul.mubr.bf16.gmra.mrb[0].mxu0 %v6033
  %v6588 = vpop.f32.mrb[0].mxu0
  %v6589 = vadd.f32 %v6300, %v6588
  %v6590 = vpop.f32.mrb[0].mxu0
  %v6591 = vpop.f32.mrb[0].mxu0
  %v6592 = vadd.f32 %v6303, %v6591
  %v6593 = vpop.f32.mrb[0].mxu0
  %6594 = vmatprep.mubr.bf16.mxu0 0
  %6595 = vmatmul.mubr.bf16.gmra.mrb[0].mxu0 %v6036
  %v6596 = vpop.f32.mrb[0].mxu0
  %v6597 = vadd.f32 %v6308, %v6596
  %v6598 = vpop.f32.mrb[0].mxu0
  %v6599 = vpop.f32.mrb[0].mxu0
  %v6600 = vadd.f32 %v6311, %v6599
  %v6601 = vpop.f32.mrb[0].mxu0
  %6602 = vmatprep.mubr.bf16.mxu0 0
  %6603 = vmatmul.mubr.bf16.gmra.mrb[0].mxu0 %v6039
  %v6604 = vpop.f32.mrb[0].mxu0
  %v6605 = vadd.f32 %v6316, %v6604
  %v6606 = vpop.f32.mrb[0].mxu0
  %v6607 = vpop.f32.mrb[0].mxu0
  %v6608 = vadd.f32 %v6319, %v6607
  %v6609 = vpop.f32.mrb[0].mxu0
  %6610 = vmatprep.mubr.bf16.mxu0 0
  %6611 = vmatmul.mubr.bf16.gmra.mrb[0].mxu0 %v2709
  %v6612 = vpop.f32.mrb[0].mxu0
  %v6613 = vadd.f32 %v6324, %v6612
  %v6614 = vpop.f32.mrb[0].mxu0
  %v6615 = vpop.f32.mrb[0].mxu0
  %v6616 = vadd.f32 %v6327, %v6615
  %v6617 = vpop.f32.mrb[0].mxu0
  %6618 = vdwg.mxu0
  %v6619 = vmax.f32 %v6365, 0.0
  %v6620 = vmax.f32 %v6368, 0.0
  %v6621 = vmax.f32 %v6373, 0.0
  %v6622 = vmax.f32 %v6376, 0.0
  %v6623 = vmax.f32 %v6381, 0.0
  %v6624 = vmax.f32 %v6384, 0.0
  %v6625 = vmax.f32 %v6389, 0.0
  %v6626 = vmax.f32 %v6392, 0.0
  %v6627 = vmax.f32 %v6397, 0.0
  %v6628 = vmax.f32 %v6400, 0.0
  %v6629 = vmax.f32 %v6405, 0.0
  %v6630 = vmax.f32 %v6408, 0.0
  %v6631 = vmax.f32 %v6413, 0.0
  %v6632 = vmax.f32 %v6416, 0.0
  %v6633 = vmax.f32 %v6421, 0.0
  %v6634 = vmax.f32 %v6424, 0.0
  %v6635 = vmax.f32 %v6429, 0.0
  %v6636 = vmax.f32 %v6432, 0.0
  %v6637 = vmax.f32 %v6437, 0.0
  %v6638 = vmax.f32 %v6440, 0.0
  %v6639 = vmax.f32 %v6445, 0.0
  %v6640 = vmax.f32 %v6448, 0.0
  %v6641 = vmax.f32 %v6453, 0.0
  %v6642 = vmax.f32 %v6456, 0.0
  %v6643 = vmax.f32 %v6461, 0.0
  %v6644 = vmax.f32 %v6464, 0.0
  %v6645 = vmax.f32 %v6469, 0.0
  %v6646 = vmax.f32 %v6472, 0.0
  %v6647 = vmax.f32 %v6477, 0.0
  %v6648 = vmax.f32 %v6480, 0.0
  %v6649 = vmax.f32 %v6485, 0.0
  %v6650 = vmax.f32 %v6488, 0.0
  %v6651 = vmax.f32 %v6493, 0.0
  %v6652 = vmax.f32 %v6496, 0.0
  %v6653 = vmax.f32 %v6501, 0.0
  %v6654 = vmax.f32 %v6504, 0.0
  %v6655 = vmax.f32 %v6509, 0.0
  %v6656 = vmax.f32 %v6512, 0.0
  %v6657 = vmax.f32 %v6517, 0.0
  %v6658 = vmax.f32 %v6520, 0.0
  %v6659 = vmax.f32 %v6525, 0.0
  %v6660 = vmax.f32 %v6528, 0.0
  %v6661 = vmax.f32 %v6533, 0.0
  %v6662 = vmax.f32 %v6536, 0.0
  %v6663 = vmax.f32 %v6541, 0.0
  %v6664 = vmax.f32 %v6544, 0.0
  %v6665 = vmax.f32 %v6549, 0.0
  %v6666 = vmax.f32 %v6552, 0.0
  %v6667 = vmax.f32 %v6557, 0.0
  %v6668 = vmax.f32 %v6560, 0.0
  %v6669 = vmax.f32 %v6565, 0.0
  %v6670 = vmax.f32 %v6568, 0.0
  %v6671 = vmax.f32 %v6573, 0.0
  %v6672 = vmax.f32 %v6576, 0.0
  %v6673 = vmax.f32 %v6581, 0.0
  %v6674 = vmax.f32 %v6584, 0.0
  %v6675 = vmax.f32 %v6589, 0.0
  %v6676 = vmax.f32 %v6592, 0.0
  %v6677 = vmax.f32 %v6597, 0.0
  %v6678 = vmax.f32 %v6600, 0.0
  %v6679 = vmax.f32 %v6605, 0.0
  %v6680 = vmax.f32 %v6608, 0.0
  %v6681 = vmax.f32 %v6613, 0.0
  %v6682 = vmax.f32 %v6616, 0.0
  %v6747 = vrot.slane %v6619, 7
  %v6748 = vrot.slane %v6620, 7
  %v6749 = vsel %vm149, %v6747, %v6748
  %v6750 = vrot.slane %v6621, 7
  %v6751 = vrot.slane %v6622, 7
  %v6752 = vsel %vm149, %v6750, %v6751
  %v6753 = vrot.slane %v6623, 7
  %v6754 = vrot.slane %v6624, 7
  %v6755 = vsel %vm149, %v6753, %v6754
  %v6756 = vrot.slane %v6625, 7
  %v6757 = vrot.slane %v6626, 7
  %v6758 = vsel %vm149, %v6756, %v6757
  %v6759 = vrot.slane %v6627, 7
  %v6760 = vrot.slane %v6628, 7
  %v6761 = vsel %vm149, %v6759, %v6760
  %v6762 = vrot.slane %v6629, 7
  %v6763 = vrot.slane %v6630, 7
  %v6764 = vsel %vm149, %v6762, %v6763
  %v6765 = vrot.slane %v6631, 7
  %v6766 = vrot.slane %v6632, 7
  %v6767 = vsel %vm149, %v6765, %v6766
  %v6768 = vrot.slane %v6633, 7
  %v6769 = vrot.slane %v6634, 7
  %v6770 = vsel %vm149, %v6768, %v6769
  %v6771 = vrot.slane %v6635, 7
  %v6772 = vrot.slane %v6636, 7
  %v6773 = vsel %vm149, %v6771, %v6772
  %v6774 = vrot.slane %v6637, 7
  %v6775 = vrot.slane %v6638, 7
  %v6776 = vsel %vm149, %v6774, %v6775
  %v6777 = vrot.slane %v6639, 7
  %v6778 = vrot.slane %v6640, 7
  %v6779 = vsel %vm149, %v6777, %v6778
  %v6780 = vrot.slane %v6641, 7
  %v6781 = vrot.slane %v6642, 7
  %v6782 = vsel %vm149, %v6780, %v6781
  %v6783 = vrot.slane %v6643, 7
  %v6784 = vrot.slane %v6644, 7
  %v6785 = vsel %vm149, %v6783, %v6784
  %v6786 = vrot.slane %v6645, 7
  %v6787 = vrot.slane %v6646, 7
  %v6788 = vsel %vm149, %v6786, %v6787
  %v6789 = vrot.slane %v6647, 7
  %v6790 = vrot.slane %v6648, 7
  %v6791 = vsel %vm149, %v6789, %v6790
  %v6792 = vrot.slane %v6649, 7
  %v6793 = vrot.slane %v6650, 7
  %v6794 = vsel %vm149, %v6792, %v6793
  %v6795 = vrot.slane %v6651, 7
  %v6796 = vrot.slane %v6652, 7
  %v6797 = vsel %vm149, %v6795, %v6796
  %v6798 = vrot.slane %v6653, 7
  %v6799 = vrot.slane %v6654, 7
  %v6800 = vsel %vm149, %v6798, %v6799
  %v6801 = vrot.slane %v6655, 7
  %v6802 = vrot.slane %v6656, 7
  %v6803 = vsel %vm149, %v6801, %v6802
  %v6804 = vrot.slane %v6657, 7
  %v6805 = vrot.slane %v6658, 7
  %v6806 = vsel %vm149, %v6804, %v6805
  %v6807 = vrot.slane %v6659, 7
  %v6808 = vrot.slane %v6660, 7
  %v6809 = vsel %vm149, %v6807, %v6808
  %v6810 = vrot.slane %v6661, 7
  %v6811 = vrot.slane %v6662, 7
  %v6812 = vsel %vm149, %v6810, %v6811
  %v6813 = vrot.slane %v6663, 7
  %v6814 = vrot.slane %v6664, 7
  %v6815 = vsel %vm149, %v6813, %v6814
  %v6816 = vrot.slane %v6665, 7
  %v6817 = vrot.slane %v6666, 7
  %v6818 = vsel %vm149, %v6816, %v6817
  %v6819 = vrot.slane %v6667, 7
  %v6820 = vrot.slane %v6668, 7
  %v6821 = vsel %vm149, %v6819, %v6820
  %v6822 = vrot.slane %v6669, 7
  %v6823 = vrot.slane %v6670, 7
  %v6824 = vsel %vm149, %v6822, %v6823
  %v6825 = vrot.slane %v6671, 7
  %v6826 = vrot.slane %v6672, 7
  %v6827 = vsel %vm149, %v6825, %v6826
  %v6828 = vrot.slane %v6673, 7
  %v6829 = vrot.slane %v6674, 7
  %v6830 = vsel %vm149, %v6828, %v6829
  %v6831 = vrot.slane %v6675, 7
  %v6832 = vrot.slane %v6676, 7
  %v6833 = vsel %vm149, %v6831, %v6832
  %v6834 = vrot.slane %v6677, 7
  %v6835 = vrot.slane %v6678, 7
  %v6836 = vsel %vm149, %v6834, %v6835
  %v6837 = vrot.slane %v6679, 7
  %v6838 = vrot.slane %v6680, 7
  %v6839 = vsel %vm149, %v6837, %v6838
  %v6840 = vrot.slane %v6681, 7
  %v6841 = vrot.slane %v6682, 7
  %v6842 = vsel %vm149, %v6840, %v6841
  %v6937 = vsel %vm149, 0.0, %v6747
  %v6938 = vsel %vm149, 0.0, %v6750
  %v6939 = vsel %vm149, 0.0, %v6753
  %v6940 = vsel %vm149, 0.0, %v6756
  %v6941 = vsel %vm149, 0.0, %v6759
  %v6942 = vsel %vm149, 0.0, %v6762
  %v6943 = vsel %vm149, 0.0, %v6765
  %v6944 = vsel %vm149, 0.0, %v6768
  %v6945 = vsel %vm149, 0.0, %v6771
  %v6946 = vsel %vm149, 0.0, %v6774
  %v6947 = vsel %vm149, 0.0, %v6777
  %v6948 = vsel %vm149, 0.0, %v6780
  %v6949 = vsel %vm149, 0.0, %v6783
  %v6950 = vsel %vm149, 0.0, %v6786
  %v6951 = vsel %vm149, 0.0, %v6789
  %v6952 = vsel %vm149, 0.0, %v6792
  %v6953 = vsel %vm149, 0.0, %v6795
  %v6954 = vsel %vm149, 0.0, %v6798
  %v6955 = vsel %vm149, 0.0, %v6801
  %v6956 = vsel %vm149, 0.0, %v6804
  %v6957 = vsel %vm149, 0.0, %v6807
  %v6958 = vsel %vm149, 0.0, %v6810
  %v6959 = vsel %vm149, 0.0, %v6813
  %v6960 = vsel %vm149, 0.0, %v6816
  %v6961 = vsel %vm149, 0.0, %v6819
  %v6962 = vsel %vm149, 0.0, %v6822
  %v6963 = vsel %vm149, 0.0, %v6825
  %v6964 = vsel %vm149, 0.0, %v6828
  %v6965 = vsel %vm149, 0.0, %v6831
  %v6966 = vsel %vm149, 0.0, %v6834
  %v6967 = vsel %vm149, 0.0, %v6837
  %v6968 = vsel %vm149, 0.0, %v6840
  %v6969 = vsel %vm149, %v6748, 0.0
  %v6970 = vsel %vm149, %v6751, 0.0
  %v6971 = vsel %vm149, %v6754, 0.0
  %v6972 = vsel %vm149, %v6757, 0.0
  %v6973 = vsel %vm149, %v6760, 0.0
  %v6974 = vsel %vm149, %v6763, 0.0
  %v6975 = vsel %vm149, %v6766, 0.0
  %v6976 = vsel %vm149, %v6769, 0.0
  %v6977 = vsel %vm149, %v6772, 0.0
  %v6978 = vsel %vm149, %v6775, 0.0
  %v6979 = vsel %vm149, %v6778, 0.0
  %v6980 = vsel %vm149, %v6781, 0.0
  %v6981 = vsel %vm149, %v6784, 0.0
  %v6982 = vsel %vm149, %v6787, 0.0
  %v6983 = vsel %vm149, %v6790, 0.0
  %v6984 = vsel %vm149, %v6793, 0.0
  %v6985 = vsel %vm149, %v6796, 0.0
  %v6986 = vsel %vm149, %v6799, 0.0
  %v6987 = vsel %vm149, %v6802, 0.0
  %v6988 = vsel %vm149, %v6805, 0.0
  %v6989 = vsel %vm149, %v6808, 0.0
  %v6990 = vsel %vm149, %v6811, 0.0
  %v6991 = vsel %vm149, %v6814, 0.0
  %v6992 = vsel %vm149, %v6817, 0.0
  %v6993 = vsel %vm149, %v6820, 0.0
  %v6994 = vsel %vm149, %v6823, 0.0
  %v6995 = vsel %vm149, %v6826, 0.0
  %v6996 = vsel %vm149, %v6829, 0.0
  %v6997 = vsel %vm149, %v6832, 0.0
  %v6998 = vsel %vm149, %v6835, 0.0
  %v6999 = vsel %vm149, %v6838, 0.0
  %v7000 = vsel %vm149, %v6841, 0.0
  %v7061 = vrot.slane %v6937, 1
  %v7062 = vrot.slane %v6749, 1
  %v7063 = vsel %vm465, %v7061, %v7062
  %v7064 = vrot.slane %v6969, 1
  %v7065 = vsel %vm465, %v7062, %v7064
  %v7066 = vrot.slane %v6938, 1
  %v7067 = vrot.slane %v6752, 1
  %v7068 = vsel %vm465, %v7066, %v7067
  %v7069 = vrot.slane %v6970, 1
  %v7070 = vsel %vm465, %v7067, %v7069
  %v7071 = vrot.slane %v6939, 1
  %v7072 = vrot.slane %v6755, 1
  %v7073 = vsel %vm465, %v7071, %v7072
  %v7074 = vrot.slane %v6971, 1
  %v7075 = vsel %vm465, %v7072, %v7074
  %v7076 = vrot.slane %v6940, 1
  %v7077 = vrot.slane %v6758, 1
  %v7078 = vsel %vm465, %v7076, %v7077
  %v7079 = vrot.slane %v6972, 1
  %v7080 = vsel %vm465, %v7077, %v7079
  %v7081 = vrot.slane %v6941, 1
  %v7082 = vrot.slane %v6761, 1
  %v7083 = vsel %vm465, %v7081, %v7082
  %v7084 = vrot.slane %v6973, 1
  %v7085 = vsel %vm465, %v7082, %v7084
  %v7086 = vrot.slane %v6942, 1
  %v7087 = vrot.slane %v6764, 1
  %v7088 = vsel %vm465, %v7086, %v7087
  %v7089 = vrot.slane %v6974, 1
  %v7090 = vsel %vm465, %v7087, %v7089
  %v7091 = vrot.slane %v6943, 1
  %v7092 = vrot.slane %v6767, 1
  %v7093 = vsel %vm465, %v7091, %v7092
  %v7094 = vrot.slane %v6975, 1
  %v7095 = vsel %vm465, %v7092, %v7094
  %v7096 = vrot.slane %v6944, 1
  %v7097 = vrot.slane %v6770, 1
  %v7098 = vsel %vm465, %v7096, %v7097
  %v7099 = vrot.slane %v6976, 1
  %v7100 = vsel %vm465, %v7097, %v7099
  %v7101 = vrot.slane %v6945, 1
  %v7102 = vrot.slane %v6773, 1
  %v7103 = vsel %vm465, %v7101, %v7102
  %v7104 = vrot.slane %v6977, 1
  %v7105 = vsel %vm465, %v7102, %v7104
  %v7106 = vrot.slane %v6946, 1
  %v7107 = vrot.slane %v6776, 1
  %v7108 = vsel %vm465, %v7106, %v7107
  %v7109 = vrot.slane %v6978, 1
  %v7110 = vsel %vm465, %v7107, %v7109
  %v7111 = vrot.slane %v6947, 1
  %v7112 = vrot.slane %v6779, 1
  %v7113 = vsel %vm465, %v7111, %v7112
  %v7114 = vrot.slane %v6979, 1
  %v7115 = vsel %vm465, %v7112, %v7114
  %v7116 = vrot.slane %v6948, 1
  %v7117 = vrot.slane %v6782, 1
  %v7118 = vsel %vm465, %v7116, %v7117
  %v7119 = vrot.slane %v6980, 1
  %v7120 = vsel %vm465, %v7117, %v7119
  %v7121 = vrot.slane %v6949, 1
  %v7122 = vrot.slane %v6785, 1
  %v7123 = vsel %vm465, %v7121, %v7122
  %v7124 = vrot.slane %v6981, 1
  %v7125 = vsel %vm465, %v7122, %v7124
  %v7126 = vrot.slane %v6950, 1
  %v7127 = vrot.slane %v6788, 1
  %v7128 = vsel %vm465, %v7126, %v7127
  %v7129 = vrot.slane %v6982, 1
  %v7130 = vsel %vm465, %v7127, %v7129
  %v7131 = vrot.slane %v6951, 1
  %v7132 = vrot.slane %v6791, 1
  %v7133 = vsel %vm465, %v7131, %v7132
  %v7134 = vrot.slane %v6983, 1
  %v7135 = vsel %vm465, %v7132, %v7134
  %v7136 = vrot.slane %v6953, 1
  %v7137 = vrot.slane %v6797, 1
  %v7138 = vsel %vm465, %v7136, %v7137
  %v7139 = vrot.slane %v6985, 1
  %v7140 = vsel %vm465, %v7137, %v7139
  %v7141 = vrot.slane %v6954, 1
  %v7142 = vrot.slane %v6800, 1
  %v7143 = vsel %vm465, %v7141, %v7142
  %v7144 = vrot.slane %v6986, 1
  %v7145 = vsel %vm465, %v7142, %v7144
  %v7146 = vrot.slane %v6955, 1
  %v7147 = vrot.slane %v6803, 1
  %v7148 = vsel %vm465, %v7146, %v7147
  %v7149 = vrot.slane %v6987, 1
  %v7150 = vsel %vm465, %v7147, %v7149
  %v7151 = vrot.slane %v6956, 1
  %v7152 = vrot.slane %v6806, 1
  %v7153 = vsel %vm465, %v7151, %v7152
  %v7154 = vrot.slane %v6988, 1
  %v7155 = vsel %vm465, %v7152, %v7154
  %v7156 = vrot.slane %v6957, 1
  %v7157 = vrot.slane %v6809, 1
  %v7158 = vsel %vm465, %v7156, %v7157
  %v7159 = vrot.slane %v6989, 1
  %v7160 = vsel %vm465, %v7157, %v7159
  %v7161 = vrot.slane %v6958, 1
  %v7162 = vrot.slane %v6812, 1
  %v7163 = vsel %vm465, %v7161, %v7162
  %v7164 = vrot.slane %v6990, 1
  %v7165 = vsel %vm465, %v7162, %v7164
  %v7166 = vrot.slane %v6959, 1
  %v7167 = vrot.slane %v6815, 1
  %v7168 = vsel %vm465, %v7166, %v7167
  %v7169 = vrot.slane %v6991, 1
  %v7170 = vsel %vm465, %v7167, %v7169
  %v7171 = vrot.slane %v6960, 1
  %v7172 = vrot.slane %v6818, 1
  %v7173 = vsel %vm465, %v7171, %v7172
  %v7174 = vrot.slane %v6992, 1
  %v7175 = vsel %vm465, %v7172, %v7174
  %v7176 = vrot.slane %v6961, 1
  %v7177 = vrot.slane %v6821, 1
  %v7178 = vsel %vm465, %v7176, %v7177
  %v7179 = vrot.slane %v6993, 1
  %v7180 = vsel %vm465, %v7177, %v7179
  %v7181 = vrot.slane %v6962, 1
  %v7182 = vrot.slane %v6824, 1
  %v7183 = vsel %vm465, %v7181, %v7182
  %v7184 = vrot.slane %v6994, 1
  %v7185 = vsel %vm465, %v7182, %v7184
  %v7186 = vrot.slane %v6963, 1
  %v7187 = vrot.slane %v6827, 1
  %v7188 = vsel %vm465, %v7186, %v7187
  %v7189 = vrot.slane %v6995, 1
  %v7190 = vsel %vm465, %v7187, %v7189
  %v7191 = vrot.slane %v6964, 1
  %v7192 = vrot.slane %v6830, 1
  %v7193 = vsel %vm465, %v7191, %v7192
  %v7194 = vrot.slane %v6996, 1
  %v7195 = vsel %vm465, %v7192, %v7194
  %v7196 = vrot.slane %v6965, 1
  %v7197 = vrot.slane %v6833, 1
  %v7198 = vsel %vm465, %v7196, %v7197
  %v7199 = vrot.slane %v6997, 1
  %v7200 = vsel %vm465, %v7197, %v7199
  %v7201 = vrot.slane %v6966, 1
  %v7202 = vrot.slane %v6836, 1
  %v7203 = vsel %vm465, %v7201, %v7202
  %v7204 = vrot.slane %v6998, 1
  %v7205 = vsel %vm465, %v7202, %v7204
  %v7206 = vrot.slane %v6967, 1
  %v7207 = vrot.slane %v6839, 1
  %v7208 = vsel %vm465, %v7206, %v7207
  %v7209 = vrot.slane %v6999, 1
  %v7210 = vsel %vm465, %v7207, %v7209
  %v7211 = vrot.slane %v6937, 2
  %v7212 = vrot.slane %v6749, 2
  %v7213 = vsel %vm618, %v7211, %v7212
  %v7214 = vrot.slane %v6969, 2
  %v7215 = vsel %vm618, %v7212, %v7214
  %v7216 = vrot.slane %v6938, 2
  %v7217 = vrot.slane %v6752, 2
  %v7218 = vsel %vm618, %v7216, %v7217
  %v7219 = vrot.slane %v6970, 2
  %v7220 = vsel %vm618, %v7217, %v7219
  %v7221 = vrot.slane %v6939, 2
  %v7222 = vrot.slane %v6755, 2
  %v7223 = vsel %vm618, %v7221, %v7222
  %v7224 = vrot.slane %v6971, 2
  %v7225 = vsel %vm618, %v7222, %v7224
  %v7226 = vrot.slane %v6940, 2
  %v7227 = vrot.slane %v6758, 2
  %v7228 = vsel %vm618, %v7226, %v7227
  %v7229 = vrot.slane %v6972, 2
  %v7230 = vsel %vm618, %v7227, %v7229
  %v7231 = vrot.slane %v6941, 2
  %v7232 = vrot.slane %v6761, 2
  %v7233 = vsel %vm618, %v7231, %v7232
  %v7234 = vrot.slane %v6973, 2
  %v7235 = vsel %vm618, %v7232, %v7234
  %v7236 = vrot.slane %v6942, 2
  %v7237 = vrot.slane %v6764, 2
  %v7238 = vsel %vm618, %v7236, %v7237
  %v7239 = vrot.slane %v6974, 2
  %v7240 = vsel %vm618, %v7237, %v7239
  %v7241 = vrot.slane %v6943, 2
  %v7242 = vrot.slane %v6767, 2
  %v7243 = vsel %vm618, %v7241, %v7242
  %v7244 = vrot.slane %v6975, 2
  %v7245 = vsel %vm618, %v7242, %v7244
  %v7246 = vrot.slane %v6944, 2
  %v7247 = vrot.slane %v6770, 2
  %v7248 = vsel %vm618, %v7246, %v7247
  %v7249 = vrot.slane %v6976, 2
  %v7250 = vsel %vm618, %v7247, %v7249
  %v7251 = vrot.slane %v6945, 2
  %v7252 = vrot.slane %v6773, 2
  %v7253 = vsel %vm618, %v7251, %v7252
  %v7254 = vrot.slane %v6977, 2
  %v7255 = vsel %vm618, %v7252, %v7254
  %v7256 = vrot.slane %v6946, 2
  %v7257 = vrot.slane %v6776, 2
  %v7258 = vsel %vm618, %v7256, %v7257
  %v7259 = vrot.slane %v6978, 2
  %v7260 = vsel %vm618, %v7257, %v7259
  %v7261 = vrot.slane %v6947, 2
  %v7262 = vrot.slane %v6779, 2
  %v7263 = vsel %vm618, %v7261, %v7262
  %v7264 = vrot.slane %v6979, 2
  %v7265 = vsel %vm618, %v7262, %v7264
  %v7266 = vrot.slane %v6948, 2
  %v7267 = vrot.slane %v6782, 2
  %v7268 = vsel %vm618, %v7266, %v7267
  %v7269 = vrot.slane %v6980, 2
  %v7270 = vsel %vm618, %v7267, %v7269
  %v7271 = vrot.slane %v6949, 2
  %v7272 = vrot.slane %v6785, 2
  %v7273 = vsel %vm618, %v7271, %v7272
  %v7274 = vrot.slane %v6981, 2
  %v7275 = vsel %vm618, %v7272, %v7274
  %v7276 = vrot.slane %v6950, 2
  %v7277 = vrot.slane %v6788, 2
  %v7278 = vsel %vm618, %v7276, %v7277
  %v7279 = vrot.slane %v6982, 2
  %v7280 = vsel %vm618, %v7277, %v7279
  %v7281 = vrot.slane %v6951, 2
  %v7282 = vrot.slane %v6791, 2
  %v7283 = vsel %vm618, %v7281, %v7282
  %v7284 = vrot.slane %v6983, 2
  %v7285 = vsel %vm618, %v7282, %v7284
  %v7286 = vrot.slane %v6953, 2
  %v7287 = vrot.slane %v6797, 2
  %v7288 = vsel %vm618, %v7286, %v7287
  %v7289 = vrot.slane %v6985, 2
  %v7290 = vsel %vm618, %v7287, %v7289
  %v7291 = vrot.slane %v6954, 2
  %v7292 = vrot.slane %v6800, 2
  %v7293 = vsel %vm618, %v7291, %v7292
  %v7294 = vrot.slane %v6986, 2
  %v7295 = vsel %vm618, %v7292, %v7294
  %v7296 = vrot.slane %v6955, 2
  %v7297 = vrot.slane %v6803, 2
  %v7298 = vsel %vm618, %v7296, %v7297
  %v7299 = vrot.slane %v6987, 2
  %v7300 = vsel %vm618, %v7297, %v7299
  %v7301 = vrot.slane %v6956, 2
  %v7302 = vrot.slane %v6806, 2
  %v7303 = vsel %vm618, %v7301, %v7302
  %v7304 = vrot.slane %v6988, 2
  %v7305 = vsel %vm618, %v7302, %v7304
  %v7306 = vrot.slane %v6957, 2
  %v7307 = vrot.slane %v6809, 2
  %v7308 = vsel %vm618, %v7306, %v7307
  %v7309 = vrot.slane %v6989, 2
  %v7310 = vsel %vm618, %v7307, %v7309
  %v7311 = vrot.slane %v6958, 2
  %v7312 = vrot.slane %v6812, 2
  %v7313 = vsel %vm618, %v7311, %v7312
  %v7314 = vrot.slane %v6990, 2
  %v7315 = vsel %vm618, %v7312, %v7314
  %v7316 = vrot.slane %v6959, 2
  %v7317 = vrot.slane %v6815, 2
  %v7318 = vsel %vm618, %v7316, %v7317
  %v7319 = vrot.slane %v6991, 2
  %v7320 = vsel %vm618, %v7317, %v7319
  %v7321 = vrot.slane %v6960, 2
  %v7322 = vrot.slane %v6818, 2
  %v7323 = vsel %vm618, %v7321, %v7322
  %v7324 = vrot.slane %v6992, 2
  %v7325 = vsel %vm618, %v7322, %v7324
  %v7326 = vrot.slane %v6961, 2
  %v7327 = vrot.slane %v6821, 2
  %v7328 = vsel %vm618, %v7326, %v7327
  %v7329 = vrot.slane %v6993, 2
  %v7330 = vsel %vm618, %v7327, %v7329
  %v7331 = vrot.slane %v6962, 2
  %v7332 = vrot.slane %v6824, 2
  %v7333 = vsel %vm618, %v7331, %v7332
  %v7334 = vrot.slane %v6994, 2
  %v7335 = vsel %vm618, %v7332, %v7334
  %v7336 = vrot.slane %v6963, 2
  %v7337 = vrot.slane %v6827, 2
  %v7338 = vsel %vm618, %v7336, %v7337
  %v7339 = vrot.slane %v6995, 2
  %v7340 = vsel %vm618, %v7337, %v7339
  %v7341 = vrot.slane %v6964, 2
  %v7342 = vrot.slane %v6830, 2
  %v7343 = vsel %vm618, %v7341, %v7342
  %v7344 = vrot.slane %v6996, 2
  %v7345 = vsel %vm618, %v7342, %v7344
  %v7346 = vrot.slane %v6965, 2
  %v7347 = vrot.slane %v6833, 2
  %v7348 = vsel %vm618, %v7346, %v7347
  %v7349 = vrot.slane %v6997, 2
  %v7350 = vsel %vm618, %v7347, %v7349
  %v7351 = vrot.slane %v6966, 2
  %v7352 = vrot.slane %v6836, 2
  %v7353 = vsel %vm618, %v7351, %v7352
  %v7354 = vrot.slane %v6998, 2
  %v7355 = vsel %vm618, %v7352, %v7354
  %v7356 = vrot.slane %v6967, 2
  %v7357 = vrot.slane %v6839, 2
  %v7358 = vsel %vm618, %v7356, %v7357
  %v7359 = vrot.slane %v6999, 2
  %v7360 = vsel %vm618, %v7357, %v7359
  %v7365 = vrot.slane %v6952, 1
  %v7366 = vrot.slane %v6794, 1
  %v7367 = vsel %vm465, %v7365, %v7366
  %v7368 = vrot.slane %v6984, 1
  %v7369 = vsel %vm465, %v7366, %v7368
  %v7370 = vrot.slane %v6968, 1
  %v7371 = vrot.slane %v6842, 1
  %v7372 = vsel %vm465, %v7370, %v7371
  %v7373 = vrot.slane %v7000, 1
  %v7374 = vsel %vm465, %v7371, %v7373
  %v7439 = vrot.slane %v6952, 2
  %v7440 = vrot.slane %v6794, 2
  %v7441 = vsel %vm618, %v7439, %v7440
  %v7442 = vrot.slane %v6984, 2
  %v7443 = vsel %vm618, %v7440, %v7442
  %v7444 = vrot.slane %v6968, 2
  %v7445 = vrot.slane %v6842, 2
  %v7446 = vsel %vm618, %v7444, %v7445
  %v7447 = vrot.slane %v7000, 2
  %v7448 = vsel %vm618, %v7445, %v7447
  %7509 = vrot.lane.b32.xlu0 %v7063, 32
  %v7510 = vpop.permute.xlu0 %7509
  %7511 = vrot.lane.b32.xlu0 %v7065, 32
  %v7512 = vpop.permute.xlu0 %7511
  %7513 = vrot.lane.b32.xlu0 %v7068, 32
  %v7514 = vpop.permute.xlu0 %7513
  %7515 = vrot.lane.b32.xlu0 %v7070, 32
  %v7516 = vpop.permute.xlu0 %7515
  %7517 = vrot.lane.b32.xlu0 %v7073, 32
  %v7518 = vpop.permute.xlu0 %7517
  %7519 = vrot.lane.b32.xlu0 %v7075, 32
  %v7520 = vpop.permute.xlu0 %7519
  %7521 = vrot.lane.b32.xlu0 %v7078, 32
  %v7522 = vpop.permute.xlu0 %7521
  %7523 = vrot.lane.b32.xlu0 %v7080, 32
  %v7524 = vpop.permute.xlu0 %7523
  %7525 = vrot.lane.b32.xlu0 %v7083, 32
  %v7526 = vpop.permute.xlu0 %7525
  %7527 = vrot.lane.b32.xlu0 %v7085, 32
  %v7528 = vpop.permute.xlu0 %7527
  %7529 = vrot.lane.b32.xlu0 %v7088, 32
  %v7530 = vpop.permute.xlu0 %7529
  %7531 = vrot.lane.b32.xlu0 %v7090, 32
  %v7532 = vpop.permute.xlu0 %7531
  %7533 = vrot.lane.b32.xlu0 %v7093, 32
  %v7534 = vpop.permute.xlu0 %7533
  %7535 = vrot.lane.b32.xlu0 %v7095, 32
  %v7536 = vpop.permute.xlu0 %7535
  %7537 = vrot.lane.b32.xlu0 %v7098, 32
  %v7538 = vpop.permute.xlu0 %7537
  %7539 = vrot.lane.b32.xlu0 %v7100, 32
  %v7540 = vpop.permute.xlu0 %7539
  %7541 = vrot.lane.b32.xlu0 %v7103, 32
  %v7542 = vpop.permute.xlu0 %7541
  %7543 = vrot.lane.b32.xlu0 %v7105, 32
  %v7544 = vpop.permute.xlu0 %7543
  %7545 = vrot.lane.b32.xlu0 %v7108, 32
  %v7546 = vpop.permute.xlu0 %7545
  %7547 = vrot.lane.b32.xlu0 %v7110, 32
  %v7548 = vpop.permute.xlu0 %7547
  %7549 = vrot.lane.b32.xlu0 %v7113, 32
  %v7550 = vpop.permute.xlu0 %7549
  %7551 = vrot.lane.b32.xlu0 %v7115, 32
  %v7552 = vpop.permute.xlu0 %7551
  %7553 = vrot.lane.b32.xlu0 %v7118, 32
  %v7554 = vpop.permute.xlu0 %7553
  %7555 = vrot.lane.b32.xlu0 %v7120, 32
  %v7556 = vpop.permute.xlu0 %7555
  %7557 = vrot.lane.b32.xlu0 %v7123, 32
  %v7558 = vpop.permute.xlu0 %7557
  %7559 = vrot.lane.b32.xlu0 %v7125, 32
  %v7560 = vpop.permute.xlu0 %7559
  %7561 = vrot.lane.b32.xlu0 %v7128, 32
  %v7562 = vpop.permute.xlu0 %7561
  %7563 = vrot.lane.b32.xlu0 %v7130, 32
  %v7564 = vpop.permute.xlu0 %7563
  %7565 = vrot.lane.b32.xlu0 %v7133, 32
  %v7566 = vpop.permute.xlu0 %7565
  %7567 = vrot.lane.b32.xlu0 %v7135, 32
  %v7568 = vpop.permute.xlu0 %7567
  %7569 = vrot.lane.b32.xlu0 %v7138, 32
  %v7570 = vpop.permute.xlu0 %7569
  %7571 = vrot.lane.b32.xlu0 %v7140, 32
  %v7572 = vpop.permute.xlu0 %7571
  %7573 = vrot.lane.b32.xlu0 %v7143, 32
  %v7574 = vpop.permute.xlu0 %7573
  %7575 = vrot.lane.b32.xlu0 %v7145, 32
  %v7576 = vpop.permute.xlu0 %7575
  %7577 = vrot.lane.b32.xlu0 %v7148, 32
  %v7578 = vpop.permute.xlu0 %7577
  %7579 = vrot.lane.b32.xlu0 %v7150, 32
  %v7580 = vpop.permute.xlu0 %7579
  %7581 = vrot.lane.b32.xlu0 %v7153, 32
  %v7582 = vpop.permute.xlu0 %7581
  %7583 = vrot.lane.b32.xlu0 %v7155, 32
  %v7584 = vpop.permute.xlu0 %7583
  %7585 = vrot.lane.b32.xlu0 %v7158, 32
  %v7586 = vpop.permute.xlu0 %7585
  %7587 = vrot.lane.b32.xlu0 %v7160, 32
  %v7588 = vpop.permute.xlu0 %7587
  %7589 = vrot.lane.b32.xlu0 %v7163, 32
  %v7590 = vpop.permute.xlu0 %7589
  %7591 = vrot.lane.b32.xlu0 %v7165, 32
  %v7592 = vpop.permute.xlu0 %7591
  %7593 = vrot.lane.b32.xlu0 %v7168, 32
  %v7594 = vpop.permute.xlu0 %7593
  %7595 = vrot.lane.b32.xlu0 %v7170, 32
  %v7596 = vpop.permute.xlu0 %7595
  %7597 = vrot.lane.b32.xlu0 %v7173, 32
  %v7598 = vpop.permute.xlu0 %7597
  %7599 = vrot.lane.b32.xlu0 %v7175, 32
  %v7600 = vpop.permute.xlu0 %7599
  %7601 = vrot.lane.b32.xlu0 %v7178, 32
  %v7602 = vpop.permute.xlu0 %7601
  %7603 = vrot.lane.b32.xlu0 %v7180, 32
  %v7604 = vpop.permute.xlu0 %7603
  %7605 = vrot.lane.b32.xlu0 %v7183, 32
  %v7606 = vpop.permute.xlu0 %7605
  %7607 = vrot.lane.b32.xlu0 %v7185, 32
  %v7608 = vpop.permute.xlu0 %7607
  %7609 = vrot.lane.b32.xlu0 %v7188, 32
  %v7610 = vpop.permute.xlu0 %7609
  %7611 = vrot.lane.b32.xlu0 %v7190, 32
  %v7612 = vpop.permute.xlu0 %7611
  %7613 = vrot.lane.b32.xlu0 %v7193, 32
  %v7614 = vpop.permute.xlu0 %7613
  %7615 = vrot.lane.b32.xlu0 %v7195, 32
  %v7616 = vpop.permute.xlu0 %7615
  %7617 = vrot.lane.b32.xlu0 %v7198, 32
  %v7618 = vpop.permute.xlu0 %7617
  %7619 = vrot.lane.b32.xlu0 %v7200, 32
  %v7620 = vpop.permute.xlu0 %7619
  %7621 = vrot.lane.b32.xlu0 %v7203, 32
  %v7622 = vpop.permute.xlu0 %7621
  %7623 = vrot.lane.b32.xlu0 %v7205, 32
  %v7624 = vpop.permute.xlu0 %7623
  %7625 = vrot.lane.b32.xlu0 %v7208, 32
  %v7626 = vpop.permute.xlu0 %7625
  %7627 = vrot.lane.b32.xlu0 %v7210, 32
  %v7628 = vpop.permute.xlu0 %7627
  %7689 = vrot.lane.b32.xlu0 %v7213, 64
  %v7690 = vpop.permute.xlu0 %7689
  %7691 = vrot.lane.b32.xlu0 %v7215, 64
  %v7692 = vpop.permute.xlu0 %7691
  %7693 = vrot.lane.b32.xlu0 %v7218, 64
  %v7694 = vpop.permute.xlu0 %7693
  %7695 = vrot.lane.b32.xlu0 %v7220, 64
  %v7696 = vpop.permute.xlu0 %7695
  %7697 = vrot.lane.b32.xlu0 %v7223, 64
  %v7698 = vpop.permute.xlu0 %7697
  %7699 = vrot.lane.b32.xlu0 %v7225, 64
  %v7700 = vpop.permute.xlu0 %7699
  %7701 = vrot.lane.b32.xlu0 %v7228, 64
  %v7702 = vpop.permute.xlu0 %7701
  %7703 = vrot.lane.b32.xlu0 %v7230, 64
  %v7704 = vpop.permute.xlu0 %7703
  %7705 = vrot.lane.b32.xlu0 %v7233, 64
  %v7706 = vpop.permute.xlu0 %7705
  %7707 = vrot.lane.b32.xlu0 %v7235, 64
  %v7708 = vpop.permute.xlu0 %7707
  %7709 = vrot.lane.b32.xlu0 %v7238, 64
  %v7710 = vpop.permute.xlu0 %7709
  %7711 = vrot.lane.b32.xlu0 %v7240, 64
  %v7712 = vpop.permute.xlu0 %7711
  %7713 = vrot.lane.b32.xlu0 %v7243, 64
  %v7714 = vpop.permute.xlu0 %7713
  %7715 = vrot.lane.b32.xlu0 %v7245, 64
  %v7716 = vpop.permute.xlu0 %7715
  %7717 = vrot.lane.b32.xlu0 %v7248, 64
  %v7718 = vpop.permute.xlu0 %7717
  %7719 = vrot.lane.b32.xlu0 %v7250, 64
  %v7720 = vpop.permute.xlu0 %7719
  %7721 = vrot.lane.b32.xlu0 %v7253, 64
  %v7722 = vpop.permute.xlu0 %7721
  %7723 = vrot.lane.b32.xlu0 %v7255, 64
  %v7724 = vpop.permute.xlu0 %7723
  %7725 = vrot.lane.b32.xlu0 %v7258, 64
  %v7726 = vpop.permute.xlu0 %7725
  %7727 = vrot.lane.b32.xlu0 %v7260, 64
  %v7728 = vpop.permute.xlu0 %7727
  %7729 = vrot.lane.b32.xlu0 %v7263, 64
  %v7730 = vpop.permute.xlu0 %7729
  %7731 = vrot.lane.b32.xlu0 %v7265, 64
  %v7732 = vpop.permute.xlu0 %7731
  %7733 = vrot.lane.b32.xlu0 %v7268, 64
  %v7734 = vpop.permute.xlu0 %7733
  %7735 = vrot.lane.b32.xlu0 %v7270, 64
  %v7736 = vpop.permute.xlu0 %7735
  %7737 = vrot.lane.b32.xlu0 %v7273, 64
  %v7738 = vpop.permute.xlu0 %7737
  %7739 = vrot.lane.b32.xlu0 %v7275, 64
  %v7740 = vpop.permute.xlu0 %7739
  %7741 = vrot.lane.b32.xlu0 %v7278, 64
  %v7742 = vpop.permute.xlu0 %7741
  %7743 = vrot.lane.b32.xlu0 %v7280, 64
  %v7744 = vpop.permute.xlu0 %7743
  %7745 = vrot.lane.b32.xlu0 %v7283, 64
  %v7746 = vpop.permute.xlu0 %7745
  %7747 = vrot.lane.b32.xlu0 %v7285, 64
  %v7748 = vpop.permute.xlu0 %7747
  %7749 = vrot.lane.b32.xlu0 %v7288, 64
  %v7750 = vpop.permute.xlu0 %7749
  %7751 = vrot.lane.b32.xlu0 %v7290, 64
  %v7752 = vpop.permute.xlu0 %7751
  %7753 = vrot.lane.b32.xlu0 %v7293, 64
  %v7754 = vpop.permute.xlu0 %7753
  %7755 = vrot.lane.b32.xlu0 %v7295, 64
  %v7756 = vpop.permute.xlu0 %7755
  %7757 = vrot.lane.b32.xlu0 %v7298, 64
  %v7758 = vpop.permute.xlu0 %7757
  %7759 = vrot.lane.b32.xlu0 %v7300, 64
  %v7760 = vpop.permute.xlu0 %7759
  %7761 = vrot.lane.b32.xlu0 %v7303, 64
  %v7762 = vpop.permute.xlu0 %7761
  %7763 = vrot.lane.b32.xlu0 %v7305, 64
  %v7764 = vpop.permute.xlu0 %7763
  %7765 = vrot.lane.b32.xlu0 %v7308, 64
  %v7766 = vpop.permute.xlu0 %7765
  %7767 = vrot.lane.b32.xlu0 %v7310, 64
  %v7768 = vpop.permute.xlu0 %7767
  %7769 = vrot.lane.b32.xlu0 %v7313, 64
  %v7770 = vpop.permute.xlu0 %7769
  %7771 = vrot.lane.b32.xlu0 %v7315, 64
  %v7772 = vpop.permute.xlu0 %7771
  %7773 = vrot.lane.b32.xlu0 %v7318, 64
  %v7774 = vpop.permute.xlu0 %7773
  %7775 = vrot.lane.b32.xlu0 %v7320, 64
  %v7776 = vpop.permute.xlu0 %7775
  %7777 = vrot.lane.b32.xlu0 %v7323, 64
  %v7778 = vpop.permute.xlu0 %7777
  %7779 = vrot.lane.b32.xlu0 %v7325, 64
  %v7780 = vpop.permute.xlu0 %7779
  %7781 = vrot.lane.b32.xlu0 %v7328, 64
  %v7782 = vpop.permute.xlu0 %7781
  %7783 = vrot.lane.b32.xlu0 %v7330, 64
  %v7784 = vpop.permute.xlu0 %7783
  %7785 = vrot.lane.b32.xlu0 %v7333, 64
  %v7786 = vpop.permute.xlu0 %7785
  %7787 = vrot.lane.b32.xlu0 %v7335, 64
  %v7788 = vpop.permute.xlu0 %7787
  %7789 = vrot.lane.b32.xlu0 %v7338, 64
  %v7790 = vpop.permute.xlu0 %7789
  %7791 = vrot.lane.b32.xlu0 %v7340, 64
  %v7792 = vpop.permute.xlu0 %7791
  %7793 = vrot.lane.b32.xlu0 %v7343, 64
  %v7794 = vpop.permute.xlu0 %7793
  %7795 = vrot.lane.b32.xlu0 %v7345, 64
  %v7796 = vpop.permute.xlu0 %7795
  %7797 = vrot.lane.b32.xlu0 %v7348, 64
  %v7798 = vpop.permute.xlu0 %7797
  %7799 = vrot.lane.b32.xlu0 %v7350, 64
  %v7800 = vpop.permute.xlu0 %7799
  %7801 = vrot.lane.b32.xlu0 %v7353, 64
  %v7802 = vpop.permute.xlu0 %7801
  %7803 = vrot.lane.b32.xlu0 %v7355, 64
  %v7804 = vpop.permute.xlu0 %7803
  %7805 = vrot.lane.b32.xlu0 %v7358, 64
  %v7806 = vpop.permute.xlu0 %7805
  %7807 = vrot.lane.b32.xlu0 %v7360, 64
  %v7808 = vpop.permute.xlu0 %7807
  %7869 = vrot.lane.b32.xlu0 %v6937, 96
  %v7870 = vpop.permute.xlu0 %7869
  %7871 = vrot.lane.b32.xlu0 %v6749, 96
  %v7872 = vpop.permute.xlu0 %7871
  %7873 = vrot.lane.b32.xlu0 %v6938, 96
  %v7874 = vpop.permute.xlu0 %7873
  %7875 = vrot.lane.b32.xlu0 %v6752, 96
  %v7876 = vpop.permute.xlu0 %7875
  %7877 = vrot.lane.b32.xlu0 %v6939, 96
  %v7878 = vpop.permute.xlu0 %7877
  %7879 = vrot.lane.b32.xlu0 %v6755, 96
  %v7880 = vpop.permute.xlu0 %7879
  %7881 = vrot.lane.b32.xlu0 %v6940, 96
  %v7882 = vpop.permute.xlu0 %7881
  %7883 = vrot.lane.b32.xlu0 %v6758, 96
  %v7884 = vpop.permute.xlu0 %7883
  %7885 = vrot.lane.b32.xlu0 %v6941, 96
  %v7886 = vpop.permute.xlu0 %7885
  %7887 = vrot.lane.b32.xlu0 %v6761, 96
  %v7888 = vpop.permute.xlu0 %7887
  %7889 = vrot.lane.b32.xlu0 %v6942, 96
  %v7890 = vpop.permute.xlu0 %7889
  %7891 = vrot.lane.b32.xlu0 %v6764, 96
  %v7892 = vpop.permute.xlu0 %7891
  %7893 = vrot.lane.b32.xlu0 %v6943, 96
  %v7894 = vpop.permute.xlu0 %7893
  %7895 = vrot.lane.b32.xlu0 %v6767, 96
  %v7896 = vpop.permute.xlu0 %7895
  %7897 = vrot.lane.b32.xlu0 %v6944, 96
  %v7898 = vpop.permute.xlu0 %7897
  %7899 = vrot.lane.b32.xlu0 %v6770, 96
  %v7900 = vpop.permute.xlu0 %7899
  %7901 = vrot.lane.b32.xlu0 %v6945, 96
  %v7902 = vpop.permute.xlu0 %7901
  %7903 = vrot.lane.b32.xlu0 %v6773, 96
  %v7904 = vpop.permute.xlu0 %7903
  %7905 = vrot.lane.b32.xlu0 %v6946, 96
  %v7906 = vpop.permute.xlu0 %7905
  %7907 = vrot.lane.b32.xlu0 %v6776, 96
  %v7908 = vpop.permute.xlu0 %7907
  %7909 = vrot.lane.b32.xlu0 %v6947, 96
  %v7910 = vpop.permute.xlu0 %7909
  %7911 = vrot.lane.b32.xlu0 %v6779, 96
  %v7912 = vpop.permute.xlu0 %7911
  %7913 = vrot.lane.b32.xlu0 %v6948, 96
  %v7914 = vpop.permute.xlu0 %7913
  %7915 = vrot.lane.b32.xlu0 %v6782, 96
  %v7916 = vpop.permute.xlu0 %7915
  %7917 = vrot.lane.b32.xlu0 %v6949, 96
  %v7918 = vpop.permute.xlu0 %7917
  %7919 = vrot.lane.b32.xlu0 %v6785, 96
  %v7920 = vpop.permute.xlu0 %7919
  %7921 = vrot.lane.b32.xlu0 %v6950, 96
  %v7922 = vpop.permute.xlu0 %7921
  %7923 = vrot.lane.b32.xlu0 %v6788, 96
  %v7924 = vpop.permute.xlu0 %7923
  %7925 = vrot.lane.b32.xlu0 %v6951, 96
  %v7926 = vpop.permute.xlu0 %7925
  %7927 = vrot.lane.b32.xlu0 %v6791, 96
  %v7928 = vpop.permute.xlu0 %7927
  %7929 = vrot.lane.b32.xlu0 %v6952, 96
  %v7930 = vpop.permute.xlu0 %7929
  %7931 = vrot.lane.b32.xlu0 %v6794, 96
  %v7932 = vpop.permute.xlu0 %7931
  %7933 = vrot.lane.b32.xlu0 %v6953, 96
  %v7934 = vpop.permute.xlu0 %7933
  %7935 = vrot.lane.b32.xlu0 %v6797, 96
  %v7936 = vpop.permute.xlu0 %7935
  %7937 = vrot.lane.b32.xlu0 %v6954, 96
  %v7938 = vpop.permute.xlu0 %7937
  %7939 = vrot.lane.b32.xlu0 %v6800, 96
  %v7940 = vpop.permute.xlu0 %7939
  %7941 = vrot.lane.b32.xlu0 %v6955, 96
  %v7942 = vpop.permute.xlu0 %7941
  %7943 = vrot.lane.b32.xlu0 %v6803, 96
  %v7944 = vpop.permute.xlu0 %7943
  %7945 = vrot.lane.b32.xlu0 %v6956, 96
  %v7946 = vpop.permute.xlu0 %7945
  %7947 = vrot.lane.b32.xlu0 %v6806, 96
  %v7948 = vpop.permute.xlu0 %7947
  %7949 = vrot.lane.b32.xlu0 %v6957, 96
  %v7950 = vpop.permute.xlu0 %7949
  %7951 = vrot.lane.b32.xlu0 %v6809, 96
  %v7952 = vpop.permute.xlu0 %7951
  %7953 = vrot.lane.b32.xlu0 %v6958, 96
  %v7954 = vpop.permute.xlu0 %7953
  %7955 = vrot.lane.b32.xlu0 %v6812, 96
  %v7956 = vpop.permute.xlu0 %7955
  %7957 = vrot.lane.b32.xlu0 %v6959, 96
  %v7958 = vpop.permute.xlu0 %7957
  %7959 = vrot.lane.b32.xlu0 %v6815, 96
  %v7960 = vpop.permute.xlu0 %7959
  %7961 = vrot.lane.b32.xlu0 %v6960, 96
  %v7962 = vpop.permute.xlu0 %7961
  %7963 = vrot.lane.b32.xlu0 %v6818, 96
  %v7964 = vpop.permute.xlu0 %7963
  %7965 = vrot.lane.b32.xlu0 %v6961, 96
  %v7966 = vpop.permute.xlu0 %7965
  %7967 = vrot.lane.b32.xlu0 %v6821, 96
  %v7968 = vpop.permute.xlu0 %7967
  %7969 = vrot.lane.b32.xlu0 %v6962, 96
  %v7970 = vpop.permute.xlu0 %7969
  %7971 = vrot.lane.b32.xlu0 %v6824, 96
  %v7972 = vpop.permute.xlu0 %7971
  %7973 = vrot.lane.b32.xlu0 %v6963, 96
  %v7974 = vpop.permute.xlu0 %7973
  %7975 = vrot.lane.b32.xlu0 %v6827, 96
  %v7976 = vpop.permute.xlu0 %7975
  %7977 = vrot.lane.b32.xlu0 %v6964, 96
  %v7978 = vpop.permute.xlu0 %7977
  %7979 = vrot.lane.b32.xlu0 %v6830, 96
  %v7980 = vpop.permute.xlu0 %7979
  %7981 = vrot.lane.b32.xlu0 %v6965, 96
  %v7982 = vpop.permute.xlu0 %7981
  %7983 = vrot.lane.b32.xlu0 %v6833, 96
  %v7984 = vpop.permute.xlu0 %7983
  %7985 = vrot.lane.b32.xlu0 %v6966, 96
  %v7986 = vpop.permute.xlu0 %7985
  %7987 = vrot.lane.b32.xlu0 %v6836, 96
  %v7988 = vpop.permute.xlu0 %7987
  %7989 = vrot.lane.b32.xlu0 %v6967, 96
  %v7990 = vpop.permute.xlu0 %7989
  %7991 = vrot.lane.b32.xlu0 %v6839, 96
  %v7992 = vpop.permute.xlu0 %7991
  %7993 = vrot.lane.b32.xlu0 %v6968, 96
  %v7994 = vpop.permute.xlu0 %7993
  %7995 = vrot.lane.b32.xlu0 %v6842, 96
  %v7996 = vpop.permute.xlu0 %7995
  %8061 = vrot.lane.b32.xlu0 %v7213, 32
  %v8062 = vpop.permute.xlu0 %8061
  %8063 = vrot.lane.b32.xlu0 %v7215, 32
  %v8064 = vpop.permute.xlu0 %8063
  %8065 = vrot.lane.b32.xlu0 %v7218, 32
  %v8066 = vpop.permute.xlu0 %8065
  %8067 = vrot.lane.b32.xlu0 %v7220, 32
  %v8068 = vpop.permute.xlu0 %8067
  %8069 = vrot.lane.b32.xlu0 %v7223, 32
  %v8070 = vpop.permute.xlu0 %8069
  %8071 = vrot.lane.b32.xlu0 %v7225, 32
  %v8072 = vpop.permute.xlu0 %8071
  %8073 = vrot.lane.b32.xlu0 %v7228, 32
  %v8074 = vpop.permute.xlu0 %8073
  %8075 = vrot.lane.b32.xlu0 %v7230, 32
  %v8076 = vpop.permute.xlu0 %8075
  %8077 = vrot.lane.b32.xlu0 %v7233, 32
  %v8078 = vpop.permute.xlu0 %8077
  %8079 = vrot.lane.b32.xlu0 %v7235, 32
  %v8080 = vpop.permute.xlu0 %8079
  %8081 = vrot.lane.b32.xlu0 %v7238, 32
  %v8082 = vpop.permute.xlu0 %8081
  %8083 = vrot.lane.b32.xlu0 %v7240, 32
  %v8084 = vpop.permute.xlu0 %8083
  %8085 = vrot.lane.b32.xlu0 %v7243, 32
  %v8086 = vpop.permute.xlu0 %8085
  %8087 = vrot.lane.b32.xlu0 %v7245, 32
  %v8088 = vpop.permute.xlu0 %8087
  %8089 = vrot.lane.b32.xlu0 %v7248, 32
  %v8090 = vpop.permute.xlu0 %8089
  %8091 = vrot.lane.b32.xlu0 %v7250, 32
  %v8092 = vpop.permute.xlu0 %8091
  %8093 = vrot.lane.b32.xlu0 %v7253, 32
  %v8094 = vpop.permute.xlu0 %8093
  %8095 = vrot.lane.b32.xlu0 %v7255, 32
  %v8096 = vpop.permute.xlu0 %8095
  %8097 = vrot.lane.b32.xlu0 %v7258, 32
  %v8098 = vpop.permute.xlu0 %8097
  %8099 = vrot.lane.b32.xlu0 %v7260, 32
  %v8100 = vpop.permute.xlu0 %8099
  %8101 = vrot.lane.b32.xlu0 %v7263, 32
  %v8102 = vpop.permute.xlu0 %8101
  %8103 = vrot.lane.b32.xlu0 %v7265, 32
  %v8104 = vpop.permute.xlu0 %8103
  %8105 = vrot.lane.b32.xlu0 %v7268, 32
  %v8106 = vpop.permute.xlu0 %8105
  %8107 = vrot.lane.b32.xlu0 %v7270, 32
  %v8108 = vpop.permute.xlu0 %8107
  %8109 = vrot.lane.b32.xlu0 %v7273, 32
  %v8110 = vpop.permute.xlu0 %8109
  %8111 = vrot.lane.b32.xlu0 %v7275, 32
  %v8112 = vpop.permute.xlu0 %8111
  %8113 = vrot.lane.b32.xlu0 %v7278, 32
  %v8114 = vpop.permute.xlu0 %8113
  %8115 = vrot.lane.b32.xlu0 %v7280, 32
  %v8116 = vpop.permute.xlu0 %8115
  %8117 = vrot.lane.b32.xlu0 %v7283, 32
  %v8118 = vpop.permute.xlu0 %8117
  %8119 = vrot.lane.b32.xlu0 %v7285, 32
  %v8120 = vpop.permute.xlu0 %8119
  %8121 = vrot.lane.b32.xlu0 %v7441, 32
  %v8122 = vpop.permute.xlu0 %8121
  %8123 = vrot.lane.b32.xlu0 %v7443, 32
  %v8124 = vpop.permute.xlu0 %8123
  %8125 = vrot.lane.b32.xlu0 %v7288, 32
  %v8126 = vpop.permute.xlu0 %8125
  %8127 = vrot.lane.b32.xlu0 %v7290, 32
  %v8128 = vpop.permute.xlu0 %8127
  %8129 = vrot.lane.b32.xlu0 %v7293, 32
  %v8130 = vpop.permute.xlu0 %8129
  %8131 = vrot.lane.b32.xlu0 %v7295, 32
  %v8132 = vpop.permute.xlu0 %8131
  %8133 = vrot.lane.b32.xlu0 %v7298, 32
  %v8134 = vpop.permute.xlu0 %8133
  %8135 = vrot.lane.b32.xlu0 %v7300, 32
  %v8136 = vpop.permute.xlu0 %8135
  %8137 = vrot.lane.b32.xlu0 %v7303, 32
  %v8138 = vpop.permute.xlu0 %8137
  %8139 = vrot.lane.b32.xlu0 %v7305, 32
  %v8140 = vpop.permute.xlu0 %8139
  %8141 = vrot.lane.b32.xlu0 %v7308, 32
  %v8142 = vpop.permute.xlu0 %8141
  %8143 = vrot.lane.b32.xlu0 %v7310, 32
  %v8144 = vpop.permute.xlu0 %8143
  %8145 = vrot.lane.b32.xlu0 %v7313, 32
  %v8146 = vpop.permute.xlu0 %8145
  %8147 = vrot.lane.b32.xlu0 %v7315, 32
  %v8148 = vpop.permute.xlu0 %8147
  %8149 = vrot.lane.b32.xlu0 %v7318, 32
  %v8150 = vpop.permute.xlu0 %8149
  %8151 = vrot.lane.b32.xlu0 %v7320, 32
  %v8152 = vpop.permute.xlu0 %8151
  %8153 = vrot.lane.b32.xlu0 %v7323, 32
  %v8154 = vpop.permute.xlu0 %8153
  %8155 = vrot.lane.b32.xlu0 %v7325, 32
  %v8156 = vpop.permute.xlu0 %8155
  %8157 = vrot.lane.b32.xlu0 %v7328, 32
  %v8158 = vpop.permute.xlu0 %8157
  %8159 = vrot.lane.b32.xlu0 %v7330, 32
  %v8160 = vpop.permute.xlu0 %8159
  %8161 = vrot.lane.b32.xlu0 %v7333, 32
  %v8162 = vpop.permute.xlu0 %8161
  %8163 = vrot.lane.b32.xlu0 %v7335, 32
  %v8164 = vpop.permute.xlu0 %8163
  %8165 = vrot.lane.b32.xlu0 %v7338, 32
  %v8166 = vpop.permute.xlu0 %8165
  %8167 = vrot.lane.b32.xlu0 %v7340, 32
  %v8168 = vpop.permute.xlu0 %8167
  %8169 = vrot.lane.b32.xlu0 %v7343, 32
  %v8170 = vpop.permute.xlu0 %8169
  %8171 = vrot.lane.b32.xlu0 %v7345, 32
  %v8172 = vpop.permute.xlu0 %8171
  %8173 = vrot.lane.b32.xlu0 %v7348, 32
  %v8174 = vpop.permute.xlu0 %8173
  %8175 = vrot.lane.b32.xlu0 %v7350, 32
  %v8176 = vpop.permute.xlu0 %8175
  %8177 = vrot.lane.b32.xlu0 %v7353, 32
  %v8178 = vpop.permute.xlu0 %8177
  %8179 = vrot.lane.b32.xlu0 %v7355, 32
  %v8180 = vpop.permute.xlu0 %8179
  %8181 = vrot.lane.b32.xlu0 %v7358, 32
  %v8182 = vpop.permute.xlu0 %8181
  %8183 = vrot.lane.b32.xlu0 %v7360, 32
  %v8184 = vpop.permute.xlu0 %8183
  %8185 = vrot.lane.b32.xlu0 %v7446, 32
  %v8186 = vpop.permute.xlu0 %8185
  %8187 = vrot.lane.b32.xlu0 %v7448, 32
  %v8188 = vpop.permute.xlu0 %8187
  %8253 = vrot.lane.b32.xlu0 %v6938, 64
  %v8254 = vpop.permute.xlu0 %8253
  %8255 = vrot.lane.b32.xlu0 %v6752, 64
  %v8256 = vpop.permute.xlu0 %8255
  %8257 = vrot.lane.b32.xlu0 %v6939, 64
  %v8258 = vpop.permute.xlu0 %8257
  %8259 = vrot.lane.b32.xlu0 %v6755, 64
  %v8260 = vpop.permute.xlu0 %8259
  %8261 = vrot.lane.b32.xlu0 %v6940, 64
  %v8262 = vpop.permute.xlu0 %8261
  %8263 = vrot.lane.b32.xlu0 %v6758, 64
  %v8264 = vpop.permute.xlu0 %8263
  %8265 = vrot.lane.b32.xlu0 %v6941, 64
  %v8266 = vpop.permute.xlu0 %8265
  %8267 = vrot.lane.b32.xlu0 %v6761, 64
  %v8268 = vpop.permute.xlu0 %8267
  %8269 = vrot.lane.b32.xlu0 %v6942, 64
  %v8270 = vpop.permute.xlu0 %8269
  %8271 = vrot.lane.b32.xlu0 %v6764, 64
  %v8272 = vpop.permute.xlu0 %8271
  %8273 = vrot.lane.b32.xlu0 %v6943, 64
  %v8274 = vpop.permute.xlu0 %8273
  %8275 = vrot.lane.b32.xlu0 %v6767, 64
  %v8276 = vpop.permute.xlu0 %8275
  %8277 = vrot.lane.b32.xlu0 %v6944, 64
  %v8278 = vpop.permute.xlu0 %8277
  %8279 = vrot.lane.b32.xlu0 %v6770, 64
  %v8280 = vpop.permute.xlu0 %8279
  %8281 = vrot.lane.b32.xlu0 %v6945, 64
  %v8282 = vpop.permute.xlu0 %8281
  %8283 = vrot.lane.b32.xlu0 %v6773, 64
  %v8284 = vpop.permute.xlu0 %8283
  %8285 = vrot.lane.b32.xlu0 %v6946, 64
  %v8286 = vpop.permute.xlu0 %8285
  %8287 = vrot.lane.b32.xlu0 %v6776, 64
  %v8288 = vpop.permute.xlu0 %8287
  %8289 = vrot.lane.b32.xlu0 %v6947, 64
  %v8290 = vpop.permute.xlu0 %8289
  %8291 = vrot.lane.b32.xlu0 %v6779, 64
  %v8292 = vpop.permute.xlu0 %8291
  %8293 = vrot.lane.b32.xlu0 %v6948, 64
  %v8294 = vpop.permute.xlu0 %8293
  %8295 = vrot.lane.b32.xlu0 %v6782, 64
  %v8296 = vpop.permute.xlu0 %8295
  %8297 = vrot.lane.b32.xlu0 %v6949, 64
  %v8298 = vpop.permute.xlu0 %8297
  %8299 = vrot.lane.b32.xlu0 %v6785, 64
  %v8300 = vpop.permute.xlu0 %8299
  %8301 = vrot.lane.b32.xlu0 %v6950, 64
  %v8302 = vpop.permute.xlu0 %8301
  %8303 = vrot.lane.b32.xlu0 %v6788, 64
  %v8304 = vpop.permute.xlu0 %8303
  %8305 = vrot.lane.b32.xlu0 %v6951, 64
  %v8306 = vpop.permute.xlu0 %8305
  %8307 = vrot.lane.b32.xlu0 %v6791, 64
  %v8308 = vpop.permute.xlu0 %8307
  %8309 = vrot.lane.b32.xlu0 %v6952, 64
  %v8310 = vpop.permute.xlu0 %8309
  %8311 = vrot.lane.b32.xlu0 %v6794, 64
  %v8312 = vpop.permute.xlu0 %8311
  %8313 = vrot.lane.b32.xlu0 %v6954, 64
  %v8314 = vpop.permute.xlu0 %8313
  %8315 = vrot.lane.b32.xlu0 %v6800, 64
  %v8316 = vpop.permute.xlu0 %8315
  %8317 = vrot.lane.b32.xlu0 %v6955, 64
  %v8318 = vpop.permute.xlu0 %8317
  %8319 = vrot.lane.b32.xlu0 %v6803, 64
  %v8320 = vpop.permute.xlu0 %8319
  %8321 = vrot.lane.b32.xlu0 %v6956, 64
  %v8322 = vpop.permute.xlu0 %8321
  %8323 = vrot.lane.b32.xlu0 %v6806, 64
  %v8324 = vpop.permute.xlu0 %8323
  %8325 = vrot.lane.b32.xlu0 %v6957, 64
  %v8326 = vpop.permute.xlu0 %8325
  %8327 = vrot.lane.b32.xlu0 %v6809, 64
  %v8328 = vpop.permute.xlu0 %8327
  %8329 = vrot.lane.b32.xlu0 %v6958, 64
  %v8330 = vpop.permute.xlu0 %8329
  %8331 = vrot.lane.b32.xlu0 %v6812, 64
  %v8332 = vpop.permute.xlu0 %8331
  %8333 = vrot.lane.b32.xlu0 %v6959, 64
  %v8334 = vpop.permute.xlu0 %8333
  %8335 = vrot.lane.b32.xlu0 %v6815, 64
  %v8336 = vpop.permute.xlu0 %8335
  %8337 = vrot.lane.b32.xlu0 %v6960, 64
  %v8338 = vpop.permute.xlu0 %8337
  %8339 = vrot.lane.b32.xlu0 %v6818, 64
  %v8340 = vpop.permute.xlu0 %8339
  %8341 = vrot.lane.b32.xlu0 %v6961, 64
  %v8342 = vpop.permute.xlu0 %8341
  %8343 = vrot.lane.b32.xlu0 %v6821, 64
  %v8344 = vpop.permute.xlu0 %8343
  %8345 = vrot.lane.b32.xlu0 %v6962, 64
  %v8346 = vpop.permute.xlu0 %8345
  %8347 = vrot.lane.b32.xlu0 %v6824, 64
  %v8348 = vpop.permute.xlu0 %8347
  %8349 = vrot.lane.b32.xlu0 %v6963, 64
  %v8350 = vpop.permute.xlu0 %8349
  %8351 = vrot.lane.b32.xlu0 %v6827, 64
  %v8352 = vpop.permute.xlu0 %8351
  %8353 = vrot.lane.b32.xlu0 %v6964, 64
  %v8354 = vpop.permute.xlu0 %8353
  %8355 = vrot.lane.b32.xlu0 %v6830, 64
  %v8356 = vpop.permute.xlu0 %8355
  %8357 = vrot.lane.b32.xlu0 %v6965, 64
  %v8358 = vpop.permute.xlu0 %8357
  %8359 = vrot.lane.b32.xlu0 %v6833, 64
  %v8360 = vpop.permute.xlu0 %8359
  %8361 = vrot.lane.b32.xlu0 %v6966, 64
  %v8362 = vpop.permute.xlu0 %8361
  %8363 = vrot.lane.b32.xlu0 %v6836, 64
  %v8364 = vpop.permute.xlu0 %8363
  %8365 = vrot.lane.b32.xlu0 %v6967, 64
  %v8366 = vpop.permute.xlu0 %8365
  %8367 = vrot.lane.b32.xlu0 %v6839, 64
  %v8368 = vpop.permute.xlu0 %8367
  %8369 = vrot.lane.b32.xlu0 %v6968, 64
  %v8370 = vpop.permute.xlu0 %8369
  %8371 = vrot.lane.b32.xlu0 %v6842, 64
  %v8372 = vpop.permute.xlu0 %8371
  %8433 = vrot.lane.b32.xlu0 %v7068, 96
  %v8434 = vpop.permute.xlu0 %8433
  %8435 = vrot.lane.b32.xlu0 %v7070, 96
  %v8436 = vpop.permute.xlu0 %8435
  %8437 = vrot.lane.b32.xlu0 %v7073, 96
  %v8438 = vpop.permute.xlu0 %8437
  %8439 = vrot.lane.b32.xlu0 %v7075, 96
  %v8440 = vpop.permute.xlu0 %8439
  %8441 = vrot.lane.b32.xlu0 %v7078, 96
  %v8442 = vpop.permute.xlu0 %8441
  %8443 = vrot.lane.b32.xlu0 %v7080, 96
  %v8444 = vpop.permute.xlu0 %8443
  %8445 = vrot.lane.b32.xlu0 %v7083, 96
  %v8446 = vpop.permute.xlu0 %8445
  %8447 = vrot.lane.b32.xlu0 %v7085, 96
  %v8448 = vpop.permute.xlu0 %8447
  %8449 = vrot.lane.b32.xlu0 %v7088, 96
  %v8450 = vpop.permute.xlu0 %8449
  %8451 = vrot.lane.b32.xlu0 %v7090, 96
  %v8452 = vpop.permute.xlu0 %8451
  %8453 = vrot.lane.b32.xlu0 %v7093, 96
  %v8454 = vpop.permute.xlu0 %8453
  %8455 = vrot.lane.b32.xlu0 %v7095, 96
  %v8456 = vpop.permute.xlu0 %8455
  %8457 = vrot.lane.b32.xlu0 %v7098, 96
  %v8458 = vpop.permute.xlu0 %8457
  %8459 = vrot.lane.b32.xlu0 %v7100, 96
  %v8460 = vpop.permute.xlu0 %8459
  %8461 = vrot.lane.b32.xlu0 %v7103, 96
  %v8462 = vpop.permute.xlu0 %8461
  %8463 = vrot.lane.b32.xlu0 %v7105, 96
  %v8464 = vpop.permute.xlu0 %8463
  %8465 = vrot.lane.b32.xlu0 %v7108, 96
  %v8466 = vpop.permute.xlu0 %8465
  %8467 = vrot.lane.b32.xlu0 %v7110, 96
  %v8468 = vpop.permute.xlu0 %8467
  %8469 = vrot.lane.b32.xlu0 %v7113, 96
  %v8470 = vpop.permute.xlu0 %8469
  %8471 = vrot.lane.b32.xlu0 %v7115, 96
  %v8472 = vpop.permute.xlu0 %8471
  %8473 = vrot.lane.b32.xlu0 %v7118, 96
  %v8474 = vpop.permute.xlu0 %8473
  %8475 = vrot.lane.b32.xlu0 %v7120, 96
  %v8476 = vpop.permute.xlu0 %8475
  %8477 = vrot.lane.b32.xlu0 %v7123, 96
  %v8478 = vpop.permute.xlu0 %8477
  %8479 = vrot.lane.b32.xlu0 %v7125, 96
  %v8480 = vpop.permute.xlu0 %8479
  %8481 = vrot.lane.b32.xlu0 %v7128, 96
  %v8482 = vpop.permute.xlu0 %8481
  %8483 = vrot.lane.b32.xlu0 %v7130, 96
  %v8484 = vpop.permute.xlu0 %8483
  %8485 = vrot.lane.b32.xlu0 %v7133, 96
  %v8486 = vpop.permute.xlu0 %8485
  %8487 = vrot.lane.b32.xlu0 %v7135, 96
  %v8488 = vpop.permute.xlu0 %8487
  %8489 = vrot.lane.b32.xlu0 %v7367, 96
  %v8490 = vpop.permute.xlu0 %8489
  %8491 = vrot.lane.b32.xlu0 %v7369, 96
  %v8492 = vpop.permute.xlu0 %8491
  %8493 = vrot.lane.b32.xlu0 %v7143, 96
  %v8494 = vpop.permute.xlu0 %8493
  %8495 = vrot.lane.b32.xlu0 %v7145, 96
  %v8496 = vpop.permute.xlu0 %8495
  %8497 = vrot.lane.b32.xlu0 %v7148, 96
  %v8498 = vpop.permute.xlu0 %8497
  %8499 = vrot.lane.b32.xlu0 %v7150, 96
  %v8500 = vpop.permute.xlu0 %8499
  %8501 = vrot.lane.b32.xlu0 %v7153, 96
  %v8502 = vpop.permute.xlu0 %8501
  %8503 = vrot.lane.b32.xlu0 %v7155, 96
  %v8504 = vpop.permute.xlu0 %8503
  %8505 = vrot.lane.b32.xlu0 %v7158, 96
  %v8506 = vpop.permute.xlu0 %8505
  %8507 = vrot.lane.b32.xlu0 %v7160, 96
  %v8508 = vpop.permute.xlu0 %8507
  %8509 = vrot.lane.b32.xlu0 %v7163, 96
  %v8510 = vpop.permute.xlu0 %8509
  %8511 = vrot.lane.b32.xlu0 %v7165, 96
  %v8512 = vpop.permute.xlu0 %8511
  %8513 = vrot.lane.b32.xlu0 %v7168, 96
  %v8514 = vpop.permute.xlu0 %8513
  %8515 = vrot.lane.b32.xlu0 %v7170, 96
  %v8516 = vpop.permute.xlu0 %8515
  %8517 = vrot.lane.b32.xlu0 %v7173, 96
  %v8518 = vpop.permute.xlu0 %8517
  %8519 = vrot.lane.b32.xlu0 %v7175, 96
  %v8520 = vpop.permute.xlu0 %8519
  %8521 = vrot.lane.b32.xlu0 %v7178, 96
  %v8522 = vpop.permute.xlu0 %8521
  %8523 = vrot.lane.b32.xlu0 %v7180, 96
  %v8524 = vpop.permute.xlu0 %8523
  %8525 = vrot.lane.b32.xlu0 %v7183, 96
  %v8526 = vpop.permute.xlu0 %8525
  %8527 = vrot.lane.b32.xlu0 %v7185, 96
  %v8528 = vpop.permute.xlu0 %8527
  %8529 = vrot.lane.b32.xlu0 %v7188, 96
  %v8530 = vpop.permute.xlu0 %8529
  %8531 = vrot.lane.b32.xlu0 %v7190, 96
  %v8532 = vpop.permute.xlu0 %8531
  %8533 = vrot.lane.b32.xlu0 %v7193, 96
  %v8534 = vpop.permute.xlu0 %8533
  %8535 = vrot.lane.b32.xlu0 %v7195, 96
  %v8536 = vpop.permute.xlu0 %8535
  %8537 = vrot.lane.b32.xlu0 %v7198, 96
  %v8538 = vpop.permute.xlu0 %8537
  %8539 = vrot.lane.b32.xlu0 %v7200, 96
  %v8540 = vpop.permute.xlu0 %8539
  %8541 = vrot.lane.b32.xlu0 %v7203, 96
  %v8542 = vpop.permute.xlu0 %8541
  %8543 = vrot.lane.b32.xlu0 %v7205, 96
  %v8544 = vpop.permute.xlu0 %8543
  %8545 = vrot.lane.b32.xlu0 %v7208, 96
  %v8546 = vpop.permute.xlu0 %8545
  %8547 = vrot.lane.b32.xlu0 %v7210, 96
  %v8548 = vpop.permute.xlu0 %8547
  %8549 = vrot.lane.b32.xlu0 %v7372, 96
  %v8550 = vpop.permute.xlu0 %8549
  %8551 = vrot.lane.b32.xlu0 %v7374, 96
  %v8552 = vpop.permute.xlu0 %8551
  %v8613 = vsel %vm2036, %v6937, %v7510
  %v8614 = vsel %vm2036, %v6749, %v7512
  %v8615 = vsel %vm2036, %v6938, %v7514
  %v8616 = vsel %vm2036, %v6752, %v7516
  %v8617 = vsel %vm2036, %v6939, %v7518
  %v8618 = vsel %vm2036, %v6755, %v7520
  %v8619 = vsel %vm2036, %v6940, %v7522
  %v8620 = vsel %vm2036, %v6758, %v7524
  %v8621 = vsel %vm2036, %v6941, %v7526
  %v8622 = vsel %vm2036, %v6761, %v7528
  %v8623 = vsel %vm2036, %v6942, %v7530
  %v8624 = vsel %vm2036, %v6764, %v7532
  %v8625 = vsel %vm2036, %v6943, %v7534
  %v8626 = vsel %vm2036, %v6767, %v7536
  %v8627 = vsel %vm2036, %v6944, %v7538
  %v8628 = vsel %vm2036, %v6770, %v7540
  %v8629 = vsel %vm2036, %v6945, %v7542
  %v8630 = vsel %vm2036, %v6773, %v7544
  %v8631 = vsel %vm2036, %v6946, %v7546
  %v8632 = vsel %vm2036, %v6776, %v7548
  %v8633 = vsel %vm2036, %v6947, %v7550
  %v8634 = vsel %vm2036, %v6779, %v7552
  %v8635 = vsel %vm2036, %v6948, %v7554
  %v8636 = vsel %vm2036, %v6782, %v7556
  %v8637 = vsel %vm2036, %v6949, %v7558
  %v8638 = vsel %vm2036, %v6785, %v7560
  %v8639 = vsel %vm2036, %v6950, %v7562
  %v8640 = vsel %vm2036, %v6788, %v7564
  %v8641 = vsel %vm2036, %v6951, %v7566
  %v8642 = vsel %vm2036, %v6791, %v7568
  %v8643 = vsel %vm2036, %v6953, %v7570
  %v8644 = vsel %vm2036, %v6797, %v7572
  %v8645 = vsel %vm2036, %v6954, %v7574
  %v8646 = vsel %vm2036, %v6800, %v7576
  %v8647 = vsel %vm2036, %v6955, %v7578
  %v8648 = vsel %vm2036, %v6803, %v7580
  %v8649 = vsel %vm2036, %v6956, %v7582
  %v8650 = vsel %vm2036, %v6806, %v7584
  %v8651 = vsel %vm2036, %v6957, %v7586
  %v8652 = vsel %vm2036, %v6809, %v7588
  %v8653 = vsel %vm2036, %v6958, %v7590
  %v8654 = vsel %vm2036, %v6812, %v7592
  %v8655 = vsel %vm2036, %v6959, %v7594
  %v8656 = vsel %vm2036, %v6815, %v7596
  %v8657 = vsel %vm2036, %v6960, %v7598
  %v8658 = vsel %vm2036, %v6818, %v7600
  %v8659 = vsel %vm2036, %v6961, %v7602
  %v8660 = vsel %vm2036, %v6821, %v7604
  %v8661 = vsel %vm2036, %v6962, %v7606
  %v8662 = vsel %vm2036, %v6824, %v7608
  %v8663 = vsel %vm2036, %v6963, %v7610
  %v8664 = vsel %vm2036, %v6827, %v7612
  %v8665 = vsel %vm2036, %v6964, %v7614
  %v8666 = vsel %vm2036, %v6830, %v7616
  %v8667 = vsel %vm2036, %v6965, %v7618
  %v8668 = vsel %vm2036, %v6833, %v7620
  %v8669 = vsel %vm2036, %v6966, %v7622
  %v8670 = vsel %vm2036, %v6836, %v7624
  %v8671 = vsel %vm2036, %v6967, %v7626
  %v8672 = vsel %vm2036, %v6839, %v7628
  %v8673 = vsel %vm2098, %v8613, %v7690
  %v8674 = vsel %vm2098, %v8614, %v7692
  %v8675 = vsel %vm2098, %v8615, %v7694
  %v8676 = vsel %vm2098, %v8616, %v7696
  %v8677 = vsel %vm2098, %v8617, %v7698
  %v8678 = vsel %vm2098, %v8618, %v7700
  %v8679 = vsel %vm2098, %v8619, %v7702
  %v8680 = vsel %vm2098, %v8620, %v7704
  %v8681 = vsel %vm2098, %v8621, %v7706
  %v8682 = vsel %vm2098, %v8622, %v7708
  %v8683 = vsel %vm2098, %v8623, %v7710
  %v8684 = vsel %vm2098, %v8624, %v7712
  %v8685 = vsel %vm2098, %v8625, %v7714
  %v8686 = vsel %vm2098, %v8626, %v7716
  %v8687 = vsel %vm2098, %v8627, %v7718
  %v8688 = vsel %vm2098, %v8628, %v7720
  %v8689 = vsel %vm2098, %v8629, %v7722
  %v8690 = vsel %vm2098, %v8630, %v7724
  %v8691 = vsel %vm2098, %v8631, %v7726
  %v8692 = vsel %vm2098, %v8632, %v7728
  %v8693 = vsel %vm2098, %v8633, %v7730
  %v8694 = vsel %vm2098, %v8634, %v7732
  %v8695 = vsel %vm2098, %v8635, %v7734
  %v8696 = vsel %vm2098, %v8636, %v7736
  %v8697 = vsel %vm2098, %v8637, %v7738
  %v8698 = vsel %vm2098, %v8638, %v7740
  %v8699 = vsel %vm2098, %v8639, %v7742
  %v8700 = vsel %vm2098, %v8640, %v7744
  %v8701 = vsel %vm2098, %v8641, %v7746
  %v8702 = vsel %vm2098, %v8642, %v7748
  %v8703 = vsel %vm2098, %v8643, %v7750
  %v8704 = vsel %vm2098, %v8644, %v7752
  %v8705 = vsel %vm2098, %v8645, %v7754
  %v8706 = vsel %vm2098, %v8646, %v7756
  %v8707 = vsel %vm2098, %v8647, %v7758
  %v8708 = vsel %vm2098, %v8648, %v7760
  %v8709 = vsel %vm2098, %v8649, %v7762
  %v8710 = vsel %vm2098, %v8650, %v7764
  %v8711 = vsel %vm2098, %v8651, %v7766
  %v8712 = vsel %vm2098, %v8652, %v7768
  %v8713 = vsel %vm2098, %v8653, %v7770
  %v8714 = vsel %vm2098, %v8654, %v7772
  %v8715 = vsel %vm2098, %v8655, %v7774
  %v8716 = vsel %vm2098, %v8656, %v7776
  %v8717 = vsel %vm2098, %v8657, %v7778
  %v8718 = vsel %vm2098, %v8658, %v7780
  %v8719 = vsel %vm2098, %v8659, %v7782
  %v8720 = vsel %vm2098, %v8660, %v7784
  %v8721 = vsel %vm2098, %v8661, %v7786
  %v8722 = vsel %vm2098, %v8662, %v7788
  %v8723 = vsel %vm2098, %v8663, %v7790
  %v8724 = vsel %vm2098, %v8664, %v7792
  %v8725 = vsel %vm2098, %v8665, %v7794
  %v8726 = vsel %vm2098, %v8666, %v7796
  %v8727 = vsel %vm2098, %v8667, %v7798
  %v8728 = vsel %vm2098, %v8668, %v7800
  %v8729 = vsel %vm2098, %v8669, %v7802
  %v8730 = vsel %vm2098, %v8670, %v7804
  %v8731 = vsel %vm2098, %v8671, %v7806
  %v8732 = vsel %vm2098, %v8672, %v7808
  %v8733 = vsel %vm2160, %v2099, %v7870
  %v8734 = vsel %vm2160, %v2099, %v7872
  %v8735 = vsel %vm2160, %v8673, %v7874
  %v8736 = vsel %vm2160, %v8674, %v7876
  %v8737 = vsel %vm2160, %v8675, %v7878
  %v8738 = vsel %vm2160, %v8676, %v7880
  %v8739 = vsel %vm2160, %v8677, %v7882
  %v8740 = vsel %vm2160, %v8678, %v7884
  %v8741 = vsel %vm2160, %v8679, %v7886
  %v8742 = vsel %vm2160, %v8680, %v7888
  %v8743 = vsel %vm2160, %v8681, %v7890
  %v8744 = vsel %vm2160, %v8682, %v7892
  %v8745 = vsel %vm2160, %v8683, %v7894
  %v8746 = vsel %vm2160, %v8684, %v7896
  %v8747 = vsel %vm2160, %v8685, %v7898
  %v8748 = vsel %vm2160, %v8686, %v7900
  %v8749 = vsel %vm2160, %v8687, %v7902
  %v8750 = vsel %vm2160, %v8688, %v7904
  %v8751 = vsel %vm2160, %v8689, %v7906
  %v8752 = vsel %vm2160, %v8690, %v7908
  %v8753 = vsel %vm2160, %v8691, %v7910
  %v8754 = vsel %vm2160, %v8692, %v7912
  %v8755 = vsel %vm2160, %v8693, %v7914
  %v8756 = vsel %vm2160, %v8694, %v7916
  %v8757 = vsel %vm2160, %v8695, %v7918
  %v8758 = vsel %vm2160, %v8696, %v7920
  %v8759 = vsel %vm2160, %v8697, %v7922
  %v8760 = vsel %vm2160, %v8698, %v7924
  %v8761 = vsel %vm2160, %v8699, %v7926
  %v8762 = vsel %vm2160, %v8700, %v7928
  %v8763 = vsel %vm2160, %v8701, %v7930
  %v8764 = vsel %vm2160, %v8702, %v7932
  %v8765 = vsel %vm2160, %v2099, %v7934
  %v8766 = vsel %vm2160, %v2099, %v7936
  %v8767 = vsel %vm2160, %v8703, %v7938
  %v8768 = vsel %vm2160, %v8704, %v7940
  %v8769 = vsel %vm2160, %v8705, %v7942
  %v8770 = vsel %vm2160, %v8706, %v7944
  %v8771 = vsel %vm2160, %v8707, %v7946
  %v8772 = vsel %vm2160, %v8708, %v7948
  %v8773 = vsel %vm2160, %v8709, %v7950
  %v8774 = vsel %vm2160, %v8710, %v7952
  %v8775 = vsel %vm2160, %v8711, %v7954
  %v8776 = vsel %vm2160, %v8712, %v7956
  %v8777 = vsel %vm2160, %v8713, %v7958
  %v8778 = vsel %vm2160, %v8714, %v7960
  %v8779 = vsel %vm2160, %v8715, %v7962
  %v8780 = vsel %vm2160, %v8716, %v7964
  %v8781 = vsel %vm2160, %v8717, %v7966
  %v8782 = vsel %vm2160, %v8718, %v7968
  %v8783 = vsel %vm2160, %v8719, %v7970
  %v8784 = vsel %vm2160, %v8720, %v7972
  %v8785 = vsel %vm2160, %v8721, %v7974
  %v8786 = vsel %vm2160, %v8722, %v7976
  %v8787 = vsel %vm2160, %v8723, %v7978
  %v8788 = vsel %vm2160, %v8724, %v7980
  %v8789 = vsel %vm2160, %v8725, %v7982
  %v8790 = vsel %vm2160, %v8726, %v7984
  %v8791 = vsel %vm2160, %v8727, %v7986
  %v8792 = vsel %vm2160, %v8728, %v7988
  %v8793 = vsel %vm2160, %v8729, %v7990
  %v8794 = vsel %vm2160, %v8730, %v7992
  %v8795 = vsel %vm2160, %v8731, %v7994
  %v8796 = vsel %vm2160, %v8732, %v7996
  %v8797 = vsel %vm2036, %v7063, %v8062
  %v8798 = vsel %vm2036, %v7065, %v8064
  %v8799 = vsel %vm2036, %v7068, %v8066
  %v8800 = vsel %vm2036, %v7070, %v8068
  %v8801 = vsel %vm2036, %v7073, %v8070
  %v8802 = vsel %vm2036, %v7075, %v8072
  %v8803 = vsel %vm2036, %v7078, %v8074
  %v8804 = vsel %vm2036, %v7080, %v8076
  %v8805 = vsel %vm2036, %v7083, %v8078
  %v8806 = vsel %vm2036, %v7085, %v8080
  %v8807 = vsel %vm2036, %v7088, %v8082
  %v8808 = vsel %vm2036, %v7090, %v8084
  %v8809 = vsel %vm2036, %v7093, %v8086
  %v8810 = vsel %vm2036, %v7095, %v8088
  %v8811 = vsel %vm2036, %v7098, %v8090
  %v8812 = vsel %vm2036, %v7100, %v8092
  %v8813 = vsel %vm2036, %v7103, %v8094
  %v8814 = vsel %vm2036, %v7105, %v8096
  %v8815 = vsel %vm2036, %v7108, %v8098
  %v8816 = vsel %vm2036, %v7110, %v8100
  %v8817 = vsel %vm2036, %v7113, %v8102
  %v8818 = vsel %vm2036, %v7115, %v8104
  %v8819 = vsel %vm2036, %v7118, %v8106
  %v8820 = vsel %vm2036, %v7120, %v8108
  %v8821 = vsel %vm2036, %v7123, %v8110
  %v8822 = vsel %vm2036, %v7125, %v8112
  %v8823 = vsel %vm2036, %v7128, %v8114
  %v8824 = vsel %vm2036, %v7130, %v8116
  %v8825 = vsel %vm2036, %v7133, %v8118
  %v8826 = vsel %vm2036, %v7135, %v8120
  %v8827 = vsel %vm2036, %v7367, %v8122
  %v8828 = vsel %vm2036, %v7369, %v8124
  %v8829 = vsel %vm2036, %v7138, %v8126
  %v8830 = vsel %vm2036, %v7140, %v8128
  %v8831 = vsel %vm2036, %v7143, %v8130
  %v8832 = vsel %vm2036, %v7145, %v8132
  %v8833 = vsel %vm2036, %v7148, %v8134
  %v8834 = vsel %vm2036, %v7150, %v8136
  %v8835 = vsel %vm2036, %v7153, %v8138
  %v8836 = vsel %vm2036, %v7155, %v8140
  %v8837 = vsel %vm2036, %v7158, %v8142
  %v8838 = vsel %vm2036, %v7160, %v8144
  %v8839 = vsel %vm2036, %v7163, %v8146
  %v8840 = vsel %vm2036, %v7165, %v8148
  %v8841 = vsel %vm2036, %v7168, %v8150
  %v8842 = vsel %vm2036, %v7170, %v8152
  %v8843 = vsel %vm2036, %v7173, %v8154
  %v8844 = vsel %vm2036, %v7175, %v8156
  %v8845 = vsel %vm2036, %v7178, %v8158
  %v8846 = vsel %vm2036, %v7180, %v8160
  %v8847 = vsel %vm2036, %v7183, %v8162
  %v8848 = vsel %vm2036, %v7185, %v8164
  %v8849 = vsel %vm2036, %v7188, %v8166
  %v8850 = vsel %vm2036, %v7190, %v8168
  %v8851 = vsel %vm2036, %v7193, %v8170
  %v8852 = vsel %vm2036, %v7195, %v8172
  %v8853 = vsel %vm2036, %v7198, %v8174
  %v8854 = vsel %vm2036, %v7200, %v8176
  %v8855 = vsel %vm2036, %v7203, %v8178
  %v8856 = vsel %vm2036, %v7205, %v8180
  %v8857 = vsel %vm2036, %v7208, %v8182
  %v8858 = vsel %vm2036, %v7210, %v8184
  %v8859 = vsel %vm2036, %v7372, %v8186
  %v8860 = vsel %vm2036, %v7374, %v8188
  %v8861 = vsel %vm2098, %v8797, %v8254
  %v8862 = vsel %vm2098, %v8798, %v8256
  %v8863 = vsel %vm2098, %v8799, %v8258
  %v8864 = vsel %vm2098, %v8800, %v8260
  %v8865 = vsel %vm2098, %v8801, %v8262
  %v8866 = vsel %vm2098, %v8802, %v8264
  %v8867 = vsel %vm2098, %v8803, %v8266
  %v8868 = vsel %vm2098, %v8804, %v8268
  %v8869 = vsel %vm2098, %v8805, %v8270
  %v8870 = vsel %vm2098, %v8806, %v8272
  %v8871 = vsel %vm2098, %v8807, %v8274
  %v8872 = vsel %vm2098, %v8808, %v8276
  %v8873 = vsel %vm2098, %v8809, %v8278
  %v8874 = vsel %vm2098, %v8810, %v8280
  %v8875 = vsel %vm2098, %v8811, %v8282
  %v8876 = vsel %vm2098, %v8812, %v8284
  %v8877 = vsel %vm2098, %v8813, %v8286
  %v8878 = vsel %vm2098, %v8814, %v8288
  %v8879 = vsel %vm2098, %v8815, %v8290
  %v8880 = vsel %vm2098, %v8816, %v8292
  %v8881 = vsel %vm2098, %v8817, %v8294
  %v8882 = vsel %vm2098, %v8818, %v8296
  %v8883 = vsel %vm2098, %v8819, %v8298
  %v8884 = vsel %vm2098, %v8820, %v8300
  %v8885 = vsel %vm2098, %v8821, %v8302
  %v8886 = vsel %vm2098, %v8822, %v8304
  %v8887 = vsel %vm2098, %v8823, %v8306
  %v8888 = vsel %vm2098, %v8824, %v8308
  %v8889 = vsel %vm2098, %v8825, %v8310
  %v8890 = vsel %vm2098, %v8826, %v8312
  %v8891 = vsel %vm2098, %v8827, %v1731
  %v8892 = vsel %vm2098, %v8828, %v1731
  %v8893 = vsel %vm2098, %v8829, %v8314
  %v8894 = vsel %vm2098, %v8830, %v8316
  %v8895 = vsel %vm2098, %v8831, %v8318
  %v8896 = vsel %vm2098, %v8832, %v8320
  %v8897 = vsel %vm2098, %v8833, %v8322
  %v8898 = vsel %vm2098, %v8834, %v8324
  %v8899 = vsel %vm2098, %v8835, %v8326
  %v8900 = vsel %vm2098, %v8836, %v8328
  %v8901 = vsel %vm2098, %v8837, %v8330
  %v8902 = vsel %vm2098, %v8838, %v8332
  %v8903 = vsel %vm2098, %v8839, %v8334
  %v8904 = vsel %vm2098, %v8840, %v8336
  %v8905 = vsel %vm2098, %v8841, %v8338
  %v8906 = vsel %vm2098, %v8842, %v8340
  %v8907 = vsel %vm2098, %v8843, %v8342
  %v8908 = vsel %vm2098, %v8844, %v8344
  %v8909 = vsel %vm2098, %v8845, %v8346
  %v8910 = vsel %vm2098, %v8846, %v8348
  %v8911 = vsel %vm2098, %v8847, %v8350
  %v8912 = vsel %vm2098, %v8848, %v8352
  %v8913 = vsel %vm2098, %v8849, %v8354
  %v8914 = vsel %vm2098, %v8850, %v8356
  %v8915 = vsel %vm2098, %v8851, %v8358
  %v8916 = vsel %vm2098, %v8852, %v8360
  %v8917 = vsel %vm2098, %v8853, %v8362
  %v8918 = vsel %vm2098, %v8854, %v8364
  %v8919 = vsel %vm2098, %v8855, %v8366
  %v8920 = vsel %vm2098, %v8856, %v8368
  %v8921 = vsel %vm2098, %v8857, %v8370
  %v8922 = vsel %vm2098, %v8858, %v8372
  %v8923 = vsel %vm2098, %v8859, %v1731
  %v8924 = vsel %vm2098, %v8860, %v1731
  %v8925 = vsel %vm2160, %v8861, %v8434
  %v8926 = vsel %vm2160, %v8862, %v8436
  %v8927 = vsel %vm2160, %v8863, %v8438
  %v8928 = vsel %vm2160, %v8864, %v8440
  %v8929 = vsel %vm2160, %v8865, %v8442
  %v8930 = vsel %vm2160, %v8866, %v8444
  %v8931 = vsel %vm2160, %v8867, %v8446
  %v8932 = vsel %vm2160, %v8868, %v8448
  %v8933 = vsel %vm2160, %v8869, %v8450
  %v8934 = vsel %vm2160, %v8870, %v8452
  %v8935 = vsel %vm2160, %v8871, %v8454
  %v8936 = vsel %vm2160, %v8872, %v8456
  %v8937 = vsel %vm2160, %v8873, %v8458
  %v8938 = vsel %vm2160, %v8874, %v8460
  %v8939 = vsel %vm2160, %v8875, %v8462
  %v8940 = vsel %vm2160, %v8876, %v8464
  %v8941 = vsel %vm2160, %v8877, %v8466
  %v8942 = vsel %vm2160, %v8878, %v8468
  %v8943 = vsel %vm2160, %v8879, %v8470
  %v8944 = vsel %vm2160, %v8880, %v8472
  %v8945 = vsel %vm2160, %v8881, %v8474
  %v8946 = vsel %vm2160, %v8882, %v8476
  %v8947 = vsel %vm2160, %v8883, %v8478
  %v8948 = vsel %vm2160, %v8884, %v8480
  %v8949 = vsel %vm2160, %v8885, %v8482
  %v8950 = vsel %vm2160, %v8886, %v8484
  %v8951 = vsel %vm2160, %v8887, %v8486
  %v8952 = vsel %vm2160, %v8888, %v8488
  %v8953 = vsel %vm2160, %v8889, %v8490
  %v8954 = vsel %vm2160, %v8890, %v8492
  %v8955 = vsel %vm2160, %v8891, %v1914
  %v8956 = vsel %vm2160, %v8892, %v1914
  %v8957 = vsel %vm2160, %v8893, %v8494
  %v8958 = vsel %vm2160, %v8894, %v8496
  %v8959 = vsel %vm2160, %v8895, %v8498
  %v8960 = vsel %vm2160, %v8896, %v8500
  %v8961 = vsel %vm2160, %v8897, %v8502
  %v8962 = vsel %vm2160, %v8898, %v8504
  %v8963 = vsel %vm2160, %v8899, %v8506
  %v8964 = vsel %vm2160, %v8900, %v8508
  %v8965 = vsel %vm2160, %v8901, %v8510
  %v8966 = vsel %vm2160, %v8902, %v8512
  %v8967 = vsel %vm2160, %v8903, %v8514
  %v8968 = vsel %vm2160, %v8904, %v8516
  %v8969 = vsel %vm2160, %v8905, %v8518
  %v8970 = vsel %vm2160, %v8906, %v8520
  %v8971 = vsel %vm2160, %v8907, %v8522
  %v8972 = vsel %vm2160, %v8908, %v8524
  %v8973 = vsel %vm2160, %v8909, %v8526
  %v8974 = vsel %vm2160, %v8910, %v8528
  %v8975 = vsel %vm2160, %v8911, %v8530
  %v8976 = vsel %vm2160, %v8912, %v8532
  %v8977 = vsel %vm2160, %v8913, %v8534
  %v8978 = vsel %vm2160, %v8914, %v8536
  %v8979 = vsel %vm2160, %v8915, %v8538
  %v8980 = vsel %vm2160, %v8916, %v8540
  %v8981 = vsel %vm2160, %v8917, %v8542
  %v8982 = vsel %vm2160, %v8918, %v8544
  %v8983 = vsel %vm2160, %v8919, %v8546
  %v8984 = vsel %vm2160, %v8920, %v8548
  %v8985 = vsel %vm2160, %v8921, %v8550
  %v8986 = vsel %vm2160, %v8922, %v8552
  %v8987 = vsel %vm2160, %v8923, %v1914
  %v8988 = vsel %vm2160, %v8924, %v1914
  %v8989 = vpack.c.bf16 %v8734, %v8733
  %v8990 = vpack.c.bf16 %v8926, %v8925
  %v8991 = vpack.c.bf16 %v7220, %v7218
  %v8992 = vpack.c.bf16 %v8736, %v8735
  %v8993 = vpack.c.bf16 %v8928, %v8927
  %v8994 = vpack.c.bf16 %v7225, %v7223
  %v8995 = vpack.c.bf16 %v8738, %v8737
  %v8996 = vpack.c.bf16 %v8930, %v8929
  %v8997 = vpack.c.bf16 %v7230, %v7228
  %v8998 = vpack.c.bf16 %v8740, %v8739
  %v8999 = vpack.c.bf16 %v8932, %v8931
  %v9000 = vpack.c.bf16 %v7235, %v7233
  %v9001 = vpack.c.bf16 %v8742, %v8741
  %v9002 = vpack.c.bf16 %v8934, %v8933
  %v9003 = vpack.c.bf16 %v7240, %v7238
  %v9004 = vpack.c.bf16 %v8744, %v8743
  %v9005 = vpack.c.bf16 %v8936, %v8935
  %v9006 = vpack.c.bf16 %v7245, %v7243
  %v9007 = vpack.c.bf16 %v8746, %v8745
  %v9008 = vpack.c.bf16 %v8938, %v8937
  %v9009 = vpack.c.bf16 %v7250, %v7248
  %v9010 = vpack.c.bf16 %v8748, %v8747
  %v9011 = vpack.c.bf16 %v8940, %v8939
  %v9012 = vpack.c.bf16 %v7255, %v7253
  %v9013 = vpack.c.bf16 %v8750, %v8749
  %v9014 = vpack.c.bf16 %v8942, %v8941
  %v9015 = vpack.c.bf16 %v7260, %v7258
  %v9016 = vpack.c.bf16 %v8752, %v8751
  %v9017 = vpack.c.bf16 %v8944, %v8943
  %v9018 = vpack.c.bf16 %v7265, %v7263
  %v9019 = vpack.c.bf16 %v8754, %v8753
  %v9020 = vpack.c.bf16 %v8946, %v8945
  %v9021 = vpack.c.bf16 %v7270, %v7268
  %v9022 = vpack.c.bf16 %v8756, %v8755
  %v9023 = vpack.c.bf16 %v8948, %v8947
  %v9024 = vpack.c.bf16 %v7275, %v7273
  %v9025 = vpack.c.bf16 %v8758, %v8757
  %v9026 = vpack.c.bf16 %v8950, %v8949
  %v9027 = vpack.c.bf16 %v7280, %v7278
  %v9028 = vpack.c.bf16 %v8760, %v8759
  %v9029 = vpack.c.bf16 %v8952, %v8951
  %v9030 = vpack.c.bf16 %v7285, %v7283
  %v9031 = vpack.c.bf16 %v8762, %v8761
  %v9032 = vpack.c.bf16 %v8954, %v8953
  %v9033 = vpack.c.bf16 %v7443, %v7441
  %v9034 = vpack.c.bf16 %v8764, %v8763
  %v9035 = vpack.c.bf16 %v8956, %v8955
  %v9036 = vpack.c.bf16 %v8766, %v8765
  %v9037 = vpack.c.bf16 %v8958, %v8957
  %v9038 = vpack.c.bf16 %v7295, %v7293
  %v9039 = vpack.c.bf16 %v8768, %v8767
  %v9040 = vpack.c.bf16 %v8960, %v8959
  %v9041 = vpack.c.bf16 %v7300, %v7298
  %v9042 = vpack.c.bf16 %v8770, %v8769
  %v9043 = vpack.c.bf16 %v8962, %v8961
  %v9044 = vpack.c.bf16 %v7305, %v7303
  %v9045 = vpack.c.bf16 %v8772, %v8771
  %v9046 = vpack.c.bf16 %v8964, %v8963
  %v9047 = vpack.c.bf16 %v7310, %v7308
  %v9048 = vpack.c.bf16 %v8774, %v8773
  %v9049 = vpack.c.bf16 %v8966, %v8965
  %v9050 = vpack.c.bf16 %v7315, %v7313
  %v9051 = vpack.c.bf16 %v8776, %v8775
  %v9052 = vpack.c.bf16 %v8968, %v8967
  %v9053 = vpack.c.bf16 %v7320, %v7318
  %v9054 = vpack.c.bf16 %v8778, %v8777
  %v9055 = vpack.c.bf16 %v8970, %v8969
  %v9056 = vpack.c.bf16 %v7325, %v7323
  %v9057 = vpack.c.bf16 %v8780, %v8779
  %v9058 = vpack.c.bf16 %v8972, %v8971
  %v9059 = vpack.c.bf16 %v7330, %v7328
  %v9060 = vpack.c.bf16 %v8782, %v8781
  %v9061 = vpack.c.bf16 %v8974, %v8973
  %v9062 = vpack.c.bf16 %v7335, %v7333
  %v9063 = vpack.c.bf16 %v8784, %v8783
  %v9064 = vpack.c.bf16 %v8976, %v8975
  %v9065 = vpack.c.bf16 %v7340, %v7338
  %v9066 = vpack.c.bf16 %v8786, %v8785
  %v9067 = vpack.c.bf16 %v8978, %v8977
  %v9068 = vpack.c.bf16 %v7345, %v7343
  %v9069 = vpack.c.bf16 %v8788, %v8787
  %v9070 = vpack.c.bf16 %v8980, %v8979
  %v9071 = vpack.c.bf16 %v7350, %v7348
  %v9072 = vpack.c.bf16 %v8790, %v8789
  %v9073 = vpack.c.bf16 %v8982, %v8981
  %v9074 = vpack.c.bf16 %v7355, %v7353
  %v9075 = vpack.c.bf16 %v8792, %v8791
  %v9076 = vpack.c.bf16 %v8984, %v8983
  %v9077 = vpack.c.bf16 %v7360, %v7358
  %v9078 = vpack.c.bf16 %v8794, %v8793
  %v9079 = vpack.c.bf16 %v8986, %v8985
  %v9080 = vpack.c.bf16 %v7448, %v7446
  %v9081 = vpack.c.bf16 %v8796, %v8795
  %v9082 = vpack.c.bf16 %v8988, %v8987
  %v9083 = vld [vmem:[%s3] sm:$0xf]
  %v9084 = vld [vmem:[%s3 + $0x4] sm:$0xf]
  %v9085 = vld [vmem:[%s3 + $0x8] sm:$0xf]
  %v9086 = vld [vmem:[%s3 + $0xc] sm:$0xf]
  %v9087 = vld [vmem:[%s3 + $0x10] sm:$0xf]
  %v9088 = vld [vmem:[%s3 + $0x14] sm:$0xf]
  %v9089 = vld [vmem:[%s3 + $0x18] sm:$0xf]
  %v9090 = vld [vmem:[%s3 + $0x1c] sm:$0xf]
  %v9091 = vld [vmem:[%s3 + $0x20] sm:$0xf]
  %v9092 = vld [vmem:[%s3 + $0x24] sm:$0xf]
  %v9093 = vld [vmem:[%s3 + $0x28] sm:$0xf]
  %v9094 = vld [vmem:[%s3 + $0x2c] sm:$0xf]
  %v9095 = vld [vmem:[%s3 + $0x30] sm:$0xf]
  %v9096 = vld [vmem:[%s3 + $0x34] sm:$0xf]
  %v9097 = vld [vmem:[%s3 + $0x38] sm:$0xf]
  %v9098 = vld [vmem:[%s3 + $0x3c] sm:$0xf]
  %v9099 = vld [vmem:[%s3 + $0x40] sm:$0xf]
  %v9100 = vld [vmem:[%s3 + $0x44] sm:$0xf]
  %v9101 = vld [vmem:[%s3 + $0x48] sm:$0xf]
  %v9102 = vld [vmem:[%s3 + $0x4c] sm:$0xf]
  %v9103 = vld [vmem:[%s3 + $0x50] sm:$0xf]
  %v9104 = vld [vmem:[%s3 + $0x54] sm:$0xf]
  %v9105 = vld [vmem:[%s3 + $0x58] sm:$0xf]
  %v9106 = vld [vmem:[%s3 + $0x5c] sm:$0xf]
  %v9107 = vld [vmem:[%s3 + $0x60] sm:$0xf]
  %v9108 = vld [vmem:[%s3 + $0x64] sm:$0xf]
  %v9109 = vld [vmem:[%s3 + $0x68] sm:$0xf]
  %v9110 = vld [vmem:[%s3 + $0x6c] sm:$0xf]
  %v9111 = vld [vmem:[%s3 + $0x70] sm:$0xf]
  %v9112 = vld [vmem:[%s3 + $0x74] sm:$0xf]
  %v9113 = vld [vmem:[%s3 + $0x78] sm:$0xf]
  %v9114 = vld [vmem:[%s3 + $0x7c] sm:$0xf]
  %v9115 = vld [vmem:[%s3 + $0x80] sm:$0xf]
  %v9116 = vld [vmem:[%s3 + $0x84] sm:$0xf]
  %v9117 = vld [vmem:[%s3 + $0x88] sm:$0xf]
  %v9118 = vld [vmem:[%s3 + $0x8c] sm:$0xf]
  %v9119 = vld [vmem:[%s4] sm:$0x1]
  %v9121 = vlaneseq
  %v9122 = vshrl.u32 %v9121, 7
  %v9123 = vsub.s32 0, %v9122
  %v9124 = vrot.slane %v9119, %v9123
  %v9162 = vunpack.c.l.b16 %v9083
  %v9163 = vunpack.c.l.b16 %v9084
  %v9164 = vunpack.c.l.b16 %v9085
  %v9165 = vunpack.c.l.b16 %v9086
  %v9166 = vunpack.c.l.b16 %v9087
  %v9167 = vunpack.c.l.b16 %v9088
  %v9168 = vunpack.c.l.b16 %v9089
  %v9169 = vunpack.c.l.b16 %v9090
  %v9170 = vunpack.c.l.b16 %v9091
  %v9171 = vunpack.c.l.b16 %v9092
  %v9172 = vunpack.c.l.b16 %v9093
  %v9173 = vunpack.c.l.b16 %v9094
  %v9174 = vunpack.c.l.b16 %v9095
  %v9175 = vunpack.c.l.b16 %v9096
  %v9176 = vunpack.c.l.b16 %v9097
  %v9177 = vunpack.c.l.b16 %v9098
  %v9178 = vunpack.c.l.b16 %v9099
  %v9179 = vunpack.c.l.b16 %v9100
  %v9180 = vunpack.c.l.b16 %v9101
  %v9181 = vunpack.c.l.b16 %v9102
  %v9182 = vunpack.c.l.b16 %v9103
  %v9183 = vunpack.c.l.b16 %v9104
  %v9184 = vunpack.c.l.b16 %v9105
  %v9185 = vunpack.c.l.b16 %v9106
  %v9186 = vunpack.c.l.b16 %v9107
  %v9187 = vunpack.c.l.b16 %v9108
  %v9188 = vunpack.c.l.b16 %v9109
  %v9189 = vunpack.c.l.b16 %v9110
  %v9190 = vunpack.c.l.b16 %v9111
  %v9191 = vunpack.c.l.b16 %v9112
  %v9192 = vunpack.c.l.b16 %v9113
  %v9193 = vunpack.c.l.b16 %v9114
  %v9194 = vunpack.c.l.b16 %v9115
  %v9195 = vunpack.c.l.b16 %v9116
  %v9196 = vunpack.c.l.b16 %v9117
  %v9197 = vunpack.c.l.b16 %v9118
  %v9198 = vpack.c.b16 %v9163, %v9162
  %v9199 = vpack.c.b16 %v9165, %v9164
  %v9200 = vpack.c.b16 %v9167, %v9166
  %v9201 = vpack.c.b16 %v9169, %v9168
  %v9202 = vpack.c.b16 %v9171, %v9170
  %v9203 = vpack.c.b16 %v9173, %v9172
  %v9204 = vpack.c.b16 %v9175, %v9174
  %v9205 = vpack.c.b16 %v9177, %v9176
  %v9206 = vpack.c.b16 %v9179, %v9178
  %v9207 = vpack.c.b16 %v9181, %v9180
  %v9208 = vpack.c.b16 %v9183, %v9182
  %v9209 = vpack.c.b16 %v9185, %v9184
  %v9210 = vpack.c.b16 %v9187, %v9186
  %v9211 = vpack.c.b16 %v9189, %v9188
  %v9212 = vpack.c.b16 %v9191, %v9190
  %v9213 = vpack.c.b16 %v9193, %v9192
  %v9214 = vpack.c.b16 %v9195, %v9194
  %v9215 = vpack.c.b16 %v9197, %v9196
  %v9235 = vsel %vm2036, %v8991, 0
  %v9238 = vsel %vm2036, %v8994, 0
  %v9241 = vsel %vm2036, %v8997, 0
  %v9244 = vsel %vm2036, %v9000, 0
  %v9247 = vsel %vm2036, %v9003, 0
  %v9250 = vsel %vm2036, %v9006, 0
  %v9253 = vsel %vm2036, %v9009, 0
  %v9256 = vsel %vm2036, %v9012, 0
  %v9259 = vsel %vm2036, %v9015, 0
  %v9262 = vsel %vm2036, %v9018, 0
  %v9265 = vsel %vm2036, %v9021, 0
  %v9268 = vsel %vm2036, %v9024, 0
  %v9271 = vsel %vm2036, %v9027, 0
  %v9274 = vsel %vm2036, %v9030, 0
  %v9277 = vsel %vm2036, %v9033, 0
  %v9280 = vsel %vm2036, %v9038, 0
  %v9283 = vsel %vm2036, %v9041, 0
  %v9286 = vsel %vm2036, %v9044, 0
  %v9289 = vsel %vm2036, %v9047, 0
  %v9292 = vsel %vm2036, %v9050, 0
  %v9295 = vsel %vm2036, %v9053, 0
  %v9298 = vsel %vm2036, %v9056, 0
  %v9301 = vsel %vm2036, %v9059, 0
  %v9304 = vsel %vm2036, %v9062, 0
  %v9307 = vsel %vm2036, %v9065, 0
  %v9310 = vsel %vm2036, %v9068, 0
  %v9313 = vsel %vm2036, %v9071, 0
  %v9316 = vsel %vm2036, %v9074, 0
  %v9319 = vsel %vm2036, %v9077, 0
  %v9322 = vsel %vm2036, %v9080, 0
  %9324 = vmatprep.subr.bf16.mxu0 0
  %9325 = vmatpush1.bf16.msra.mxu0 %v9198
  %9326 = vmatprep.subr.bf16.mxu0 0
  %9327 = vmatpush1.bf16.msra.mxu0 %v9199
  %9328 = vmatprep.subr.bf16.mxu0 0
  %9329 = vmatpush1.bf16.msra.mxu0 %v9200
  %9330 = vmatprep.subr.bf16.mxu0 0
  %9331 = vmatpush1.bf16.msra.mxu0 %v9201
  %9332 = vmatprep.subr.bf16.mxu0 0
  %9333 = vmatpush1.bf16.msra.mxu0 %v9202
  %9334 = vmatprep.subr.bf16.mxu0 0
  %9335 = vmatpush1.bf16.msra.mxu0 %v9203
  %9336 = vmatprep.subr.bf16.mxu0 0
  %9337 = vmatpush1.bf16.msra.mxu0 %v9204
  %9338 = vmatprep.subr.bf16.mxu0 0
  %9339 = vmatpush1.bf16.msra.mxu0 %v9205
  %9340 = vmatprep.subr.bf16.mxu0 0
  %9341 = vmatpush1.bf16.msra.mxu0 %v9206
  %9342 = vmatprep.subr.bf16.mxu0 0
  %9343 = vmatpush1.bf16.msra.mxu0 %v9207
  %9344 = vmatprep.subr.bf16.mxu0 0
  %9345 = vmatpush1.bf16.msra.mxu0 %v9208
  %9346 = vmatprep.subr.bf16.mxu0 0
  %9347 = vmatpush1.bf16.msra.mxu0 %v9209
  %9348 = vmatprep.subr.bf16.mxu0 0
  %9349 = vmatpush1.bf16.msra.mxu0 %v9210
  %9350 = vmatprep.subr.bf16.mxu0 0
  %9351 = vmatpush1.bf16.msra.mxu0 %v9211
  %9352 = vmatprep.subr.bf16.mxu0 0
  %9353 = vmatpush1.bf16.msra.mxu0 %v9212
  %9354 = vmatprep.subr.bf16.mxu0 0
  %9355 = vmatpush1.bf16.msra.mxu0 %v9213
  %9356 = vmatprep.mubr.bf16.mxu0 %v8990
  %9357 = vmatmul.mubr.bf16.gmra.mrb[0].mxu0 %v8989
  %v9358 = vpop.f32.mrb[0].mxu0
  %v9359 = vadd.f32 %v9124, %v9358
  %v9360 = vpop.f32.mrb[0].mxu0
  %v9361 = vpop.f32.mrb[0].mxu0
  %v9362 = vadd.f32 %v9124, %v9361
  %v9363 = vpop.f32.mrb[0].mxu0
  %9364 = vmatprep.mubr.bf16.mxu0 %v8993
  %9365 = vmatmul.mubr.bf16.gmra.mrb[0].mxu0 %v8992
  %v9366 = vpop.f32.mrb[0].mxu0
  %v9367 = vadd.f32 %v9124, %v9366
  %v9368 = vpop.f32.mrb[0].mxu0
  %v9369 = vpop.f32.mrb[0].mxu0
  %v9370 = vadd.f32 %v9124, %v9369
  %v9371 = vpop.f32.mrb[0].mxu0
  %9372 = vmatprep.mubr.bf16.mxu0 %v8996
  %9373 = vmatmul.mubr.bf16.gmra.mrb[0].mxu0 %v8995
  %v9374 = vpop.f32.mrb[0].mxu0
  %v9375 = vadd.f32 %v9124, %v9374
  %v9376 = vpop.f32.mrb[0].mxu0
  %v9377 = vpop.f32.mrb[0].mxu0
  %v9378 = vadd.f32 %v9124, %v9377
  %v9379 = vpop.f32.mrb[0].mxu0
  %9380 = vmatprep.mubr.bf16.mxu0 %v8999
  %9381 = vmatmul.mubr.bf16.gmra.mrb[0].mxu0 %v8998
  %v9382 = vpop.f32.mrb[0].mxu0
  %v9383 = vadd.f32 %v9124, %v9382
  %v9384 = vpop.f32.mrb[0].mxu0
  %v9385 = vpop.f32.mrb[0].mxu0
  %v9386 = vadd.f32 %v9124, %v9385
  %v9387 = vpop.f32.mrb[0].mxu0
  %9388 = vmatprep.mubr.bf16.mxu0 %v9002
  %9389 = vmatmul.mubr.bf16.gmra.mrb[0].mxu0 %v9001
  %v9390 = vpop.f32.mrb[0].mxu0
  %v9391 = vadd.f32 %v9124, %v9390
  %v9392 = vpop.f32.mrb[0].mxu0
  %v9393 = vpop.f32.mrb[0].mxu0
  %v9394 = vadd.f32 %v9124, %v9393
  %v9395 = vpop.f32.mrb[0].mxu0
  %9396 = vmatprep.mubr.bf16.mxu0 %v9005
  %9397 = vmatmul.mubr.bf16.gmra.mrb[0].mxu0 %v9004
  %v9398 = vpop.f32.mrb[0].mxu0
  %v9399 = vadd.f32 %v9124, %v9398
  %v9400 = vpop.f32.mrb[0].mxu0
  %v9401 = vpop.f32.mrb[0].mxu0
  %v9402 = vadd.f32 %v9124, %v9401
  %v9403 = vpop.f32.mrb[0].mxu0
  %9404 = vmatprep.mubr.bf16.mxu0 %v9008
  %9405 = vmatmul.mubr.bf16.gmra.mrb[0].mxu0 %v9007
  %v9406 = vpop.f32.mrb[0].mxu0
  %v9407 = vadd.f32 %v9124, %v9406
  %v9408 = vpop.f32.mrb[0].mxu0
  %v9409 = vpop.f32.mrb[0].mxu0
  %v9410 = vadd.f32 %v9124, %v9409
  %v9411 = vpop.f32.mrb[0].mxu0
  %9412 = vmatprep.mubr.bf16.mxu0 %v9011
  %9413 = vmatmul.mubr.bf16.gmra.mrb[0].mxu0 %v9010
  %v9414 = vpop.f32.mrb[0].mxu0
  %v9415 = vadd.f32 %v9124, %v9414
  %v9416 = vpop.f32.mrb[0].mxu0
  %v9417 = vpop.f32.mrb[0].mxu0
  %v9418 = vadd.f32 %v9124, %v9417
  %v9419 = vpop.f32.mrb[0].mxu0
  %9420 = vmatprep.mubr.bf16.mxu0 %v9014
  %9421 = vmatmul.mubr.bf16.gmra.mrb[0].mxu0 %v9013
  %v9422 = vpop.f32.mrb[0].mxu0
  %v9423 = vadd.f32 %v9124, %v9422
  %v9424 = vpop.f32.mrb[0].mxu0
  %v9425 = vpop.f32.mrb[0].mxu0
  %v9426 = vadd.f32 %v9124, %v9425
  %v9427 = vpop.f32.mrb[0].mxu0
  %9428 = vmatprep.mubr.bf16.mxu0 %v9017
  %9429 = vmatmul.mubr.bf16.gmra.mrb[0].mxu0 %v9016
  %v9430 = vpop.f32.mrb[0].mxu0
  %v9431 = vadd.f32 %v9124, %v9430
  %v9432 = vpop.f32.mrb[0].mxu0
  %v9433 = vpop.f32.mrb[0].mxu0
  %v9434 = vadd.f32 %v9124, %v9433
  %v9435 = vpop.f32.mrb[0].mxu0
  %9436 = vmatprep.mubr.bf16.mxu0 %v9020
  %9437 = vmatmul.mubr.bf16.gmra.mrb[0].mxu0 %v9019
  %v9438 = vpop.f32.mrb[0].mxu0
  %v9439 = vadd.f32 %v9124, %v9438
  %v9440 = vpop.f32.mrb[0].mxu0
  %v9441 = vpop.f32.mrb[0].mxu0
  %v9442 = vadd.f32 %v9124, %v9441
  %v9443 = vpop.f32.mrb[0].mxu0
  %9444 = vmatprep.mubr.bf16.mxu0 %v9023
  %9445 = vmatmul.mubr.bf16.gmra.mrb[0].mxu0 %v9022
  %v9446 = vpop.f32.mrb[0].mxu0
  %v9447 = vadd.f32 %v9124, %v9446
  %v9448 = vpop.f32.mrb[0].mxu0
  %v9449 = vpop.f32.mrb[0].mxu0
  %v9450 = vadd.f32 %v9124, %v9449
  %v9451 = vpop.f32.mrb[0].mxu0
  %9452 = vmatprep.mubr.bf16.mxu0 %v9026
  %9453 = vmatmul.mubr.bf16.gmra.mrb[0].mxu0 %v9025
  %v9454 = vpop.f32.mrb[0].mxu0
  %v9455 = vadd.f32 %v9124, %v9454
  %v9456 = vpop.f32.mrb[0].mxu0
  %v9457 = vpop.f32.mrb[0].mxu0
  %v9458 = vadd.f32 %v9124, %v9457
  %v9459 = vpop.f32.mrb[0].mxu0
  %9460 = vmatprep.mubr.bf16.mxu0 %v9029
  %9461 = vmatmul.mubr.bf16.gmra.mrb[0].mxu0 %v9028
  %v9462 = vpop.f32.mrb[0].mxu0
  %v9463 = vadd.f32 %v9124, %v9462
  %v9464 = vpop.f32.mrb[0].mxu0
  %v9465 = vpop.f32.mrb[0].mxu0
  %v9466 = vadd.f32 %v9124, %v9465
  %v9467 = vpop.f32.mrb[0].mxu0
  %9468 = vmatprep.mubr.bf16.mxu0 %v9032
  %9469 = vmatmul.mubr.bf16.gmra.mrb[0].mxu0 %v9031
  %v9470 = vpop.f32.mrb[0].mxu0
  %v9471 = vadd.f32 %v9124, %v9470
  %v9472 = vpop.f32.mrb[0].mxu0
  %v9473 = vpop.f32.mrb[0].mxu0
  %v9474 = vadd.f32 %v9124, %v9473
  %v9475 = vpop.f32.mrb[0].mxu0
  %9476 = vmatprep.mubr.bf16.mxu0 %v9035
  %9477 = vmatmul.mubr.bf16.gmra.mrb[0].mxu0 %v9034
  %v9478 = vpop.f32.mrb[0].mxu0
  %v9479 = vadd.f32 %v9124, %v9478
  %v9480 = vpop.f32.mrb[0].mxu0
  %v9481 = vpop.f32.mrb[0].mxu0
  %v9482 = vadd.f32 %v9124, %v9481
  %v9483 = vpop.f32.mrb[0].mxu0
  %9484 = vmatprep.mubr.bf16.mxu0 %v9037
  %9485 = vmatmul.mubr.bf16.gmra.mrb[0].mxu0 %v9036
  %v9486 = vpop.f32.mrb[0].mxu0
  %v9487 = vadd.f32 %v9124, %v9486
  %v9488 = vpop.f32.mrb[0].mxu0
  %v9489 = vpop.f32.mrb[0].mxu0
  %v9490 = vadd.f32 %v9124, %v9489
  %v9491 = vpop.f32.mrb[0].mxu0
  %9492 = vmatprep.mubr.bf16.mxu0 %v9040
  %9493 = vmatmul.mubr.bf16.gmra.mrb[0].mxu0 %v9039
  %v9494 = vpop.f32.mrb[0].mxu0
  %v9495 = vadd.f32 %v9124, %v9494
  %v9496 = vpop.f32.mrb[0].mxu0
  %v9497 = vpop.f32.mrb[0].mxu0
  %v9498 = vadd.f32 %v9124, %v9497
  %v9499 = vpop.f32.mrb[0].mxu0
  %9500 = vmatprep.mubr.bf16.mxu0 %v9043
  %9501 = vmatmul.mubr.bf16.gmra.mrb[0].mxu0 %v9042
  %v9502 = vpop.f32.mrb[0].mxu0
  %v9503 = vadd.f32 %v9124, %v9502
  %v9504 = vpop.f32.mrb[0].mxu0
  %v9505 = vpop.f32.mrb[0].mxu0
  %v9506 = vadd.f32 %v9124, %v9505
  %v9507 = vpop.f32.mrb[0].mxu0
  %9508 = vmatprep.mubr.bf16.mxu0 %v9046
  %9509 = vmatmul.mubr.bf16.gmra.mrb[0].mxu0 %v9045
  %v9510 = vpop.f32.mrb[0].mxu0
  %v9511 = vadd.f32 %v9124, %v9510
  %v9512 = vpop.f32.mrb[0].mxu0
  %v9513 = vpop.f32.mrb[0].mxu0
  %v9514 = vadd.f32 %v9124, %v9513
  %v9515 = vpop.f32.mrb[0].mxu0
  %9516 = vmatprep.mubr.bf16.mxu0 %v9049
  %9517 = vmatmul.mubr.bf16.gmra.mrb[0].mxu0 %v9048
  %v9518 = vpop.f32.mrb[0].mxu0
  %v9519 = vadd.f32 %v9124, %v9518
  %v9520 = vpop.f32.mrb[0].mxu0
  %v9521 = vpop.f32.mrb[0].mxu0
  %v9522 = vadd.f32 %v9124, %v9521
  %v9523 = vpop.f32.mrb[0].mxu0
  %9524 = vmatprep.mubr.bf16.mxu0 %v9052
  %9525 = vmatmul.mubr.bf16.gmra.mrb[0].mxu0 %v9051
  %v9526 = vpop.f32.mrb[0].mxu0
  %v9527 = vadd.f32 %v9124, %v9526
  %v9528 = vpop.f32.mrb[0].mxu0
  %v9529 = vpop.f32.mrb[0].mxu0
  %v9530 = vadd.f32 %v9124, %v9529
  %v9531 = vpop.f32.mrb[0].mxu0
  %9532 = vmatprep.mubr.bf16.mxu0 %v9055
  %9533 = vmatmul.mubr.bf16.gmra.mrb[0].mxu0 %v9054
  %v9534 = vpop.f32.mrb[0].mxu0
  %v9535 = vadd.f32 %v9124, %v9534
  %v9536 = vpop.f32.mrb[0].mxu0
  %v9537 = vpop.f32.mrb[0].mxu0
  %v9538 = vadd.f32 %v9124, %v9537
  %v9539 = vpop.f32.mrb[0].mxu0
  %9540 = vmatprep.mubr.bf16.mxu0 %v9058
  %9541 = vmatmul.mubr.bf16.gmra.mrb[0].mxu0 %v9057
  %v9542 = vpop.f32.mrb[0].mxu0
  %v9543 = vadd.f32 %v9124, %v9542
  %v9544 = vpop.f32.mrb[0].mxu0
  %v9545 = vpop.f32.mrb[0].mxu0
  %v9546 = vadd.f32 %v9124, %v9545
  %v9547 = vpop.f32.mrb[0].mxu0
  %9548 = vmatprep.mubr.bf16.mxu0 %v9061
  %9549 = vmatmul.mubr.bf16.gmra.mrb[0].mxu0 %v9060
  %v9550 = vpop.f32.mrb[0].mxu0
  %v9551 = vadd.f32 %v9124, %v9550
  %v9552 = vpop.f32.mrb[0].mxu0
  %v9553 = vpop.f32.mrb[0].mxu0
  %v9554 = vadd.f32 %v9124, %v9553
  %v9555 = vpop.f32.mrb[0].mxu0
  %9556 = vmatprep.mubr.bf16.mxu0 %v9064
  %9557 = vmatmul.mubr.bf16.gmra.mrb[0].mxu0 %v9063
  %v9558 = vpop.f32.mrb[0].mxu0
  %v9559 = vadd.f32 %v9124, %v9558
  %v9560 = vpop.f32.mrb[0].mxu0
  %v9561 = vpop.f32.mrb[0].mxu0
  %v9562 = vadd.f32 %v9124, %v9561
  %v9563 = vpop.f32.mrb[0].mxu0
  %9564 = vmatprep.mubr.bf16.mxu0 %v9067
  %9565 = vmatmul.mubr.bf16.gmra.mrb[0].mxu0 %v9066
  %v9566 = vpop.f32.mrb[0].mxu0
  %v9567 = vadd.f32 %v9124, %v9566
  %v9568 = vpop.f32.mrb[0].mxu0
  %v9569 = vpop.f32.mrb[0].mxu0
  %v9570 = vadd.f32 %v9124, %v9569
  %v9571 = vpop.f32.mrb[0].mxu0
  %9572 = vmatprep.mubr.bf16.mxu0 %v9070
  %9573 = vmatmul.mubr.bf16.gmra.mrb[0].mxu0 %v9069
  %v9574 = vpop.f32.mrb[0].mxu0
  %v9575 = vadd.f32 %v9124, %v9574
  %v9576 = vpop.f32.mrb[0].mxu0
  %v9577 = vpop.f32.mrb[0].mxu0
  %v9578 = vadd.f32 %v9124, %v9577
  %v9579 = vpop.f32.mrb[0].mxu0
  %9580 = vmatprep.mubr.bf16.mxu0 %v9073
  %9581 = vmatmul.mubr.bf16.gmra.mrb[0].mxu0 %v9072
  %v9582 = vpop.f32.mrb[0].mxu0
  %v9583 = vadd.f32 %v9124, %v9582
  %v9584 = vpop.f32.mrb[0].mxu0
  %v9585 = vpop.f32.mrb[0].mxu0
  %v9586 = vadd.f32 %v9124, %v9585
  %v9587 = vpop.f32.mrb[0].mxu0
  %9588 = vmatprep.mubr.bf16.mxu0 %v9076
  %9589 = vmatmul.mubr.bf16.gmra.mrb[0].mxu0 %v9075
  %v9590 = vpop.f32.mrb[0].mxu0
  %v9591 = vadd.f32 %v9124, %v9590
  %v9592 = vpop.f32.mrb[0].mxu0
  %v9593 = vpop.f32.mrb[0].mxu0
  %v9594 = vadd.f32 %v9124, %v9593
  %v9595 = vpop.f32.mrb[0].mxu0
  %9596 = vmatprep.mubr.bf16.mxu0 %v9079
  %9597 = vmatmul.mubr.bf16.gmra.mrb[0].mxu0 %v9078
  %v9598 = vpop.f32.mrb[0].mxu0
  %v9599 = vadd.f32 %v9124, %v9598
  %v9600 = vpop.f32.mrb[0].mxu0
  %v9601 = vpop.f32.mrb[0].mxu0
  %v9602 = vadd.f32 %v9124, %v9601
  %v9603 = vpop.f32.mrb[0].mxu0
  %9604 = vmatprep.mubr.bf16.mxu0 %v9082
  %9605 = vmatmul.mubr.bf16.gmra.mrb[0].mxu0 %v9081
  %v9606 = vpop.f32.mrb[0].mxu0
  %v9607 = vadd.f32 %v9124, %v9606
  %v9608 = vpop.f32.mrb[0].mxu0
  %v9609 = vpop.f32.mrb[0].mxu0
  %v9610 = vadd.f32 %v9124, %v9609
  %v9611 = vpop.f32.mrb[0].mxu0
  %9612 = vdwg.mxu0
  %9613 = vmatprep.subr.bf16.mxu0 0
  %9614 = vmatpush1.bf16.msra.mxu0 %v9214
  %9615 = vmatprep.subr.bf16.mxu0 0
  %9616 = vmatpush1.bf16.msra.mxu0 %v9215
  %9617 = vmatprep.subr.bf16.mxu0 0
  %9618 = vmatpush1.bf16.msra.mxu0 0
  %9619 = vmatprep.subr.bf16.mxu0 0
  %9620 = vmatpush1.bf16.msra.mxu0 0
  %9621 = vmatprep.subr.bf16.mxu0 0
  %9622 = vmatpush1.bf16.msra.mxu0 0
  %9623 = vmatprep.subr.bf16.mxu0 0
  %9624 = vmatpush1.bf16.msra.mxu0 0
  %9625 = vmatprep.subr.bf16.mxu0 0
  %9626 = vmatpush1.bf16.msra.mxu0 0
  %9627 = vmatprep.subr.bf16.mxu0 0
  %9628 = vmatpush1.bf16.msra.mxu0 0
  %9629 = vmatprep.subr.bf16.mxu0 0
  %9630 = vmatpush1.bf16.msra.mxu0 0
  %9631 = vmatprep.subr.bf16.mxu0 0
  %9632 = vmatpush1.bf16.msra.mxu0 0
  %9633 = vmatprep.subr.bf16.mxu0 0
  %9634 = vmatpush1.bf16.msra.mxu0 0
  %9635 = vmatprep.subr.bf16.mxu0 0
  %9636 = vmatpush1.bf16.msra.mxu0 0
  %9637 = vmatprep.subr.bf16.mxu0 0
  %9638 = vmatpush1.bf16.msra.mxu0 0
  %9639 = vmatprep.subr.bf16.mxu0 0
  %9640 = vmatpush1.bf16.msra.mxu0 0
  %9641 = vmatprep.subr.bf16.mxu0 0
  %9642 = vmatpush1.bf16.msra.mxu0 0
  %9643 = vmatprep.subr.bf16.mxu0 0
  %9644 = vmatpush1.bf16.msra.mxu0 0
  %9645 = vmatprep.mubr.bf16.mxu0 0
  %9646 = vmatmul.mubr.bf16.gmra.mrb[0].mxu0 %v9235
  %v9647 = vpop.f32.mrb[0].mxu0
  %v9648 = vadd.f32 %v9359, %v9647
  %v9649 = vpop.f32.mrb[0].mxu0
  %v9650 = vpop.f32.mrb[0].mxu0
  %v9651 = vadd.f32 %v9362, %v9650
  %v9652 = vpop.f32.mrb[0].mxu0
  %9653 = vmatprep.mubr.bf16.mxu0 0
  %9654 = vmatmul.mubr.bf16.gmra.mrb[0].mxu0 %v9238
  %v9655 = vpop.f32.mrb[0].mxu0
  %v9656 = vadd.f32 %v9367, %v9655
  %v9657 = vpop.f32.mrb[0].mxu0
  %v9658 = vpop.f32.mrb[0].mxu0
  %v9659 = vadd.f32 %v9370, %v9658
  %v9660 = vpop.f32.mrb[0].mxu0
  %9661 = vmatprep.mubr.bf16.mxu0 0
  %9662 = vmatmul.mubr.bf16.gmra.mrb[0].mxu0 %v9241
  %v9663 = vpop.f32.mrb[0].mxu0
  %v9664 = vadd.f32 %v9375, %v9663
  %v9665 = vpop.f32.mrb[0].mxu0
  %v9666 = vpop.f32.mrb[0].mxu0
  %v9667 = vadd.f32 %v9378, %v9666
  %v9668 = vpop.f32.mrb[0].mxu0
  %9669 = vmatprep.mubr.bf16.mxu0 0
  %9670 = vmatmul.mubr.bf16.gmra.mrb[0].mxu0 %v9244
  %v9671 = vpop.f32.mrb[0].mxu0
  %v9672 = vadd.f32 %v9383, %v9671
  %v9673 = vpop.f32.mrb[0].mxu0
  %v9674 = vpop.f32.mrb[0].mxu0
  %v9675 = vadd.f32 %v9386, %v9674
  %v9676 = vpop.f32.mrb[0].mxu0
  %9677 = vmatprep.mubr.bf16.mxu0 0
  %9678 = vmatmul.mubr.bf16.gmra.mrb[0].mxu0 %v9247
  %v9679 = vpop.f32.mrb[0].mxu0
  %v9680 = vadd.f32 %v9391, %v9679
  %v9681 = vpop.f32.mrb[0].mxu0
  %v9682 = vpop.f32.mrb[0].mxu0
  %v9683 = vadd.f32 %v9394, %v9682
  %v9684 = vpop.f32.mrb[0].mxu0
  %9685 = vmatprep.mubr.bf16.mxu0 0
  %9686 = vmatmul.mubr.bf16.gmra.mrb[0].mxu0 %v9250
  %v9687 = vpop.f32.mrb[0].mxu0
  %v9688 = vadd.f32 %v9399, %v9687
  %v9689 = vpop.f32.mrb[0].mxu0
  %v9690 = vpop.f32.mrb[0].mxu0
  %v9691 = vadd.f32 %v9402, %v9690
  %v9692 = vpop.f32.mrb[0].mxu0
  %9693 = vmatprep.mubr.bf16.mxu0 0
  %9694 = vmatmul.mubr.bf16.gmra.mrb[0].mxu0 %v9253
  %v9695 = vpop.f32.mrb[0].mxu0
  %v9696 = vadd.f32 %v9407, %v9695
  %v9697 = vpop.f32.mrb[0].mxu0
  %v9698 = vpop.f32.mrb[0].mxu0
  %v9699 = vadd.f32 %v9410, %v9698
  %v9700 = vpop.f32.mrb[0].mxu0
  %9701 = vmatprep.mubr.bf16.mxu0 0
  %9702 = vmatmul.mubr.bf16.gmra.mrb[0].mxu0 %v9256
  %v9703 = vpop.f32.mrb[0].mxu0
  %v9704 = vadd.f32 %v9415, %v9703
  %v9705 = vpop.f32.mrb[0].mxu0
  %v9706 = vpop.f32.mrb[0].mxu0
  %v9707 = vadd.f32 %v9418, %v9706
  %v9708 = vpop.f32.mrb[0].mxu0
  %9709 = vmatprep.mubr.bf16.mxu0 0
  %9710 = vmatmul.mubr.bf16.gmra.mrb[0].mxu0 %v9259
  %v9711 = vpop.f32.mrb[0].mxu0
  %v9712 = vadd.f32 %v9423, %v9711
  %v9713 = vpop.f32.mrb[0].mxu0
  %v9714 = vpop.f32.mrb[0].mxu0
  %v9715 = vadd.f32 %v9426, %v9714
  %v9716 = vpop.f32.mrb[0].mxu0
  %9717 = vmatprep.mubr.bf16.mxu0 0
  %9718 = vmatmul.mubr.bf16.gmra.mrb[0].mxu0 %v9262
  %v9719 = vpop.f32.mrb[0].mxu0
  %v9720 = vadd.f32 %v9431, %v9719
  %v9721 = vpop.f32.mrb[0].mxu0
  %v9722 = vpop.f32.mrb[0].mxu0
  %v9723 = vadd.f32 %v9434, %v9722
  %v9724 = vpop.f32.mrb[0].mxu0
  %9725 = vmatprep.mubr.bf16.mxu0 0
  %9726 = vmatmul.mubr.bf16.gmra.mrb[0].mxu0 %v9265
  %v9727 = vpop.f32.mrb[0].mxu0
  %v9728 = vadd.f32 %v9439, %v9727
  %v9729 = vpop.f32.mrb[0].mxu0
  %v9730 = vpop.f32.mrb[0].mxu0
  %v9731 = vadd.f32 %v9442, %v9730
  %v9732 = vpop.f32.mrb[0].mxu0
  %9733 = vmatprep.mubr.bf16.mxu0 0
  %9734 = vmatmul.mubr.bf16.gmra.mrb[0].mxu0 %v9268
  %v9735 = vpop.f32.mrb[0].mxu0
  %v9736 = vadd.f32 %v9447, %v9735
  %v9737 = vpop.f32.mrb[0].mxu0
  %v9738 = vpop.f32.mrb[0].mxu0
  %v9739 = vadd.f32 %v9450, %v9738
  %v9740 = vpop.f32.mrb[0].mxu0
  %9741 = vmatprep.mubr.bf16.mxu0 0
  %9742 = vmatmul.mubr.bf16.gmra.mrb[0].mxu0 %v9271
  %v9743 = vpop.f32.mrb[0].mxu0
  %v9744 = vadd.f32 %v9455, %v9743
  %v9745 = vpop.f32.mrb[0].mxu0
  %v9746 = vpop.f32.mrb[0].mxu0
  %v9747 = vadd.f32 %v9458, %v9746
  %v9748 = vpop.f32.mrb[0].mxu0
  %9749 = vmatprep.mubr.bf16.mxu0 0
  %9750 = vmatmul.mubr.bf16.gmra.mrb[0].mxu0 %v9274
  %v9751 = vpop.f32.mrb[0].mxu0
  %v9752 = vadd.f32 %v9463, %v9751
  %v9753 = vpop.f32.mrb[0].mxu0
  %v9754 = vpop.f32.mrb[0].mxu0
  %v9755 = vadd.f32 %v9466, %v9754
  %v9756 = vpop.f32.mrb[0].mxu0
  %9757 = vmatprep.mubr.bf16.mxu0 0
  %9758 = vmatmul.mubr.bf16.gmra.mrb[0].mxu0 %v9277
  %v9759 = vpop.f32.mrb[0].mxu0
  %v9760 = vadd.f32 %v9471, %v9759
  %v9761 = vpop.f32.mrb[0].mxu0
  %v9762 = vpop.f32.mrb[0].mxu0
  %v9763 = vadd.f32 %v9474, %v9762
  %v9764 = vpop.f32.mrb[0].mxu0
  %9765 = vmatprep.mubr.bf16.mxu0 0
  %9766 = vmatmul.mubr.bf16.gmra.mrb[0].mxu0 %v2709
  %v9767 = vpop.f32.mrb[0].mxu0
  %v9768 = vadd.f32 %v9479, %v9767
  %v9769 = vpop.f32.mrb[0].mxu0
  %v9770 = vpop.f32.mrb[0].mxu0
  %v9771 = vadd.f32 %v9482, %v9770
  %v9772 = vpop.f32.mrb[0].mxu0
  %9773 = vmatprep.mubr.bf16.mxu0 0
  %9774 = vmatmul.mubr.bf16.gmra.mrb[0].mxu0 %v9280
  %v9775 = vpop.f32.mrb[0].mxu0
  %v9776 = vadd.f32 %v9487, %v9775
  %v9777 = vpop.f32.mrb[0].mxu0
  %v9778 = vpop.f32.mrb[0].mxu0
  %v9779 = vadd.f32 %v9490, %v9778
  %v9780 = vpop.f32.mrb[0].mxu0
  %9781 = vmatprep.mubr.bf16.mxu0 0
  %9782 = vmatmul.mubr.bf16.gmra.mrb[0].mxu0 %v9283
  %v9783 = vpop.f32.mrb[0].mxu0
  %v9784 = vadd.f32 %v9495, %v9783
  %v9785 = vpop.f32.mrb[0].mxu0
  %v9786 = vpop.f32.mrb[0].mxu0
  %v9787 = vadd.f32 %v9498, %v9786
  %v9788 = vpop.f32.mrb[0].mxu0
  %9789 = vmatprep.mubr.bf16.mxu0 0
  %9790 = vmatmul.mubr.bf16.gmra.mrb[0].mxu0 %v9286
  %v9791 = vpop.f32.mrb[0].mxu0
  %v9792 = vadd.f32 %v9503, %v9791
  %v9793 = vpop.f32.mrb[0].mxu0
  %v9794 = vpop.f32.mrb[0].mxu0
  %v9795 = vadd.f32 %v9506, %v9794
  %v9796 = vpop.f32.mrb[0].mxu0
  %9797 = vmatprep.mubr.bf16.mxu0 0
  %9798 = vmatmul.mubr.bf16.gmra.mrb[0].mxu0 %v9289
  %v9799 = vpop.f32.mrb[0].mxu0
  %v9800 = vadd.f32 %v9511, %v9799
  %v9801 = vpop.f32.mrb[0].mxu0
  %v9802 = vpop.f32.mrb[0].mxu0
  %v9803 = vadd.f32 %v9514, %v9802
  %v9804 = vpop.f32.mrb[0].mxu0
  %9805 = vmatprep.mubr.bf16.mxu0 0
  %9806 = vmatmul.mubr.bf16.gmra.mrb[0].mxu0 %v9292
  %v9807 = vpop.f32.mrb[0].mxu0
  %v9808 = vadd.f32 %v9519, %v9807
  %v9809 = vpop.f32.mrb[0].mxu0
  %v9810 = vpop.f32.mrb[0].mxu0
  %v9811 = vadd.f32 %v9522, %v9810
  %v9812 = vpop.f32.mrb[0].mxu0
  %9813 = vmatprep.mubr.bf16.mxu0 0
  %9814 = vmatmul.mubr.bf16.gmra.mrb[0].mxu0 %v9295
  %v9815 = vpop.f32.mrb[0].mxu0
  %v9816 = vadd.f32 %v9527, %v9815
  %v9817 = vpop.f32.mrb[0].mxu0
  %v9818 = vpop.f32.mrb[0].mxu0
  %v9819 = vadd.f32 %v9530, %v9818
  %v9820 = vpop.f32.mrb[0].mxu0
  %9821 = vmatprep.mubr.bf16.mxu0 0
  %9822 = vmatmul.mubr.bf16.gmra.mrb[0].mxu0 %v9298
  %v9823 = vpop.f32.mrb[0].mxu0
  %v9824 = vadd.f32 %v9535, %v9823
  %v9825 = vpop.f32.mrb[0].mxu0
  %v9826 = vpop.f32.mrb[0].mxu0
  %v9827 = vadd.f32 %v9538, %v9826
  %v9828 = vpop.f32.mrb[0].mxu0
  %9829 = vmatprep.mubr.bf16.mxu0 0
  %9830 = vmatmul.mubr.bf16.gmra.mrb[0].mxu0 %v9301
  %v9831 = vpop.f32.mrb[0].mxu0
  %v9832 = vadd.f32 %v9543, %v9831
  %v9833 = vpop.f32.mrb[0].mxu0
  %v9834 = vpop.f32.mrb[0].mxu0
  %v9835 = vadd.f32 %v9546, %v9834
  %v9836 = vpop.f32.mrb[0].mxu0
  %9837 = vmatprep.mubr.bf16.mxu0 0
  %9838 = vmatmul.mubr.bf16.gmra.mrb[0].mxu0 %v9304
  %v9839 = vpop.f32.mrb[0].mxu0
  %v9840 = vadd.f32 %v9551, %v9839
  %v9841 = vpop.f32.mrb[0].mxu0
  %v9842 = vpop.f32.mrb[0].mxu0
  %v9843 = vadd.f32 %v9554, %v9842
  %v9844 = vpop.f32.mrb[0].mxu0
  %9845 = vmatprep.mubr.bf16.mxu0 0
  %9846 = vmatmul.mubr.bf16.gmra.mrb[0].mxu0 %v9307
  %v9847 = vpop.f32.mrb[0].mxu0
  %v9848 = vadd.f32 %v9559, %v9847
  %v9849 = vpop.f32.mrb[0].mxu0
  %v9850 = vpop.f32.mrb[0].mxu0
  %v9851 = vadd.f32 %v9562, %v9850
  %v9852 = vpop.f32.mrb[0].mxu0
  %9853 = vmatprep.mubr.bf16.mxu0 0
  %9854 = vmatmul.mubr.bf16.gmra.mrb[0].mxu0 %v9310
  %v9855 = vpop.f32.mrb[0].mxu0
  %v9856 = vadd.f32 %v9567, %v9855
  %v9857 = vpop.f32.mrb[0].mxu0
  %v9858 = vpop.f32.mrb[0].mxu0
  %v9859 = vadd.f32 %v9570, %v9858
  %v9860 = vpop.f32.mrb[0].mxu0
  %9861 = vmatprep.mubr.bf16.mxu0 0
  %9862 = vmatmul.mubr.bf16.gmra.mrb[0].mxu0 %v9313
  %v9863 = vpop.f32.mrb[0].mxu0
  %v9864 = vadd.f32 %v9575, %v9863
  %v9865 = vpop.f32.mrb[0].mxu0
  %v9866 = vpop.f32.mrb[0].mxu0
  %v9867 = vadd.f32 %v9578, %v9866
  %v9868 = vpop.f32.mrb[0].mxu0
  %9869 = vmatprep.mubr.bf16.mxu0 0
  %9870 = vmatmul.mubr.bf16.gmra.mrb[0].mxu0 %v9316
  %v9871 = vpop.f32.mrb[0].mxu0
  %v9872 = vadd.f32 %v9583, %v9871
  %v9873 = vpop.f32.mrb[0].mxu0
  %v9874 = vpop.f32.mrb[0].mxu0
  %v9875 = vadd.f32 %v9586, %v9874
  %v9876 = vpop.f32.mrb[0].mxu0
  %9877 = vmatprep.mubr.bf16.mxu0 0
  %9878 = vmatmul.mubr.bf16.gmra.mrb[0].mxu0 %v9319
  %v9879 = vpop.f32.mrb[0].mxu0
  %v9880 = vadd.f32 %v9591, %v9879
  %v9881 = vpop.f32.mrb[0].mxu0
  %v9882 = vpop.f32.mrb[0].mxu0
  %v9883 = vadd.f32 %v9594, %v9882
  %v9884 = vpop.f32.mrb[0].mxu0
  %9885 = vmatprep.mubr.bf16.mxu0 0
  %9886 = vmatmul.mubr.bf16.gmra.mrb[0].mxu0 %v9322
  %v9887 = vpop.f32.mrb[0].mxu0
  %v9888 = vadd.f32 %v9599, %v9887
  %v9889 = vpop.f32.mrb[0].mxu0
  %v9890 = vpop.f32.mrb[0].mxu0
  %v9891 = vadd.f32 %v9602, %v9890
  %v9892 = vpop.f32.mrb[0].mxu0
  %9893 = vmatprep.mubr.bf16.mxu0 0
  %9894 = vmatmul.mubr.bf16.gmra.mrb[0].mxu0 %v2709
  %v9895 = vpop.f32.mrb[0].mxu0
  %v9896 = vadd.f32 %v9607, %v9895
  %v9897 = vpop.f32.mrb[0].mxu0
  %v9898 = vpop.f32.mrb[0].mxu0
  %v9899 = vadd.f32 %v9610, %v9898
  %v9900 = vpop.f32.mrb[0].mxu0
  %9901 = vdwg.mxu0
  %9902 = vst [vmem:[%s5] sm:$0xff] %v9648
  %9903 = vst [vmem:[%s5 + $0x8] sm:$0xff] %v9651
  %9904 = vst [vmem:[%s5 + $0x10] sm:$0xff] %v9656
  %9905 = vst [vmem:[%s5 + $0x18] sm:$0xff] %v9659
  %9906 = vst [vmem:[%s5 + $0x20] sm:$0xff] %v9664
  %9907 = vst [vmem:[%s5 + $0x28] sm:$0xff] %v9667
  %9908 = vst [vmem:[%s5 + $0x30] sm:$0xff] %v9672
  %9909 = vst [vmem:[%s5 + $0x38] sm:$0xff] %v9675
  %9910 = vst [vmem:[%s5 + $0x40] sm:$0xff] %v9680
  %9911 = vst [vmem:[%s5 + $0x48] sm:$0xff] %v9683
  %9912 = vst [vmem:[%s5 + $0x50] sm:$0xff] %v9688
  %9913 = vst [vmem:[%s5 + $0x58] sm:$0xff] %v9691
  %9914 = vst [vmem:[%s5 + $0x60] sm:$0xff] %v9696
  %9915 = vst [vmem:[%s5 + $0x68] sm:$0xff] %v9699
  %9916 = vst [vmem:[%s5 + $0x70] sm:$0xff] %v9704
  %9917 = vst [vmem:[%s5 + $0x78] sm:$0xff] %v9707
  %9918 = vst [vmem:[%s5 + $0x80] sm:$0xff] %v9712
  %9919 = vst [vmem:[%s5 + $0x88] sm:$0xff] %v9715
  %9920 = vst [vmem:[%s5 + $0x90] sm:$0xff] %v9720
  %9921 = vst [vmem:[%s5 + $0x98] sm:$0xff] %v9723
  %9922 = vst [vmem:[%s5 + $0xa0] sm:$0xff] %v9728
  %9923 = vst [vmem:[%s5 + $0xa8] sm:$0xff] %v9731
  %9924 = vst [vmem:[%s5 + $0xb0] sm:$0xff] %v9736
  %9925 = vst [vmem:[%s5 + $0xb8] sm:$0xff] %v9739
  %9926 = vst [vmem:[%s5 + $0xc0] sm:$0xff] %v9744
  %9927 = vst [vmem:[%s5 + $0xc8] sm:$0xff] %v9747
  %9928 = vst [vmem:[%s5 + $0xd0] sm:$0xff] %v9752
  %9929 = vst [vmem:[%s5 + $0xd8] sm:$0xff] %v9755
  %9930 = vst [vmem:[%s5 + $0xe0] sm:$0xff] %v9760
  %9931 = vst [vmem:[%s5 + $0xe8] sm:$0xff] %v9763
  %9932 = vst [vmem:[%s5 + $0xf0] sm:$0xff] %v9768
  %9933 = vst [vmem:[%s5 + $0xf8] sm:$0xff] %v9771
  %9934 = vst [vmem:[%s5 + $0x100] sm:$0xff] %v9776
  %9935 = vst [vmem:[%s5 + $0x108] sm:$0xff] %v9779
  %9936 = vst [vmem:[%s5 + $0x110] sm:$0xff] %v9784
  %9937 = vst [vmem:[%s5 + $0x118] sm:$0xff] %v9787
  %9938 = vst [vmem:[%s5 + $0x120] sm:$0xff] %v9792
  %9939 = vst [vmem:[%s5 + $0x128] sm:$0xff] %v9795
  %9940 = vst [vmem:[%s5 + $0x130] sm:$0xff] %v9800
  %9941 = vst [vmem:[%s5 + $0x138] sm:$0xff] %v9803
  %9942 = vst [vmem:[%s5 + $0x140] sm:$0xff] %v9808
  %9943 = vst [vmem:[%s5 + $0x148] sm:$0xff] %v9811
  %9944 = vst [vmem:[%s5 + $0x150] sm:$0xff] %v9816
  %9945 = vst [vmem:[%s5 + $0x158] sm:$0xff] %v9819
  %9946 = vst [vmem:[%s5 + $0x160] sm:$0xff] %v9824
  %9947 = vst [vmem:[%s5 + $0x168] sm:$0xff] %v9827
  %9948 = vst [vmem:[%s5 + $0x170] sm:$0xff] %v9832
  %9949 = vst [vmem:[%s5 + $0x178] sm:$0xff] %v9835
  %9950 = vst [vmem:[%s5 + $0x180] sm:$0xff] %v9840
  %9951 = vst [vmem:[%s5 + $0x188] sm:$0xff] %v9843
  %9952 = vst [vmem:[%s5 + $0x190] sm:$0xff] %v9848
  %9953 = vst [vmem:[%s5 + $0x198] sm:$0xff] %v9851
  %9954 = vst [vmem:[%s5 + $0x1a0] sm:$0xff] %v9856
  %9955 = vst [vmem:[%s5 + $0x1a8] sm:$0xff] %v9859
  %9956 = vst [vmem:[%s5 + $0x1b0] sm:$0xff] %v9864
  %9957 = vst [vmem:[%s5 + $0x1b8] sm:$0xff] %v9867
  %9958 = vst [vmem:[%s5 + $0x1c0] sm:$0xff] %v9872
  %9959 = vst [vmem:[%s5 + $0x1c8] sm:$0xff] %v9875
  %9960 = vst [vmem:[%s5 + $0x1d0] sm:$0xff] %v9880
  %9961 = vst [vmem:[%s5 + $0x1d8] sm:$0xff] %v9883
  %9962 = vst [vmem:[%s5 + $0x1e0] sm:$0xff] %v9888
  %9963 = vst [vmem:[%s5 + $0x1e8] sm:$0xff] %v9891
  %9964 = vst [vmem:[%s5 + $0x1f0] sm:$0xff] %v9896
  %9965 = vst [vmem:[%s5 + $0x1f8] sm:$0xff] %v9899
  // Predicated region
  $region22: #{_lambda_.1} parent=0 // pred_check
    _
  $region23: #{_lambda_.1} parent=0 // pred_check_branch
    %9967 = sbr.rel (0) target = $region25
  $region24: #{_lambda_.1} parent=0 // pred_region
    _
  $region25: #{_lambda_.1} parent=0 // pred_fallthru
    _
  // Predicated region
  $region26: #{_lambda_.1} parent=0 // pred_check
    _
  $region27: #{_lambda_.1} parent=0 // pred_check_branch
    %9969 = sbr.rel (0) target = $region29
  $region28: #{_lambda_.1} parent=0 // pred_region
    _
  $region29: #{_lambda_.1} parent=0 // pred_fallthru
    _

</llo_original>
